<compile_context>
chip_gen: v7x
topology: tpu7x:2x2x1
jax: 0.10.0
libtpu: 0.0.40
codegen_flags: <defaults>
</compile_context>

<pallas_src>
import functools
import math

import jax
import jax.numpy as jnp
from jax.experimental import pallas as pl
from jax.experimental.pallas import tpu as pltpu

NEG_SLOPE = 0.01          # F.leaky_relu default
BN_EPS = 1e-5             # nn.BatchNorm2d default
MXU_DTYPE = jnp.bfloat16  # MXU operand dtype (accumulation stays f32)


# ---------------------------------------------------------------------------
# Trace-time constant builders
# ---------------------------------------------------------------------------

def conv_band_weights(wt, width):
    """(Cout, Cin, KH, KW) -> K-merged banded matrix (KH*W*Cin, Wo*Cout).

    A VALID conv over a lane-dense (H, W*Cin) row slab is then
    concat_ky(x[ky:ky+Ho]) @ T, a single MXU contraction.
    """
    c_out, c_in, kh, kw = wt.shape
    w_out = width - kw + 1
    wo_idx = jnp.arange(w_out)
    mats = []
    for ky in range(kh):
        t4 = jnp.zeros((width, c_in, w_out, c_out), jnp.float32)
        for kx in range(kw):
            blk = jnp.broadcast_to(wt[:, :, ky, kx].T, (w_out, c_in, c_out))
            t4 = t4.at[wo_idx + kx, :, wo_idx, :].set(blk)
        mats.append(t4.reshape(width * c_in, w_out * c_out))
    return jnp.concatenate(mats, axis=0)


def channel_fold_mats(w_out, c):
    """s: (Wo*C, C) folds lane-width stats to per-channel; st = s.T expands."""
    s = jnp.tile(jnp.eye(c, dtype=jnp.float32), (w_out, 1))
    return s, s.T


def pool_col_select(w_out, c, dtype):
    """0/1 matrices selecting even / odd conv columns (channel-interleaved)."""
    wp = w_out // 2
    cols = jnp.arange(wp * c)
    src_even = (cols // c) * (2 * c) + (cols % c)
    se = jnp.zeros((w_out * c, wp * c), dtype).at[src_even, cols].set(1)
    so = jnp.zeros((w_out * c, wp * c), dtype).at[src_even + c, cols].set(1)
    return se, so


def pool_row_select(b, h_in, h_out, m, dtype):
    """0/1 matrices selecting rows 2r / 2r+1 of every image in a batch tile."""
    hp = h_out // 2
    rows = jnp.arange(b * hp)
    src_even = (rows // hp) * h_in + (rows % hp) * 2
    re = jnp.zeros((b * hp, m), dtype).at[rows, src_even].set(1)
    ro = jnp.zeros((b * hp, m), dtype).at[rows, src_even + 1].set(1)
    return re, ro


def valid_row_mask(h_in, h_out, m):
    """1 for real conv-output rows, 0 for rows straddling image boundaries."""
    return ((jnp.arange(m) % h_in) < h_out).astype(jnp.float32).reshape(m, 1)


def _pick_batch_tile(n, sublane_dims, max_b=16):
    """Largest divisor of n (<= max_b) whose row blocks stay 8-aligned."""
    for b in range(min(n, max_b), 0, -1):
        if n % b:
            continue
        if b == n or all((b * d) % 8 == 0 for d in sublane_dims):
            return b
    return n


# ---------------------------------------------------------------------------
# Pallas kernels
# ---------------------------------------------------------------------------

def _conv_bn_lrelu_pool_kernel(x_ref, t_ref, s_ref, st_ref, g_ref, be_ref,
                               vm_ref, re_ref, ro_ref, ce_ref, co_ref,
                               o_ref, sum_ref, ssq_ref, *, kh, inv_m):
    ph = pl.program_id(0)      # 0: accumulate BN stats, 1: normalize + emit
    tile = pl.program_id(1)    # batch tile

    # K-merged banded conv (bias dropped: cancelled by training-mode BN).
    x = x_ref[...]                                       # (B*H, W*Cin) bf16
    m_rows = x.shape[0] - (kh - 1)
    lhs = jnp.concatenate([x[ky:ky + m_rows, :] for ky in range(kh)], axis=-1)
    y = jnp.dot(lhs, t_ref[...], preferred_element_type=jnp.float32)

    @pl.when(jnp.logical_and(ph == 0, tile == 0))
    def _():
        sum_ref[...] = jnp.zeros_like(sum_ref)
        ssq_ref[...] = jnp.zeros_like(ssq_ref)

    @pl.when(ph == 0)
    def _():
        # Lane-width one-pass stats on the VPU; rows straddling an image
        # boundary are masked out.
        ym = y * vm_ref[...]
        sum_ref[...] += jnp.sum(ym, axis=0, keepdims=True)
        ssq_ref[...] += jnp.sum(ym * y, axis=0, keepdims=True)

    @pl.when(jnp.logical_and(ph == 1, tile == 0))
    def _():
        # Batch-invariant BN work, done exactly once: fold lane-width stats to
        # per-channel, compute scale/shift, expand back to lane width and
        # stash them in the (now free) stats scratch.
        ch_sum = jnp.dot(sum_ref[...], s_ref[...],
                         preferred_element_type=jnp.float32)
        ch_ssq = jnp.dot(ssq_ref[...], s_ref[...],
                         preferred_element_type=jnp.float32)
        mean = ch_sum * inv_m
        var = ch_ssq * inv_m - mean * mean               # biased (PyTorch)
        scale = g_ref[...] * jax.lax.rsqrt(var + BN_EPS)
        shift = be_ref[...] - mean * scale
        sum_ref[...] = jnp.dot(scale, st_ref[...],
                               preferred_element_type=jnp.float32)   # scale_w
        ssq_ref[...] = jnp.dot(shift, st_ref[...],
                               preferred_element_type=jnp.float32)   # shift_w

    @pl.when(ph == 1)
    def _():
        z = y * sum_ref[...] + ssq_ref[...]
        a = jnp.where(z > 0, z, NEG_SLOPE * z).astype(MXU_DTYPE)
        # Fused 2x2 max-pool: row-pair max (also drops image-boundary rows and
        # stacks the tile's images), then column-pair max, all via exact 0/1
        # selection matmuls.
        rp = jnp.maximum(
            jnp.dot(re_ref[...], a, preferred_element_type=jnp.float32),
            jnp.dot(ro_ref[...], a, preferred_element_type=jnp.float32),
        ).astype(MXU_DTYPE)
        o_ref[...] = jnp.maximum(
            jnp.dot(rp, ce_ref[...], preferred_element_type=jnp.float32),
            jnp.dot(rp, co_ref[...], preferred_element_type=jnp.float32),
        ).astype(o_ref.dtype)


def _dense_kernel(x_ref, w1_ref, b1_ref, w2_ref, b2_ref, o_ref):
    h = (jnp.dot(x_ref[...], w1_ref[...], preferred_element_type=jnp.float32)
         + b1_ref[...])
    h = jnp.where(h > 0, h, NEG_SLOPE * h).astype(MXU_DTYPE)
    o_ref[...] = (jnp.dot(h, w2_ref[...], preferred_element_type=jnp.float32)
                  + b2_ref[...])


# ---------------------------------------------------------------------------
# pallas_call wrappers
# ---------------------------------------------------------------------------

def conv_bn_lrelu_pool_block(x2d, conv_w, gamma, beta, *, n, h_in, w_in,
                             c_in, c_out, max_b=16):
    """x2d: (N*H, W*Cin) bf16 lane-dense slabs -> pooled (N*Hp, Wp*Cout) bf16."""
    kh, kw = int(conv_w.shape[2]), int(conv_w.shape[3])
    h_out, w_out = h_in - kh + 1, w_in - kw + 1
    hp, wp = h_out // 2, w_out // 2
    wc, wo_c = w_in * c_in, w_out * c_out

    b = _pick_batch_tile(n, (h_in, hp), max_b)
    num_tiles = n // b
    m = b * h_in - (kh - 1)

    t_merged = conv_band_weights(conv_w, w_in).astype(MXU_DTYPE)
    s_mat, st_mat = channel_fold_mats(w_out, c_out)
    se, so = pool_col_select(w_out, c_out, MXU_DTYPE)
    re, ro = pool_row_select(b, h_in, h_out, m, MXU_DTYPE)
    vmask = valid_row_mask(h_in, h_out, m)
    inv_m = 1.0 / float(n * h_out * w_out)

    kernel = functools.partial(_conv_bn_lrelu_pool_kernel, kh=kh, inv_m=inv_m)

    conv_flops = 2 * m * (kh * wc) * wo_c
    pool_flops = 4 * b * hp * wo_c * (m + wp * c_out)
    flops = int(num_tiles * (2 * conv_flops + pool_flops))
    bytes_acc = int(2 * (2 * n * h_in * wc + n * hp * wp * c_out
                         + kh * wc * wo_c))

    return pl.pallas_call(
        kernel,
        out_shape=jax.ShapeDtypeStruct((n * hp, wp * c_out), MXU_DTYPE),
        grid_spec=pltpu.PrefetchScalarGridSpec(
            num_scalar_prefetch=0,
            grid=(2, num_tiles),
            in_specs=[
                pl.BlockSpec((b * h_in, wc), lambda ph, t: (t, 0)),
                pl.BlockSpec((kh * wc, wo_c), lambda ph, t: (0, 0)),
                pl.BlockSpec((wo_c, c_out), lambda ph, t: (0, 0)),
                pl.BlockSpec((c_out, wo_c), lambda ph, t: (0, 0)),
                pl.BlockSpec((1, c_out), lambda ph, t: (0, 0)),
                pl.BlockSpec((1, c_out), lambda ph, t: (0, 0)),
                pl.BlockSpec((m, 1), lambda ph, t: (0, 0)),
                pl.BlockSpec((b * hp, m), lambda ph, t: (0, 0)),
                pl.BlockSpec((b * hp, m), lambda ph, t: (0, 0)),
                pl.BlockSpec((wo_c, wp * c_out), lambda ph, t: (0, 0)),
                pl.BlockSpec((wo_c, wp * c_out), lambda ph, t: (0, 0)),
            ],
            # Pinned to block 0 during phase 0: no garbage writebacks; every
            # output block is written back exactly once, after phase 1 fills it.
            out_specs=pl.BlockSpec((b * hp, wp * c_out),
                                   lambda ph, t: (ph * t, 0)),
            scratch_shapes=[pltpu.VMEM((1, wo_c), jnp.float32),
                            pltpu.VMEM((1, wo_c), jnp.float32)],
        ),
        # BN stats couple all batch tiles -> both grid axes stay sequential.
        compiler_params=pltpu.CompilerParams(
            dimension_semantics=("arbitrary", "arbitrary")),
        cost_estimate=pl.CostEstimate(flops=flops, transcendentals=c_out,
                                      bytes_accessed=bytes_acc),
    )(x2d, t_merged, s_mat, st_mat,
      gamma.reshape(1, c_out).astype(jnp.float32),
      beta.reshape(1, c_out).astype(jnp.float32),
      vmask, re, ro, se, so)


def dense_head(flat, w1, b1, w2, b2):
    """Fused l1 + leaky-ReLU + l2 over row tiles (bf16 MXU operands)."""
    n, k = flat.shape
    h1, c = w1.shape[1], w2.shape[1]
    # 256-row tiles fill the v6e/v7x MXU M dim; 128 suits v5e; tiny batches
    # just pad to a sublane multiple.
    if n >= 256:
        row_tile = 256
    elif n >= 128:
        row_tile = 128
    else:
        row_tile = ((n + 7) // 8) * 8
    n_pad = pl.cdiv(n, row_tile) * row_tile
    flat = flat.astype(MXU_DTYPE)
    if n_pad != n:
        flat = jnp.pad(flat, ((0, n_pad - n), (0, 0)))

    out = pl.pallas_call(
        _dense_kernel,
        out_shape=jax.ShapeDtypeStruct((n_pad, c), jnp.float32),
        grid_spec=pltpu.PrefetchScalarGridSpec(
            num_scalar_prefetch=0,
            grid=(n_pad // row_tile,),
            in_specs=[
                pl.BlockSpec((row_tile, k), lambda i: (i, 0)),
                pl.BlockSpec((k, h1), lambda i: (0, 0)),
                pl.BlockSpec((1, h1), lambda i: (0, 0)),
                pl.BlockSpec((h1, c), lambda i: (0, 0)),
                pl.BlockSpec((1, c), lambda i: (0, 0)),
            ],
            out_specs=pl.BlockSpec((row_tile, c), lambda i: (i, 0)),
        ),
        compiler_params=pltpu.CompilerParams(
            dimension_semantics=("parallel",)),
        cost_estimate=pl.CostEstimate(
            flops=int(2 * n_pad * (k * h1 + h1 * c)), transcendentals=0,
            bytes_accessed=int(2 * (n_pad * k + k * h1 + h1 * c)
                               + 4 * n_pad * c)),
    )(flat, w1.astype(MXU_DTYPE), b1.reshape(1, h1).astype(jnp.float32),
      w2.astype(MXU_DTYPE), b2.reshape(1, c).astype(jnp.float32))
    return out[:n]


# ---------------------------------------------------------------------------
# Forward pass
# ---------------------------------------------------------------------------

def cnn_forward(x, params):
    # x: (N, 1, 28, 28) float32, NCHW (PyTorch convention)
    n = x.shape[0]
    c = 16

    # NCHW -> lane-dense 2-D row slabs (N*H, W*Cin), channels fastest in a row.
    x1 = jnp.transpose(x, (0, 2, 3, 1)).reshape(n * 28, 28 * 1).astype(MXU_DTYPE)

    # conv1 + bn1 + leaky_relu + 2x2 max-pool  (one fused kernel)
    p1 = conv_bn_lrelu_pool_block(x1, params["conv1_w"], params["bn1_g"],
                                  params["bn1_b"], n=n, h_in=28, w_in=28,
                                  c_in=1, c_out=c)       # (N*13, 13*16)

    # conv2 + bn2 + leaky_relu + 2x2 max-pool  (one fused kernel; p1 is
    # already in the right layout, no inter-kernel re-layout)
    p2 = conv_bn_lrelu_pool_block(p1, params["conv2_w"], params["bn2_g"],
                                  params["bn2_b"], n=n, h_in=13, w_in=13,
                                  c_in=c, c_out=c)       # (N*5, 5*16)

    # PyTorch's x.view(-1, 16*5*5) flattens NCHW; absorb the NHWC->NCHW
    # permutation into l1's weight matrix instead of transposing activations.
    flat = p2.reshape(n, 5 * 5 * c)
    hh, ww, cc = jnp.meshgrid(jnp.arange(5), jnp.arange(5), jnp.arange(c),
                              indexing="ij")
    nchw_idx = (cc * 25 + hh * 5 + ww).reshape(-1)
    w1p = params["l1_w"].T[nchw_idx]                     # (400, 120)

    # l1 + leaky_relu + l2 (one fused kernel)
    return dense_head(flat, w1p, params["l1_b"], params["l2_w"].T,
                      params["l2_b"])


# ---------------------------------------------------------------------------
# Pure-JAX reference (PyTorch semantics, incl. conv bias + training-mode BN)
# ---------------------------------------------------------------------------

def reference_forward(x, params):
    hi = jax.lax.Precision.HIGHEST

    def conv(x, w, b):
        y = jax.lax.conv_general_dilated(
            x, w, (1, 1), "VALID",
            dimension_numbers=("NCHW", "OIHW", "NCHW"), precision=hi)
        return y + b.reshape(1, -1, 1, 1)

    def bn(x, g, be):
        mean = jnp.mean(x, axis=(0, 2, 3), keepdims=True)
        var = jnp.mean(jnp.square(x - mean), axis=(0, 2, 3), keepdims=True)
        return ((x - mean) * jax.lax.rsqrt(var + BN_EPS)
                * g.reshape(1, -1, 1, 1) + be.reshape(1, -1, 1, 1))

    def lrelu(x):
        return jnp.where(x > 0, x, NEG_SLOPE * x)

    def pool(x):
        return jax.lax.reduce_window(x, -jnp.inf, jax.lax.max,
                                     (1, 1, 2, 2), (1, 1, 2, 2), "VALID")

    y = pool(lrelu(bn(conv(x, params["conv1_w"], params["conv1_b"]),
                      params["bn1_g"], params["bn1_b"])))
    y = pool(lrelu(bn(conv(y, params["conv2_w"], params["conv2_b"]),
                      params["bn2_g"], params["bn2_b"])))
    y = y.reshape(y.shape[0], -1)
    y = lrelu(jnp.dot(y, params["l1_w"].T, precision=hi) + params["l1_b"])
    y = jnp.dot(y, params["l2_w"].T, precision=hi) + params["l2_b"]
    return y


# ---------------------------------------------------------------------------
# Deterministic parameter init (shapes from CNN_model.__init__)
# ---------------------------------------------------------------------------

def init_params(key):
    ks = jax.random.split(key, 12)

    def uinit(k, shape, fan_in):
        bound = 1.0 / math.sqrt(fan_in)
        return jax.random.uniform(k, shape, jnp.float32, -bound, bound)

    return {
        "conv1_w": uinit(ks[0], (16, 1, 3, 3), 1 * 9),
        "conv1_b": uinit(ks[1], (16,), 1 * 9),    # cancelled by BN (ref only)
        "conv2_w": uinit(ks[2], (16, 16, 3, 3), 16 * 9),
        "conv2_b": uinit(ks[3], (16,), 16 * 9),   # cancelled by BN (ref only)
        "l1_w": uinit(ks[4], (120, 16 * 5 * 5), 16 * 5 * 5),
        "l1_b": uinit(ks[5], (120,), 16 * 5 * 5),
        "l2_w": uinit(ks[6], (10, 120), 120),
        "l2_b": uinit(ks[7], (10,), 120),
        "bn1_g": 1.0 + 0.1 * jax.random.normal(ks[8], (16,), jnp.float32),
        "bn1_b": 0.1 * jax.random.normal(ks[9], (16,), jnp.float32),
        "bn2_g": 1.0 + 0.1 * jax.random.normal(ks[10], (16,), jnp.float32),
        "bn2_b": 0.1 * jax.random.normal(ks[11], (16,), jnp.float32),
    }


if __name__ == "__main__":
    key = jax.random.PRNGKey(0)
    pkey, xkey = jax.random.split(key)
    params = init_params(pkey)

    # MNIST-shaped input (28x28 is required by the 16*5*5 flatten), small batch.
    x = jax.random.normal(xkey, (2, 1, 28, 28), jnp.float32)

    out = jax.block_until_ready(jax.jit(cnn_forward)(x, params))
    assert out.shape == (2, 10) and out.dtype == jnp.float32

    ref = jax.block_until_ready(reference_forward(x, params))
    max_err = float(jnp.max(jnp.abs(out - ref)))
    # bf16 MXU operands (f32 accumulation) -> slightly looser tolerance.
    assert jnp.allclose(out, ref, rtol=5e-2, atol=5e-2), f"max abs err {max_err}"

    print("KERNEL_OK")
</pallas_src>

<mosaic_0001>
module attributes {stable_mosaic.version = 11 : i64} {
  func.func @_conv_bn_lrelu_pool_kernel(%arg0: i32, %arg1: i32, %arg2: memref<56x28xbf16, #tpu.memory_space<vmem>>, %arg3: memref<84x416xbf16, #tpu.memory_space<vmem>>, %arg4: memref<416x16xf32, #tpu.memory_space<vmem>>, %arg5: memref<16x416xf32, #tpu.memory_space<vmem>>, %arg6: memref<1x16xf32, #tpu.memory_space<vmem>>, %arg7: memref<1x16xf32, #tpu.memory_space<vmem>>, %arg8: memref<54x1xf32, #tpu.memory_space<vmem>>, %arg9: memref<26x54xbf16, #tpu.memory_space<vmem>>, %arg10: memref<26x54xbf16, #tpu.memory_space<vmem>>, %arg11: memref<416x208xbf16, #tpu.memory_space<vmem>>, %arg12: memref<416x208xbf16, #tpu.memory_space<vmem>>, %arg13: memref<26x208xbf16, #tpu.memory_space<vmem>>, %arg14: memref<1x416xf32, #tpu.memory_space<vmem>>, %arg15: memref<1x416xf32, #tpu.memory_space<vmem>>) attributes {dimension_semantics = [#tpu.dimension_semantics<arbitrary>, #tpu.dimension_semantics<arbitrary>], iteration_bounds = array<i64: 2, 1>, scalar_prefetch = 0 : i64, scratch_operands = 2 : i64, tpu.core_type = #tpu.core_type<tc>, window_params = [{transform_indices = @transform_0, window_bounds = array<i64: 56, 28>}, {pipeline_mode = #tpu.pipeline_mode<synchronous>, transform_indices = @transform_1, window_bounds = array<i64: 84, 416>}, {pipeline_mode = #tpu.pipeline_mode<synchronous>, transform_indices = @transform_2, window_bounds = array<i64: 416, 16>}, {pipeline_mode = #tpu.pipeline_mode<synchronous>, transform_indices = @transform_3, window_bounds = array<i64: 16, 416>}, {pipeline_mode = #tpu.pipeline_mode<synchronous>, transform_indices = @transform_4, window_bounds = array<i64: 1, 16>}, {pipeline_mode = #tpu.pipeline_mode<synchronous>, transform_indices = @transform_5, window_bounds = array<i64: 1, 16>}, {pipeline_mode = #tpu.pipeline_mode<synchronous>, transform_indices = @transform_6, window_bounds = array<i64: 54, 1>}, {pipeline_mode = #tpu.pipeline_mode<synchronous>, transform_indices = @transform_7, window_bounds = array<i64: 26, 54>}, {pipeline_mode = #tpu.pipeline_mode<synchronous>, transform_indices = @transform_8, window_bounds = array<i64: 26, 54>}, {pipeline_mode = #tpu.pipeline_mode<synchronous>, transform_indices = @transform_9, window_bounds = array<i64: 416, 208>}, {pipeline_mode = #tpu.pipeline_mode<synchronous>, transform_indices = @transform_10, window_bounds = array<i64: 416, 208>}, {transform_indices = @transform_11, window_bounds = array<i64: 26, 208>}]} {
    %c0 = arith.constant 0 : index
    %c0_0 = arith.constant 0 : index
    %0 = vector.load %arg2[%c0, %c0_0] : memref<56x28xbf16, #tpu.memory_space<vmem>>, vector<56x28xbf16>
    %1 = vector.extract_strided_slice %0 {offsets = [0, 0], sizes = [54, 28], strides = [1, 1]} : vector<56x28xbf16> to vector<54x28xbf16>
    %2 = vector.extract_strided_slice %0 {offsets = [1, 0], sizes = [54, 28], strides = [1, 1]} : vector<56x28xbf16> to vector<54x28xbf16>
    %3 = vector.extract_strided_slice %0 {offsets = [2, 0], sizes = [54, 28], strides = [1, 1]} : vector<56x28xbf16> to vector<54x28xbf16>
    %4 = tpu.concatenate %1, %2, %3 in 1 : vector<54x28xbf16>, vector<54x28xbf16>, vector<54x28xbf16> -> vector<54x84xbf16>
    %c0_1 = arith.constant 0 : index
    %c0_2 = arith.constant 0 : index
    %5 = vector.load %arg3[%c0_1, %c0_2] : memref<84x416xbf16, #tpu.memory_space<vmem>>, vector<84x416xbf16>
    %cst = arith.constant dense<0.000000e+00> : vector<54x416xf32>
    %6 = tpu.matmul %4, %5, %cst {dimension_numbers = #tpu.dot_dimension_numbers<[1], [0], [0], [1], [0, 0, 1, 1], [], []>} : vector<54x84xbf16>, vector<84x416xbf16>, vector<54x416xf32> -> vector<54x416xf32>
    %c0_i32 = arith.constant 0 : i32
    %7 = arith.cmpi eq, %arg0, %c0_i32 : i32
    %c0_i32_3 = arith.constant 0 : i32
    %8 = arith.cmpi eq, %arg1, %c0_i32_3 : i32
    %9 = arith.andi %7, %8 : i1
    %10 = arith.extui %9 : i1 to i32
    %c0_i32_4 = arith.constant 0 : i32
    %11 = arith.cmpi ne, %10, %c0_i32_4 : i32
    scf.if %11 {
      %cst_11 = arith.constant 0.000000e+00 : f32
      %23 = vector.broadcast %cst_11 : f32 to vector<1x416xf32>
      %c0_12 = arith.constant 0 : index
      %c0_13 = arith.constant 0 : index
      %24 = vector.load %arg14[%c0_12, %c0_13] : memref<1x416xf32, #tpu.memory_space<vmem>>, vector<1x416xf32>
      tpu.vector_store %arg14[%c0_12, %c0_13], %23 {strides = array<i32>} : memref<1x416xf32, #tpu.memory_space<vmem>>, vector<1x416xf32>,
      %cst_14 = arith.constant 0.000000e+00 : f32
      %25 = vector.broadcast %cst_14 : f32 to vector<1x416xf32>
      %c0_15 = arith.constant 0 : index
      %c0_16 = arith.constant 0 : index
      %26 = vector.load %arg15[%c0_15, %c0_16] : memref<1x416xf32, #tpu.memory_space<vmem>>, vector<1x416xf32>
      tpu.vector_store %arg15[%c0_15, %c0_16], %25 {strides = array<i32>} : memref<1x416xf32, #tpu.memory_space<vmem>>, vector<1x416xf32>,
    } else {
    }
    %c0_i32_5 = arith.constant 0 : i32
    %12 = arith.cmpi eq, %arg0, %c0_i32_5 : i32
    %13 = arith.extui %12 : i1 to i32
    %c0_i32_6 = arith.constant 0 : i32
    %14 = arith.cmpi ne, %13, %c0_i32_6 : i32
    scf.if %14 {
      %c0_11 = arith.constant 0 : index
      %c0_12 = arith.constant 0 : index
      %23 = vector.load %arg8[%c0_11, %c0_12] : memref<54x1xf32, #tpu.memory_space<vmem>>, vector<54x1xf32>
      %24 = vector.broadcast %23 : vector<54x1xf32> to vector<54x416xf32>
      %25 = arith.mulf %6, %24 : vector<54x416xf32>
      %c0_13 = arith.constant 0 : index
      %c0_14 = arith.constant 0 : index
      %26 = vector.load %arg14[%c0_13, %c0_14] : memref<1x416xf32, #tpu.memory_space<vmem>>, vector<1x416xf32>
      %cst_15 = arith.constant dense<0.000000e+00> : vector<416xf32>
      %27 = vector.multi_reduction <add>, %25, %cst_15 [0] : vector<54x416xf32> to vector<416xf32>
      %28 = vector.shape_cast %27 : vector<416xf32> to vector<1x416xf32>
      %29 = arith.addf %26, %28 : vector<1x416xf32>
      %c0_16 = arith.constant 0 : index
      %c0_17 = arith.constant 0 : index
      %30 = vector.load %arg14[%c0_16, %c0_17] : memref<1x416xf32, #tpu.memory_space<vmem>>, vector<1x416xf32>
      tpu.vector_store %arg14[%c0_16, %c0_17], %29 {strides = array<i32>} : memref<1x416xf32, #tpu.memory_space<vmem>>, vector<1x416xf32>,
      %c0_18 = arith.constant 0 : index
      %c0_19 = arith.constant 0 : index
      %31 = vector.load %arg15[%c0_18, %c0_19] : memref<1x416xf32, #tpu.memory_space<vmem>>, vector<1x416xf32>
      %32 = arith.mulf %25, %6 : vector<54x416xf32>
      %cst_20 = arith.constant dense<0.000000e+00> : vector<416xf32>
      %33 = vector.multi_reduction <add>, %32, %cst_20 [0] : vector<54x416xf32> to vector<416xf32>
      %34 = vector.shape_cast %33 : vector<416xf32> to vector<1x416xf32>
      %35 = arith.addf %31, %34 : vector<1x416xf32>
      %c0_21 = arith.constant 0 : index
      %c0_22 = arith.constant 0 : index
      %36 = vector.load %arg15[%c0_21, %c0_22] : memref<1x416xf32, #tpu.memory_space<vmem>>, vector<1x416xf32>
      tpu.vector_store %arg15[%c0_21, %c0_22], %35 {strides = array<i32>} : memref<1x416xf32, #tpu.memory_space<vmem>>, vector<1x416xf32>,
    } else {
    }
    %c1_i32 = arith.constant 1 : i32
    %15 = arith.cmpi eq, %arg0, %c1_i32 : i32
    %c0_i32_7 = arith.constant 0 : i32
    %16 = arith.cmpi eq, %arg1, %c0_i32_7 : i32
    %17 = arith.andi %15, %16 : i1
    %18 = arith.extui %17 : i1 to i32
    %c0_i32_8 = arith.constant 0 : i32
    %19 = arith.cmpi ne, %18, %c0_i32_8 : i32
    scf.if %19 {
      %c0_11 = arith.constant 0 : index
      %c0_12 = arith.constant 0 : index
      %23 = vector.load %arg14[%c0_11, %c0_12] : memref<1x416xf32, #tpu.memory_space<vmem>>, vector<1x416xf32>
      %c0_13 = arith.constant 0 : index
      %c0_14 = arith.constant 0 : index
      %24 = vector.load %arg4[%c0_13, %c0_14] : memref<416x16xf32, #tpu.memory_space<vmem>>, vector<416x16xf32>
      %cst_15 = arith.constant dense<0.000000e+00> : vector<1x16xf32>
      %25 = tpu.matmul %23, %24, %cst_15 {dimension_numbers = #tpu.dot_dimension_numbers<[1], [0], [0], [1], [0, 0, 1, 1], [], []>} : vector<1x416xf32>, vector<416x16xf32>, vector<1x16xf32> -> vector<1x16xf32>
      %c0_16 = arith.constant 0 : index
      %c0_17 = arith.constant 0 : index
      %26 = vector.load %arg15[%c0_16, %c0_17] : memref<1x416xf32, #tpu.memory_space<vmem>>, vector<1x416xf32>
      %c0_18 = arith.constant 0 : index
      %c0_19 = arith.constant 0 : index
      %27 = vector.load %arg4[%c0_18, %c0_19] : memref<416x16xf32, #tpu.memory_space<vmem>>, vector<416x16xf32>
      %cst_20 = arith.constant dense<0.000000e+00> : vector<1x16xf32>
      %28 = tpu.matmul %26, %27, %cst_20 {dimension_numbers = #tpu.dot_dimension_numbers<[1], [0], [0], [1], [0, 0, 1, 1], [], []>} : vector<1x416xf32>, vector<416x16xf32>, vector<1x16xf32> -> vector<1x16xf32>
      %cst_21 = arith.constant 7.396450e-04 : f32
      %29 = vector.broadcast %cst_21 : f32 to vector<1x16xf32>
      %30 = arith.mulf %25, %29 : vector<1x16xf32>
      %cst_22 = arith.constant 7.396450e-04 : f32
      %31 = vector.broadcast %cst_22 : f32 to vector<1x16xf32>
      %32 = arith.mulf %28, %31 : vector<1x16xf32>
      %33 = arith.mulf %30, %30 : vector<1x16xf32>
      %34 = arith.subf %32, %33 : vector<1x16xf32>
      %c0_23 = arith.constant 0 : index
      %c0_24 = arith.constant 0 : index
      %35 = vector.load %arg6[%c0_23, %c0_24] : memref<1x16xf32, #tpu.memory_space<vmem>>, vector<1x16xf32>
      %cst_25 = arith.constant 9.99999974E-6 : f32
      %36 = vector.broadcast %cst_25 : f32 to vector<1x16xf32>
      %37 = arith.addf %34, %36 : vector<1x16xf32>
      %38 = math.rsqrt %37 : vector<1x16xf32>
      %39 = arith.mulf %35, %38 : vector<1x16xf32>
      %c0_26 = arith.constant 0 : index
      %c0_27 = arith.constant 0 : index
      %40 = vector.load %arg7[%c0_26, %c0_27] : memref<1x16xf32, #tpu.memory_space<vmem>>, vector<1x16xf32>
      %41 = arith.mulf %30, %39 : vector<1x16xf32>
      %42 = arith.subf %40, %41 : vector<1x16xf32>
      %c0_28 = arith.constant 0 : index
      %c0_29 = arith.constant 0 : index
      %43 = vector.load %arg5[%c0_28, %c0_29] : memref<16x416xf32, #tpu.memory_space<vmem>>, vector<16x416xf32>
      %cst_30 = arith.constant dense<0.000000e+00> : vector<1x416xf32>
      %44 = tpu.matmul %39, %43, %cst_30 {dimension_numbers = #tpu.dot_dimension_numbers<[1], [0], [0], [1], [0, 0, 1, 1], [], []>} : vector<1x16xf32>, vector<16x416xf32>, vector<1x416xf32> -> vector<1x416xf32>
      %c0_31 = arith.constant 0 : index
      %c0_32 = arith.constant 0 : index
      %45 = vector.load %arg14[%c0_31, %c0_32] : memref<1x416xf32, #tpu.memory_space<vmem>>, vector<1x416xf32>
      tpu.vector_store %arg14[%c0_31, %c0_32], %44 {strides = array<i32>} : memref<1x416xf32, #tpu.memory_space<vmem>>, vector<1x416xf32>,
      %c0_33 = arith.constant 0 : index
      %c0_34 = arith.constant 0 : index
      %46 = vector.load %arg5[%c0_33, %c0_34] : memref<16x416xf32, #tpu.memory_space<vmem>>, vector<16x416xf32>
      %cst_35 = arith.constant dense<0.000000e+00> : vector<1x416xf32>
      %47 = tpu.matmul %42, %46, %cst_35 {dimension_numbers = #tpu.dot_dimension_numbers<[1], [0], [0], [1], [0, 0, 1, 1], [], []>} : vector<1x16xf32>, vector<16x416xf32>, vector<1x416xf32> -> vector<1x416xf32>
      %c0_36 = arith.constant 0 : index
      %c0_37 = arith.constant 0 : index
      %48 = vector.load %arg15[%c0_36, %c0_37] : memref<1x416xf32, #tpu.memory_space<vmem>>, vector<1x416xf32>
      tpu.vector_store %arg15[%c0_36, %c0_37], %47 {strides = array<i32>} : memref<1x416xf32, #tpu.memory_space<vmem>>, vector<1x416xf32>,
    } else {
    }
    %c1_i32_9 = arith.constant 1 : i32
    %20 = arith.cmpi eq, %arg0, %c1_i32_9 : i32
    %21 = arith.extui %20 : i1 to i32
    %c0_i32_10 = arith.constant 0 : i32
    %22 = arith.cmpi ne, %21, %c0_i32_10 : i32
    scf.if %22 {
      %c0_11 = arith.constant 0 : index
      %c0_12 = arith.constant 0 : index
      %23 = vector.load %arg14[%c0_11, %c0_12] : memref<1x416xf32, #tpu.memory_space<vmem>>, vector<1x416xf32>
      %24 = vector.broadcast %23 : vector<1x416xf32> to vector<54x416xf32>
      %25 = arith.mulf %6, %24 : vector<54x416xf32>
      %c0_13 = arith.constant 0 : index
      %c0_14 = arith.constant 0 : index
      %26 = vector.load %arg15[%c0_13, %c0_14] : memref<1x416xf32, #tpu.memory_space<vmem>>, vector<1x416xf32>
      %27 = vector.broadcast %26 : vector<1x416xf32> to vector<54x416xf32>
      %28 = arith.addf %25, %27 : vector<54x416xf32>
      %cst_15 = arith.constant 0.000000e+00 : f32
      %29 = vector.broadcast %cst_15 : f32 to vector<54x416xf32>
      %30 = arith.cmpf ogt, %28, %29 : vector<54x416xf32>
      %cst_16 = arith.constant 0.00999999977 : f32
      %31 = vector.broadcast %cst_16 : f32 to vector<54x416xf32>
      %32 = arith.mulf %31, %28 : vector<54x416xf32>
      %33 = arith.select %30, %28, %32 : vector<54x416xi1>, vector<54x416xf32>
      %34 = arith.truncf %33 : vector<54x416xf32> to vector<54x416xbf16>
      %c0_17 = arith.constant 0 : index
      %c0_18 = arith.constant 0 : index
      %35 = vector.load %arg9[%c0_17, %c0_18] : memref<26x54xbf16, #tpu.memory_space<vmem>>, vector<26x54xbf16>
      %cst_19 = arith.constant dense<0.000000e+00> : vector<26x416xf32>
      %36 = tpu.matmul %35, %34, %cst_19 {dimension_numbers = #tpu.dot_dimension_numbers<[1], [0], [0], [1], [0, 0, 1, 1], [], []>} : vector<26x54xbf16>, vector<54x416xbf16>, vector<26x416xf32> -> vector<26x416xf32>
      %c0_20 = arith.constant 0 : index
      %c0_21 = arith.constant 0 : index
      %37 = vector.load %arg10[%c0_20, %c0_21] : memref<26x54xbf16, #tpu.memory_space<vmem>>, vector<26x54xbf16>
      %cst_22 = arith.constant dense<0.000000e+00> : vector<26x416xf32>
      %38 = tpu.matmul %37, %34, %cst_22 {dimension_numbers = #tpu.dot_dimension_numbers<[1], [0], [0], [1], [0, 0, 1, 1], [], []>} : vector<26x54xbf16>, vector<54x416xbf16>, vector<26x416xf32> -> vector<26x416xf32>
      %39 = arith.maximumf %36, %38 : vector<26x416xf32>
      %40 = arith.truncf %39 : vector<26x416xf32> to vector<26x416xbf16>
      %c0_23 = arith.constant 0 : index
      %c0_24 = arith.constant 0 : index
      %41 = vector.load %arg11[%c0_23, %c0_24] : memref<416x208xbf16, #tpu.memory_space<vmem>>, vector<416x208xbf16>
      %cst_25 = arith.constant dense<0.000000e+00> : vector<26x208xf32>
      %42 = tpu.matmul %40, %41, %cst_25 {dimension_numbers = #tpu.dot_dimension_numbers<[1], [0], [0], [1], [0, 0, 1, 1], [], []>} : vector<26x416xbf16>, vector<416x208xbf16>, vector<26x208xf32> -> vector<26x208xf32>
      %c0_26 = arith.constant 0 : index
      %c0_27 = arith.constant 0 : index
      %43 = vector.load %arg12[%c0_26, %c0_27] : memref<416x208xbf16, #tpu.memory_space<vmem>>, vector<416x208xbf16>
      %cst_28 = arith.constant dense<0.000000e+00> : vector<26x208xf32>
      %44 = tpu.matmul %40, %43, %cst_28 {dimension_numbers = #tpu.dot_dimension_numbers<[1], [0], [0], [1], [0, 0, 1, 1], [], []>} : vector<26x416xbf16>, vector<416x208xbf16>, vector<26x208xf32> -> vector<26x208xf32>
      %45 = arith.maximumf %42, %44 : vector<26x208xf32>
      %46 = arith.truncf %45 : vector<26x208xf32> to vector<26x208xbf16>
      %c0_29 = arith.constant 0 : index
      %c0_30 = arith.constant 0 : index
      %47 = vector.load %arg13[%c0_29, %c0_30] : memref<26x208xbf16, #tpu.memory_space<vmem>>, vector<26x208xbf16>
      tpu.vector_store %arg13[%c0_29, %c0_30], %46 {strides = array<i32>} : memref<26x208xbf16, #tpu.memory_space<vmem>>, vector<26x208xbf16>,
    } else {
    }
    return
  }
  func.func @transform_0(%arg0: i32, %arg1: i32) -> (i32, i32) {
    %c0_i32 = arith.constant 0 : i32
    %c0_i32_0 = arith.constant 0 : i32
    return %arg1, %c0_i32 : i32, i32
  }
  func.func @transform_1(%arg0: i32, %arg1: i32) -> (i32, i32) {
    %c0_i32 = arith.constant 0 : i32
    %c0_i32_0 = arith.constant 0 : i32
    %c0_i32_1 = arith.constant 0 : i32
    return %c0_i32, %c0_i32_0 : i32, i32
  }
  func.func @transform_2(%arg0: i32, %arg1: i32) -> (i32, i32) {
    %c0_i32 = arith.constant 0 : i32
    %c0_i32_0 = arith.constant 0 : i32
    %c0_i32_1 = arith.constant 0 : i32
    return %c0_i32, %c0_i32_0 : i32, i32
  }
  func.func @transform_3(%arg0: i32, %arg1: i32) -> (i32, i32) {
    %c0_i32 = arith.constant 0 : i32
    %c0_i32_0 = arith.constant 0 : i32
    %c0_i32_1 = arith.constant 0 : i32
    return %c0_i32, %c0_i32_0 : i32, i32
  }
  func.func @transform_4(%arg0: i32, %arg1: i32) -> (i32, i32) {
    %c0_i32 = arith.constant 0 : i32
    %c0_i32_0 = arith.constant 0 : i32
    %c0_i32_1 = arith.constant 0 : i32
    return %c0_i32, %c0_i32_0 : i32, i32
  }
  func.func @transform_5(%arg0: i32, %arg1: i32) -> (i32, i32) {
    %c0_i32 = arith.constant 0 : i32
    %c0_i32_0 = arith.constant 0 : i32
    %c0_i32_1 = arith.constant 0 : i32
    return %c0_i32, %c0_i32_0 : i32, i32
  }
  func.func @transform_6(%arg0: i32, %arg1: i32) -> (i32, i32) {
    %c0_i32 = arith.constant 0 : i32
    %c0_i32_0 = arith.constant 0 : i32
    %c0_i32_1 = arith.constant 0 : i32
    return %c0_i32, %c0_i32_0 : i32, i32
  }
  func.func @transform_7(%arg0: i32, %arg1: i32) -> (i32, i32) {
    %c0_i32 = arith.constant 0 : i32
    %c0_i32_0 = arith.constant 0 : i32
    %c0_i32_1 = arith.constant 0 : i32
    return %c0_i32, %c0_i32_0 : i32, i32
  }
  func.func @transform_8(%arg0: i32, %arg1: i32) -> (i32, i32) {
    %c0_i32 = arith.constant 0 : i32
    %c0_i32_0 = arith.constant 0 : i32
    %c0_i32_1 = arith.constant 0 : i32
    return %c0_i32, %c0_i32_0 : i32, i32
  }
  func.func @transform_9(%arg0: i32, %arg1: i32) -> (i32, i32) {
    %c0_i32 = arith.constant 0 : i32
    %c0_i32_0 = arith.constant 0 : i32
    %c0_i32_1 = arith.constant 0 : i32
    return %c0_i32, %c0_i32_0 : i32, i32
  }
  func.func @transform_10(%arg0: i32, %arg1: i32) -> (i32, i32) {
    %c0_i32 = arith.constant 0 : i32
    %c0_i32_0 = arith.constant 0 : i32
    %c0_i32_1 = arith.constant 0 : i32
    return %c0_i32, %c0_i32_0 : i32, i32
  }
  func.func @transform_11(%arg0: i32, %arg1: i32) -> (i32, i32) {
    %0 = arith.muli %arg0, %arg1 : i32
    %c0_i32 = arith.constant 0 : i32
    %c0_i32_0 = arith.constant 0 : i32
    return %0, %c0_i32 : i32, i32
  }
}

module attributes {stable_mosaic.version = 11 : i64} {
  func.func @_conv_bn_lrelu_pool_kernel(%arg0: i32, %arg1: i32, %arg2: memref<26x208xbf16, #tpu.memory_space<vmem>>, %arg3: memref<624x176xbf16, #tpu.memory_space<vmem>>, %arg4: memref<176x16xf32, #tpu.memory_space<vmem>>, %arg5: memref<16x176xf32, #tpu.memory_space<vmem>>, %arg6: memref<1x16xf32, #tpu.memory_space<vmem>>, %arg7: memref<1x16xf32, #tpu.memory_space<vmem>>, %arg8: memref<24x1xf32, #tpu.memory_space<vmem>>, %arg9: memref<10x24xbf16, #tpu.memory_space<vmem>>, %arg10: memref<10x24xbf16, #tpu.memory_space<vmem>>, %arg11: memref<176x80xbf16, #tpu.memory_space<vmem>>, %arg12: memref<176x80xbf16, #tpu.memory_space<vmem>>, %arg13: memref<10x80xbf16, #tpu.memory_space<vmem>>, %arg14: memref<1x176xf32, #tpu.memory_space<vmem>>, %arg15: memref<1x176xf32, #tpu.memory_space<vmem>>) attributes {dimension_semantics = [#tpu.dimension_semantics<arbitrary>, #tpu.dimension_semantics<arbitrary>], iteration_bounds = array<i64: 2, 1>, scalar_prefetch = 0 : i64, scratch_operands = 2 : i64, tpu.core_type = #tpu.core_type<tc>, window_params = [{transform_indices = @transform_0, window_bounds = array<i64: 26, 208>}, {pipeline_mode = #tpu.pipeline_mode<synchronous>, transform_indices = @transform_1, window_bounds = array<i64: 624, 176>}, {pipeline_mode = #tpu.pipeline_mode<synchronous>, transform_indices = @transform_2, window_bounds = array<i64: 176, 16>}, {pipeline_mode = #tpu.pipeline_mode<synchronous>, transform_indices = @transform_3, window_bounds = array<i64: 16, 176>}, {pipeline_mode = #tpu.pipeline_mode<synchronous>, transform_indices = @transform_4, window_bounds = array<i64: 1, 16>}, {pipeline_mode = #tpu.pipeline_mode<synchronous>, transform_indices = @transform_5, window_bounds = array<i64: 1, 16>}, {pipeline_mode = #tpu.pipeline_mode<synchronous>, transform_indices = @transform_6, window_bounds = array<i64: 24, 1>}, {pipeline_mode = #tpu.pipeline_mode<synchronous>, transform_indices = @transform_7, window_bounds = array<i64: 10, 24>}, {pipeline_mode = #tpu.pipeline_mode<synchronous>, transform_indices = @transform_8, window_bounds = array<i64: 10, 24>}, {pipeline_mode = #tpu.pipeline_mode<synchronous>, transform_indices = @transform_9, window_bounds = array<i64: 176, 80>}, {pipeline_mode = #tpu.pipeline_mode<synchronous>, transform_indices = @transform_10, window_bounds = array<i64: 176, 80>}, {transform_indices = @transform_11, window_bounds = array<i64: 10, 80>}]} {
    %c0 = arith.constant 0 : index
    %c0_0 = arith.constant 0 : index
    %0 = vector.load %arg2[%c0, %c0_0] : memref<26x208xbf16, #tpu.memory_space<vmem>>, vector<26x208xbf16>
    %1 = vector.extract_strided_slice %0 {offsets = [0, 0], sizes = [24, 208], strides = [1, 1]} : vector<26x208xbf16> to vector<24x208xbf16>
    %2 = vector.extract_strided_slice %0 {offsets = [1, 0], sizes = [24, 208], strides = [1, 1]} : vector<26x208xbf16> to vector<24x208xbf16>
    %3 = vector.extract_strided_slice %0 {offsets = [2, 0], sizes = [24, 208], strides = [1, 1]} : vector<26x208xbf16> to vector<24x208xbf16>
    %4 = tpu.concatenate %1, %2, %3 in 1 : vector<24x208xbf16>, vector<24x208xbf16>, vector<24x208xbf16> -> vector<24x624xbf16>
    %c0_1 = arith.constant 0 : index
    %c0_2 = arith.constant 0 : index
    %5 = vector.load %arg3[%c0_1, %c0_2] : memref<624x176xbf16, #tpu.memory_space<vmem>>, vector<624x176xbf16>
    %cst = arith.constant dense<0.000000e+00> : vector<24x176xf32>
    %6 = tpu.matmul %4, %5, %cst {dimension_numbers = #tpu.dot_dimension_numbers<[1], [0], [0], [1], [0, 0, 1, 1], [], []>} : vector<24x624xbf16>, vector<624x176xbf16>, vector<24x176xf32> -> vector<24x176xf32>
    %c0_i32 = arith.constant 0 : i32
    %7 = arith.cmpi eq, %arg0, %c0_i32 : i32
    %c0_i32_3 = arith.constant 0 : i32
    %8 = arith.cmpi eq, %arg1, %c0_i32_3 : i32
    %9 = arith.andi %7, %8 : i1
    %10 = arith.extui %9 : i1 to i32
    %c0_i32_4 = arith.constant 0 : i32
    %11 = arith.cmpi ne, %10, %c0_i32_4 : i32
    scf.if %11 {
      %cst_11 = arith.constant 0.000000e+00 : f32
      %23 = vector.broadcast %cst_11 : f32 to vector<1x176xf32>
      %c0_12 = arith.constant 0 : index
      %c0_13 = arith.constant 0 : index
      %24 = vector.load %arg14[%c0_12, %c0_13] : memref<1x176xf32, #tpu.memory_space<vmem>>, vector<1x176xf32>
      tpu.vector_store %arg14[%c0_12, %c0_13], %23 {strides = array<i32>} : memref<1x176xf32, #tpu.memory_space<vmem>>, vector<1x176xf32>,
      %cst_14 = arith.constant 0.000000e+00 : f32
      %25 = vector.broadcast %cst_14 : f32 to vector<1x176xf32>
      %c0_15 = arith.constant 0 : index
      %c0_16 = arith.constant 0 : index
      %26 = vector.load %arg15[%c0_15, %c0_16] : memref<1x176xf32, #tpu.memory_space<vmem>>, vector<1x176xf32>
      tpu.vector_store %arg15[%c0_15, %c0_16], %25 {strides = array<i32>} : memref<1x176xf32, #tpu.memory_space<vmem>>, vector<1x176xf32>,
    } else {
    }
    %c0_i32_5 = arith.constant 0 : i32
    %12 = arith.cmpi eq, %arg0, %c0_i32_5 : i32
    %13 = arith.extui %12 : i1 to i32
    %c0_i32_6 = arith.constant 0 : i32
    %14 = arith.cmpi ne, %13, %c0_i32_6 : i32
    scf.if %14 {
      %c0_11 = arith.constant 0 : index
      %c0_12 = arith.constant 0 : index
      %23 = vector.load %arg8[%c0_11, %c0_12] : memref<24x1xf32, #tpu.memory_space<vmem>>, vector<24x1xf32>
      %24 = vector.broadcast %23 : vector<24x1xf32> to vector<24x176xf32>
      %25 = arith.mulf %6, %24 : vector<24x176xf32>
      %c0_13 = arith.constant 0 : index
      %c0_14 = arith.constant 0 : index
      %26 = vector.load %arg14[%c0_13, %c0_14] : memref<1x176xf32, #tpu.memory_space<vmem>>, vector<1x176xf32>
      %cst_15 = arith.constant dense<0.000000e+00> : vector<176xf32>
      %27 = vector.multi_reduction <add>, %25, %cst_15 [0] : vector<24x176xf32> to vector<176xf32>
      %28 = vector.shape_cast %27 : vector<176xf32> to vector<1x176xf32>
      %29 = arith.addf %26, %28 : vector<1x176xf32>
      %c0_16 = arith.constant 0 : index
      %c0_17 = arith.constant 0 : index
      %30 = vector.load %arg14[%c0_16, %c0_17] : memref<1x176xf32, #tpu.memory_space<vmem>>, vector<1x176xf32>
      tpu.vector_store %arg14[%c0_16, %c0_17], %29 {strides = array<i32>} : memref<1x176xf32, #tpu.memory_space<vmem>>, vector<1x176xf32>,
      %c0_18 = arith.constant 0 : index
      %c0_19 = arith.constant 0 : index
      %31 = vector.load %arg15[%c0_18, %c0_19] : memref<1x176xf32, #tpu.memory_space<vmem>>, vector<1x176xf32>
      %32 = arith.mulf %25, %6 : vector<24x176xf32>
      %cst_20 = arith.constant dense<0.000000e+00> : vector<176xf32>
      %33 = vector.multi_reduction <add>, %32, %cst_20 [0] : vector<24x176xf32> to vector<176xf32>
      %34 = vector.shape_cast %33 : vector<176xf32> to vector<1x176xf32>
      %35 = arith.addf %31, %34 : vector<1x176xf32>
      %c0_21 = arith.constant 0 : index
      %c0_22 = arith.constant 0 : index
      %36 = vector.load %arg15[%c0_21, %c0_22] : memref<1x176xf32, #tpu.memory_space<vmem>>, vector<1x176xf32>
      tpu.vector_store %arg15[%c0_21, %c0_22], %35 {strides = array<i32>} : memref<1x176xf32, #tpu.memory_space<vmem>>, vector<1x176xf32>,
    } else {
    }
    %c1_i32 = arith.constant 1 : i32
    %15 = arith.cmpi eq, %arg0, %c1_i32 : i32
    %c0_i32_7 = arith.constant 0 : i32
    %16 = arith.cmpi eq, %arg1, %c0_i32_7 : i32
    %17 = arith.andi %15, %16 : i1
    %18 = arith.extui %17 : i1 to i32
    %c0_i32_8 = arith.constant 0 : i32
    %19 = arith.cmpi ne, %18, %c0_i32_8 : i32
    scf.if %19 {
      %c0_11 = arith.constant 0 : index
      %c0_12 = arith.constant 0 : index
      %23 = vector.load %arg14[%c0_11, %c0_12] : memref<1x176xf32, #tpu.memory_space<vmem>>, vector<1x176xf32>
      %c0_13 = arith.constant 0 : index
      %c0_14 = arith.constant 0 : index
      %24 = vector.load %arg4[%c0_13, %c0_14] : memref<176x16xf32, #tpu.memory_space<vmem>>, vector<176x16xf32>
      %cst_15 = arith.constant dense<0.000000e+00> : vector<1x16xf32>
      %25 = tpu.matmul %23, %24, %cst_15 {dimension_numbers = #tpu.dot_dimension_numbers<[1], [0], [0], [1], [0, 0, 1, 1], [], []>} : vector<1x176xf32>, vector<176x16xf32>, vector<1x16xf32> -> vector<1x16xf32>
      %c0_16 = arith.constant 0 : index
      %c0_17 = arith.constant 0 : index
      %26 = vector.load %arg15[%c0_16, %c0_17] : memref<1x176xf32, #tpu.memory_space<vmem>>, vector<1x176xf32>
      %c0_18 = arith.constant 0 : index
      %c0_19 = arith.constant 0 : index
      %27 = vector.load %arg4[%c0_18, %c0_19] : memref<176x16xf32, #tpu.memory_space<vmem>>, vector<176x16xf32>
      %cst_20 = arith.constant dense<0.000000e+00> : vector<1x16xf32>
      %28 = tpu.matmul %26, %27, %cst_20 {dimension_numbers = #tpu.dot_dimension_numbers<[1], [0], [0], [1], [0, 0, 1, 1], [], []>} : vector<1x176xf32>, vector<176x16xf32>, vector<1x16xf32> -> vector<1x16xf32>
      %cst_21 = arith.constant 0.00413223123 : f32
      %29 = vector.broadcast %cst_21 : f32 to vector<1x16xf32>
      %30 = arith.mulf %25, %29 : vector<1x16xf32>
      %cst_22 = arith.constant 0.00413223123 : f32
      %31 = vector.broadcast %cst_22 : f32 to vector<1x16xf32>
      %32 = arith.mulf %28, %31 : vector<1x16xf32>
      %33 = arith.mulf %30, %30 : vector<1x16xf32>
      %34 = arith.subf %32, %33 : vector<1x16xf32>
      %c0_23 = arith.constant 0 : index
      %c0_24 = arith.constant 0 : index
      %35 = vector.load %arg6[%c0_23, %c0_24] : memref<1x16xf32, #tpu.memory_space<vmem>>, vector<1x16xf32>
      %cst_25 = arith.constant 9.99999974E-6 : f32
      %36 = vector.broadcast %cst_25 : f32 to vector<1x16xf32>
      %37 = arith.addf %34, %36 : vector<1x16xf32>
      %38 = math.rsqrt %37 : vector<1x16xf32>
      %39 = arith.mulf %35, %38 : vector<1x16xf32>
      %c0_26 = arith.constant 0 : index
      %c0_27 = arith.constant 0 : index
      %40 = vector.load %arg7[%c0_26, %c0_27] : memref<1x16xf32, #tpu.memory_space<vmem>>, vector<1x16xf32>
      %41 = arith.mulf %30, %39 : vector<1x16xf32>
      %42 = arith.subf %40, %41 : vector<1x16xf32>
      %c0_28 = arith.constant 0 : index
      %c0_29 = arith.constant 0 : index
      %43 = vector.load %arg5[%c0_28, %c0_29] : memref<16x176xf32, #tpu.memory_space<vmem>>, vector<16x176xf32>
      %cst_30 = arith.constant dense<0.000000e+00> : vector<1x176xf32>
      %44 = tpu.matmul %39, %43, %cst_30 {dimension_numbers = #tpu.dot_dimension_numbers<[1], [0], [0], [1], [0, 0, 1, 1], [], []>} : vector<1x16xf32>, vector<16x176xf32>, vector<1x176xf32> -> vector<1x176xf32>
      %c0_31 = arith.constant 0 : index
      %c0_32 = arith.constant 0 : index
      %45 = vector.load %arg14[%c0_31, %c0_32] : memref<1x176xf32, #tpu.memory_space<vmem>>, vector<1x176xf32>
      tpu.vector_store %arg14[%c0_31, %c0_32], %44 {strides = array<i32>} : memref<1x176xf32, #tpu.memory_space<vmem>>, vector<1x176xf32>,
      %c0_33 = arith.constant 0 : index
      %c0_34 = arith.constant 0 : index
      %46 = vector.load %arg5[%c0_33, %c0_34] : memref<16x176xf32, #tpu.memory_space<vmem>>, vector<16x176xf32>
      %cst_35 = arith.constant dense<0.000000e+00> : vector<1x176xf32>
      %47 = tpu.matmul %42, %46, %cst_35 {dimension_numbers = #tpu.dot_dimension_numbers<[1], [0], [0], [1], [0, 0, 1, 1], [], []>} : vector<1x16xf32>, vector<16x176xf32>, vector<1x176xf32> -> vector<1x176xf32>
      %c0_36 = arith.constant 0 : index
      %c0_37 = arith.constant 0 : index
      %48 = vector.load %arg15[%c0_36, %c0_37] : memref<1x176xf32, #tpu.memory_space<vmem>>, vector<1x176xf32>
      tpu.vector_store %arg15[%c0_36, %c0_37], %47 {strides = array<i32>} : memref<1x176xf32, #tpu.memory_space<vmem>>, vector<1x176xf32>,
    } else {
    }
    %c1_i32_9 = arith.constant 1 : i32
    %20 = arith.cmpi eq, %arg0, %c1_i32_9 : i32
    %21 = arith.extui %20 : i1 to i32
    %c0_i32_10 = arith.constant 0 : i32
    %22 = arith.cmpi ne, %21, %c0_i32_10 : i32
    scf.if %22 {
      %c0_11 = arith.constant 0 : index
      %c0_12 = arith.constant 0 : index
      %23 = vector.load %arg14[%c0_11, %c0_12] : memref<1x176xf32, #tpu.memory_space<vmem>>, vector<1x176xf32>
      %24 = vector.broadcast %23 : vector<1x176xf32> to vector<24x176xf32>
      %25 = arith.mulf %6, %24 : vector<24x176xf32>
      %c0_13 = arith.constant 0 : index
      %c0_14 = arith.constant 0 : index
      %26 = vector.load %arg15[%c0_13, %c0_14] : memref<1x176xf32, #tpu.memory_space<vmem>>, vector<1x176xf32>
      %27 = vector.broadcast %26 : vector<1x176xf32> to vector<24x176xf32>
      %28 = arith.addf %25, %27 : vector<24x176xf32>
      %cst_15 = arith.constant 0.000000e+00 : f32
      %29 = vector.broadcast %cst_15 : f32 to vector<24x176xf32>
      %30 = arith.cmpf ogt, %28, %29 : vector<24x176xf32>
      %cst_16 = arith.constant 0.00999999977 : f32
      %31 = vector.broadcast %cst_16 : f32 to vector<24x176xf32>
      %32 = arith.mulf %31, %28 : vector<24x176xf32>
      %33 = arith.select %30, %28, %32 : vector<24x176xi1>, vector<24x176xf32>
      %34 = arith.truncf %33 : vector<24x176xf32> to vector<24x176xbf16>
      %c0_17 = arith.constant 0 : index
      %c0_18 = arith.constant 0 : index
      %35 = vector.load %arg9[%c0_17, %c0_18] : memref<10x24xbf16, #tpu.memory_space<vmem>>, vector<10x24xbf16>
      %cst_19 = arith.constant dense<0.000000e+00> : vector<10x176xf32>
      %36 = tpu.matmul %35, %34, %cst_19 {dimension_numbers = #tpu.dot_dimension_numbers<[1], [0], [0], [1], [0, 0, 1, 1], [], []>} : vector<10x24xbf16>, vector<24x176xbf16>, vector<10x176xf32> -> vector<10x176xf32>
      %c0_20 = arith.constant 0 : index
      %c0_21 = arith.constant 0 : index
      %37 = vector.load %arg10[%c0_20, %c0_21] : memref<10x24xbf16, #tpu.memory_space<vmem>>, vector<10x24xbf16>
      %cst_22 = arith.constant dense<0.000000e+00> : vector<10x176xf32>
      %38 = tpu.matmul %37, %34, %cst_22 {dimension_numbers = #tpu.dot_dimension_numbers<[1], [0], [0], [1], [0, 0, 1, 1], [], []>} : vector<10x24xbf16>, vector<24x176xbf16>, vector<10x176xf32> -> vector<10x176xf32>
      %39 = arith.maximumf %36, %38 : vector<10x176xf32>
      %40 = arith.truncf %39 : vector<10x176xf32> to vector<10x176xbf16>
      %c0_23 = arith.constant 0 : index
      %c0_24 = arith.constant 0 : index
      %41 = vector.load %arg11[%c0_23, %c0_24] : memref<176x80xbf16, #tpu.memory_space<vmem>>, vector<176x80xbf16>
      %cst_25 = arith.constant dense<0.000000e+00> : vector<10x80xf32>
      %42 = tpu.matmul %40, %41, %cst_25 {dimension_numbers = #tpu.dot_dimension_numbers<[1], [0], [0], [1], [0, 0, 1, 1], [], []>} : vector<10x176xbf16>, vector<176x80xbf16>, vector<10x80xf32> -> vector<10x80xf32>
      %c0_26 = arith.constant 0 : index
      %c0_27 = arith.constant 0 : index
      %43 = vector.load %arg12[%c0_26, %c0_27] : memref<176x80xbf16, #tpu.memory_space<vmem>>, vector<176x80xbf16>
      %cst_28 = arith.constant dense<0.000000e+00> : vector<10x80xf32>
      %44 = tpu.matmul %40, %43, %cst_28 {dimension_numbers = #tpu.dot_dimension_numbers<[1], [0], [0], [1], [0, 0, 1, 1], [], []>} : vector<10x176xbf16>, vector<176x80xbf16>, vector<10x80xf32> -> vector<10x80xf32>
      %45 = arith.maximumf %42, %44 : vector<10x80xf32>
      %46 = arith.truncf %45 : vector<10x80xf32> to vector<10x80xbf16>
      %c0_29 = arith.constant 0 : index
      %c0_30 = arith.constant 0 : index
      %47 = vector.load %arg13[%c0_29, %c0_30] : memref<10x80xbf16, #tpu.memory_space<vmem>>, vector<10x80xbf16>
      tpu.vector_store %arg13[%c0_29, %c0_30], %46 {strides = array<i32>} : memref<10x80xbf16, #tpu.memory_space<vmem>>, vector<10x80xbf16>,
    } else {
    }
    return
  }
  func.func @transform_0(%arg0: i32, %arg1: i32) -> (i32, i32) {
    %c0_i32 = arith.constant 0 : i32
    %c0_i32_0 = arith.constant 0 : i32
    return %arg1, %c0_i32 : i32, i32
  }
  func.func @transform_1(%arg0: i32, %arg1: i32) -> (i32, i32) {
    %c0_i32 = arith.constant 0 : i32
    %c0_i32_0 = arith.constant 0 : i32
    %c0_i32_1 = arith.constant 0 : i32
    return %c0_i32, %c0_i32_0 : i32, i32
  }
  func.func @transform_2(%arg0: i32, %arg1: i32) -> (i32, i32) {
    %c0_i32 = arith.constant 0 : i32
    %c0_i32_0 = arith.constant 0 : i32
    %c0_i32_1 = arith.constant 0 : i32
    return %c0_i32, %c0_i32_0 : i32, i32
  }
  func.func @transform_3(%arg0: i32, %arg1: i32) -> (i32, i32) {
    %c0_i32 = arith.constant 0 : i32
    %c0_i32_0 = arith.constant 0 : i32
    %c0_i32_1 = arith.constant 0 : i32
    return %c0_i32, %c0_i32_0 : i32, i32
  }
  func.func @transform_4(%arg0: i32, %arg1: i32) -> (i32, i32) {
    %c0_i32 = arith.constant 0 : i32
    %c0_i32_0 = arith.constant 0 : i32
    %c0_i32_1 = arith.constant 0 : i32
    return %c0_i32, %c0_i32_0 : i32, i32
  }
  func.func @transform_5(%arg0: i32, %arg1: i32) -> (i32, i32) {
    %c0_i32 = arith.constant 0 : i32
    %c0_i32_0 = arith.constant 0 : i32
    %c0_i32_1 = arith.constant 0 : i32
    return %c0_i32, %c0_i32_0 : i32, i32
  }
  func.func @transform_6(%arg0: i32, %arg1: i32) -> (i32, i32) {
    %c0_i32 = arith.constant 0 : i32
    %c0_i32_0 = arith.constant 0 : i32
    %c0_i32_1 = arith.constant 0 : i32
    return %c0_i32, %c0_i32_0 : i32, i32
  }
  func.func @transform_7(%arg0: i32, %arg1: i32) -> (i32, i32) {
    %c0_i32 = arith.constant 0 : i32
    %c0_i32_0 = arith.constant 0 : i32
    %c0_i32_1 = arith.constant 0 : i32
    return %c0_i32, %c0_i32_0 : i32, i32
  }
  func.func @transform_8(%arg0: i32, %arg1: i32) -> (i32, i32) {
    %c0_i32 = arith.constant 0 : i32
    %c0_i32_0 = arith.constant 0 : i32
    %c0_i32_1 = arith.constant 0 : i32
    return %c0_i32, %c0_i32_0 : i32, i32
  }
  func.func @transform_9(%arg0: i32, %arg1: i32) -> (i32, i32) {
    %c0_i32 = arith.constant 0 : i32
    %c0_i32_0 = arith.constant 0 : i32
    %c0_i32_1 = arith.constant 0 : i32
    return %c0_i32, %c0_i32_0 : i32, i32
  }
  func.func @transform_10(%arg0: i32, %arg1: i32) -> (i32, i32) {
    %c0_i32 = arith.constant 0 : i32
    %c0_i32_0 = arith.constant 0 : i32
    %c0_i32_1 = arith.constant 0 : i32
    return %c0_i32, %c0_i32_0 : i32, i32
  }
  func.func @transform_11(%arg0: i32, %arg1: i32) -> (i32, i32) {
    %0 = arith.muli %arg0, %arg1 : i32
    %c0_i32 = arith.constant 0 : i32
    %c0_i32_0 = arith.constant 0 : i32
    return %0, %c0_i32 : i32, i32
  }
}

module attributes {stable_mosaic.version = 11 : i64} {
  func.func @_dense_kernel(%arg0: i32, %arg1: memref<8x400xbf16, #tpu.memory_space<vmem>>, %arg2: memref<400x120xbf16, #tpu.memory_space<vmem>>, %arg3: memref<1x120xf32, #tpu.memory_space<vmem>>, %arg4: memref<120x10xbf16, #tpu.memory_space<vmem>>, %arg5: memref<1x10xf32, #tpu.memory_space<vmem>>, %arg6: memref<8x10xf32, #tpu.memory_space<vmem>>) attributes {dimension_semantics = [#tpu.dimension_semantics<parallel>], iteration_bounds = array<i64: 1>, scalar_prefetch = 0 : i64, scratch_operands = 0 : i64, tpu.core_type = #tpu.core_type<tc>, window_params = [{transform_indices = @transform_0, window_bounds = array<i64: 8, 400>}, {pipeline_mode = #tpu.pipeline_mode<synchronous>, transform_indices = @transform_1, window_bounds = array<i64: 400, 120>}, {pipeline_mode = #tpu.pipeline_mode<synchronous>, transform_indices = @transform_2, window_bounds = array<i64: 1, 120>}, {pipeline_mode = #tpu.pipeline_mode<synchronous>, transform_indices = @transform_3, window_bounds = array<i64: 120, 10>}, {pipeline_mode = #tpu.pipeline_mode<synchronous>, transform_indices = @transform_4, window_bounds = array<i64: 1, 10>}, {transform_indices = @transform_5, window_bounds = array<i64: 8, 10>}]} {
    %c0 = arith.constant 0 : index
    %c0_0 = arith.constant 0 : index
    %0 = vector.load %arg1[%c0, %c0_0] : memref<8x400xbf16, #tpu.memory_space<vmem>>, vector<8x400xbf16>
    %c0_1 = arith.constant 0 : index
    %c0_2 = arith.constant 0 : index
    %1 = vector.load %arg2[%c0_1, %c0_2] : memref<400x120xbf16, #tpu.memory_space<vmem>>, vector<400x120xbf16>
    %cst = arith.constant dense<0.000000e+00> : vector<8x120xf32>
    %2 = tpu.matmul %0, %1, %cst {dimension_numbers = #tpu.dot_dimension_numbers<[1], [0], [0], [1], [0, 0, 1, 1], [], []>} : vector<8x400xbf16>, vector<400x120xbf16>, vector<8x120xf32> -> vector<8x120xf32>
    %c0_3 = arith.constant 0 : index
    %c0_4 = arith.constant 0 : index
    %3 = vector.load %arg3[%c0_3, %c0_4] : memref<1x120xf32, #tpu.memory_space<vmem>>, vector<1x120xf32>
    %4 = vector.broadcast %3 : vector<1x120xf32> to vector<8x120xf32>
    %5 = arith.addf %2, %4 : vector<8x120xf32>
    %cst_5 = arith.constant 0.000000e+00 : f32
    %6 = vector.broadcast %cst_5 : f32 to vector<8x120xf32>
    %7 = arith.cmpf ogt, %5, %6 : vector<8x120xf32>
    %cst_6 = arith.constant 0.00999999977 : f32
    %8 = vector.broadcast %cst_6 : f32 to vector<8x120xf32>
    %9 = arith.mulf %8, %5 : vector<8x120xf32>
    %10 = arith.select %7, %5, %9 : vector<8x120xi1>, vector<8x120xf32>
    %11 = arith.truncf %10 : vector<8x120xf32> to vector<8x120xbf16>
    %c0_7 = arith.constant 0 : index
    %c0_8 = arith.constant 0 : index
    %12 = vector.load %arg4[%c0_7, %c0_8] : memref<120x10xbf16, #tpu.memory_space<vmem>>, vector<120x10xbf16>
    %cst_9 = arith.constant dense<0.000000e+00> : vector<8x10xf32>
    %13 = tpu.matmul %11, %12, %cst_9 {dimension_numbers = #tpu.dot_dimension_numbers<[1], [0], [0], [1], [0, 0, 1, 1], [], []>} : vector<8x120xbf16>, vector<120x10xbf16>, vector<8x10xf32> -> vector<8x10xf32>
    %c0_10 = arith.constant 0 : index
    %c0_11 = arith.constant 0 : index
    %14 = vector.load %arg5[%c0_10, %c0_11] : memref<1x10xf32, #tpu.memory_space<vmem>>, vector<1x10xf32>
    %15 = vector.broadcast %14 : vector<1x10xf32> to vector<8x10xf32>
    %16 = arith.addf %13, %15 : vector<8x10xf32>
    %c0_12 = arith.constant 0 : index
    %c0_13 = arith.constant 0 : index
    %17 = vector.load %arg6[%c0_12, %c0_13] : memref<8x10xf32, #tpu.memory_space<vmem>>, vector<8x10xf32>
    tpu.vector_store %arg6[%c0_12, %c0_13], %16 {strides = array<i32>} : memref<8x10xf32, #tpu.memory_space<vmem>>, vector<8x10xf32>,
    return
  }
  func.func @transform_0(%arg0: i32) -> (i32, i32) {
    %c0_i32 = arith.constant 0 : i32
    %c0_i32_0 = arith.constant 0 : i32
    return %arg0, %c0_i32 : i32, i32
  }
  func.func @transform_1(%arg0: i32) -> (i32, i32) {
    %c0_i32 = arith.constant 0 : i32
    %c0_i32_0 = arith.constant 0 : i32
    %c0_i32_1 = arith.constant 0 : i32
    return %c0_i32, %c0_i32_0 : i32, i32
  }
  func.func @transform_2(%arg0: i32) -> (i32, i32) {
    %c0_i32 = arith.constant 0 : i32
    %c0_i32_0 = arith.constant 0 : i32
    %c0_i32_1 = arith.constant 0 : i32
    return %c0_i32, %c0_i32_0 : i32, i32
  }
  func.func @transform_3(%arg0: i32) -> (i32, i32) {
    %c0_i32 = arith.constant 0 : i32
    %c0_i32_0 = arith.constant 0 : i32
    %c0_i32_1 = arith.constant 0 : i32
    return %c0_i32, %c0_i32_0 : i32, i32
  }
  func.func @transform_4(%arg0: i32) -> (i32, i32) {
    %c0_i32 = arith.constant 0 : i32
    %c0_i32_0 = arith.constant 0 : i32
    %c0_i32_1 = arith.constant 0 : i32
    return %c0_i32, %c0_i32_0 : i32, i32
  }
  func.func @transform_5(%arg0: i32) -> (i32, i32) {
    %c0_i32 = arith.constant 0 : i32
    %c0_i32_0 = arith.constant 0 : i32
    return %arg0, %c0_i32 : i32, i32
  }
}

</mosaic_0001>

<llo_original>
// kernel: tile.14
$region0: #{tile.14}
  %s0 = inlined_call_operand.vmem [shape: f32[26,16,16], index: 0, kind: input, shape index: {}]
  %s1 = inlined_call_operand.vmem [shape: f32[416,16], index: 1, kind: output, shape index: {}]
  %v2 = vld [vmem:[%s0] ss:$8 sm:$0xf]
  %v3 = vld [vmem:[%s0] ss:$8 sm:$0xf0]
  %vm4 = vcmask 1047556
  %v5 = vsel %vm4, %v3, %v2
  %vm6 = vcmask 130048
  %7 = vst.msk [vmem:[%s1] ss:$8 sm:$0xf] %vm6, %v5
  %s8 = scalar_lea.vmem %s1, 4294967265
  %9 = vst.msk [vmem:[%s8] ss:$8 sm:$0xf0] %vm6, %v5
  %s10 = scalar_lea.vmem %s0, 64
  %v11 = vld [vmem:[%s10] ss:$8 sm:$0xf]
  %s12 = scalar_lea.vmem %s0, 64
  %v13 = vld [vmem:[%s12] ss:$8 sm:$0xf0]
  %vm14 = vcmask 1047556
  %v15 = vsel %vm14, %v13, %v11
  %vm16 = vcmask 130048
  %s17 = scalar_lea.vmem %s1, 2
  %18 = vst.msk [vmem:[%s17] ss:$8 sm:$0xf] %vm16, %v15
  %s19 = scalar_lea.vmem %s1, 4294967267
  %20 = vst.msk [vmem:[%s19] ss:$8 sm:$0xf0] %vm16, %v15
  %s21 = scalar_lea.vmem %s0, 128
  %v22 = vld [vmem:[%s21] ss:$8 sm:$0xf]
  %s23 = scalar_lea.vmem %s0, 128
  %v24 = vld [vmem:[%s23] ss:$8 sm:$0xf0]
  %vm25 = vcmask 1047556
  %v26 = vsel %vm25, %v24, %v22
  %vm27 = vcmask 130048
  %s28 = scalar_lea.vmem %s1, 4
  %29 = vst.msk [vmem:[%s28] ss:$8 sm:$0xf] %vm27, %v26
  %s30 = scalar_lea.vmem %s1, 4294967269
  %31 = vst.msk [vmem:[%s30] ss:$8 sm:$0xf0] %vm27, %v26
  %s32 = scalar_lea.vmem %s0, 192
  %v33 = vld [vmem:[%s32] ss:$8 sm:$0xf]
  %s34 = scalar_lea.vmem %s0, 192
  %v35 = vld [vmem:[%s34] ss:$8 sm:$0xf0]
  %vm36 = vcmask 1047556
  %v37 = vsel %vm36, %v35, %v33
  %vm38 = vcmask 130048
  %s39 = scalar_lea.vmem %s1, 6
  %40 = vst.msk [vmem:[%s39] ss:$8 sm:$0xf] %vm38, %v37
  %s41 = scalar_lea.vmem %s1, 4294967271
  %42 = vst.msk [vmem:[%s41] ss:$8 sm:$0xf0] %vm38, %v37
  %s43 = scalar_lea.vmem %s0, 256
  %v44 = vld [vmem:[%s43] ss:$8 sm:$0xf]
  %s45 = scalar_lea.vmem %s0, 256
  %v46 = vld [vmem:[%s45] ss:$8 sm:$0xf0]
  %vm47 = vcmask 1047556
  %v48 = vsel %vm47, %v46, %v44
  %vm49 = vcmask 130048
  %s50 = scalar_lea.vmem %s1, 32
  %51 = vst.msk [vmem:[%s50] ss:$8 sm:$0xf] %vm49, %v48
  %s52 = scalar_lea.vmem %s1, 1
  %53 = vst.msk [vmem:[%s52] ss:$8 sm:$0xf0] %vm49, %v48
  %s54 = scalar_lea.vmem %s0, 320
  %v55 = vld [vmem:[%s54] ss:$8 sm:$0xf]
  %s56 = scalar_lea.vmem %s0, 320
  %v57 = vld [vmem:[%s56] ss:$8 sm:$0xf0]
  %vm58 = vcmask 1047556
  %v59 = vsel %vm58, %v57, %v55
  %vm60 = vcmask 130048
  %s61 = scalar_lea.vmem %s1, 34
  %62 = vst.msk [vmem:[%s61] ss:$8 sm:$0xf] %vm60, %v59
  %s63 = scalar_lea.vmem %s1, 3
  %64 = vst.msk [vmem:[%s63] ss:$8 sm:$0xf0] %vm60, %v59
  %s65 = scalar_lea.vmem %s0, 384
  %v66 = vld [vmem:[%s65] ss:$8 sm:$0xf]
  %s67 = scalar_lea.vmem %s0, 384
  %v68 = vld [vmem:[%s67] ss:$8 sm:$0xf0]
  %vm69 = vcmask 1047556
  %v70 = vsel %vm69, %v68, %v66
  %vm71 = vcmask 130048
  %s72 = scalar_lea.vmem %s1, 36
  %73 = vst.msk [vmem:[%s72] ss:$8 sm:$0xf] %vm71, %v70
  %s74 = scalar_lea.vmem %s1, 5
  %75 = vst.msk [vmem:[%s74] ss:$8 sm:$0xf0] %vm71, %v70
  %s76 = scalar_lea.vmem %s0, 448
  %v77 = vld [vmem:[%s76] ss:$8 sm:$0xf]
  %s78 = scalar_lea.vmem %s0, 448
  %v79 = vld [vmem:[%s78] ss:$8 sm:$0xf0]
  %vm80 = vcmask 1047556
  %v81 = vsel %vm80, %v79, %v77
  %vm82 = vcmask 130048
  %s83 = scalar_lea.vmem %s1, 38
  %84 = vst.msk [vmem:[%s83] ss:$8 sm:$0xf] %vm82, %v81
  %s85 = scalar_lea.vmem %s1, 7
  %86 = vst.msk [vmem:[%s85] ss:$8 sm:$0xf0] %vm82, %v81
  %s87 = scalar_lea.vmem %s0, 7
  %v88 = vld [vmem:[%s87] sm:$0x1]
  %s89 = scalar_lea.vmem %s0, 38
  %v90 = vld [vmem:[%s89] sm:$0x2]
  %vm91 = vcmask 1041409
  %v92 = vsel %vm91, %v90, %v88
  %s93 = scalar_lea.vmem %s0, 69
  %v94 = vld [vmem:[%s93] sm:$0x4]
  %vm95 = vcmask 1042434
  %v96 = vsel %vm95, %v94, %v92
  %s97 = scalar_lea.vmem %s0, 100
  %v98 = vld [vmem:[%s97] sm:$0x8]
  %vm99 = vcmask 1043459
  %v100 = vsel %vm99, %v98, %v96
  %s101 = scalar_lea.vmem %s0, 131
  %v102 = vld [vmem:[%s101] sm:$0x10]
  %vm103 = vcmask 1044484
  %v104 = vsel %vm103, %v102, %v100
  %s105 = scalar_lea.vmem %s0, 162
  %v106 = vld [vmem:[%s105] sm:$0x20]
  %vm107 = vcmask 1045509
  %v108 = vsel %vm107, %v106, %v104
  %s109 = scalar_lea.vmem %s0, 193
  %v110 = vld [vmem:[%s109] sm:$0x40]
  %vm111 = vcmask 1046534
  %v112 = vsel %vm111, %v110, %v108
  %s113 = scalar_lea.vmem %s0, 224
  %v114 = vld [vmem:[%s113] sm:$0x80]
  %vm115 = vcmask 1047559
  %v116 = vsel %vm115, %v114, %v112
  %117 = vrot.lane.b32.xlu0 %v116, 112
  %v118 = vpop.permute.xlu0 %117
  %vm119 = vcmask 1048448
  %120 = vst.msk [vmem:[%s1] sm:$0xff] %vm119, %v118
  %s121 = scalar_lea.vmem %s0, 263
  %v122 = vld [vmem:[%s121] sm:$0x1]
  %s123 = scalar_lea.vmem %s0, 294
  %v124 = vld [vmem:[%s123] sm:$0x2]
  %vm125 = vcmask 1041409
  %v126 = vsel %vm125, %v124, %v122
  %s127 = scalar_lea.vmem %s0, 325
  %v128 = vld [vmem:[%s127] sm:$0x4]
  %vm129 = vcmask 1042434
  %v130 = vsel %vm129, %v128, %v126
  %s131 = scalar_lea.vmem %s0, 356
  %v132 = vld [vmem:[%s131] sm:$0x8]
  %vm133 = vcmask 1043459
  %v134 = vsel %vm133, %v132, %v130
  %s135 = scalar_lea.vmem %s0, 387
  %v136 = vld [vmem:[%s135] sm:$0x10]
  %vm137 = vcmask 1044484
  %v138 = vsel %vm137, %v136, %v134
  %s139 = scalar_lea.vmem %s0, 418
  %v140 = vld [vmem:[%s139] sm:$0x20]
  %vm141 = vcmask 1045509
  %v142 = vsel %vm141, %v140, %v138
  %s143 = scalar_lea.vmem %s0, 449
  %v144 = vld [vmem:[%s143] sm:$0x40]
  %vm145 = vcmask 1046534
  %v146 = vsel %vm145, %v144, %v142
  %s147 = scalar_lea.vmem %s0, 480
  %v148 = vld [vmem:[%s147] sm:$0x80]
  %vm149 = vcmask 1047559
  %v150 = vsel %vm149, %v148, %v146
  %151 = vrot.lane.b32.xlu0 %v150, 112
  %v152 = vpop.permute.xlu0 %151
  %vm153 = vcmask 1048448
  %s154 = scalar_lea.vmem %s1, 32
  %155 = vst.msk [vmem:[%s154] sm:$0xff] %vm153, %v152
  %s156 = scalar_lea.vmem %s0, 15
  %v157 = vld [vmem:[%s156] sm:$0x1]
  %s158 = scalar_lea.vmem %s0, 46
  %v159 = vld [vmem:[%s158] sm:$0x2]
  %vm160 = vcmask 1041409
  %v161 = vsel %vm160, %v159, %v157
  %s162 = scalar_lea.vmem %s0, 77
  %v163 = vld [vmem:[%s162] sm:$0x4]
  %vm164 = vcmask 1042434
  %v165 = vsel %vm164, %v163, %v161
  %s166 = scalar_lea.vmem %s0, 108
  %v167 = vld [vmem:[%s166] sm:$0x8]
  %vm168 = vcmask 1043459
  %v169 = vsel %vm168, %v167, %v165
  %s170 = scalar_lea.vmem %s0, 139
  %v171 = vld [vmem:[%s170] sm:$0x10]
  %vm172 = vcmask 1044484
  %v173 = vsel %vm172, %v171, %v169
  %s174 = scalar_lea.vmem %s0, 170
  %v175 = vld [vmem:[%s174] sm:$0x20]
  %vm176 = vcmask 1045509
  %v177 = vsel %vm176, %v175, %v173
  %s178 = scalar_lea.vmem %s0, 201
  %v179 = vld [vmem:[%s178] sm:$0x40]
  %vm180 = vcmask 1046534
  %v181 = vsel %vm180, %v179, %v177
  %s182 = scalar_lea.vmem %s0, 232
  %v183 = vld [vmem:[%s182] sm:$0x80]
  %vm184 = vcmask 1047559
  %v185 = vsel %vm184, %v183, %v181
  %186 = vrot.lane.b32.xlu0 %v185, 112
  %v187 = vpop.permute.xlu0 %186
  %vm188 = vcmask 1048448
  %s189 = scalar_lea.vmem %s1, 8
  %190 = vst.msk [vmem:[%s189] sm:$0xff] %vm188, %v187
  %s191 = scalar_lea.vmem %s0, 271
  %v192 = vld [vmem:[%s191] sm:$0x1]
  %s193 = scalar_lea.vmem %s0, 302
  %v194 = vld [vmem:[%s193] sm:$0x2]
  %vm195 = vcmask 1041409
  %v196 = vsel %vm195, %v194, %v192
  %s197 = scalar_lea.vmem %s0, 333
  %v198 = vld [vmem:[%s197] sm:$0x4]
  %vm199 = vcmask 1042434
  %v200 = vsel %vm199, %v198, %v196
  %s201 = scalar_lea.vmem %s0, 364
  %v202 = vld [vmem:[%s201] sm:$0x8]
  %vm203 = vcmask 1043459
  %v204 = vsel %vm203, %v202, %v200
  %s205 = scalar_lea.vmem %s0, 395
  %v206 = vld [vmem:[%s205] sm:$0x10]
  %vm207 = vcmask 1044484
  %v208 = vsel %vm207, %v206, %v204
  %s209 = scalar_lea.vmem %s0, 426
  %v210 = vld [vmem:[%s209] sm:$0x20]
  %vm211 = vcmask 1045509
  %v212 = vsel %vm211, %v210, %v208
  %s213 = scalar_lea.vmem %s0, 457
  %v214 = vld [vmem:[%s213] sm:$0x40]
  %vm215 = vcmask 1046534
  %v216 = vsel %vm215, %v214, %v212
  %s217 = scalar_lea.vmem %s0, 488
  %v218 = vld [vmem:[%s217] sm:$0x80]
  %vm219 = vcmask 1047559
  %v220 = vsel %vm219, %v218, %v216
  %221 = vrot.lane.b32.xlu0 %v220, 112
  %v222 = vpop.permute.xlu0 %221
  %vm223 = vcmask 1048448
  %s224 = scalar_lea.vmem %s1, 40
  %225 = vst.msk [vmem:[%s224] sm:$0xff] %vm223, %v222
  %s226 = scalar_lea.vmem %s0, 23
  %v227 = vld [vmem:[%s226] sm:$0x1]
  %s228 = scalar_lea.vmem %s0, 54
  %v229 = vld [vmem:[%s228] sm:$0x2]
  %vm230 = vcmask 1041409
  %v231 = vsel %vm230, %v229, %v227
  %s232 = scalar_lea.vmem %s0, 85
  %v233 = vld [vmem:[%s232] sm:$0x4]
  %vm234 = vcmask 1042434
  %v235 = vsel %vm234, %v233, %v231
  %s236 = scalar_lea.vmem %s0, 116
  %v237 = vld [vmem:[%s236] sm:$0x8]
  %vm238 = vcmask 1043459
  %v239 = vsel %vm238, %v237, %v235
  %s240 = scalar_lea.vmem %s0, 147
  %v241 = vld [vmem:[%s240] sm:$0x10]
  %vm242 = vcmask 1044484
  %v243 = vsel %vm242, %v241, %v239
  %s244 = scalar_lea.vmem %s0, 178
  %v245 = vld [vmem:[%s244] sm:$0x20]
  %vm246 = vcmask 1045509
  %v247 = vsel %vm246, %v245, %v243
  %s248 = scalar_lea.vmem %s0, 209
  %v249 = vld [vmem:[%s248] sm:$0x40]
  %vm250 = vcmask 1046534
  %v251 = vsel %vm250, %v249, %v247
  %s252 = scalar_lea.vmem %s0, 240
  %v253 = vld [vmem:[%s252] sm:$0x80]
  %vm254 = vcmask 1047559
  %v255 = vsel %vm254, %v253, %v251
  %256 = vrot.lane.b32.xlu0 %v255, 112
  %v257 = vpop.permute.xlu0 %256
  %vm258 = vcmask 1048448
  %s259 = scalar_lea.vmem %s1, 16
  %260 = vst.msk [vmem:[%s259] sm:$0xff] %vm258, %v257
  %s261 = scalar_lea.vmem %s0, 279
  %v262 = vld [vmem:[%s261] sm:$0x1]
  %s263 = scalar_lea.vmem %s0, 310
  %v264 = vld [vmem:[%s263] sm:$0x2]
  %vm265 = vcmask 1041409
  %v266 = vsel %vm265, %v264, %v262
  %s267 = scalar_lea.vmem %s0, 341
  %v268 = vld [vmem:[%s267] sm:$0x4]
  %vm269 = vcmask 1042434
  %v270 = vsel %vm269, %v268, %v266
  %s271 = scalar_lea.vmem %s0, 372
  %v272 = vld [vmem:[%s271] sm:$0x8]
  %vm273 = vcmask 1043459
  %v274 = vsel %vm273, %v272, %v270
  %s275 = scalar_lea.vmem %s0, 403
  %v276 = vld [vmem:[%s275] sm:$0x10]
  %vm277 = vcmask 1044484
  %v278 = vsel %vm277, %v276, %v274
  %s279 = scalar_lea.vmem %s0, 434
  %v280 = vld [vmem:[%s279] sm:$0x20]
  %vm281 = vcmask 1045509
  %v282 = vsel %vm281, %v280, %v278
  %s283 = scalar_lea.vmem %s0, 465
  %v284 = vld [vmem:[%s283] sm:$0x40]
  %vm285 = vcmask 1046534
  %v286 = vsel %vm285, %v284, %v282
  %s287 = scalar_lea.vmem %s0, 496
  %v288 = vld [vmem:[%s287] sm:$0x80]
  %vm289 = vcmask 1047559
  %v290 = vsel %vm289, %v288, %v286
  %291 = vrot.lane.b32.xlu0 %v290, 112
  %v292 = vpop.permute.xlu0 %291
  %vm293 = vcmask 1048448
  %s294 = scalar_lea.vmem %s1, 48
  %295 = vst.msk [vmem:[%s294] sm:$0xff] %vm293, %v292
  %s296 = scalar_lea.vmem %s0, 6
  %v297 = vld [vmem:[%s296] sm:$0x1]
  %s298 = scalar_lea.vmem %s0, 37
  %v299 = vld [vmem:[%s298] sm:$0x2]
  %vm300 = vcmask 1041409
  %v301 = vsel %vm300, %v299, %v297
  %s302 = scalar_lea.vmem %s0, 68
  %v303 = vld [vmem:[%s302] sm:$0x4]
  %vm304 = vcmask 1042434
  %v305 = vsel %vm304, %v303, %v301
  %s306 = scalar_lea.vmem %s0, 99
  %v307 = vld [vmem:[%s306] sm:$0x8]
  %vm308 = vcmask 1043459
  %v309 = vsel %vm308, %v307, %v305
  %s310 = scalar_lea.vmem %s0, 130
  %v311 = vld [vmem:[%s310] sm:$0x10]
  %vm312 = vcmask 1044484
  %v313 = vsel %vm312, %v311, %v309
  %s314 = scalar_lea.vmem %s0, 161
  %v315 = vld [vmem:[%s314] sm:$0x20]
  %vm316 = vcmask 1045509
  %v317 = vsel %vm316, %v315, %v313
  %s318 = scalar_lea.vmem %s0, 192
  %v319 = vld [vmem:[%s318] sm:$0x40]
  %vm320 = vcmask 1046534
  %v321 = vsel %vm320, %v319, %v317
  %s322 = scalar_lea.vmem %s0, 223
  %v323 = vld [vmem:[%s322] sm:$0x80]
  %vm324 = vcmask 1047559
  %v325 = vsel %vm324, %v323, %v321
  %326 = vrot.lane.b32.xlu0 %v325, 96
  %v327 = vpop.permute.xlu0 %326
  %vm328 = vcmask 917248
  %329 = vst.msk [vmem:[%s1] sm:$0xff] %vm328, %v327
  %s330 = scalar_lea.vmem %s0, 262
  %v331 = vld [vmem:[%s330] sm:$0x1]
  %s332 = scalar_lea.vmem %s0, 293
  %v333 = vld [vmem:[%s332] sm:$0x2]
  %vm334 = vcmask 1041409
  %v335 = vsel %vm334, %v333, %v331
  %s336 = scalar_lea.vmem %s0, 324
  %v337 = vld [vmem:[%s336] sm:$0x4]
  %vm338 = vcmask 1042434
  %v339 = vsel %vm338, %v337, %v335
  %s340 = scalar_lea.vmem %s0, 355
  %v341 = vld [vmem:[%s340] sm:$0x8]
  %vm342 = vcmask 1043459
  %v343 = vsel %vm342, %v341, %v339
  %s344 = scalar_lea.vmem %s0, 386
  %v345 = vld [vmem:[%s344] sm:$0x10]
  %vm346 = vcmask 1044484
  %v347 = vsel %vm346, %v345, %v343
  %s348 = scalar_lea.vmem %s0, 417
  %v349 = vld [vmem:[%s348] sm:$0x20]
  %vm350 = vcmask 1045509
  %v351 = vsel %vm350, %v349, %v347
  %s352 = scalar_lea.vmem %s0, 448
  %v353 = vld [vmem:[%s352] sm:$0x40]
  %vm354 = vcmask 1046534
  %v355 = vsel %vm354, %v353, %v351
  %s356 = scalar_lea.vmem %s0, 479
  %v357 = vld [vmem:[%s356] sm:$0x80]
  %vm358 = vcmask 1047559
  %v359 = vsel %vm358, %v357, %v355
  %360 = vrot.lane.b32.xlu0 %v359, 96
  %v361 = vpop.permute.xlu0 %360
  %vm362 = vcmask 917248
  %s363 = scalar_lea.vmem %s1, 32
  %364 = vst.msk [vmem:[%s363] sm:$0xff] %vm362, %v361
  %s365 = scalar_lea.vmem %s0, 14
  %v366 = vld [vmem:[%s365] sm:$0x1]
  %s367 = scalar_lea.vmem %s0, 45
  %v368 = vld [vmem:[%s367] sm:$0x2]
  %vm369 = vcmask 1041409
  %v370 = vsel %vm369, %v368, %v366
  %s371 = scalar_lea.vmem %s0, 76
  %v372 = vld [vmem:[%s371] sm:$0x4]
  %vm373 = vcmask 1042434
  %v374 = vsel %vm373, %v372, %v370
  %s375 = scalar_lea.vmem %s0, 107
  %v376 = vld [vmem:[%s375] sm:$0x8]
  %vm377 = vcmask 1043459
  %v378 = vsel %vm377, %v376, %v374
  %s379 = scalar_lea.vmem %s0, 138
  %v380 = vld [vmem:[%s379] sm:$0x10]
  %vm381 = vcmask 1044484
  %v382 = vsel %vm381, %v380, %v378
  %s383 = scalar_lea.vmem %s0, 169
  %v384 = vld [vmem:[%s383] sm:$0x20]
  %vm385 = vcmask 1045509
  %v386 = vsel %vm385, %v384, %v382
  %s387 = scalar_lea.vmem %s0, 200
  %v388 = vld [vmem:[%s387] sm:$0x40]
  %vm389 = vcmask 1046534
  %v390 = vsel %vm389, %v388, %v386
  %s391 = scalar_lea.vmem %s0, 231
  %v392 = vld [vmem:[%s391] sm:$0x80]
  %vm393 = vcmask 1047559
  %v394 = vsel %vm393, %v392, %v390
  %395 = vrot.lane.b32.xlu0 %v394, 96
  %v396 = vpop.permute.xlu0 %395
  %vm397 = vcmask 917248
  %s398 = scalar_lea.vmem %s1, 8
  %399 = vst.msk [vmem:[%s398] sm:$0xff] %vm397, %v396
  %s400 = scalar_lea.vmem %s0, 270
  %v401 = vld [vmem:[%s400] sm:$0x1]
  %s402 = scalar_lea.vmem %s0, 301
  %v403 = vld [vmem:[%s402] sm:$0x2]
  %vm404 = vcmask 1041409
  %v405 = vsel %vm404, %v403, %v401
  %s406 = scalar_lea.vmem %s0, 332
  %v407 = vld [vmem:[%s406] sm:$0x4]
  %vm408 = vcmask 1042434
  %v409 = vsel %vm408, %v407, %v405
  %s410 = scalar_lea.vmem %s0, 363
  %v411 = vld [vmem:[%s410] sm:$0x8]
  %vm412 = vcmask 1043459
  %v413 = vsel %vm412, %v411, %v409
  %s414 = scalar_lea.vmem %s0, 394
  %v415 = vld [vmem:[%s414] sm:$0x10]
  %vm416 = vcmask 1044484
  %v417 = vsel %vm416, %v415, %v413
  %s418 = scalar_lea.vmem %s0, 425
  %v419 = vld [vmem:[%s418] sm:$0x20]
  %vm420 = vcmask 1045509
  %v421 = vsel %vm420, %v419, %v417
  %s422 = scalar_lea.vmem %s0, 456
  %v423 = vld [vmem:[%s422] sm:$0x40]
  %vm424 = vcmask 1046534
  %v425 = vsel %vm424, %v423, %v421
  %s426 = scalar_lea.vmem %s0, 487
  %v427 = vld [vmem:[%s426] sm:$0x80]
  %vm428 = vcmask 1047559
  %v429 = vsel %vm428, %v427, %v425
  %430 = vrot.lane.b32.xlu0 %v429, 96
  %v431 = vpop.permute.xlu0 %430
  %vm432 = vcmask 917248
  %s433 = scalar_lea.vmem %s1, 40
  %434 = vst.msk [vmem:[%s433] sm:$0xff] %vm432, %v431
  %s435 = scalar_lea.vmem %s0, 22
  %v436 = vld [vmem:[%s435] sm:$0x1]
  %s437 = scalar_lea.vmem %s0, 53
  %v438 = vld [vmem:[%s437] sm:$0x2]
  %vm439 = vcmask 1041409
  %v440 = vsel %vm439, %v438, %v436
  %s441 = scalar_lea.vmem %s0, 84
  %v442 = vld [vmem:[%s441] sm:$0x4]
  %vm443 = vcmask 1042434
  %v444 = vsel %vm443, %v442, %v440
  %s445 = scalar_lea.vmem %s0, 115
  %v446 = vld [vmem:[%s445] sm:$0x8]
  %vm447 = vcmask 1043459
  %v448 = vsel %vm447, %v446, %v444
  %s449 = scalar_lea.vmem %s0, 146
  %v450 = vld [vmem:[%s449] sm:$0x10]
  %vm451 = vcmask 1044484
  %v452 = vsel %vm451, %v450, %v448
  %s453 = scalar_lea.vmem %s0, 177
  %v454 = vld [vmem:[%s453] sm:$0x20]
  %vm455 = vcmask 1045509
  %v456 = vsel %vm455, %v454, %v452
  %s457 = scalar_lea.vmem %s0, 208
  %v458 = vld [vmem:[%s457] sm:$0x40]
  %vm459 = vcmask 1046534
  %v460 = vsel %vm459, %v458, %v456
  %s461 = scalar_lea.vmem %s0, 239
  %v462 = vld [vmem:[%s461] sm:$0x80]
  %vm463 = vcmask 1047559
  %v464 = vsel %vm463, %v462, %v460
  %465 = vrot.lane.b32.xlu0 %v464, 96
  %v466 = vpop.permute.xlu0 %465
  %vm467 = vcmask 917248
  %s468 = scalar_lea.vmem %s1, 16
  %469 = vst.msk [vmem:[%s468] sm:$0xff] %vm467, %v466
  %s470 = scalar_lea.vmem %s0, 278
  %v471 = vld [vmem:[%s470] sm:$0x1]
  %s472 = scalar_lea.vmem %s0, 309
  %v473 = vld [vmem:[%s472] sm:$0x2]
  %vm474 = vcmask 1041409
  %v475 = vsel %vm474, %v473, %v471
  %s476 = scalar_lea.vmem %s0, 340
  %v477 = vld [vmem:[%s476] sm:$0x4]
  %vm478 = vcmask 1042434
  %v479 = vsel %vm478, %v477, %v475
  %s480 = scalar_lea.vmem %s0, 371
  %v481 = vld [vmem:[%s480] sm:$0x8]
  %vm482 = vcmask 1043459
  %v483 = vsel %vm482, %v481, %v479
  %s484 = scalar_lea.vmem %s0, 402
  %v485 = vld [vmem:[%s484] sm:$0x10]
  %vm486 = vcmask 1044484
  %v487 = vsel %vm486, %v485, %v483
  %s488 = scalar_lea.vmem %s0, 433
  %v489 = vld [vmem:[%s488] sm:$0x20]
  %vm490 = vcmask 1045509
  %v491 = vsel %vm490, %v489, %v487
  %s492 = scalar_lea.vmem %s0, 464
  %v493 = vld [vmem:[%s492] sm:$0x40]
  %vm494 = vcmask 1046534
  %v495 = vsel %vm494, %v493, %v491
  %s496 = scalar_lea.vmem %s0, 495
  %v497 = vld [vmem:[%s496] sm:$0x80]
  %vm498 = vcmask 1047559
  %v499 = vsel %vm498, %v497, %v495
  %500 = vrot.lane.b32.xlu0 %v499, 96
  %v501 = vpop.permute.xlu0 %500
  %vm502 = vcmask 917248
  %s503 = scalar_lea.vmem %s1, 48
  %504 = vst.msk [vmem:[%s503] sm:$0xff] %vm502, %v501
  %s505 = scalar_lea.vmem %s0, 5
  %v506 = vld [vmem:[%s505] sm:$0x1]
  %s507 = scalar_lea.vmem %s0, 36
  %v508 = vld [vmem:[%s507] sm:$0x2]
  %vm509 = vcmask 1041409
  %v510 = vsel %vm509, %v508, %v506
  %s511 = scalar_lea.vmem %s0, 67
  %v512 = vld [vmem:[%s511] sm:$0x4]
  %vm513 = vcmask 1042434
  %v514 = vsel %vm513, %v512, %v510
  %s515 = scalar_lea.vmem %s0, 98
  %v516 = vld [vmem:[%s515] sm:$0x8]
  %vm517 = vcmask 1043459
  %v518 = vsel %vm517, %v516, %v514
  %s519 = scalar_lea.vmem %s0, 129
  %v520 = vld [vmem:[%s519] sm:$0x10]
  %vm521 = vcmask 1044484
  %v522 = vsel %vm521, %v520, %v518
  %s523 = scalar_lea.vmem %s0, 160
  %v524 = vld [vmem:[%s523] sm:$0x20]
  %vm525 = vcmask 1045509
  %v526 = vsel %vm525, %v524, %v522
  %s527 = scalar_lea.vmem %s0, 191
  %v528 = vld [vmem:[%s527] sm:$0x40]
  %vm529 = vcmask 1046534
  %v530 = vsel %vm529, %v528, %v526
  %s531 = scalar_lea.vmem %s0, 222
  %v532 = vld [vmem:[%s531] sm:$0x80]
  %vm533 = vcmask 1047559
  %v534 = vsel %vm533, %v532, %v530
  %535 = vrot.lane.b32.xlu0 %v534, 80
  %v536 = vpop.permute.xlu0 %535
  %vm537 = vcmask 786048
  %538 = vst.msk [vmem:[%s1] sm:$0xff] %vm537, %v536
  %s539 = scalar_lea.vmem %s0, 261
  %v540 = vld [vmem:[%s539] sm:$0x1]
  %s541 = scalar_lea.vmem %s0, 292
  %v542 = vld [vmem:[%s541] sm:$0x2]
  %vm543 = vcmask 1041409
  %v544 = vsel %vm543, %v542, %v540
  %s545 = scalar_lea.vmem %s0, 323
  %v546 = vld [vmem:[%s545] sm:$0x4]
  %vm547 = vcmask 1042434
  %v548 = vsel %vm547, %v546, %v544
  %s549 = scalar_lea.vmem %s0, 354
  %v550 = vld [vmem:[%s549] sm:$0x8]
  %vm551 = vcmask 1043459
  %v552 = vsel %vm551, %v550, %v548
  %s553 = scalar_lea.vmem %s0, 385
  %v554 = vld [vmem:[%s553] sm:$0x10]
  %vm555 = vcmask 1044484
  %v556 = vsel %vm555, %v554, %v552
  %s557 = scalar_lea.vmem %s0, 416
  %v558 = vld [vmem:[%s557] sm:$0x20]
  %vm559 = vcmask 1045509
  %v560 = vsel %vm559, %v558, %v556
  %s561 = scalar_lea.vmem %s0, 447
  %v562 = vld [vmem:[%s561] sm:$0x40]
  %vm563 = vcmask 1046534
  %v564 = vsel %vm563, %v562, %v560
  %s565 = scalar_lea.vmem %s0, 478
  %v566 = vld [vmem:[%s565] sm:$0x80]
  %vm567 = vcmask 1047559
  %v568 = vsel %vm567, %v566, %v564
  %569 = vrot.lane.b32.xlu0 %v568, 80
  %v570 = vpop.permute.xlu0 %569
  %vm571 = vcmask 786048
  %s572 = scalar_lea.vmem %s1, 32
  %573 = vst.msk [vmem:[%s572] sm:$0xff] %vm571, %v570
  %s574 = scalar_lea.vmem %s0, 13
  %v575 = vld [vmem:[%s574] sm:$0x1]
  %s576 = scalar_lea.vmem %s0, 44
  %v577 = vld [vmem:[%s576] sm:$0x2]
  %vm578 = vcmask 1041409
  %v579 = vsel %vm578, %v577, %v575
  %s580 = scalar_lea.vmem %s0, 75
  %v581 = vld [vmem:[%s580] sm:$0x4]
  %vm582 = vcmask 1042434
  %v583 = vsel %vm582, %v581, %v579
  %s584 = scalar_lea.vmem %s0, 106
  %v585 = vld [vmem:[%s584] sm:$0x8]
  %vm586 = vcmask 1043459
  %v587 = vsel %vm586, %v585, %v583
  %s588 = scalar_lea.vmem %s0, 137
  %v589 = vld [vmem:[%s588] sm:$0x10]
  %vm590 = vcmask 1044484
  %v591 = vsel %vm590, %v589, %v587
  %s592 = scalar_lea.vmem %s0, 168
  %v593 = vld [vmem:[%s592] sm:$0x20]
  %vm594 = vcmask 1045509
  %v595 = vsel %vm594, %v593, %v591
  %s596 = scalar_lea.vmem %s0, 199
  %v597 = vld [vmem:[%s596] sm:$0x40]
  %vm598 = vcmask 1046534
  %v599 = vsel %vm598, %v597, %v595
  %s600 = scalar_lea.vmem %s0, 230
  %v601 = vld [vmem:[%s600] sm:$0x80]
  %vm602 = vcmask 1047559
  %v603 = vsel %vm602, %v601, %v599
  %604 = vrot.lane.b32.xlu0 %v603, 80
  %v605 = vpop.permute.xlu0 %604
  %vm606 = vcmask 786048
  %s607 = scalar_lea.vmem %s1, 8
  %608 = vst.msk [vmem:[%s607] sm:$0xff] %vm606, %v605
  %s609 = scalar_lea.vmem %s0, 269
  %v610 = vld [vmem:[%s609] sm:$0x1]
  %s611 = scalar_lea.vmem %s0, 300
  %v612 = vld [vmem:[%s611] sm:$0x2]
  %vm613 = vcmask 1041409
  %v614 = vsel %vm613, %v612, %v610
  %s615 = scalar_lea.vmem %s0, 331
  %v616 = vld [vmem:[%s615] sm:$0x4]
  %vm617 = vcmask 1042434
  %v618 = vsel %vm617, %v616, %v614
  %s619 = scalar_lea.vmem %s0, 362
  %v620 = vld [vmem:[%s619] sm:$0x8]
  %vm621 = vcmask 1043459
  %v622 = vsel %vm621, %v620, %v618
  %s623 = scalar_lea.vmem %s0, 393
  %v624 = vld [vmem:[%s623] sm:$0x10]
  %vm625 = vcmask 1044484
  %v626 = vsel %vm625, %v624, %v622
  %s627 = scalar_lea.vmem %s0, 424
  %v628 = vld [vmem:[%s627] sm:$0x20]
  %vm629 = vcmask 1045509
  %v630 = vsel %vm629, %v628, %v626
  %s631 = scalar_lea.vmem %s0, 455
  %v632 = vld [vmem:[%s631] sm:$0x40]
  %vm633 = vcmask 1046534
  %v634 = vsel %vm633, %v632, %v630
  %s635 = scalar_lea.vmem %s0, 486
  %v636 = vld [vmem:[%s635] sm:$0x80]
  %vm637 = vcmask 1047559
  %v638 = vsel %vm637, %v636, %v634
  %639 = vrot.lane.b32.xlu0 %v638, 80
  %v640 = vpop.permute.xlu0 %639
  %vm641 = vcmask 786048
  %s642 = scalar_lea.vmem %s1, 40
  %643 = vst.msk [vmem:[%s642] sm:$0xff] %vm641, %v640
  %s644 = scalar_lea.vmem %s0, 21
  %v645 = vld [vmem:[%s644] sm:$0x1]
  %s646 = scalar_lea.vmem %s0, 52
  %v647 = vld [vmem:[%s646] sm:$0x2]
  %vm648 = vcmask 1041409
  %v649 = vsel %vm648, %v647, %v645
  %s650 = scalar_lea.vmem %s0, 83
  %v651 = vld [vmem:[%s650] sm:$0x4]
  %vm652 = vcmask 1042434
  %v653 = vsel %vm652, %v651, %v649
  %s654 = scalar_lea.vmem %s0, 114
  %v655 = vld [vmem:[%s654] sm:$0x8]
  %vm656 = vcmask 1043459
  %v657 = vsel %vm656, %v655, %v653
  %s658 = scalar_lea.vmem %s0, 145
  %v659 = vld [vmem:[%s658] sm:$0x10]
  %vm660 = vcmask 1044484
  %v661 = vsel %vm660, %v659, %v657
  %s662 = scalar_lea.vmem %s0, 176
  %v663 = vld [vmem:[%s662] sm:$0x20]
  %vm664 = vcmask 1045509
  %v665 = vsel %vm664, %v663, %v661
  %s666 = scalar_lea.vmem %s0, 207
  %v667 = vld [vmem:[%s666] sm:$0x40]
  %vm668 = vcmask 1046534
  %v669 = vsel %vm668, %v667, %v665
  %s670 = scalar_lea.vmem %s0, 238
  %v671 = vld [vmem:[%s670] sm:$0x80]
  %vm672 = vcmask 1047559
  %v673 = vsel %vm672, %v671, %v669
  %674 = vrot.lane.b32.xlu0 %v673, 80
  %v675 = vpop.permute.xlu0 %674
  %vm676 = vcmask 786048
  %s677 = scalar_lea.vmem %s1, 16
  %678 = vst.msk [vmem:[%s677] sm:$0xff] %vm676, %v675
  %s679 = scalar_lea.vmem %s0, 277
  %v680 = vld [vmem:[%s679] sm:$0x1]
  %s681 = scalar_lea.vmem %s0, 308
  %v682 = vld [vmem:[%s681] sm:$0x2]
  %vm683 = vcmask 1041409
  %v684 = vsel %vm683, %v682, %v680
  %s685 = scalar_lea.vmem %s0, 339
  %v686 = vld [vmem:[%s685] sm:$0x4]
  %vm687 = vcmask 1042434
  %v688 = vsel %vm687, %v686, %v684
  %s689 = scalar_lea.vmem %s0, 370
  %v690 = vld [vmem:[%s689] sm:$0x8]
  %vm691 = vcmask 1043459
  %v692 = vsel %vm691, %v690, %v688
  %s693 = scalar_lea.vmem %s0, 401
  %v694 = vld [vmem:[%s693] sm:$0x10]
  %vm695 = vcmask 1044484
  %v696 = vsel %vm695, %v694, %v692
  %s697 = scalar_lea.vmem %s0, 432
  %v698 = vld [vmem:[%s697] sm:$0x20]
  %vm699 = vcmask 1045509
  %v700 = vsel %vm699, %v698, %v696
  %s701 = scalar_lea.vmem %s0, 463
  %v702 = vld [vmem:[%s701] sm:$0x40]
  %vm703 = vcmask 1046534
  %v704 = vsel %vm703, %v702, %v700
  %s705 = scalar_lea.vmem %s0, 494
  %v706 = vld [vmem:[%s705] sm:$0x80]
  %vm707 = vcmask 1047559
  %v708 = vsel %vm707, %v706, %v704
  %709 = vrot.lane.b32.xlu0 %v708, 80
  %v710 = vpop.permute.xlu0 %709
  %vm711 = vcmask 786048
  %s712 = scalar_lea.vmem %s1, 48
  %713 = vst.msk [vmem:[%s712] sm:$0xff] %vm711, %v710
  %s714 = scalar_lea.vmem %s0, 4
  %v715 = vld [vmem:[%s714] sm:$0x1]
  %s716 = scalar_lea.vmem %s0, 35
  %v717 = vld [vmem:[%s716] sm:$0x2]
  %vm718 = vcmask 1041409
  %v719 = vsel %vm718, %v717, %v715
  %s720 = scalar_lea.vmem %s0, 66
  %v721 = vld [vmem:[%s720] sm:$0x4]
  %vm722 = vcmask 1042434
  %v723 = vsel %vm722, %v721, %v719
  %s724 = scalar_lea.vmem %s0, 97
  %v725 = vld [vmem:[%s724] sm:$0x8]
  %vm726 = vcmask 1043459
  %v727 = vsel %vm726, %v725, %v723
  %s728 = scalar_lea.vmem %s0, 128
  %v729 = vld [vmem:[%s728] sm:$0x10]
  %vm730 = vcmask 1044484
  %v731 = vsel %vm730, %v729, %v727
  %s732 = scalar_lea.vmem %s0, 159
  %v733 = vld [vmem:[%s732] sm:$0x20]
  %vm734 = vcmask 1045509
  %v735 = vsel %vm734, %v733, %v731
  %s736 = scalar_lea.vmem %s0, 190
  %v737 = vld [vmem:[%s736] sm:$0x40]
  %vm738 = vcmask 1046534
  %v739 = vsel %vm738, %v737, %v735
  %s740 = scalar_lea.vmem %s0, 221
  %v741 = vld [vmem:[%s740] sm:$0x80]
  %vm742 = vcmask 1047559
  %v743 = vsel %vm742, %v741, %v739
  %744 = vrot.lane.b32.xlu0 %v743, 64
  %v745 = vpop.permute.xlu0 %744
  %vm746 = vcmask 654848
  %747 = vst.msk [vmem:[%s1] sm:$0xff] %vm746, %v745
  %s748 = scalar_lea.vmem %s0, 260
  %v749 = vld [vmem:[%s748] sm:$0x1]
  %s750 = scalar_lea.vmem %s0, 291
  %v751 = vld [vmem:[%s750] sm:$0x2]
  %vm752 = vcmask 1041409
  %v753 = vsel %vm752, %v751, %v749
  %s754 = scalar_lea.vmem %s0, 322
  %v755 = vld [vmem:[%s754] sm:$0x4]
  %vm756 = vcmask 1042434
  %v757 = vsel %vm756, %v755, %v753
  %s758 = scalar_lea.vmem %s0, 353
  %v759 = vld [vmem:[%s758] sm:$0x8]
  %vm760 = vcmask 1043459
  %v761 = vsel %vm760, %v759, %v757
  %s762 = scalar_lea.vmem %s0, 384
  %v763 = vld [vmem:[%s762] sm:$0x10]
  %vm764 = vcmask 1044484
  %v765 = vsel %vm764, %v763, %v761
  %s766 = scalar_lea.vmem %s0, 415
  %v767 = vld [vmem:[%s766] sm:$0x20]
  %vm768 = vcmask 1045509
  %v769 = vsel %vm768, %v767, %v765
  %s770 = scalar_lea.vmem %s0, 446
  %v771 = vld [vmem:[%s770] sm:$0x40]
  %vm772 = vcmask 1046534
  %v773 = vsel %vm772, %v771, %v769
  %s774 = scalar_lea.vmem %s0, 477
  %v775 = vld [vmem:[%s774] sm:$0x80]
  %vm776 = vcmask 1047559
  %v777 = vsel %vm776, %v775, %v773
  %778 = vrot.lane.b32.xlu0 %v777, 64
  %v779 = vpop.permute.xlu0 %778
  %vm780 = vcmask 654848
  %s781 = scalar_lea.vmem %s1, 32
  %782 = vst.msk [vmem:[%s781] sm:$0xff] %vm780, %v779
  %s783 = scalar_lea.vmem %s0, 12
  %v784 = vld [vmem:[%s783] sm:$0x1]
  %s785 = scalar_lea.vmem %s0, 43
  %v786 = vld [vmem:[%s785] sm:$0x2]
  %vm787 = vcmask 1041409
  %v788 = vsel %vm787, %v786, %v784
  %s789 = scalar_lea.vmem %s0, 74
  %v790 = vld [vmem:[%s789] sm:$0x4]
  %vm791 = vcmask 1042434
  %v792 = vsel %vm791, %v790, %v788
  %s793 = scalar_lea.vmem %s0, 105
  %v794 = vld [vmem:[%s793] sm:$0x8]
  %vm795 = vcmask 1043459
  %v796 = vsel %vm795, %v794, %v792
  %s797 = scalar_lea.vmem %s0, 136
  %v798 = vld [vmem:[%s797] sm:$0x10]
  %vm799 = vcmask 1044484
  %v800 = vsel %vm799, %v798, %v796
  %s801 = scalar_lea.vmem %s0, 167
  %v802 = vld [vmem:[%s801] sm:$0x20]
  %vm803 = vcmask 1045509
  %v804 = vsel %vm803, %v802, %v800
  %s805 = scalar_lea.vmem %s0, 198
  %v806 = vld [vmem:[%s805] sm:$0x40]
  %vm807 = vcmask 1046534
  %v808 = vsel %vm807, %v806, %v804
  %s809 = scalar_lea.vmem %s0, 229
  %v810 = vld [vmem:[%s809] sm:$0x80]
  %vm811 = vcmask 1047559
  %v812 = vsel %vm811, %v810, %v808
  %813 = vrot.lane.b32.xlu0 %v812, 64
  %v814 = vpop.permute.xlu0 %813
  %vm815 = vcmask 654848
  %s816 = scalar_lea.vmem %s1, 8
  %817 = vst.msk [vmem:[%s816] sm:$0xff] %vm815, %v814
  %s818 = scalar_lea.vmem %s0, 268
  %v819 = vld [vmem:[%s818] sm:$0x1]
  %s820 = scalar_lea.vmem %s0, 299
  %v821 = vld [vmem:[%s820] sm:$0x2]
  %vm822 = vcmask 1041409
  %v823 = vsel %vm822, %v821, %v819
  %s824 = scalar_lea.vmem %s0, 330
  %v825 = vld [vmem:[%s824] sm:$0x4]
  %vm826 = vcmask 1042434
  %v827 = vsel %vm826, %v825, %v823
  %s828 = scalar_lea.vmem %s0, 361
  %v829 = vld [vmem:[%s828] sm:$0x8]
  %vm830 = vcmask 1043459
  %v831 = vsel %vm830, %v829, %v827
  %s832 = scalar_lea.vmem %s0, 392
  %v833 = vld [vmem:[%s832] sm:$0x10]
  %vm834 = vcmask 1044484
  %v835 = vsel %vm834, %v833, %v831
  %s836 = scalar_lea.vmem %s0, 423
  %v837 = vld [vmem:[%s836] sm:$0x20]
  %vm838 = vcmask 1045509
  %v839 = vsel %vm838, %v837, %v835
  %s840 = scalar_lea.vmem %s0, 454
  %v841 = vld [vmem:[%s840] sm:$0x40]
  %vm842 = vcmask 1046534
  %v843 = vsel %vm842, %v841, %v839
  %s844 = scalar_lea.vmem %s0, 485
  %v845 = vld [vmem:[%s844] sm:$0x80]
  %vm846 = vcmask 1047559
  %v847 = vsel %vm846, %v845, %v843
  %848 = vrot.lane.b32.xlu0 %v847, 64
  %v849 = vpop.permute.xlu0 %848
  %vm850 = vcmask 654848
  %s851 = scalar_lea.vmem %s1, 40
  %852 = vst.msk [vmem:[%s851] sm:$0xff] %vm850, %v849
  %s853 = scalar_lea.vmem %s0, 20
  %v854 = vld [vmem:[%s853] sm:$0x1]
  %s855 = scalar_lea.vmem %s0, 51
  %v856 = vld [vmem:[%s855] sm:$0x2]
  %vm857 = vcmask 1041409
  %v858 = vsel %vm857, %v856, %v854
  %s859 = scalar_lea.vmem %s0, 82
  %v860 = vld [vmem:[%s859] sm:$0x4]
  %vm861 = vcmask 1042434
  %v862 = vsel %vm861, %v860, %v858
  %s863 = scalar_lea.vmem %s0, 113
  %v864 = vld [vmem:[%s863] sm:$0x8]
  %vm865 = vcmask 1043459
  %v866 = vsel %vm865, %v864, %v862
  %s867 = scalar_lea.vmem %s0, 144
  %v868 = vld [vmem:[%s867] sm:$0x10]
  %vm869 = vcmask 1044484
  %v870 = vsel %vm869, %v868, %v866
  %s871 = scalar_lea.vmem %s0, 175
  %v872 = vld [vmem:[%s871] sm:$0x20]
  %vm873 = vcmask 1045509
  %v874 = vsel %vm873, %v872, %v870
  %s875 = scalar_lea.vmem %s0, 206
  %v876 = vld [vmem:[%s875] sm:$0x40]
  %vm877 = vcmask 1046534
  %v878 = vsel %vm877, %v876, %v874
  %s879 = scalar_lea.vmem %s0, 237
  %v880 = vld [vmem:[%s879] sm:$0x80]
  %vm881 = vcmask 1047559
  %v882 = vsel %vm881, %v880, %v878
  %883 = vrot.lane.b32.xlu0 %v882, 64
  %v884 = vpop.permute.xlu0 %883
  %vm885 = vcmask 654848
  %s886 = scalar_lea.vmem %s1, 16
  %887 = vst.msk [vmem:[%s886] sm:$0xff] %vm885, %v884
  %s888 = scalar_lea.vmem %s0, 276
  %v889 = vld [vmem:[%s888] sm:$0x1]
  %s890 = scalar_lea.vmem %s0, 307
  %v891 = vld [vmem:[%s890] sm:$0x2]
  %vm892 = vcmask 1041409
  %v893 = vsel %vm892, %v891, %v889
  %s894 = scalar_lea.vmem %s0, 338
  %v895 = vld [vmem:[%s894] sm:$0x4]
  %vm896 = vcmask 1042434
  %v897 = vsel %vm896, %v895, %v893
  %s898 = scalar_lea.vmem %s0, 369
  %v899 = vld [vmem:[%s898] sm:$0x8]
  %vm900 = vcmask 1043459
  %v901 = vsel %vm900, %v899, %v897
  %s902 = scalar_lea.vmem %s0, 400
  %v903 = vld [vmem:[%s902] sm:$0x10]
  %vm904 = vcmask 1044484
  %v905 = vsel %vm904, %v903, %v901
  %s906 = scalar_lea.vmem %s0, 431
  %v907 = vld [vmem:[%s906] sm:$0x20]
  %vm908 = vcmask 1045509
  %v909 = vsel %vm908, %v907, %v905
  %s910 = scalar_lea.vmem %s0, 462
  %v911 = vld [vmem:[%s910] sm:$0x40]
  %vm912 = vcmask 1046534
  %v913 = vsel %vm912, %v911, %v909
  %s914 = scalar_lea.vmem %s0, 493
  %v915 = vld [vmem:[%s914] sm:$0x80]
  %vm916 = vcmask 1047559
  %v917 = vsel %vm916, %v915, %v913
  %918 = vrot.lane.b32.xlu0 %v917, 64
  %v919 = vpop.permute.xlu0 %918
  %vm920 = vcmask 654848
  %s921 = scalar_lea.vmem %s1, 48
  %922 = vst.msk [vmem:[%s921] sm:$0xff] %vm920, %v919
  %s923 = scalar_lea.vmem %s0, 3
  %v924 = vld [vmem:[%s923] sm:$0x1]
  %s925 = scalar_lea.vmem %s0, 34
  %v926 = vld [vmem:[%s925] sm:$0x2]
  %vm927 = vcmask 1041409
  %v928 = vsel %vm927, %v926, %v924
  %s929 = scalar_lea.vmem %s0, 65
  %v930 = vld [vmem:[%s929] sm:$0x4]
  %vm931 = vcmask 1042434
  %v932 = vsel %vm931, %v930, %v928
  %s933 = scalar_lea.vmem %s0, 96
  %v934 = vld [vmem:[%s933] sm:$0x8]
  %vm935 = vcmask 1043459
  %v936 = vsel %vm935, %v934, %v932
  %s937 = scalar_lea.vmem %s0, 127
  %v938 = vld [vmem:[%s937] sm:$0x10]
  %vm939 = vcmask 1044484
  %v940 = vsel %vm939, %v938, %v936
  %s941 = scalar_lea.vmem %s0, 158
  %v942 = vld [vmem:[%s941] sm:$0x20]
  %vm943 = vcmask 1045509
  %v944 = vsel %vm943, %v942, %v940
  %s945 = scalar_lea.vmem %s0, 189
  %v946 = vld [vmem:[%s945] sm:$0x40]
  %vm947 = vcmask 1046534
  %v948 = vsel %vm947, %v946, %v944
  %s949 = scalar_lea.vmem %s0, 220
  %v950 = vld [vmem:[%s949] sm:$0x80]
  %vm951 = vcmask 1047559
  %v952 = vsel %vm951, %v950, %v948
  %953 = vrot.lane.b32.xlu0 %v952, 48
  %v954 = vpop.permute.xlu0 %953
  %vm955 = vcmask 523648
  %956 = vst.msk [vmem:[%s1] sm:$0xff] %vm955, %v954
  %s957 = scalar_lea.vmem %s0, 259
  %v958 = vld [vmem:[%s957] sm:$0x1]
  %s959 = scalar_lea.vmem %s0, 290
  %v960 = vld [vmem:[%s959] sm:$0x2]
  %vm961 = vcmask 1041409
  %v962 = vsel %vm961, %v960, %v958
  %s963 = scalar_lea.vmem %s0, 321
  %v964 = vld [vmem:[%s963] sm:$0x4]
  %vm965 = vcmask 1042434
  %v966 = vsel %vm965, %v964, %v962
  %s967 = scalar_lea.vmem %s0, 352
  %v968 = vld [vmem:[%s967] sm:$0x8]
  %vm969 = vcmask 1043459
  %v970 = vsel %vm969, %v968, %v966
  %s971 = scalar_lea.vmem %s0, 383
  %v972 = vld [vmem:[%s971] sm:$0x10]
  %vm973 = vcmask 1044484
  %v974 = vsel %vm973, %v972, %v970
  %s975 = scalar_lea.vmem %s0, 414
  %v976 = vld [vmem:[%s975] sm:$0x20]
  %vm977 = vcmask 1045509
  %v978 = vsel %vm977, %v976, %v974
  %s979 = scalar_lea.vmem %s0, 445
  %v980 = vld [vmem:[%s979] sm:$0x40]
  %vm981 = vcmask 1046534
  %v982 = vsel %vm981, %v980, %v978
  %s983 = scalar_lea.vmem %s0, 476
  %v984 = vld [vmem:[%s983] sm:$0x80]
  %vm985 = vcmask 1047559
  %v986 = vsel %vm985, %v984, %v982
  %987 = vrot.lane.b32.xlu0 %v986, 48
  %v988 = vpop.permute.xlu0 %987
  %vm989 = vcmask 523648
  %s990 = scalar_lea.vmem %s1, 32
  %991 = vst.msk [vmem:[%s990] sm:$0xff] %vm989, %v988
  %s992 = scalar_lea.vmem %s0, 11
  %v993 = vld [vmem:[%s992] sm:$0x1]
  %s994 = scalar_lea.vmem %s0, 42
  %v995 = vld [vmem:[%s994] sm:$0x2]
  %vm996 = vcmask 1041409
  %v997 = vsel %vm996, %v995, %v993
  %s998 = scalar_lea.vmem %s0, 73
  %v999 = vld [vmem:[%s998] sm:$0x4]
  %vm1000 = vcmask 1042434
  %v1001 = vsel %vm1000, %v999, %v997
  %s1002 = scalar_lea.vmem %s0, 104
  %v1003 = vld [vmem:[%s1002] sm:$0x8]
  %vm1004 = vcmask 1043459
  %v1005 = vsel %vm1004, %v1003, %v1001
  %s1006 = scalar_lea.vmem %s0, 135
  %v1007 = vld [vmem:[%s1006] sm:$0x10]
  %vm1008 = vcmask 1044484
  %v1009 = vsel %vm1008, %v1007, %v1005
  %s1010 = scalar_lea.vmem %s0, 166
  %v1011 = vld [vmem:[%s1010] sm:$0x20]
  %vm1012 = vcmask 1045509
  %v1013 = vsel %vm1012, %v1011, %v1009
  %s1014 = scalar_lea.vmem %s0, 197
  %v1015 = vld [vmem:[%s1014] sm:$0x40]
  %vm1016 = vcmask 1046534
  %v1017 = vsel %vm1016, %v1015, %v1013
  %s1018 = scalar_lea.vmem %s0, 228
  %v1019 = vld [vmem:[%s1018] sm:$0x80]
  %vm1020 = vcmask 1047559
  %v1021 = vsel %vm1020, %v1019, %v1017
  %1022 = vrot.lane.b32.xlu0 %v1021, 48
  %v1023 = vpop.permute.xlu0 %1022
  %vm1024 = vcmask 523648
  %s1025 = scalar_lea.vmem %s1, 8
  %1026 = vst.msk [vmem:[%s1025] sm:$0xff] %vm1024, %v1023
  %s1027 = scalar_lea.vmem %s0, 267
  %v1028 = vld [vmem:[%s1027] sm:$0x1]
  %s1029 = scalar_lea.vmem %s0, 298
  %v1030 = vld [vmem:[%s1029] sm:$0x2]
  %vm1031 = vcmask 1041409
  %v1032 = vsel %vm1031, %v1030, %v1028
  %s1033 = scalar_lea.vmem %s0, 329
  %v1034 = vld [vmem:[%s1033] sm:$0x4]
  %vm1035 = vcmask 1042434
  %v1036 = vsel %vm1035, %v1034, %v1032
  %s1037 = scalar_lea.vmem %s0, 360
  %v1038 = vld [vmem:[%s1037] sm:$0x8]
  %vm1039 = vcmask 1043459
  %v1040 = vsel %vm1039, %v1038, %v1036
  %s1041 = scalar_lea.vmem %s0, 391
  %v1042 = vld [vmem:[%s1041] sm:$0x10]
  %vm1043 = vcmask 1044484
  %v1044 = vsel %vm1043, %v1042, %v1040
  %s1045 = scalar_lea.vmem %s0, 422
  %v1046 = vld [vmem:[%s1045] sm:$0x20]
  %vm1047 = vcmask 1045509
  %v1048 = vsel %vm1047, %v1046, %v1044
  %s1049 = scalar_lea.vmem %s0, 453
  %v1050 = vld [vmem:[%s1049] sm:$0x40]
  %vm1051 = vcmask 1046534
  %v1052 = vsel %vm1051, %v1050, %v1048
  %s1053 = scalar_lea.vmem %s0, 484
  %v1054 = vld [vmem:[%s1053] sm:$0x80]
  %vm1055 = vcmask 1047559
  %v1056 = vsel %vm1055, %v1054, %v1052
  %1057 = vrot.lane.b32.xlu0 %v1056, 48
  %v1058 = vpop.permute.xlu0 %1057
  %vm1059 = vcmask 523648
  %s1060 = scalar_lea.vmem %s1, 40
  %1061 = vst.msk [vmem:[%s1060] sm:$0xff] %vm1059, %v1058
  %s1062 = scalar_lea.vmem %s0, 19
  %v1063 = vld [vmem:[%s1062] sm:$0x1]
  %s1064 = scalar_lea.vmem %s0, 50
  %v1065 = vld [vmem:[%s1064] sm:$0x2]
  %vm1066 = vcmask 1041409
  %v1067 = vsel %vm1066, %v1065, %v1063
  %s1068 = scalar_lea.vmem %s0, 81
  %v1069 = vld [vmem:[%s1068] sm:$0x4]
  %vm1070 = vcmask 1042434
  %v1071 = vsel %vm1070, %v1069, %v1067
  %s1072 = scalar_lea.vmem %s0, 112
  %v1073 = vld [vmem:[%s1072] sm:$0x8]
  %vm1074 = vcmask 1043459
  %v1075 = vsel %vm1074, %v1073, %v1071
  %s1076 = scalar_lea.vmem %s0, 143
  %v1077 = vld [vmem:[%s1076] sm:$0x10]
  %vm1078 = vcmask 1044484
  %v1079 = vsel %vm1078, %v1077, %v1075
  %s1080 = scalar_lea.vmem %s0, 174
  %v1081 = vld [vmem:[%s1080] sm:$0x20]
  %vm1082 = vcmask 1045509
  %v1083 = vsel %vm1082, %v1081, %v1079
  %s1084 = scalar_lea.vmem %s0, 205
  %v1085 = vld [vmem:[%s1084] sm:$0x40]
  %vm1086 = vcmask 1046534
  %v1087 = vsel %vm1086, %v1085, %v1083
  %s1088 = scalar_lea.vmem %s0, 236
  %v1089 = vld [vmem:[%s1088] sm:$0x80]
  %vm1090 = vcmask 1047559
  %v1091 = vsel %vm1090, %v1089, %v1087
  %1092 = vrot.lane.b32.xlu0 %v1091, 48
  %v1093 = vpop.permute.xlu0 %1092
  %vm1094 = vcmask 523648
  %s1095 = scalar_lea.vmem %s1, 16
  %1096 = vst.msk [vmem:[%s1095] sm:$0xff] %vm1094, %v1093
  %s1097 = scalar_lea.vmem %s0, 275
  %v1098 = vld [vmem:[%s1097] sm:$0x1]
  %s1099 = scalar_lea.vmem %s0, 306
  %v1100 = vld [vmem:[%s1099] sm:$0x2]
  %vm1101 = vcmask 1041409
  %v1102 = vsel %vm1101, %v1100, %v1098
  %s1103 = scalar_lea.vmem %s0, 337
  %v1104 = vld [vmem:[%s1103] sm:$0x4]
  %vm1105 = vcmask 1042434
  %v1106 = vsel %vm1105, %v1104, %v1102
  %s1107 = scalar_lea.vmem %s0, 368
  %v1108 = vld [vmem:[%s1107] sm:$0x8]
  %vm1109 = vcmask 1043459
  %v1110 = vsel %vm1109, %v1108, %v1106
  %s1111 = scalar_lea.vmem %s0, 399
  %v1112 = vld [vmem:[%s1111] sm:$0x10]
  %vm1113 = vcmask 1044484
  %v1114 = vsel %vm1113, %v1112, %v1110
  %s1115 = scalar_lea.vmem %s0, 430
  %v1116 = vld [vmem:[%s1115] sm:$0x20]
  %vm1117 = vcmask 1045509
  %v1118 = vsel %vm1117, %v1116, %v1114
  %s1119 = scalar_lea.vmem %s0, 461
  %v1120 = vld [vmem:[%s1119] sm:$0x40]
  %vm1121 = vcmask 1046534
  %v1122 = vsel %vm1121, %v1120, %v1118
  %s1123 = scalar_lea.vmem %s0, 492
  %v1124 = vld [vmem:[%s1123] sm:$0x80]
  %vm1125 = vcmask 1047559
  %v1126 = vsel %vm1125, %v1124, %v1122
  %1127 = vrot.lane.b32.xlu0 %v1126, 48
  %v1128 = vpop.permute.xlu0 %1127
  %vm1129 = vcmask 523648
  %s1130 = scalar_lea.vmem %s1, 48
  %1131 = vst.msk [vmem:[%s1130] sm:$0xff] %vm1129, %v1128
  %s1132 = scalar_lea.vmem %s0, 2
  %v1133 = vld [vmem:[%s1132] sm:$0x1]
  %s1134 = scalar_lea.vmem %s0, 33
  %v1135 = vld [vmem:[%s1134] sm:$0x2]
  %vm1136 = vcmask 1041409
  %v1137 = vsel %vm1136, %v1135, %v1133
  %s1138 = scalar_lea.vmem %s0, 64
  %v1139 = vld [vmem:[%s1138] sm:$0x4]
  %vm1140 = vcmask 1042434
  %v1141 = vsel %vm1140, %v1139, %v1137
  %s1142 = scalar_lea.vmem %s0, 95
  %v1143 = vld [vmem:[%s1142] sm:$0x8]
  %vm1144 = vcmask 1043459
  %v1145 = vsel %vm1144, %v1143, %v1141
  %s1146 = scalar_lea.vmem %s0, 126
  %v1147 = vld [vmem:[%s1146] sm:$0x10]
  %vm1148 = vcmask 1044484
  %v1149 = vsel %vm1148, %v1147, %v1145
  %s1150 = scalar_lea.vmem %s0, 157
  %v1151 = vld [vmem:[%s1150] sm:$0x20]
  %vm1152 = vcmask 1045509
  %v1153 = vsel %vm1152, %v1151, %v1149
  %s1154 = scalar_lea.vmem %s0, 188
  %v1155 = vld [vmem:[%s1154] sm:$0x40]
  %vm1156 = vcmask 1046534
  %v1157 = vsel %vm1156, %v1155, %v1153
  %s1158 = scalar_lea.vmem %s0, 219
  %v1159 = vld [vmem:[%s1158] sm:$0x80]
  %vm1160 = vcmask 1047559
  %v1161 = vsel %vm1160, %v1159, %v1157
  %1162 = vrot.lane.b32.xlu0 %v1161, 32
  %v1163 = vpop.permute.xlu0 %1162
  %vm1164 = vcmask 392448
  %1165 = vst.msk [vmem:[%s1] sm:$0xff] %vm1164, %v1163
  %s1166 = scalar_lea.vmem %s0, 258
  %v1167 = vld [vmem:[%s1166] sm:$0x1]
  %s1168 = scalar_lea.vmem %s0, 289
  %v1169 = vld [vmem:[%s1168] sm:$0x2]
  %vm1170 = vcmask 1041409
  %v1171 = vsel %vm1170, %v1169, %v1167
  %s1172 = scalar_lea.vmem %s0, 320
  %v1173 = vld [vmem:[%s1172] sm:$0x4]
  %vm1174 = vcmask 1042434
  %v1175 = vsel %vm1174, %v1173, %v1171
  %s1176 = scalar_lea.vmem %s0, 351
  %v1177 = vld [vmem:[%s1176] sm:$0x8]
  %vm1178 = vcmask 1043459
  %v1179 = vsel %vm1178, %v1177, %v1175
  %s1180 = scalar_lea.vmem %s0, 382
  %v1181 = vld [vmem:[%s1180] sm:$0x10]
  %vm1182 = vcmask 1044484
  %v1183 = vsel %vm1182, %v1181, %v1179
  %s1184 = scalar_lea.vmem %s0, 413
  %v1185 = vld [vmem:[%s1184] sm:$0x20]
  %vm1186 = vcmask 1045509
  %v1187 = vsel %vm1186, %v1185, %v1183
  %s1188 = scalar_lea.vmem %s0, 444
  %v1189 = vld [vmem:[%s1188] sm:$0x40]
  %vm1190 = vcmask 1046534
  %v1191 = vsel %vm1190, %v1189, %v1187
  %s1192 = scalar_lea.vmem %s0, 475
  %v1193 = vld [vmem:[%s1192] sm:$0x80]
  %vm1194 = vcmask 1047559
  %v1195 = vsel %vm1194, %v1193, %v1191
  %1196 = vrot.lane.b32.xlu0 %v1195, 32
  %v1197 = vpop.permute.xlu0 %1196
  %vm1198 = vcmask 392448
  %s1199 = scalar_lea.vmem %s1, 32
  %1200 = vst.msk [vmem:[%s1199] sm:$0xff] %vm1198, %v1197
  %s1201 = scalar_lea.vmem %s0, 10
  %v1202 = vld [vmem:[%s1201] sm:$0x1]
  %s1203 = scalar_lea.vmem %s0, 41
  %v1204 = vld [vmem:[%s1203] sm:$0x2]
  %vm1205 = vcmask 1041409
  %v1206 = vsel %vm1205, %v1204, %v1202
  %s1207 = scalar_lea.vmem %s0, 72
  %v1208 = vld [vmem:[%s1207] sm:$0x4]
  %vm1209 = vcmask 1042434
  %v1210 = vsel %vm1209, %v1208, %v1206
  %s1211 = scalar_lea.vmem %s0, 103
  %v1212 = vld [vmem:[%s1211] sm:$0x8]
  %vm1213 = vcmask 1043459
  %v1214 = vsel %vm1213, %v1212, %v1210
  %s1215 = scalar_lea.vmem %s0, 134
  %v1216 = vld [vmem:[%s1215] sm:$0x10]
  %vm1217 = vcmask 1044484
  %v1218 = vsel %vm1217, %v1216, %v1214
  %s1219 = scalar_lea.vmem %s0, 165
  %v1220 = vld [vmem:[%s1219] sm:$0x20]
  %vm1221 = vcmask 1045509
  %v1222 = vsel %vm1221, %v1220, %v1218
  %s1223 = scalar_lea.vmem %s0, 196
  %v1224 = vld [vmem:[%s1223] sm:$0x40]
  %vm1225 = vcmask 1046534
  %v1226 = vsel %vm1225, %v1224, %v1222
  %s1227 = scalar_lea.vmem %s0, 227
  %v1228 = vld [vmem:[%s1227] sm:$0x80]
  %vm1229 = vcmask 1047559
  %v1230 = vsel %vm1229, %v1228, %v1226
  %1231 = vrot.lane.b32.xlu0 %v1230, 32
  %v1232 = vpop.permute.xlu0 %1231
  %vm1233 = vcmask 392448
  %s1234 = scalar_lea.vmem %s1, 8
  %1235 = vst.msk [vmem:[%s1234] sm:$0xff] %vm1233, %v1232
  %s1236 = scalar_lea.vmem %s0, 266
  %v1237 = vld [vmem:[%s1236] sm:$0x1]
  %s1238 = scalar_lea.vmem %s0, 297
  %v1239 = vld [vmem:[%s1238] sm:$0x2]
  %vm1240 = vcmask 1041409
  %v1241 = vsel %vm1240, %v1239, %v1237
  %s1242 = scalar_lea.vmem %s0, 328
  %v1243 = vld [vmem:[%s1242] sm:$0x4]
  %vm1244 = vcmask 1042434
  %v1245 = vsel %vm1244, %v1243, %v1241
  %s1246 = scalar_lea.vmem %s0, 359
  %v1247 = vld [vmem:[%s1246] sm:$0x8]
  %vm1248 = vcmask 1043459
  %v1249 = vsel %vm1248, %v1247, %v1245
  %s1250 = scalar_lea.vmem %s0, 390
  %v1251 = vld [vmem:[%s1250] sm:$0x10]
  %vm1252 = vcmask 1044484
  %v1253 = vsel %vm1252, %v1251, %v1249
  %s1254 = scalar_lea.vmem %s0, 421
  %v1255 = vld [vmem:[%s1254] sm:$0x20]
  %vm1256 = vcmask 1045509
  %v1257 = vsel %vm1256, %v1255, %v1253
  %s1258 = scalar_lea.vmem %s0, 452
  %v1259 = vld [vmem:[%s1258] sm:$0x40]
  %vm1260 = vcmask 1046534
  %v1261 = vsel %vm1260, %v1259, %v1257
  %s1262 = scalar_lea.vmem %s0, 483
  %v1263 = vld [vmem:[%s1262] sm:$0x80]
  %vm1264 = vcmask 1047559
  %v1265 = vsel %vm1264, %v1263, %v1261
  %1266 = vrot.lane.b32.xlu0 %v1265, 32
  %v1267 = vpop.permute.xlu0 %1266
  %vm1268 = vcmask 392448
  %s1269 = scalar_lea.vmem %s1, 40
  %1270 = vst.msk [vmem:[%s1269] sm:$0xff] %vm1268, %v1267
  %s1271 = scalar_lea.vmem %s0, 18
  %v1272 = vld [vmem:[%s1271] sm:$0x1]
  %s1273 = scalar_lea.vmem %s0, 49
  %v1274 = vld [vmem:[%s1273] sm:$0x2]
  %vm1275 = vcmask 1041409
  %v1276 = vsel %vm1275, %v1274, %v1272
  %s1277 = scalar_lea.vmem %s0, 80
  %v1278 = vld [vmem:[%s1277] sm:$0x4]
  %vm1279 = vcmask 1042434
  %v1280 = vsel %vm1279, %v1278, %v1276
  %s1281 = scalar_lea.vmem %s0, 111
  %v1282 = vld [vmem:[%s1281] sm:$0x8]
  %vm1283 = vcmask 1043459
  %v1284 = vsel %vm1283, %v1282, %v1280
  %s1285 = scalar_lea.vmem %s0, 142
  %v1286 = vld [vmem:[%s1285] sm:$0x10]
  %vm1287 = vcmask 1044484
  %v1288 = vsel %vm1287, %v1286, %v1284
  %s1289 = scalar_lea.vmem %s0, 173
  %v1290 = vld [vmem:[%s1289] sm:$0x20]
  %vm1291 = vcmask 1045509
  %v1292 = vsel %vm1291, %v1290, %v1288
  %s1293 = scalar_lea.vmem %s0, 204
  %v1294 = vld [vmem:[%s1293] sm:$0x40]
  %vm1295 = vcmask 1046534
  %v1296 = vsel %vm1295, %v1294, %v1292
  %s1297 = scalar_lea.vmem %s0, 235
  %v1298 = vld [vmem:[%s1297] sm:$0x80]
  %vm1299 = vcmask 1047559
  %v1300 = vsel %vm1299, %v1298, %v1296
  %1301 = vrot.lane.b32.xlu0 %v1300, 32
  %v1302 = vpop.permute.xlu0 %1301
  %vm1303 = vcmask 392448
  %s1304 = scalar_lea.vmem %s1, 16
  %1305 = vst.msk [vmem:[%s1304] sm:$0xff] %vm1303, %v1302
  %s1306 = scalar_lea.vmem %s0, 274
  %v1307 = vld [vmem:[%s1306] sm:$0x1]
  %s1308 = scalar_lea.vmem %s0, 305
  %v1309 = vld [vmem:[%s1308] sm:$0x2]
  %vm1310 = vcmask 1041409
  %v1311 = vsel %vm1310, %v1309, %v1307
  %s1312 = scalar_lea.vmem %s0, 336
  %v1313 = vld [vmem:[%s1312] sm:$0x4]
  %vm1314 = vcmask 1042434
  %v1315 = vsel %vm1314, %v1313, %v1311
  %s1316 = scalar_lea.vmem %s0, 367
  %v1317 = vld [vmem:[%s1316] sm:$0x8]
  %vm1318 = vcmask 1043459
  %v1319 = vsel %vm1318, %v1317, %v1315
  %s1320 = scalar_lea.vmem %s0, 398
  %v1321 = vld [vmem:[%s1320] sm:$0x10]
  %vm1322 = vcmask 1044484
  %v1323 = vsel %vm1322, %v1321, %v1319
  %s1324 = scalar_lea.vmem %s0, 429
  %v1325 = vld [vmem:[%s1324] sm:$0x20]
  %vm1326 = vcmask 1045509
  %v1327 = vsel %vm1326, %v1325, %v1323
  %s1328 = scalar_lea.vmem %s0, 460
  %v1329 = vld [vmem:[%s1328] sm:$0x40]
  %vm1330 = vcmask 1046534
  %v1331 = vsel %vm1330, %v1329, %v1327
  %s1332 = scalar_lea.vmem %s0, 491
  %v1333 = vld [vmem:[%s1332] sm:$0x80]
  %vm1334 = vcmask 1047559
  %v1335 = vsel %vm1334, %v1333, %v1331
  %1336 = vrot.lane.b32.xlu0 %v1335, 32
  %v1337 = vpop.permute.xlu0 %1336
  %vm1338 = vcmask 392448
  %s1339 = scalar_lea.vmem %s1, 48
  %1340 = vst.msk [vmem:[%s1339] sm:$0xff] %vm1338, %v1337
  %s1341 = scalar_lea.vmem %s0, 1
  %v1342 = vld [vmem:[%s1341] sm:$0x1]
  %s1343 = scalar_lea.vmem %s0, 32
  %v1344 = vld [vmem:[%s1343] sm:$0x2]
  %vm1345 = vcmask 1041409
  %v1346 = vsel %vm1345, %v1344, %v1342
  %s1347 = scalar_lea.vmem %s0, 63
  %v1348 = vld [vmem:[%s1347] sm:$0x4]
  %vm1349 = vcmask 1042434
  %v1350 = vsel %vm1349, %v1348, %v1346
  %s1351 = scalar_lea.vmem %s0, 94
  %v1352 = vld [vmem:[%s1351] sm:$0x8]
  %vm1353 = vcmask 1043459
  %v1354 = vsel %vm1353, %v1352, %v1350
  %s1355 = scalar_lea.vmem %s0, 125
  %v1356 = vld [vmem:[%s1355] sm:$0x10]
  %vm1357 = vcmask 1044484
  %v1358 = vsel %vm1357, %v1356, %v1354
  %s1359 = scalar_lea.vmem %s0, 156
  %v1360 = vld [vmem:[%s1359] sm:$0x20]
  %vm1361 = vcmask 1045509
  %v1362 = vsel %vm1361, %v1360, %v1358
  %s1363 = scalar_lea.vmem %s0, 187
  %v1364 = vld [vmem:[%s1363] sm:$0x40]
  %vm1365 = vcmask 1046534
  %v1366 = vsel %vm1365, %v1364, %v1362
  %s1367 = scalar_lea.vmem %s0, 218
  %v1368 = vld [vmem:[%s1367] sm:$0x80]
  %vm1369 = vcmask 1047559
  %v1370 = vsel %vm1369, %v1368, %v1366
  %1371 = vrot.lane.b32.xlu0 %v1370, 16
  %v1372 = vpop.permute.xlu0 %1371
  %vm1373 = vcmask 261248
  %1374 = vst.msk [vmem:[%s1] sm:$0xff] %vm1373, %v1372
  %s1375 = scalar_lea.vmem %s0, 257
  %v1376 = vld [vmem:[%s1375] sm:$0x1]
  %s1377 = scalar_lea.vmem %s0, 288
  %v1378 = vld [vmem:[%s1377] sm:$0x2]
  %vm1379 = vcmask 1041409
  %v1380 = vsel %vm1379, %v1378, %v1376
  %s1381 = scalar_lea.vmem %s0, 319
  %v1382 = vld [vmem:[%s1381] sm:$0x4]
  %vm1383 = vcmask 1042434
  %v1384 = vsel %vm1383, %v1382, %v1380
  %s1385 = scalar_lea.vmem %s0, 350
  %v1386 = vld [vmem:[%s1385] sm:$0x8]
  %vm1387 = vcmask 1043459
  %v1388 = vsel %vm1387, %v1386, %v1384
  %s1389 = scalar_lea.vmem %s0, 381
  %v1390 = vld [vmem:[%s1389] sm:$0x10]
  %vm1391 = vcmask 1044484
  %v1392 = vsel %vm1391, %v1390, %v1388
  %s1393 = scalar_lea.vmem %s0, 412
  %v1394 = vld [vmem:[%s1393] sm:$0x20]
  %vm1395 = vcmask 1045509
  %v1396 = vsel %vm1395, %v1394, %v1392
  %s1397 = scalar_lea.vmem %s0, 443
  %v1398 = vld [vmem:[%s1397] sm:$0x40]
  %vm1399 = vcmask 1046534
  %v1400 = vsel %vm1399, %v1398, %v1396
  %s1401 = scalar_lea.vmem %s0, 474
  %v1402 = vld [vmem:[%s1401] sm:$0x80]
  %vm1403 = vcmask 1047559
  %v1404 = vsel %vm1403, %v1402, %v1400
  %1405 = vrot.lane.b32.xlu0 %v1404, 16
  %v1406 = vpop.permute.xlu0 %1405
  %vm1407 = vcmask 261248
  %s1408 = scalar_lea.vmem %s1, 32
  %1409 = vst.msk [vmem:[%s1408] sm:$0xff] %vm1407, %v1406
  %s1410 = scalar_lea.vmem %s0, 9
  %v1411 = vld [vmem:[%s1410] sm:$0x1]
  %s1412 = scalar_lea.vmem %s0, 40
  %v1413 = vld [vmem:[%s1412] sm:$0x2]
  %vm1414 = vcmask 1041409
  %v1415 = vsel %vm1414, %v1413, %v1411
  %s1416 = scalar_lea.vmem %s0, 71
  %v1417 = vld [vmem:[%s1416] sm:$0x4]
  %vm1418 = vcmask 1042434
  %v1419 = vsel %vm1418, %v1417, %v1415
  %s1420 = scalar_lea.vmem %s0, 102
  %v1421 = vld [vmem:[%s1420] sm:$0x8]
  %vm1422 = vcmask 1043459
  %v1423 = vsel %vm1422, %v1421, %v1419
  %s1424 = scalar_lea.vmem %s0, 133
  %v1425 = vld [vmem:[%s1424] sm:$0x10]
  %vm1426 = vcmask 1044484
  %v1427 = vsel %vm1426, %v1425, %v1423
  %s1428 = scalar_lea.vmem %s0, 164
  %v1429 = vld [vmem:[%s1428] sm:$0x20]
  %vm1430 = vcmask 1045509
  %v1431 = vsel %vm1430, %v1429, %v1427
  %s1432 = scalar_lea.vmem %s0, 195
  %v1433 = vld [vmem:[%s1432] sm:$0x40]
  %vm1434 = vcmask 1046534
  %v1435 = vsel %vm1434, %v1433, %v1431
  %s1436 = scalar_lea.vmem %s0, 226
  %v1437 = vld [vmem:[%s1436] sm:$0x80]
  %vm1438 = vcmask 1047559
  %v1439 = vsel %vm1438, %v1437, %v1435
  %1440 = vrot.lane.b32.xlu0 %v1439, 16
  %v1441 = vpop.permute.xlu0 %1440
  %vm1442 = vcmask 261248
  %s1443 = scalar_lea.vmem %s1, 8
  %1444 = vst.msk [vmem:[%s1443] sm:$0xff] %vm1442, %v1441
  %s1445 = scalar_lea.vmem %s0, 265
  %v1446 = vld [vmem:[%s1445] sm:$0x1]
  %s1447 = scalar_lea.vmem %s0, 296
  %v1448 = vld [vmem:[%s1447] sm:$0x2]
  %vm1449 = vcmask 1041409
  %v1450 = vsel %vm1449, %v1448, %v1446
  %s1451 = scalar_lea.vmem %s0, 327
  %v1452 = vld [vmem:[%s1451] sm:$0x4]
  %vm1453 = vcmask 1042434
  %v1454 = vsel %vm1453, %v1452, %v1450
  %s1455 = scalar_lea.vmem %s0, 358
  %v1456 = vld [vmem:[%s1455] sm:$0x8]
  %vm1457 = vcmask 1043459
  %v1458 = vsel %vm1457, %v1456, %v1454
  %s1459 = scalar_lea.vmem %s0, 389
  %v1460 = vld [vmem:[%s1459] sm:$0x10]
  %vm1461 = vcmask 1044484
  %v1462 = vsel %vm1461, %v1460, %v1458
  %s1463 = scalar_lea.vmem %s0, 420
  %v1464 = vld [vmem:[%s1463] sm:$0x20]
  %vm1465 = vcmask 1045509
  %v1466 = vsel %vm1465, %v1464, %v1462
  %s1467 = scalar_lea.vmem %s0, 451
  %v1468 = vld [vmem:[%s1467] sm:$0x40]
  %vm1469 = vcmask 1046534
  %v1470 = vsel %vm1469, %v1468, %v1466
  %s1471 = scalar_lea.vmem %s0, 482
  %v1472 = vld [vmem:[%s1471] sm:$0x80]
  %vm1473 = vcmask 1047559
  %v1474 = vsel %vm1473, %v1472, %v1470
  %1475 = vrot.lane.b32.xlu0 %v1474, 16
  %v1476 = vpop.permute.xlu0 %1475
  %vm1477 = vcmask 261248
  %s1478 = scalar_lea.vmem %s1, 40
  %1479 = vst.msk [vmem:[%s1478] sm:$0xff] %vm1477, %v1476
  %s1480 = scalar_lea.vmem %s0, 17
  %v1481 = vld [vmem:[%s1480] sm:$0x1]
  %s1482 = scalar_lea.vmem %s0, 48
  %v1483 = vld [vmem:[%s1482] sm:$0x2]
  %vm1484 = vcmask 1041409
  %v1485 = vsel %vm1484, %v1483, %v1481
  %s1486 = scalar_lea.vmem %s0, 79
  %v1487 = vld [vmem:[%s1486] sm:$0x4]
  %vm1488 = vcmask 1042434
  %v1489 = vsel %vm1488, %v1487, %v1485
  %s1490 = scalar_lea.vmem %s0, 110
  %v1491 = vld [vmem:[%s1490] sm:$0x8]
  %vm1492 = vcmask 1043459
  %v1493 = vsel %vm1492, %v1491, %v1489
  %s1494 = scalar_lea.vmem %s0, 141
  %v1495 = vld [vmem:[%s1494] sm:$0x10]
  %vm1496 = vcmask 1044484
  %v1497 = vsel %vm1496, %v1495, %v1493
  %s1498 = scalar_lea.vmem %s0, 172
  %v1499 = vld [vmem:[%s1498] sm:$0x20]
  %vm1500 = vcmask 1045509
  %v1501 = vsel %vm1500, %v1499, %v1497
  %s1502 = scalar_lea.vmem %s0, 203
  %v1503 = vld [vmem:[%s1502] sm:$0x40]
  %vm1504 = vcmask 1046534
  %v1505 = vsel %vm1504, %v1503, %v1501
  %s1506 = scalar_lea.vmem %s0, 234
  %v1507 = vld [vmem:[%s1506] sm:$0x80]
  %vm1508 = vcmask 1047559
  %v1509 = vsel %vm1508, %v1507, %v1505
  %1510 = vrot.lane.b32.xlu0 %v1509, 16
  %v1511 = vpop.permute.xlu0 %1510
  %vm1512 = vcmask 261248
  %s1513 = scalar_lea.vmem %s1, 16
  %1514 = vst.msk [vmem:[%s1513] sm:$0xff] %vm1512, %v1511
  %s1515 = scalar_lea.vmem %s0, 273
  %v1516 = vld [vmem:[%s1515] sm:$0x1]
  %s1517 = scalar_lea.vmem %s0, 304
  %v1518 = vld [vmem:[%s1517] sm:$0x2]
  %vm1519 = vcmask 1041409
  %v1520 = vsel %vm1519, %v1518, %v1516
  %s1521 = scalar_lea.vmem %s0, 335
  %v1522 = vld [vmem:[%s1521] sm:$0x4]
  %vm1523 = vcmask 1042434
  %v1524 = vsel %vm1523, %v1522, %v1520
  %s1525 = scalar_lea.vmem %s0, 366
  %v1526 = vld [vmem:[%s1525] sm:$0x8]
  %vm1527 = vcmask 1043459
  %v1528 = vsel %vm1527, %v1526, %v1524
  %s1529 = scalar_lea.vmem %s0, 397
  %v1530 = vld [vmem:[%s1529] sm:$0x10]
  %vm1531 = vcmask 1044484
  %v1532 = vsel %vm1531, %v1530, %v1528
  %s1533 = scalar_lea.vmem %s0, 428
  %v1534 = vld [vmem:[%s1533] sm:$0x20]
  %vm1535 = vcmask 1045509
  %v1536 = vsel %vm1535, %v1534, %v1532
  %s1537 = scalar_lea.vmem %s0, 459
  %v1538 = vld [vmem:[%s1537] sm:$0x40]
  %vm1539 = vcmask 1046534
  %v1540 = vsel %vm1539, %v1538, %v1536
  %s1541 = scalar_lea.vmem %s0, 490
  %v1542 = vld [vmem:[%s1541] sm:$0x80]
  %vm1543 = vcmask 1047559
  %v1544 = vsel %vm1543, %v1542, %v1540
  %1545 = vrot.lane.b32.xlu0 %v1544, 16
  %v1546 = vpop.permute.xlu0 %1545
  %vm1547 = vcmask 261248
  %s1548 = scalar_lea.vmem %s1, 48
  %1549 = vst.msk [vmem:[%s1548] sm:$0xff] %vm1547, %v1546
  %s1550 = scalar_lea.vmem %s0, 25
  %v1551 = vld [vmem:[%s1550] sm:$0x1]
  %s1552 = scalar_lea.vmem %s0, 56
  %v1553 = vld [vmem:[%s1552] sm:$0x2]
  %vm1554 = vcmask 1041409
  %v1555 = vsel %vm1554, %v1553, %v1551
  %s1556 = scalar_lea.vmem %s0, 87
  %v1557 = vld [vmem:[%s1556] sm:$0x4]
  %vm1558 = vcmask 1042434
  %v1559 = vsel %vm1558, %v1557, %v1555
  %s1560 = scalar_lea.vmem %s0, 118
  %v1561 = vld [vmem:[%s1560] sm:$0x8]
  %vm1562 = vcmask 1043459
  %v1563 = vsel %vm1562, %v1561, %v1559
  %s1564 = scalar_lea.vmem %s0, 149
  %v1565 = vld [vmem:[%s1564] sm:$0x10]
  %vm1566 = vcmask 1044484
  %v1567 = vsel %vm1566, %v1565, %v1563
  %s1568 = scalar_lea.vmem %s0, 180
  %v1569 = vld [vmem:[%s1568] sm:$0x20]
  %vm1570 = vcmask 1045509
  %v1571 = vsel %vm1570, %v1569, %v1567
  %s1572 = scalar_lea.vmem %s0, 211
  %v1573 = vld [vmem:[%s1572] sm:$0x40]
  %vm1574 = vcmask 1046534
  %v1575 = vsel %vm1574, %v1573, %v1571
  %s1576 = scalar_lea.vmem %s0, 242
  %v1577 = vld [vmem:[%s1576] sm:$0x80]
  %vm1578 = vcmask 1047559
  %v1579 = vsel %vm1578, %v1577, %v1575
  %1580 = vrot.lane.b32.xlu0 %v1579, 16
  %v1581 = vpop.permute.xlu0 %1580
  %vm1582 = vcmask 261248
  %s1583 = scalar_lea.vmem %s1, 24
  %1584 = vst.msk [vmem:[%s1583] sm:$0xff] %vm1582, %v1581
  %s1585 = scalar_lea.vmem %s0, 281
  %v1586 = vld [vmem:[%s1585] sm:$0x1]
  %s1587 = scalar_lea.vmem %s0, 312
  %v1588 = vld [vmem:[%s1587] sm:$0x2]
  %vm1589 = vcmask 1041409
  %v1590 = vsel %vm1589, %v1588, %v1586
  %s1591 = scalar_lea.vmem %s0, 343
  %v1592 = vld [vmem:[%s1591] sm:$0x4]
  %vm1593 = vcmask 1042434
  %v1594 = vsel %vm1593, %v1592, %v1590
  %s1595 = scalar_lea.vmem %s0, 374
  %v1596 = vld [vmem:[%s1595] sm:$0x8]
  %vm1597 = vcmask 1043459
  %v1598 = vsel %vm1597, %v1596, %v1594
  %s1599 = scalar_lea.vmem %s0, 405
  %v1600 = vld [vmem:[%s1599] sm:$0x10]
  %vm1601 = vcmask 1044484
  %v1602 = vsel %vm1601, %v1600, %v1598
  %s1603 = scalar_lea.vmem %s0, 436
  %v1604 = vld [vmem:[%s1603] sm:$0x20]
  %vm1605 = vcmask 1045509
  %v1606 = vsel %vm1605, %v1604, %v1602
  %s1607 = scalar_lea.vmem %s0, 467
  %v1608 = vld [vmem:[%s1607] sm:$0x40]
  %vm1609 = vcmask 1046534
  %v1610 = vsel %vm1609, %v1608, %v1606
  %s1611 = scalar_lea.vmem %s0, 498
  %v1612 = vld [vmem:[%s1611] sm:$0x80]
  %vm1613 = vcmask 1047559
  %v1614 = vsel %vm1613, %v1612, %v1610
  %1615 = vrot.lane.b32.xlu0 %v1614, 16
  %v1616 = vpop.permute.xlu0 %1615
  %vm1617 = vcmask 261248
  %s1618 = scalar_lea.vmem %s1, 56
  %1619 = vst.msk [vmem:[%s1618] sm:$0xff] %vm1617, %v1616

// kernel: tile.19
$region0: #{tile.19}
  %s0 = inlined_call_operand.vmem [shape: f32[11,16,16], index: 0, kind: input, shape index: {}]
  %s1 = inlined_call_operand.vmem [shape: f32[176,16], index: 1, kind: output, shape index: {}]
  %v2 = vld [vmem:[%s0] ss:$8 sm:$0xf]
  %v3 = vld [vmem:[%s0] ss:$8 sm:$0xf0]
  %vm4 = vcmask 1047556
  %v5 = vsel %vm4, %v3, %v2
  %vm6 = vcmask 130048
  %7 = vst.msk [vmem:[%s1] ss:$8 sm:$0x3] %vm6, %v5
  %s8 = scalar_lea.vmem %s1, 4294967281
  %9 = vst.msk [vmem:[%s8] ss:$8 sm:$0xc] %vm6, %v5
  %s10 = scalar_lea.vmem %s1, 4294967266
  %11 = vst.msk [vmem:[%s10] ss:$8 sm:$0x30] %vm6, %v5
  %s12 = scalar_lea.vmem %s1, 4294967251
  %13 = vst.msk [vmem:[%s12] ss:$8 sm:$0xc0] %vm6, %v5
  %s14 = scalar_lea.vmem %s0, 64
  %v15 = vld [vmem:[%s14] ss:$8 sm:$0xf]
  %s16 = scalar_lea.vmem %s0, 64
  %v17 = vld [vmem:[%s16] ss:$8 sm:$0xf0]
  %vm18 = vcmask 1047556
  %v19 = vsel %vm18, %v17, %v15
  %vm20 = vcmask 130048
  %s21 = scalar_lea.vmem %s1, 4
  %22 = vst.msk [vmem:[%s21] ss:$8 sm:$0x3] %vm20, %v19
  %s23 = scalar_lea.vmem %s1, 4294967285
  %24 = vst.msk [vmem:[%s23] ss:$8 sm:$0xc] %vm20, %v19
  %s25 = scalar_lea.vmem %s1, 4294967270
  %26 = vst.msk [vmem:[%s25] ss:$8 sm:$0x30] %vm20, %v19
  %s27 = scalar_lea.vmem %s1, 4294967255
  %28 = vst.msk [vmem:[%s27] ss:$8 sm:$0xc0] %vm20, %v19
  %s29 = scalar_lea.vmem %s0, 128
  %v30 = vld [vmem:[%s29] ss:$8 sm:$0xf]
  %s31 = scalar_lea.vmem %s0, 128
  %v32 = vld [vmem:[%s31] ss:$8 sm:$0xf0]
  %vm33 = vcmask 1047556
  %v34 = vsel %vm33, %v32, %v30
  %vm35 = vcmask 130048
  %s36 = scalar_lea.vmem %s1, 16
  %37 = vst.msk [vmem:[%s36] ss:$8 sm:$0x3] %vm35, %v34
  %s38 = scalar_lea.vmem %s1, 1
  %39 = vst.msk [vmem:[%s38] ss:$8 sm:$0xc] %vm35, %v34
  %s40 = scalar_lea.vmem %s1, 4294967282
  %41 = vst.msk [vmem:[%s40] ss:$8 sm:$0x30] %vm35, %v34
  %s42 = scalar_lea.vmem %s1, 4294967267
  %43 = vst.msk [vmem:[%s42] ss:$8 sm:$0xc0] %vm35, %v34
  %s44 = scalar_lea.vmem %s0, 192
  %v45 = vld [vmem:[%s44] ss:$8 sm:$0xf]
  %s46 = scalar_lea.vmem %s0, 192
  %v47 = vld [vmem:[%s46] ss:$8 sm:$0xf0]
  %vm48 = vcmask 1047556
  %v49 = vsel %vm48, %v47, %v45
  %vm50 = vcmask 130048
  %s51 = scalar_lea.vmem %s1, 20
  %52 = vst.msk [vmem:[%s51] ss:$8 sm:$0x3] %vm50, %v49
  %s53 = scalar_lea.vmem %s1, 5
  %54 = vst.msk [vmem:[%s53] ss:$8 sm:$0xc] %vm50, %v49
  %s55 = scalar_lea.vmem %s1, 4294967286
  %56 = vst.msk [vmem:[%s55] ss:$8 sm:$0x30] %vm50, %v49
  %s57 = scalar_lea.vmem %s1, 4294967271
  %58 = vst.msk [vmem:[%s57] ss:$8 sm:$0xc0] %vm50, %v49
  %s59 = scalar_lea.vmem %s0, 7
  %s60 = smov 3
  %v61 = vld [vmem:[%s59] ss:$16 sm:%s60]
  %s62 = scalar_lea.vmem %s0, 7
  %s63 = smov 12
  %v64 = vld [vmem:[%s62] ss:$16 sm:%s63]
  %vm65 = vcmask 1043458
  %v66 = vsel %vm65, %v64, %v61
  %s67 = scalar_lea.vmem %s0, 7
  %s68 = smov 48
  %v69 = vld [vmem:[%s67] ss:$16 sm:%s68]
  %vm70 = vcmask 1045508
  %v71 = vsel %vm70, %v69, %v66
  %s72 = scalar_lea.vmem %s0, 7
  %s73 = smov 192
  %v74 = vld [vmem:[%s72] ss:$16 sm:%s73]
  %vm75 = vcmask 1047558
  %v76 = vsel %vm75, %v74, %v71
  %77 = vrot.lane.b32.xlu0 %v76, 112
  %v78 = vpop.permute.xlu0 %77
  %vm79 = vcmask 1048448
  %80 = vst.msk [vmem:[%s1] sm:$0xff] %vm79, %v78
  %s81 = scalar_lea.vmem %s0, 135
  %s82 = smov 3
  %v83 = vld [vmem:[%s81] ss:$16 sm:%s82]
  %s84 = scalar_lea.vmem %s0, 135
  %s85 = smov 12
  %v86 = vld [vmem:[%s84] ss:$16 sm:%s85]
  %vm87 = vcmask 1043458
  %v88 = vsel %vm87, %v86, %v83
  %s89 = scalar_lea.vmem %s0, 135
  %s90 = smov 48
  %v91 = vld [vmem:[%s89] ss:$16 sm:%s90]
  %vm92 = vcmask 1045508
  %v93 = vsel %vm92, %v91, %v88
  %s94 = scalar_lea.vmem %s0, 135
  %s95 = smov 192
  %v96 = vld [vmem:[%s94] ss:$16 sm:%s95]
  %vm97 = vcmask 1047558
  %v98 = vsel %vm97, %v96, %v93
  %99 = vrot.lane.b32.xlu0 %v98, 112
  %v100 = vpop.permute.xlu0 %99
  %vm101 = vcmask 1048448
  %s102 = scalar_lea.vmem %s1, 16
  %103 = vst.msk [vmem:[%s102] sm:$0xff] %vm101, %v100
  %s104 = scalar_lea.vmem %s0, 6
  %s105 = smov 3
  %v106 = vld [vmem:[%s104] ss:$16 sm:%s105]
  %s107 = scalar_lea.vmem %s0, 6
  %s108 = smov 12
  %v109 = vld [vmem:[%s107] ss:$16 sm:%s108]
  %vm110 = vcmask 1043458
  %v111 = vsel %vm110, %v109, %v106
  %s112 = scalar_lea.vmem %s0, 6
  %s113 = smov 48
  %v114 = vld [vmem:[%s112] ss:$16 sm:%s113]
  %vm115 = vcmask 1045508
  %v116 = vsel %vm115, %v114, %v111
  %s117 = scalar_lea.vmem %s0, 6
  %s118 = smov 192
  %v119 = vld [vmem:[%s117] ss:$16 sm:%s118]
  %vm120 = vcmask 1047558
  %v121 = vsel %vm120, %v119, %v116
  %122 = vrot.lane.b32.xlu0 %v121, 96
  %v123 = vpop.permute.xlu0 %122
  %vm124 = vcmask 917248
  %125 = vst.msk [vmem:[%s1] sm:$0xff] %vm124, %v123
  %s126 = scalar_lea.vmem %s0, 134
  %s127 = smov 3
  %v128 = vld [vmem:[%s126] ss:$16 sm:%s127]
  %s129 = scalar_lea.vmem %s0, 134
  %s130 = smov 12
  %v131 = vld [vmem:[%s129] ss:$16 sm:%s130]
  %vm132 = vcmask 1043458
  %v133 = vsel %vm132, %v131, %v128
  %s134 = scalar_lea.vmem %s0, 134
  %s135 = smov 48
  %v136 = vld [vmem:[%s134] ss:$16 sm:%s135]
  %vm137 = vcmask 1045508
  %v138 = vsel %vm137, %v136, %v133
  %s139 = scalar_lea.vmem %s0, 134
  %s140 = smov 192
  %v141 = vld [vmem:[%s139] ss:$16 sm:%s140]
  %vm142 = vcmask 1047558
  %v143 = vsel %vm142, %v141, %v138
  %144 = vrot.lane.b32.xlu0 %v143, 96
  %v145 = vpop.permute.xlu0 %144
  %vm146 = vcmask 917248
  %s147 = scalar_lea.vmem %s1, 16
  %148 = vst.msk [vmem:[%s147] sm:$0xff] %vm146, %v145
  %s149 = scalar_lea.vmem %s0, 5
  %s150 = smov 3
  %v151 = vld [vmem:[%s149] ss:$16 sm:%s150]
  %s152 = scalar_lea.vmem %s0, 5
  %s153 = smov 12
  %v154 = vld [vmem:[%s152] ss:$16 sm:%s153]
  %vm155 = vcmask 1043458
  %v156 = vsel %vm155, %v154, %v151
  %s157 = scalar_lea.vmem %s0, 5
  %s158 = smov 48
  %v159 = vld [vmem:[%s157] ss:$16 sm:%s158]
  %vm160 = vcmask 1045508
  %v161 = vsel %vm160, %v159, %v156
  %s162 = scalar_lea.vmem %s0, 5
  %s163 = smov 192
  %v164 = vld [vmem:[%s162] ss:$16 sm:%s163]
  %vm165 = vcmask 1047558
  %v166 = vsel %vm165, %v164, %v161
  %167 = vrot.lane.b32.xlu0 %v166, 80
  %v168 = vpop.permute.xlu0 %167
  %vm169 = vcmask 786048
  %170 = vst.msk [vmem:[%s1] sm:$0xff] %vm169, %v168
  %s171 = scalar_lea.vmem %s0, 133
  %s172 = smov 3
  %v173 = vld [vmem:[%s171] ss:$16 sm:%s172]
  %s174 = scalar_lea.vmem %s0, 133
  %s175 = smov 12
  %v176 = vld [vmem:[%s174] ss:$16 sm:%s175]
  %vm177 = vcmask 1043458
  %v178 = vsel %vm177, %v176, %v173
  %s179 = scalar_lea.vmem %s0, 133
  %s180 = smov 48
  %v181 = vld [vmem:[%s179] ss:$16 sm:%s180]
  %vm182 = vcmask 1045508
  %v183 = vsel %vm182, %v181, %v178
  %s184 = scalar_lea.vmem %s0, 133
  %s185 = smov 192
  %v186 = vld [vmem:[%s184] ss:$16 sm:%s185]
  %vm187 = vcmask 1047558
  %v188 = vsel %vm187, %v186, %v183
  %189 = vrot.lane.b32.xlu0 %v188, 80
  %v190 = vpop.permute.xlu0 %189
  %vm191 = vcmask 786048
  %s192 = scalar_lea.vmem %s1, 16
  %193 = vst.msk [vmem:[%s192] sm:$0xff] %vm191, %v190
  %s194 = scalar_lea.vmem %s0, 4
  %s195 = smov 3
  %v196 = vld [vmem:[%s194] ss:$16 sm:%s195]
  %s197 = scalar_lea.vmem %s0, 4
  %s198 = smov 12
  %v199 = vld [vmem:[%s197] ss:$16 sm:%s198]
  %vm200 = vcmask 1043458
  %v201 = vsel %vm200, %v199, %v196
  %s202 = scalar_lea.vmem %s0, 4
  %s203 = smov 48
  %v204 = vld [vmem:[%s202] ss:$16 sm:%s203]
  %vm205 = vcmask 1045508
  %v206 = vsel %vm205, %v204, %v201
  %s207 = scalar_lea.vmem %s0, 4
  %s208 = smov 192
  %v209 = vld [vmem:[%s207] ss:$16 sm:%s208]
  %vm210 = vcmask 1047558
  %v211 = vsel %vm210, %v209, %v206
  %212 = vrot.lane.b32.xlu0 %v211, 64
  %v213 = vpop.permute.xlu0 %212
  %vm214 = vcmask 654848
  %215 = vst.msk [vmem:[%s1] sm:$0xff] %vm214, %v213
  %s216 = scalar_lea.vmem %s0, 132
  %s217 = smov 3
  %v218 = vld [vmem:[%s216] ss:$16 sm:%s217]
  %s219 = scalar_lea.vmem %s0, 132
  %s220 = smov 12
  %v221 = vld [vmem:[%s219] ss:$16 sm:%s220]
  %vm222 = vcmask 1043458
  %v223 = vsel %vm222, %v221, %v218
  %s224 = scalar_lea.vmem %s0, 132
  %s225 = smov 48
  %v226 = vld [vmem:[%s224] ss:$16 sm:%s225]
  %vm227 = vcmask 1045508
  %v228 = vsel %vm227, %v226, %v223
  %s229 = scalar_lea.vmem %s0, 132
  %s230 = smov 192
  %v231 = vld [vmem:[%s229] ss:$16 sm:%s230]
  %vm232 = vcmask 1047558
  %v233 = vsel %vm232, %v231, %v228
  %234 = vrot.lane.b32.xlu0 %v233, 64
  %v235 = vpop.permute.xlu0 %234
  %vm236 = vcmask 654848
  %s237 = scalar_lea.vmem %s1, 16
  %238 = vst.msk [vmem:[%s237] sm:$0xff] %vm236, %v235
  %s239 = scalar_lea.vmem %s0, 3
  %s240 = smov 3
  %v241 = vld [vmem:[%s239] ss:$16 sm:%s240]
  %s242 = scalar_lea.vmem %s0, 3
  %s243 = smov 12
  %v244 = vld [vmem:[%s242] ss:$16 sm:%s243]
  %vm245 = vcmask 1043458
  %v246 = vsel %vm245, %v244, %v241
  %s247 = scalar_lea.vmem %s0, 3
  %s248 = smov 48
  %v249 = vld [vmem:[%s247] ss:$16 sm:%s248]
  %vm250 = vcmask 1045508
  %v251 = vsel %vm250, %v249, %v246
  %s252 = scalar_lea.vmem %s0, 3
  %s253 = smov 192
  %v254 = vld [vmem:[%s252] ss:$16 sm:%s253]
  %vm255 = vcmask 1047558
  %v256 = vsel %vm255, %v254, %v251
  %257 = vrot.lane.b32.xlu0 %v256, 48
  %v258 = vpop.permute.xlu0 %257
  %vm259 = vcmask 523648
  %260 = vst.msk [vmem:[%s1] sm:$0xff] %vm259, %v258
  %s261 = scalar_lea.vmem %s0, 131
  %s262 = smov 3
  %v263 = vld [vmem:[%s261] ss:$16 sm:%s262]
  %s264 = scalar_lea.vmem %s0, 131
  %s265 = smov 12
  %v266 = vld [vmem:[%s264] ss:$16 sm:%s265]
  %vm267 = vcmask 1043458
  %v268 = vsel %vm267, %v266, %v263
  %s269 = scalar_lea.vmem %s0, 131
  %s270 = smov 48
  %v271 = vld [vmem:[%s269] ss:$16 sm:%s270]
  %vm272 = vcmask 1045508
  %v273 = vsel %vm272, %v271, %v268
  %s274 = scalar_lea.vmem %s0, 131
  %s275 = smov 192
  %v276 = vld [vmem:[%s274] ss:$16 sm:%s275]
  %vm277 = vcmask 1047558
  %v278 = vsel %vm277, %v276, %v273
  %279 = vrot.lane.b32.xlu0 %v278, 48
  %v280 = vpop.permute.xlu0 %279
  %vm281 = vcmask 523648
  %s282 = scalar_lea.vmem %s1, 16
  %283 = vst.msk [vmem:[%s282] sm:$0xff] %vm281, %v280
  %s284 = scalar_lea.vmem %s0, 2
  %s285 = smov 3
  %v286 = vld [vmem:[%s284] ss:$16 sm:%s285]
  %s287 = scalar_lea.vmem %s0, 2
  %s288 = smov 12
  %v289 = vld [vmem:[%s287] ss:$16 sm:%s288]
  %vm290 = vcmask 1043458
  %v291 = vsel %vm290, %v289, %v286
  %s292 = scalar_lea.vmem %s0, 2
  %s293 = smov 48
  %v294 = vld [vmem:[%s292] ss:$16 sm:%s293]
  %vm295 = vcmask 1045508
  %v296 = vsel %vm295, %v294, %v291
  %s297 = scalar_lea.vmem %s0, 2
  %s298 = smov 192
  %v299 = vld [vmem:[%s297] ss:$16 sm:%s298]
  %vm300 = vcmask 1047558
  %v301 = vsel %vm300, %v299, %v296
  %302 = vrot.lane.b32.xlu0 %v301, 32
  %v303 = vpop.permute.xlu0 %302
  %vm304 = vcmask 392448
  %305 = vst.msk [vmem:[%s1] sm:$0xff] %vm304, %v303
  %s306 = scalar_lea.vmem %s0, 10
  %s307 = smov 3
  %v308 = vld [vmem:[%s306] ss:$16 sm:%s307]
  %s309 = scalar_lea.vmem %s0, 10
  %s310 = smov 12
  %v311 = vld [vmem:[%s309] ss:$16 sm:%s310]
  %vm312 = vcmask 1043458
  %v313 = vsel %vm312, %v311, %v308
  %s314 = scalar_lea.vmem %s0, 10
  %s315 = smov 48
  %v316 = vld [vmem:[%s314] ss:$16 sm:%s315]
  %vm317 = vcmask 1045508
  %v318 = vsel %vm317, %v316, %v313
  %s319 = scalar_lea.vmem %s0, 10
  %s320 = smov 192
  %v321 = vld [vmem:[%s319] ss:$16 sm:%s320]
  %vm322 = vcmask 1047558
  %v323 = vsel %vm322, %v321, %v318
  %324 = vrot.lane.b32.xlu0 %v323, 32
  %v325 = vpop.permute.xlu0 %324
  %vm326 = vcmask 392448
  %s327 = scalar_lea.vmem %s1, 8
  %328 = vst.msk [vmem:[%s327] sm:$0xff] %vm326, %v325
  %s329 = scalar_lea.vmem %s0, 130
  %s330 = smov 3
  %v331 = vld [vmem:[%s329] ss:$16 sm:%s330]
  %s332 = scalar_lea.vmem %s0, 130
  %s333 = smov 12
  %v334 = vld [vmem:[%s332] ss:$16 sm:%s333]
  %vm335 = vcmask 1043458
  %v336 = vsel %vm335, %v334, %v331
  %s337 = scalar_lea.vmem %s0, 130
  %s338 = smov 48
  %v339 = vld [vmem:[%s337] ss:$16 sm:%s338]
  %vm340 = vcmask 1045508
  %v341 = vsel %vm340, %v339, %v336
  %s342 = scalar_lea.vmem %s0, 130
  %s343 = smov 192
  %v344 = vld [vmem:[%s342] ss:$16 sm:%s343]
  %vm345 = vcmask 1047558
  %v346 = vsel %vm345, %v344, %v341
  %347 = vrot.lane.b32.xlu0 %v346, 32
  %v348 = vpop.permute.xlu0 %347
  %vm349 = vcmask 392448
  %s350 = scalar_lea.vmem %s1, 16
  %351 = vst.msk [vmem:[%s350] sm:$0xff] %vm349, %v348
  %s352 = scalar_lea.vmem %s0, 138
  %s353 = smov 3
  %v354 = vld [vmem:[%s352] ss:$16 sm:%s353]
  %s355 = scalar_lea.vmem %s0, 138
  %s356 = smov 12
  %v357 = vld [vmem:[%s355] ss:$16 sm:%s356]
  %vm358 = vcmask 1043458
  %v359 = vsel %vm358, %v357, %v354
  %s360 = scalar_lea.vmem %s0, 138
  %s361 = smov 48
  %v362 = vld [vmem:[%s360] ss:$16 sm:%s361]
  %vm363 = vcmask 1045508
  %v364 = vsel %vm363, %v362, %v359
  %s365 = scalar_lea.vmem %s0, 138
  %s366 = smov 192
  %v367 = vld [vmem:[%s365] ss:$16 sm:%s366]
  %vm368 = vcmask 1047558
  %v369 = vsel %vm368, %v367, %v364
  %370 = vrot.lane.b32.xlu0 %v369, 32
  %v371 = vpop.permute.xlu0 %370
  %vm372 = vcmask 392448
  %s373 = scalar_lea.vmem %s1, 24
  %374 = vst.msk [vmem:[%s373] sm:$0xff] %vm372, %v371
  %s375 = scalar_lea.vmem %s0, 1
  %s376 = smov 3
  %v377 = vld [vmem:[%s375] ss:$16 sm:%s376]
  %s378 = scalar_lea.vmem %s0, 1
  %s379 = smov 12
  %v380 = vld [vmem:[%s378] ss:$16 sm:%s379]
  %vm381 = vcmask 1043458
  %v382 = vsel %vm381, %v380, %v377
  %s383 = scalar_lea.vmem %s0, 1
  %s384 = smov 48
  %v385 = vld [vmem:[%s383] ss:$16 sm:%s384]
  %vm386 = vcmask 1045508
  %v387 = vsel %vm386, %v385, %v382
  %s388 = scalar_lea.vmem %s0, 1
  %s389 = smov 192
  %v390 = vld [vmem:[%s388] ss:$16 sm:%s389]
  %vm391 = vcmask 1047558
  %v392 = vsel %vm391, %v390, %v387
  %393 = vrot.lane.b32.xlu0 %v392, 16
  %v394 = vpop.permute.xlu0 %393
  %vm395 = vcmask 261248
  %396 = vst.msk [vmem:[%s1] sm:$0xff] %vm395, %v394
  %s397 = scalar_lea.vmem %s0, 9
  %s398 = smov 3
  %v399 = vld [vmem:[%s397] ss:$16 sm:%s398]
  %s400 = scalar_lea.vmem %s0, 9
  %s401 = smov 12
  %v402 = vld [vmem:[%s400] ss:$16 sm:%s401]
  %vm403 = vcmask 1043458
  %v404 = vsel %vm403, %v402, %v399
  %s405 = scalar_lea.vmem %s0, 9
  %s406 = smov 48
  %v407 = vld [vmem:[%s405] ss:$16 sm:%s406]
  %vm408 = vcmask 1045508
  %v409 = vsel %vm408, %v407, %v404
  %s410 = scalar_lea.vmem %s0, 9
  %s411 = smov 192
  %v412 = vld [vmem:[%s410] ss:$16 sm:%s411]
  %vm413 = vcmask 1047558
  %v414 = vsel %vm413, %v412, %v409
  %415 = vrot.lane.b32.xlu0 %v414, 16
  %v416 = vpop.permute.xlu0 %415
  %vm417 = vcmask 261248
  %s418 = scalar_lea.vmem %s1, 8
  %419 = vst.msk [vmem:[%s418] sm:$0xff] %vm417, %v416
  %s420 = scalar_lea.vmem %s0, 129
  %s421 = smov 3
  %v422 = vld [vmem:[%s420] ss:$16 sm:%s421]
  %s423 = scalar_lea.vmem %s0, 129
  %s424 = smov 12
  %v425 = vld [vmem:[%s423] ss:$16 sm:%s424]
  %vm426 = vcmask 1043458
  %v427 = vsel %vm426, %v425, %v422
  %s428 = scalar_lea.vmem %s0, 129
  %s429 = smov 48
  %v430 = vld [vmem:[%s428] ss:$16 sm:%s429]
  %vm431 = vcmask 1045508
  %v432 = vsel %vm431, %v430, %v427
  %s433 = scalar_lea.vmem %s0, 129
  %s434 = smov 192
  %v435 = vld [vmem:[%s433] ss:$16 sm:%s434]
  %vm436 = vcmask 1047558
  %v437 = vsel %vm436, %v435, %v432
  %438 = vrot.lane.b32.xlu0 %v437, 16
  %v439 = vpop.permute.xlu0 %438
  %vm440 = vcmask 261248
  %s441 = scalar_lea.vmem %s1, 16
  %442 = vst.msk [vmem:[%s441] sm:$0xff] %vm440, %v439
  %s443 = scalar_lea.vmem %s0, 137
  %s444 = smov 3
  %v445 = vld [vmem:[%s443] ss:$16 sm:%s444]
  %s446 = scalar_lea.vmem %s0, 137
  %s447 = smov 12
  %v448 = vld [vmem:[%s446] ss:$16 sm:%s447]
  %vm449 = vcmask 1043458
  %v450 = vsel %vm449, %v448, %v445
  %s451 = scalar_lea.vmem %s0, 137
  %s452 = smov 48
  %v453 = vld [vmem:[%s451] ss:$16 sm:%s452]
  %vm454 = vcmask 1045508
  %v455 = vsel %vm454, %v453, %v450
  %s456 = scalar_lea.vmem %s0, 137
  %s457 = smov 192
  %v458 = vld [vmem:[%s456] ss:$16 sm:%s457]
  %vm459 = vcmask 1047558
  %v460 = vsel %vm459, %v458, %v455
  %461 = vrot.lane.b32.xlu0 %v460, 16
  %v462 = vpop.permute.xlu0 %461
  %vm463 = vcmask 261248
  %s464 = scalar_lea.vmem %s1, 24
  %465 = vst.msk [vmem:[%s464] sm:$0xff] %vm463, %v462

// kernel: cnn_forward.3
$region0: #{cnn_forward.3}
  #allocation0 [shape = 'u32[]', space=smem, size = 0x4, offset = 0x4, fixed_abs, tag = 'smem constant byte address 0x4 - core index']
  #allocation1 [shape = 'u32[144,128]{1,0:T(1,128)}', space=vmem, size = 0x12000, scoped, tag = 'internal scratch']
  #allocation2 [shape = 'f32[1,416]{1,0:T(1,128)}', space=vmem, size = 0x800, scoped, tag = 'scratch operand']
  #allocation3 [shape = 'f32[1,416]{1,0:T(1,128)}', space=vmem, size = 0x800, scoped, tag = 'scratch operand']
  %s0 = inlined_call_operand.vmem [shape: bf16[56,28], index: 0, kind: input, shape index: {}]
  %s1 = inlined_call_operand.vmem [shape: bf16[84,416], index: 1, kind: input, shape index: {}]
  %s2 = inlined_call_operand.vmem [shape: f32[416,16], index: 2, kind: input, shape index: {}]
  %s3 = inlined_call_operand.vmem [shape: f32[16,416], index: 3, kind: input, shape index: {}]
  %s4 = inlined_call_operand.vmem [shape: f32[1,16], index: 4, kind: input, shape index: {}]
  %s5 = inlined_call_operand.vmem [shape: f32[1,16], index: 5, kind: input, shape index: {}]
  %s6 = inlined_call_operand.vmem [shape: f32[54,1], index: 6, kind: input, shape index: {}]
  %s7 = inlined_call_operand.vmem [shape: bf16[26,54], index: 7, kind: input, shape index: {}]
  %s8 = inlined_call_operand.vmem [shape: bf16[26,54], index: 8, kind: input, shape index: {}]
  %s9 = inlined_call_operand.vmem [shape: bf16[416,208], index: 9, kind: input, shape index: {}]
  %s10 = inlined_call_operand.vmem [shape: bf16[416,208], index: 10, kind: input, shape index: {}]
  %s11 = inlined_call_operand.vmem [shape: bf16[26,208], index: 11, kind: output, shape index: {}]
  %s12 = sld [smem:[#allocation0]]
  $region93: #{cnn_forward.3} parent=0
    _
  %s14 = ssub.s32 1, %s12
  %s15 = scalar_select 0, %s14, %s12
  loop: start=0, step=1, limit=4
  $region2: #{cnn_forward.3} parent=0 // loop_pre_header
    _
  $region3: #{cnn_forward.3} parent=0 // loop_header
    %s17 = sphi 0, %s21
    %p18 = scmp.ge.s32.totalorder %s17, 4
    %s24 = sphi 0, %s36
    %s25 = sphi 0, %s32
    %s26 = sphi 0, %s24
    %s27 = sphi 0, %s25
    %s28 = sphi 0, %s26
    %s29 = sphi 0, %s27
    %s39 = sphi 0, %s41
    %s42 = sphi 0, %s39
    %s43 = sphi 0, %s42
    %s59 = sphi 0, %s43
    %s63 = sphi 0, %s63
    %s65 = sphi 0, %s63
    %s66 = sphi 0, %s65
    %s80 = sphi 0, %s66
    %s84 = sphi 0, %s84
    %s86 = sphi 0, %s84
    %s87 = sphi 0, %s86
    %s101 = sphi 0, %s87
    %s105 = sphi 0, %s105
    %s107 = sphi 0, %s105
    %s108 = sphi 0, %s107
    %s122 = sphi 0, %s108
    %s126 = sphi 0, %s126
    %s128 = sphi 0, %s126
    %s129 = sphi 0, %s128
    %s143 = sphi 0, %s129
    %s147 = sphi 0, %s147
    %s149 = sphi 0, %s147
    %s150 = sphi 0, %s149
    %s164 = sphi 0, %s150
    %s168 = sphi 0, %s168
    %s170 = sphi 0, %s168
    %s171 = sphi 0, %s170
    %s185 = sphi 0, %s171
    %s189 = sphi 0, %s189
    %s191 = sphi 0, %s189
    %s192 = sphi 0, %s191
    %s206 = sphi 0, %s192
    %s210 = sphi 0, %s210
    %s212 = sphi 0, %s210
    %s213 = sphi 0, %s212
    %s227 = sphi 0, %s213
    %s231 = sphi 0, %s231
    %s233 = sphi 0, %s231
    %s234 = sphi 0, %s233
    %s248 = sphi 0, %s234
    %s252 = sphi 0, %s252
    %s254 = sphi 0, %s252
    %s255 = sphi 0, %s254
    %s269 = sphi 0, %s255
    %s277 = sphi 0, %s279
    %s280 = sphi 0, %s277
    %s281 = sphi 0, %s280
    %s297 = sphi 0, %s281
  $region4: #{cnn_forward.3} parent=0 // loop_header_branch
    %20 = sbr.rel (%p18) target = $region8
  $region5: #{cnn_forward.3} parent=0 // loop_body
    %s22 = ssub.s32 %s17, 1
    %s23 = ssub.s32 %s17, 2
    %s30 = sadd.s32 1, %s25
    %p31 = scmp.ge.s32.totalorder %s30, 1
    %s32 = scalar_select %p31, 0, %s30
    %s33 = sadd.s32 1, %s24
    %s34 = scalar_select %p31, %s33, %s24
    %p35 = scmp.ge.s32.totalorder %s34, 2
    %s36 = scalar_select %p35, 0, %s34
    %s37 = ssub.s32 %s25, %s32
    %p38 = scmp.eq.s32.totalorder %s37, 0
    %s40 = sadd.s32 %s39, 1
    %s41 = scalar_select %p38, %s39, %s40
    %p44 = pneg %p38
    %p45 = scmp.eq.s32.totalorder %s17, 1
    %p46 = por %p44, %p45
    %p47 = scmp.ne.s32.totalorder %s39, %s42
    %p48 = scmp.eq.s32.totalorder %s17, 0
    %p49 = por %p47, %p48
    %p50 = scmp.ne.s32.totalorder %s39, %s42
    %p51 = scmp.eq.s32.totalorder %s22, 1
    %p52 = por %p50, %p51
    %p53 = scmp.ne.s32.totalorder %s42, %s43
    %p54 = scmp.eq.s32.totalorder %s22, 0
    %p55 = por %p53, %p54
    %p56 = scmp.ne.s32.totalorder %s42, %s43
    %p57 = scmp.eq.s32.totalorder %s23, 1
    %p58 = por %p56, %p57
    %p60 = scmp.ne.s32.totalorder %s43, %s59
    %p61 = scmp.eq.s32.totalorder %s23, 0
    %p62 = por %p60, %p61
    %s64 = sadd.s32 %s63, 1
    %p67 = scmp.eq.s32.totalorder %s17, 1
    %p68 = scmp.ne.s32.totalorder %s63, %s65
    %p69 = scmp.eq.s32.totalorder %s17, 0
    %p70 = por %p68, %p69
    %p71 = scmp.ne.s32.totalorder %s63, %s65
    %p72 = scmp.eq.s32.totalorder %s22, 1
    %p73 = por %p71, %p72
    %p74 = scmp.ne.s32.totalorder %s65, %s66
    %p75 = scmp.eq.s32.totalorder %s22, 0
    %p76 = por %p74, %p75
    %p77 = scmp.ne.s32.totalorder %s65, %s66
    %p78 = scmp.eq.s32.totalorder %s23, 1
    %p79 = por %p77, %p78
    %p81 = scmp.ne.s32.totalorder %s66, %s80
    %p82 = scmp.eq.s32.totalorder %s23, 0
    %p83 = por %p81, %p82
    %s85 = sadd.s32 %s84, 1
    %p88 = scmp.eq.s32.totalorder %s17, 1
    %p89 = scmp.ne.s32.totalorder %s84, %s86
    %p90 = scmp.eq.s32.totalorder %s17, 0
    %p91 = por %p89, %p90
    %p92 = scmp.ne.s32.totalorder %s84, %s86
    %p93 = scmp.eq.s32.totalorder %s22, 1
    %p94 = por %p92, %p93
    %p95 = scmp.ne.s32.totalorder %s86, %s87
    %p96 = scmp.eq.s32.totalorder %s22, 0
    %p97 = por %p95, %p96
    %p98 = scmp.ne.s32.totalorder %s86, %s87
    %p99 = scmp.eq.s32.totalorder %s23, 1
    %p100 = por %p98, %p99
    %p102 = scmp.ne.s32.totalorder %s87, %s101
    %p103 = scmp.eq.s32.totalorder %s23, 0
    %p104 = por %p102, %p103
    %s106 = sadd.s32 %s105, 1
    %p109 = scmp.eq.s32.totalorder %s17, 1
    %p110 = scmp.ne.s32.totalorder %s105, %s107
    %p111 = scmp.eq.s32.totalorder %s17, 0
    %p112 = por %p110, %p111
    %p113 = scmp.ne.s32.totalorder %s105, %s107
    %p114 = scmp.eq.s32.totalorder %s22, 1
    %p115 = por %p113, %p114
    %p116 = scmp.ne.s32.totalorder %s107, %s108
    %p117 = scmp.eq.s32.totalorder %s22, 0
    %p118 = por %p116, %p117
    %p119 = scmp.ne.s32.totalorder %s107, %s108
    %p120 = scmp.eq.s32.totalorder %s23, 1
    %p121 = por %p119, %p120
    %p123 = scmp.ne.s32.totalorder %s108, %s122
    %p124 = scmp.eq.s32.totalorder %s23, 0
    %p125 = por %p123, %p124
    %s127 = sadd.s32 %s126, 1
    %p130 = scmp.eq.s32.totalorder %s17, 1
    %p131 = scmp.ne.s32.totalorder %s126, %s128
    %p132 = scmp.eq.s32.totalorder %s17, 0
    %p133 = por %p131, %p132
    %p134 = scmp.ne.s32.totalorder %s126, %s128
    %p135 = scmp.eq.s32.totalorder %s22, 1
    %p136 = por %p134, %p135
    %p137 = scmp.ne.s32.totalorder %s128, %s129
    %p138 = scmp.eq.s32.totalorder %s22, 0
    %p139 = por %p137, %p138
    %p140 = scmp.ne.s32.totalorder %s128, %s129
    %p141 = scmp.eq.s32.totalorder %s23, 1
    %p142 = por %p140, %p141
    %p144 = scmp.ne.s32.totalorder %s129, %s143
    %p145 = scmp.eq.s32.totalorder %s23, 0
    %p146 = por %p144, %p145
    %s148 = sadd.s32 %s147, 1
    %p151 = scmp.eq.s32.totalorder %s17, 1
    %p152 = scmp.ne.s32.totalorder %s147, %s149
    %p153 = scmp.eq.s32.totalorder %s17, 0
    %p154 = por %p152, %p153
    %p155 = scmp.ne.s32.totalorder %s147, %s149
    %p156 = scmp.eq.s32.totalorder %s22, 1
    %p157 = por %p155, %p156
    %p158 = scmp.ne.s32.totalorder %s149, %s150
    %p159 = scmp.eq.s32.totalorder %s22, 0
    %p160 = por %p158, %p159
    %p161 = scmp.ne.s32.totalorder %s149, %s150
    %p162 = scmp.eq.s32.totalorder %s23, 1
    %p163 = por %p161, %p162
    %p165 = scmp.ne.s32.totalorder %s150, %s164
    %p166 = scmp.eq.s32.totalorder %s23, 0
    %p167 = por %p165, %p166
    %s169 = sadd.s32 %s168, 1
    %p172 = scmp.eq.s32.totalorder %s17, 1
    %p173 = scmp.ne.s32.totalorder %s168, %s170
    %p174 = scmp.eq.s32.totalorder %s17, 0
    %p175 = por %p173, %p174
    %p176 = scmp.ne.s32.totalorder %s168, %s170
    %p177 = scmp.eq.s32.totalorder %s22, 1
    %p178 = por %p176, %p177
    %p179 = scmp.ne.s32.totalorder %s170, %s171
    %p180 = scmp.eq.s32.totalorder %s22, 0
    %p181 = por %p179, %p180
    %p182 = scmp.ne.s32.totalorder %s170, %s171
    %p183 = scmp.eq.s32.totalorder %s23, 1
    %p184 = por %p182, %p183
    %p186 = scmp.ne.s32.totalorder %s171, %s185
    %p187 = scmp.eq.s32.totalorder %s23, 0
    %p188 = por %p186, %p187
    %s190 = sadd.s32 %s189, 1
    %p193 = scmp.eq.s32.totalorder %s17, 1
    %p194 = scmp.ne.s32.totalorder %s189, %s191
    %p195 = scmp.eq.s32.totalorder %s17, 0
    %p196 = por %p194, %p195
    %p197 = scmp.ne.s32.totalorder %s189, %s191
    %p198 = scmp.eq.s32.totalorder %s22, 1
    %p199 = por %p197, %p198
    %p200 = scmp.ne.s32.totalorder %s191, %s192
    %p201 = scmp.eq.s32.totalorder %s22, 0
    %p202 = por %p200, %p201
    %p203 = scmp.ne.s32.totalorder %s191, %s192
    %p204 = scmp.eq.s32.totalorder %s23, 1
    %p205 = por %p203, %p204
    %p207 = scmp.ne.s32.totalorder %s192, %s206
    %p208 = scmp.eq.s32.totalorder %s23, 0
    %p209 = por %p207, %p208
    %s211 = sadd.s32 %s210, 1
    %p214 = scmp.eq.s32.totalorder %s17, 1
    %p215 = scmp.ne.s32.totalorder %s210, %s212
    %p216 = scmp.eq.s32.totalorder %s17, 0
    %p217 = por %p215, %p216
    %p218 = scmp.ne.s32.totalorder %s210, %s212
    %p219 = scmp.eq.s32.totalorder %s22, 1
    %p220 = por %p218, %p219
    %p221 = scmp.ne.s32.totalorder %s212, %s213
    %p222 = scmp.eq.s32.totalorder %s22, 0
    %p223 = por %p221, %p222
    %p224 = scmp.ne.s32.totalorder %s212, %s213
    %p225 = scmp.eq.s32.totalorder %s23, 1
    %p226 = por %p224, %p225
    %p228 = scmp.ne.s32.totalorder %s213, %s227
    %p229 = scmp.eq.s32.totalorder %s23, 0
    %p230 = por %p228, %p229
    %s232 = sadd.s32 %s231, 1
    %p235 = scmp.eq.s32.totalorder %s17, 1
    %p236 = scmp.ne.s32.totalorder %s231, %s233
    %p237 = scmp.eq.s32.totalorder %s17, 0
    %p238 = por %p236, %p237
    %p239 = scmp.ne.s32.totalorder %s231, %s233
    %p240 = scmp.eq.s32.totalorder %s22, 1
    %p241 = por %p239, %p240
    %p242 = scmp.ne.s32.totalorder %s233, %s234
    %p243 = scmp.eq.s32.totalorder %s22, 0
    %p244 = por %p242, %p243
    %p245 = scmp.ne.s32.totalorder %s233, %s234
    %p246 = scmp.eq.s32.totalorder %s23, 1
    %p247 = por %p245, %p246
    %p249 = scmp.ne.s32.totalorder %s234, %s248
    %p250 = scmp.eq.s32.totalorder %s23, 0
    %p251 = por %p249, %p250
    %s253 = sadd.s32 %s252, 1
    %p256 = scmp.eq.s32.totalorder %s17, 1
    %p257 = scmp.ne.s32.totalorder %s252, %s254
    %p258 = scmp.eq.s32.totalorder %s17, 0
    %p259 = por %p257, %p258
    %p260 = scmp.ne.s32.totalorder %s252, %s254
    %p261 = scmp.eq.s32.totalorder %s22, 1
    %p262 = por %p260, %p261
    %p263 = scmp.ne.s32.totalorder %s254, %s255
    %p264 = scmp.eq.s32.totalorder %s22, 0
    %p265 = por %p263, %p264
    %p266 = scmp.ne.s32.totalorder %s254, %s255
    %p267 = scmp.eq.s32.totalorder %s23, 1
    %p268 = por %p266, %p267
    %p270 = scmp.ne.s32.totalorder %s255, %s269
    %p271 = scmp.eq.s32.totalorder %s23, 0
    %p272 = por %p270, %p271
    %s273 = smul.u32 %s24, %s25
    %s274 = smul.u32 %s36, %s32
    %s275 = ssub.s32 %s273, %s274
    %p276 = scmp.eq.s32.totalorder %s275, 0
    %s278 = sadd.s32 %s277, 1
    %s279 = scalar_select %p276, %s277, %s278
    %p282 = pneg %p276
    %p283 = scmp.eq.s32.totalorder %s17, 1
    %p284 = por %p282, %p283
    %p285 = scmp.ne.s32.totalorder %s277, %s280
    %p286 = scmp.eq.s32.totalorder %s17, 0
    %p287 = por %p285, %p286
    %p288 = scmp.ne.s32.totalorder %s277, %s280
    %p289 = scmp.eq.s32.totalorder %s22, 1
    %p290 = por %p288, %p289
    %p291 = scmp.ne.s32.totalorder %s280, %s281
    %p292 = scmp.eq.s32.totalorder %s22, 0
    %p293 = por %p291, %p292
    %p294 = scmp.ne.s32.totalorder %s280, %s281
    %p295 = scmp.eq.s32.totalorder %s23, 1
    %p296 = por %p294, %p295
    %p298 = scmp.ne.s32.totalorder %s281, %s297
    %p299 = scmp.eq.s32.totalorder %s23, 0
    %p300 = por %p298, %p299
    %p301 = scmp.le.s32.totalorder 1, %s17
    %p302 = scmp.lt.s32.totalorder %s17, 3
    %p303 = pnand %p301, %p302
    %p304 = pneg %p303
    // Predicated region
    $region9: #{cnn_forward.3} parent=5 // pred_check
      _
    $region10: #{cnn_forward.3} parent=5 // pred_check_branch
      %306 = sbr.rel (%p303) target = $region12
    $region11: #{cnn_forward.3} parent=5 // pred_region
      %s307 = ssub.s32 %s17, 1
      // Predicated region
      $region13: #{cnn_forward.3} parent=11 // pred_check
        %p308 = pneg %p55
      $region14: #{cnn_forward.3} parent=11 // pred_check_branch
        %310 = sbr.rel (%p308) target = $region16
      $region15: #{cnn_forward.3} parent=11 // pred_region
        %s311 = smul.u32 7, %s27
        %p312 = scmp.lt.s32.totalorder %s311, 6
        %s313 = scalar_select %p312, %s311, 6
        %s314 = smul.addr %s313, 4
        %s315 = scalar_lea.vmem %s0, %s314
        %s316 = smul.u32 7, %s27
      $region16: #{cnn_forward.3} parent=11 // pred_fallthru
        _
      // Predicated region
      $region17: #{cnn_forward.3} parent=11 // pred_check
        %p317 = pneg %p76
      $region18: #{cnn_forward.3} parent=11 // pred_check_branch
        %319 = sbr.rel (%p317) target = $region20
      $region19: #{cnn_forward.3} parent=11 // pred_region
        _
      $region20: #{cnn_forward.3} parent=11 // pred_fallthru
        _
      // Predicated region
      $region21: #{cnn_forward.3} parent=11 // pred_check
        %p320 = pneg %p97
      $region22: #{cnn_forward.3} parent=11 // pred_check_branch
        %322 = sbr.rel (%p320) target = $region24
      $region23: #{cnn_forward.3} parent=11 // pred_region
        _
      $region24: #{cnn_forward.3} parent=11 // pred_fallthru
        _
      // Predicated region
      $region25: #{cnn_forward.3} parent=11 // pred_check
        %p323 = pneg %p118
      $region26: #{cnn_forward.3} parent=11 // pred_check_branch
        %325 = sbr.rel (%p323) target = $region28
      $region27: #{cnn_forward.3} parent=11 // pred_region
        _
      $region28: #{cnn_forward.3} parent=11 // pred_fallthru
        _
      // Predicated region
      $region29: #{cnn_forward.3} parent=11 // pred_check
        %p326 = pneg %p139
      $region30: #{cnn_forward.3} parent=11 // pred_check_branch
        %328 = sbr.rel (%p326) target = $region32
      $region31: #{cnn_forward.3} parent=11 // pred_region
        _
      $region32: #{cnn_forward.3} parent=11 // pred_fallthru
        _
      // Predicated region
      $region33: #{cnn_forward.3} parent=11 // pred_check
        %p329 = pneg %p160
      $region34: #{cnn_forward.3} parent=11 // pred_check_branch
        %331 = sbr.rel (%p329) target = $region36
      $region35: #{cnn_forward.3} parent=11 // pred_region
        _
      $region36: #{cnn_forward.3} parent=11 // pred_fallthru
        _
      // Predicated region
      $region37: #{cnn_forward.3} parent=11 // pred_check
        %p332 = pneg %p181
      $region38: #{cnn_forward.3} parent=11 // pred_check_branch
        %334 = sbr.rel (%p332) target = $region40
      $region39: #{cnn_forward.3} parent=11 // pred_region
        _
      $region40: #{cnn_forward.3} parent=11 // pred_fallthru
        _
      // Predicated region
      $region41: #{cnn_forward.3} parent=11 // pred_check
        %p335 = pneg %p202
      $region42: #{cnn_forward.3} parent=11 // pred_check_branch
        %337 = sbr.rel (%p335) target = $region44
      $region43: #{cnn_forward.3} parent=11 // pred_region
        _
      $region44: #{cnn_forward.3} parent=11 // pred_fallthru
        _
      // Predicated region
      $region45: #{cnn_forward.3} parent=11 // pred_check
        %p338 = pneg %p223
      $region46: #{cnn_forward.3} parent=11 // pred_check_branch
        %340 = sbr.rel (%p338) target = $region48
      $region47: #{cnn_forward.3} parent=11 // pred_region
        _
      $region48: #{cnn_forward.3} parent=11 // pred_fallthru
        _
      // Predicated region
      $region49: #{cnn_forward.3} parent=11 // pred_check
        %p341 = pneg %p244
      $region50: #{cnn_forward.3} parent=11 // pred_check_branch
        %343 = sbr.rel (%p341) target = $region52
      $region51: #{cnn_forward.3} parent=11 // pred_region
        _
      $region52: #{cnn_forward.3} parent=11 // pred_fallthru
        _
      // Predicated region
      $region53: #{cnn_forward.3} parent=11 // pred_check
        %p344 = pneg %p265
      $region54: #{cnn_forward.3} parent=11 // pred_check_branch
        %346 = sbr.rel (%p344) target = $region56
      $region55: #{cnn_forward.3} parent=11 // pred_region
        _
      $region56: #{cnn_forward.3} parent=11 // pred_fallthru
        _
    $region12: #{cnn_forward.3} parent=5 // pred_fallthru
      _
    %p347 = scmp.lt.s32.totalorder %s17, 2
    // Predicated region
    $region57: #{cnn_forward.3} parent=5 // pred_check
      %p348 = pneg %p347
    $region58: #{cnn_forward.3} parent=5 // pred_check_branch
      %350 = sbr.rel (%p348) target = $region60
    $region59: #{cnn_forward.3} parent=5 // pred_region
      _
    $region60: #{cnn_forward.3} parent=5 // pred_fallthru
      _
    %p351 = scmp.le.s32.totalorder 1, %s17
    %p352 = scmp.lt.s32.totalorder %s17, 3
    %p353 = pnand %p351, %p352
    %p354 = pneg %p353
    // Predicated region
    $region61: #{cnn_forward.3} parent=5 // pred_check
      _
    $region62: #{cnn_forward.3} parent=5 // pred_check_branch
      %356 = sbr.rel (%p353) target = $region64
    $region63: #{cnn_forward.3} parent=5 // pred_region
      %s357 = ssub.s32 %s17, 1
      %s358 = smul.u32 7, %s27
      %p359 = scmp.lt.s32.totalorder %s358, 6
      %s360 = scalar_select %p359, %s358, 6
      %s361 = smul.addr %s360, 4
      %s362 = scalar_lea.vmem %s0, %s361
      %p363 = pneg %p55
      %p364 = pneg %p52
      %p365 = pneg %p76
      %p366 = pneg %p73
      %p367 = pneg %p97
      %p368 = pneg %p94
      %p369 = pneg %p118
      %p370 = pneg %p115
      %p371 = pneg %p139
      %p372 = pneg %p136
      %p373 = pneg %p160
      %p374 = pneg %p157
      %p375 = pneg %p181
      %p376 = pneg %p178
      %p377 = pneg %p202
      %p378 = pneg %p199
      %p379 = pneg %p223
      %p380 = pneg %p220
      %p381 = pneg %p244
      %p382 = pneg %p241
      %p383 = pneg %p265
      %p384 = pneg %p262
      %p385 = pneg %p293
      %p386 = pneg %p290
      %s387 = smul.u32 %s26, %s27
      %s388 = smul.u32 4, %s387
      %p389 = scmp.lt.s32.totalorder %s388, 3
      %s390 = scalar_select %p389, %s388, 3
      %s391 = smul.addr %s390, 2
      %s392 = smul.addr %s391, 4
      %s393 = scalar_lea.vmem %s11, %s392
      %s394 = smul.u32 7, %s27
      %p395 = scmp.lt.s32.totalorder %s394, 6
      %s396 = scalar_select %p395, %s394, 6
      %s397 = smul.addr %s396, 4
      %s398 = scalar_lea.vmem %s0, %s397
      %s399 = smul.u32 7, %s27
      %s400 = smul.u32 %s26, %s27
      %s401 = smul.u32 4, %s400
      %p402 = scmp.lt.s32.totalorder %s401, 3
      %s403 = scalar_select %p402, %s401, 3
      %s404 = smul.addr %s403, 2
      %s405 = smul.addr %s404, 4
      %s406 = scalar_lea.vmem %s11, %s405
      %s407 = smul.u32 %s26, %s27
      %s408 = smul.u32 4, %s407
      %v410 = vld [vmem:[%s398] sm:$0xf]
      %v411 = vld [vmem:[%s398 + $0x4] sm:$0xf]
      %v412 = vld [vmem:[%s398 + $0x8] sm:$0xf]
      %v413 = vld [vmem:[%s398 + $0xc] sm:$0xf]
      %v414 = vld [vmem:[%s398 + $0x10] sm:$0xf]
      %v415 = vld [vmem:[%s398 + $0x14] sm:$0xf]
      %v416 = vld [vmem:[%s398 + $0x18] sm:$0xf]
      %v424 = vunpack.c.l.b16 %v410
      %v425 = vunpack.c.l.b16 %v411
      %v426 = vunpack.c.l.b16 %v412
      %v427 = vunpack.c.l.b16 %v413
      %v428 = vunpack.c.l.b16 %v414
      %v429 = vunpack.c.l.b16 %v415
      %v430 = vunpack.c.l.b16 %v416
      %v431 = vpack.c.b16 %v425, %v424
      %v432 = vpack.c.b16 %v427, %v426
      %v433 = vpack.c.b16 %v429, %v428
      %v434 = vpack.c.b16 %v430, %v430
      %vm435 = vsmask.f32 7424
      %v437 = vshrl.u32 %v431, 16
      %v439 = vshll.u32 %v431, 16
      %v441 = vrot.slane %v439, 1
      %v442 = vor.u32 %v437, %v441
      %v444 = vshll.u32 %v432, 16
      %v446 = vrot.slane %v444, 1
      %v447 = vsel %vm435, %v442, %v446
      %v448 = vshrl.u32 %v432, 16
      %v450 = vor.u32 %v448, %v446
      %v452 = vshll.u32 %v433, 16
      %v454 = vrot.slane %v452, 1
      %v455 = vsel %vm435, %v450, %v454
      %v456 = vshrl.u32 %v433, 16
      %v458 = vor.u32 %v456, %v454
      %v460 = vshll.u32 %v434, 16
      %v462 = vrot.slane %v460, 1
      %v463 = vsel %vm435, %v458, %v462
      %v464 = vshrl.u32 %v434, 16
      %v466 = vor.u32 %v464, %v462
      %467 = vrot.lane.b32.xlu0 %v447, 28
      %v468 = vpop.permute.xlu0 %467
      %469 = vrot.lane.b32.xlu0 %v455, 28
      %v470 = vpop.permute.xlu0 %469
      %471 = vrot.lane.b32.xlu0 %v463, 28
      %v472 = vpop.permute.xlu0 %471
      %473 = vrot.lane.b32.xlu0 %v466, 28
      %v474 = vpop.permute.xlu0 %473
      %vm475 = vcmask 1046528
      %v476 = vrot.slane %v431, 1
      %v477 = vrot.slane %v432, 1
      %v478 = vsel %vm475, %v476, %v477
      %v479 = vrot.slane %v433, 1
      %v480 = vsel %vm475, %v477, %v479
      %v481 = vrot.slane %v434, 1
      %v482 = vsel %vm475, %v479, %v481
      %483 = vrot.lane.b32.xlu0 %v478, 56
      %v484 = vpop.permute.xlu0 %483
      %485 = vrot.lane.b32.xlu0 %v480, 56
      %v486 = vpop.permute.xlu0 %485
      %487 = vrot.lane.b32.xlu0 %v482, 56
      %v488 = vpop.permute.xlu0 %487
      %489 = vrot.lane.b32.xlu0 %v481, 56
      %v490 = vpop.permute.xlu0 %489
      %vm491 = vcmask 228352
      %v493 = vsel %vm491, %v431, %v468
      %v495 = vsel %vm491, %v432, %v470
      %v497 = vsel %vm491, %v433, %v472
      %v499 = vsel %vm491, %v434, %v474
      %vm500 = vcmask 457728
      %v502 = vsel %vm500, %v493, %v484
      %v504 = vsel %vm500, %v495, %v486
      %v506 = vsel %vm500, %v497, %v488
      %v508 = vsel %vm500, %v499, %v490
      %v509 = vld [vmem:[%s1] sm:$0xff]
      %v510 = vld [vmem:[%s1 + $0x8] sm:$0xff]
      %v511 = vld [vmem:[%s1 + $0x10] sm:$0xff]
      %v512 = vld [vmem:[%s1 + $0x18] sm:$0xff]
      %v513 = vld [vmem:[%s1 + $0x20] sm:$0xff]
      %v514 = vld [vmem:[%s1 + $0x28] sm:$0xff]
      %v515 = vld [vmem:[%s1 + $0x30] sm:$0xff]
      %v516 = vld [vmem:[%s1 + $0x38] sm:$0xff]
      %v517 = vld [vmem:[%s1 + $0x40] sm:$0xff]
      %v518 = vld [vmem:[%s1 + $0x48] sm:$0xff]
      %v519 = vld [vmem:[%s1 + $0x50] sm:$0xff]
      %v520 = vld [vmem:[%s1 + $0x58] sm:$0xff]
      %v521 = vld [vmem:[%s1 + $0x60] sm:$0xff]
      %v522 = vld [vmem:[%s1 + $0x68] sm:$0xff]
      %v523 = vld [vmem:[%s1 + $0x70] sm:$0xff]
      %v524 = vld [vmem:[%s1 + $0x78] sm:$0xff]
      %v525 = vld [vmem:[%s1 + $0x80] sm:$0xff]
      %v526 = vld [vmem:[%s1 + $0x88] sm:$0xff]
      %v527 = vld [vmem:[%s1 + $0x90] sm:$0xff]
      %v528 = vld [vmem:[%s1 + $0x98] sm:$0xff]
      %v529 = vld [vmem:[%s1 + $0xa0] sm:$0x33]
      %v530 = vld [vmem:[%s1 + $0xa8] sm:$0x33]
      %v553 = vunpack.c.l.b16 %v509
      %v554 = vunpack.c.h.b16 %v509
      %v555 = vunpack.c.l.b16 %v510
      %v556 = vunpack.c.h.b16 %v510
      %v557 = vunpack.c.l.b16 %v511
      %v558 = vunpack.c.h.b16 %v511
      %v559 = vunpack.c.l.b16 %v512
      %v560 = vunpack.c.h.b16 %v512
      %v561 = vunpack.c.l.b16 %v513
      %v562 = vunpack.c.h.b16 %v513
      %v563 = vunpack.c.l.b16 %v514
      %v564 = vunpack.c.h.b16 %v514
      %v565 = vunpack.c.l.b16 %v515
      %v566 = vunpack.c.h.b16 %v515
      %v567 = vunpack.c.l.b16 %v516
      %v568 = vunpack.c.h.b16 %v516
      %v569 = vunpack.c.l.b16 %v517
      %v570 = vunpack.c.h.b16 %v517
      %v571 = vunpack.c.l.b16 %v518
      %v572 = vunpack.c.h.b16 %v518
      %v573 = vunpack.c.l.b16 %v519
      %v574 = vunpack.c.h.b16 %v519
      %v575 = vunpack.c.l.b16 %v520
      %v576 = vunpack.c.h.b16 %v520
      %v577 = vunpack.c.l.b16 %v521
      %v578 = vunpack.c.h.b16 %v521
      %v579 = vunpack.c.l.b16 %v522
      %v580 = vunpack.c.h.b16 %v522
      %v581 = vunpack.c.l.b16 %v523
      %v582 = vunpack.c.h.b16 %v523
      %v583 = vunpack.c.l.b16 %v524
      %v584 = vunpack.c.h.b16 %v524
      %v585 = vunpack.c.l.b16 %v525
      %v586 = vunpack.c.h.b16 %v525
      %v587 = vunpack.c.l.b16 %v526
      %v588 = vunpack.c.h.b16 %v526
      %v589 = vunpack.c.l.b16 %v527
      %v590 = vunpack.c.h.b16 %v527
      %v591 = vunpack.c.l.b16 %v528
      %v592 = vunpack.c.h.b16 %v528
      %v593 = vunpack.c.l.b16 %v529
      %v594 = vunpack.c.h.b16 %v529
      %v595 = vunpack.c.l.b16 %v530
      %v596 = vunpack.c.h.b16 %v530
      %v597 = vpack.c.b16 %v557, %v553
      %v598 = vpack.c.b16 %v558, %v554
      %v599 = vpack.c.b16 %v559, %v555
      %v600 = vpack.c.b16 %v560, %v556
      %v601 = vpack.c.b16 %v565, %v561
      %v602 = vpack.c.b16 %v566, %v562
      %v603 = vpack.c.b16 %v567, %v563
      %v604 = vpack.c.b16 %v568, %v564
      %v605 = vpack.c.b16 %v573, %v569
      %v606 = vpack.c.b16 %v574, %v570
      %v607 = vpack.c.b16 %v575, %v571
      %v608 = vpack.c.b16 %v576, %v572
      %v609 = vpack.c.b16 %v581, %v577
      %v610 = vpack.c.b16 %v582, %v578
      %v611 = vpack.c.b16 %v583, %v579
      %v612 = vpack.c.b16 %v584, %v580
      %v613 = vpack.c.b16 %v589, %v585
      %v614 = vpack.c.b16 %v590, %v586
      %v615 = vpack.c.b16 %v591, %v587
      %v616 = vpack.c.b16 %v592, %v588
      %v617 = vpack.c.b16 %v593, %v593
      %v618 = vpack.c.b16 %v594, %v594
      %v619 = vpack.c.b16 %v595, %v595
      %v620 = vpack.c.b16 %v596, %v596
      %vm641 = vcmask 687104
      %v642 = vsel %vm641, %v502, 0
      %v644 = vsel %vm641, %v504, 0
      %v646 = vsel %vm641, %v506, 0
      %v648 = vsel %vm641, %v508, 0
      %vm650 = vcmask 1041408
      %v652 = vsel %vm650, %v617, 0
      %v655 = vsel %vm650, %v618, 0
      %v658 = vsel %vm650, %v619, 0
      %v661 = vsel %vm650, %v620, 0
      %663 = vmatprep.subr.bf16.mxu0 %v598
      %664 = vmatpush1.bf16.msra.mxu0 %v597
      %665 = vmatprep.subr.bf16.mxu0 %v602
      %666 = vmatpush1.bf16.msra.mxu0 %v601
      %667 = vmatprep.subr.bf16.mxu0 %v606
      %668 = vmatpush1.bf16.msra.mxu0 %v605
      %669 = vmatprep.subr.bf16.mxu0 %v610
      %670 = vmatpush1.bf16.msra.mxu0 %v609
      %671 = vmatprep.subr.bf16.mxu0 %v614
      %672 = vmatpush1.bf16.msra.mxu0 %v613
      %673 = vmatprep.subr.bf16.mxu0 %v655
      %674 = vmatpush1.bf16.msra.mxu0 %v652
      %675 = vmatprep.subr.bf16.mxu0 0
      %676 = vmatpush1.bf16.msra.mxu0 0
      %677 = vmatprep.subr.bf16.mxu0 0
      %678 = vmatpush1.bf16.msra.mxu0 0
      %679 = vmatprep.subr.bf16.mxu0 0
      %680 = vmatpush1.bf16.msra.mxu0 0
      %681 = vmatprep.subr.bf16.mxu0 0
      %682 = vmatpush1.bf16.msra.mxu0 0
      %683 = vmatprep.subr.bf16.mxu0 0
      %684 = vmatpush1.bf16.msra.mxu0 0
      %685 = vmatprep.subr.bf16.mxu0 0
      %686 = vmatpush1.bf16.msra.mxu0 0
      %687 = vmatprep.subr.bf16.mxu0 0
      %688 = vmatpush1.bf16.msra.mxu0 0
      %689 = vmatprep.subr.bf16.mxu0 0
      %690 = vmatpush1.bf16.msra.mxu0 0
      %691 = vmatprep.subr.bf16.mxu0 0
      %692 = vmatpush1.bf16.msra.mxu0 0
      %693 = vmatprep.subr.bf16.mxu0 0
      %694 = vmatpush1.bf16.msra.mxu0 0
      %695 = vmatprep.mubr.bf16.mxu0 0
      %696 = vmatmul.mubr.bf16.gmra.mrb[0].mxu0 %v642
      %v697 = vpop.f32.mrb[0].mxu0
      %v698 = vadd.f32 0.0, %v697
      %v699 = vpop.f32.mrb[0].mxu0
      %v700 = vadd.f32 0.0, %v699
      %v701 = vpop.f32.mrb[0].mxu0
      %v702 = vadd.f32 0.0, %v701
      %v703 = vpop.f32.mrb[0].mxu0
      %v704 = vadd.f32 0.0, %v703
      %705 = vmatprep.mubr.bf16.mxu0 0
      %706 = vmatmul.mubr.bf16.gmra.mrb[0].mxu0 %v644
      %v707 = vpop.f32.mrb[0].mxu0
      %v708 = vadd.f32 0.0, %v707
      %v709 = vpop.f32.mrb[0].mxu0
      %v710 = vadd.f32 0.0, %v709
      %v711 = vpop.f32.mrb[0].mxu0
      %v712 = vadd.f32 0.0, %v711
      %v713 = vpop.f32.mrb[0].mxu0
      %v714 = vadd.f32 0.0, %v713
      %715 = vmatprep.mubr.bf16.mxu0 0
      %716 = vmatmul.mubr.bf16.gmra.mrb[0].mxu0 %v646
      %v717 = vpop.f32.mrb[0].mxu0
      %v718 = vadd.f32 0.0, %v717
      %v719 = vpop.f32.mrb[0].mxu0
      %v720 = vadd.f32 0.0, %v719
      %v721 = vpop.f32.mrb[0].mxu0
      %v722 = vadd.f32 0.0, %v721
      %v723 = vpop.f32.mrb[0].mxu0
      %v724 = vadd.f32 0.0, %v723
      %725 = vmatprep.mubr.bf16.mxu0 0
      %726 = vmatmul.mubr.bf16.gmra.mrb[0].mxu0 %v648
      %v727 = vpop.f32.mrb[0].mxu0
      %v728 = vadd.f32 0.0, %v727
      %v729 = vpop.f32.mrb[0].mxu0
      %v730 = vadd.f32 0.0, %v729
      %v731 = vpop.f32.mrb[0].mxu0
      %v732 = vpop.f32.mrb[0].mxu0
      %733 = vdwg.mxu0
      %734 = vmatprep.subr.bf16.mxu0 %v600
      %735 = vmatpush1.bf16.msra.mxu0 %v599
      %736 = vmatprep.subr.bf16.mxu0 %v604
      %737 = vmatpush1.bf16.msra.mxu0 %v603
      %738 = vmatprep.subr.bf16.mxu0 %v608
      %739 = vmatpush1.bf16.msra.mxu0 %v607
      %740 = vmatprep.subr.bf16.mxu0 %v612
      %741 = vmatpush1.bf16.msra.mxu0 %v611
      %742 = vmatprep.subr.bf16.mxu0 %v616
      %743 = vmatpush1.bf16.msra.mxu0 %v615
      %744 = vmatprep.subr.bf16.mxu0 %v661
      %745 = vmatpush1.bf16.msra.mxu0 %v658
      %746 = vmatprep.subr.bf16.mxu0 0
      %747 = vmatpush1.bf16.msra.mxu0 0
      %748 = vmatprep.subr.bf16.mxu0 0
      %749 = vmatpush1.bf16.msra.mxu0 0
      %750 = vmatprep.subr.bf16.mxu0 0
      %751 = vmatpush1.bf16.msra.mxu0 0
      %752 = vmatprep.subr.bf16.mxu0 0
      %753 = vmatpush1.bf16.msra.mxu0 0
      %754 = vmatprep.subr.bf16.mxu0 0
      %755 = vmatpush1.bf16.msra.mxu0 0
      %756 = vmatprep.subr.bf16.mxu0 0
      %757 = vmatpush1.bf16.msra.mxu0 0
      %758 = vmatprep.subr.bf16.mxu0 0
      %759 = vmatpush1.bf16.msra.mxu0 0
      %760 = vmatprep.subr.bf16.mxu0 0
      %761 = vmatpush1.bf16.msra.mxu0 0
      %762 = vmatprep.subr.bf16.mxu0 0
      %763 = vmatpush1.bf16.msra.mxu0 0
      %764 = vmatprep.subr.bf16.mxu0 0
      %765 = vmatpush1.bf16.msra.mxu0 0
      %766 = vmatprep.mubr.bf16.mxu0 0
      %767 = vmatmul.mubr.bf16.gmra.mrb[0].mxu0 %v642
      %v768 = vpop.f32.mrb[0].mxu0
      %v769 = vadd.f32 0.0, %v768
      %v770 = vpop.f32.mrb[0].mxu0
      %v771 = vadd.f32 0.0, %v770
      %v772 = vpop.f32.mrb[0].mxu0
      %v773 = vadd.f32 0.0, %v772
      %v774 = vpop.f32.mrb[0].mxu0
      %v775 = vadd.f32 0.0, %v774
      %776 = vmatprep.mubr.bf16.mxu0 0
      %777 = vmatmul.mubr.bf16.gmra.mrb[0].mxu0 %v644
      %v778 = vpop.f32.mrb[0].mxu0
      %v779 = vadd.f32 0.0, %v778
      %v780 = vpop.f32.mrb[0].mxu0
      %v781 = vadd.f32 0.0, %v780
      %v782 = vpop.f32.mrb[0].mxu0
      %v783 = vadd.f32 0.0, %v782
      %v784 = vpop.f32.mrb[0].mxu0
      %v785 = vadd.f32 0.0, %v784
      %786 = vmatprep.mubr.bf16.mxu0 0
      %787 = vmatmul.mubr.bf16.gmra.mrb[0].mxu0 %v646
      %v788 = vpop.f32.mrb[0].mxu0
      %v789 = vadd.f32 0.0, %v788
      %v790 = vpop.f32.mrb[0].mxu0
      %v791 = vadd.f32 0.0, %v790
      %v792 = vpop.f32.mrb[0].mxu0
      %v793 = vadd.f32 0.0, %v792
      %v794 = vpop.f32.mrb[0].mxu0
      %v795 = vadd.f32 0.0, %v794
      %796 = vmatprep.mubr.bf16.mxu0 0
      %797 = vmatmul.mubr.bf16.gmra.mrb[0].mxu0 %v648
      %v798 = vpop.f32.mrb[0].mxu0
      %v799 = vadd.f32 0.0, %v798
      %v800 = vpop.f32.mrb[0].mxu0
      %v801 = vadd.f32 0.0, %v800
      %v802 = vpop.f32.mrb[0].mxu0
      %v803 = vpop.f32.mrb[0].mxu0
      %804 = vdwg.mxu0
      %p805 = scmp.eq.s32.totalorder %s26, 0
      %p806 = scmp.eq.s32.totalorder %s27, 0
      %p807 = pnand %p805, %p806
      %p808 = pneg %p807
      // Predicated region
      $region65: #{cnn_forward.3} parent=63 // pred_check
        _
      $region66: #{cnn_forward.3} parent=63 // pred_check_branch
        %810 = sbr.rel (%p807) target = $region68
      $region67: #{cnn_forward.3} parent=63 // pred_region
        %v811 = vlaneseq
        %vm812 = vcmp.ge.s32.totalorder %v811, 0
        %vm813 = vcmp.lt.s32.totalorder %v811, 416
        %vm814 = vmand %vm812, %vm813
        %815 = vst.msk [vmem:[#allocation2] sm:$0xf] %vm814, 0.0
        %816 = vst.msk [vmem:[#allocation3] sm:$0xf] %vm814, 0.0
      $region68: #{cnn_forward.3} parent=63 // pred_fallthru
        _
      // Predicated region
      $region69: #{cnn_forward.3} parent=63 // pred_check
        %p817 = pneg %p805
      $region70: #{cnn_forward.3} parent=63 // pred_check_branch
        %819 = sbr.rel (%p817) target = $region72
      $region71: #{cnn_forward.3} parent=63 // pred_region
        %v820 = vld [vmem:[%s6] sm:$0xff]
        %v821 = vld [vmem:[%s6 + $0x8] sm:$0xff]
        %v822 = vld [vmem:[%s6 + $0x10] sm:$0xff]
        %v823 = vld [vmem:[%s6 + $0x18] sm:$0xff]
        %v824 = vld [vmem:[%s6 + $0x20] sm:$0xff]
        %v825 = vld [vmem:[%s6 + $0x28] sm:$0xff]
        %v826 = vld [vmem:[%s6 + $0x30] sm:$0x3f]
        %828 = vset.pattern.permute.xlu0 0
        %829 = vperm.xlu0 %828, %v820
        %v830 = vpop.permute.xlu0 %829
        %833 = vset.pattern.permute.xlu0 0
        %834 = vperm.xlu0 %833, %v821
        %v835 = vpop.permute.xlu0 %834
        %838 = vset.pattern.permute.xlu0 0
        %839 = vperm.xlu0 %838, %v822
        %v840 = vpop.permute.xlu0 %839
        %843 = vset.pattern.permute.xlu0 0
        %844 = vperm.xlu0 %843, %v823
        %v845 = vpop.permute.xlu0 %844
        %848 = vset.pattern.permute.xlu0 0
        %849 = vperm.xlu0 %848, %v824
        %v850 = vpop.permute.xlu0 %849
        %853 = vset.pattern.permute.xlu0 0
        %854 = vperm.xlu0 %853, %v825
        %v855 = vpop.permute.xlu0 %854
        %858 = vset.pattern.permute.xlu0 0
        %859 = vperm.xlu0 %858, %v826
        %v860 = vpop.permute.xlu0 %859
        %v862 = vmul.f32 %v698, %v830
        %v863 = vmul.f32 %v700, %v830
        %v864 = vmul.f32 %v769, %v830
        %v865 = vmul.f32 %v771, %v830
        %v866 = vmul.f32 %v702, %v835
        %v867 = vmul.f32 %v704, %v835
        %v868 = vmul.f32 %v773, %v835
        %v869 = vmul.f32 %v775, %v835
        %v870 = vmul.f32 %v708, %v840
        %v871 = vmul.f32 %v710, %v840
        %v872 = vmul.f32 %v779, %v840
        %v873 = vmul.f32 %v781, %v840
        %v874 = vmul.f32 %v712, %v845
        %v875 = vmul.f32 %v714, %v845
        %v876 = vmul.f32 %v783, %v845
        %v877 = vmul.f32 %v785, %v845
        %v878 = vmul.f32 %v718, %v850
        %v879 = vmul.f32 %v720, %v850
        %v880 = vmul.f32 %v789, %v850
        %v881 = vmul.f32 %v791, %v850
        %v882 = vmul.f32 %v722, %v855
        %v883 = vmul.f32 %v724, %v855
        %v884 = vmul.f32 %v793, %v855
        %v885 = vmul.f32 %v795, %v855
        %v886 = vmul.f32 %v728, %v860
        %v887 = vmul.f32 %v730, %v860
        %v888 = vmul.f32 %v799, %v860
        %v889 = vmul.f32 %v801, %v860
        %v890 = vld [vmem:[#allocation2] sm:$0xf]
        %v891 = vadd.f32 %v862, %v866
        %v892 = vadd.f32 %v891, %v870
        %v893 = vadd.f32 %v892, %v874
        %v894 = vadd.f32 %v893, %v878
        %v895 = vadd.f32 %v894, %v882
        %vm896 = vcmask 1045504
        %v897 = vsel %vm896, %v886, 0.0
        %v898 = vadd.f32 %v895, %v897
        %v899 = vrot.slane %v898, 4
        %v900 = vadd.f32 %v898, %v899
        %v901 = vrot.slane %v900, 2
        %v902 = vadd.f32 %v900, %v901
        %v903 = vrot.slane %v902, 1
        %v904 = vadd.f32 %v902, %v903
        %v905 = vadd.f32 %v863, %v867
        %v906 = vadd.f32 %v905, %v871
        %v907 = vadd.f32 %v906, %v875
        %v908 = vadd.f32 %v907, %v879
        %v909 = vadd.f32 %v908, %v883
        %v910 = vsel %vm896, %v887, 0.0
        %v911 = vadd.f32 %v909, %v910
        %v912 = vrot.slane %v911, 4
        %v913 = vadd.f32 %v911, %v912
        %v914 = vrot.slane %v913, 2
        %v915 = vadd.f32 %v913, %v914
        %v916 = vrot.slane %v915, 1
        %v917 = vadd.f32 %v915, %v916
        %v918 = vadd.f32 %v864, %v868
        %v919 = vadd.f32 %v918, %v872
        %v920 = vadd.f32 %v919, %v876
        %v921 = vadd.f32 %v920, %v880
        %v922 = vadd.f32 %v921, %v884
        %v923 = vsel %vm896, %v888, 0.0
        %v924 = vadd.f32 %v922, %v923
        %v925 = vrot.slane %v924, 4
        %v926 = vadd.f32 %v924, %v925
        %v927 = vrot.slane %v926, 2
        %v928 = vadd.f32 %v926, %v927
        %v929 = vrot.slane %v928, 1
        %v930 = vadd.f32 %v928, %v929
        %vm931 = vcmask 261120
        %v932 = vsel %vm931, %v865, 0.0
        %v933 = vsel %vm931, %v869, 0.0
        %v934 = vadd.f32 %v932, %v933
        %v935 = vsel %vm931, %v873, 0.0
        %v936 = vadd.f32 %v934, %v935
        %v937 = vsel %vm931, %v877, 0.0
        %v938 = vadd.f32 %v936, %v937
        %v939 = vsel %vm931, %v881, 0.0
        %v940 = vadd.f32 %v938, %v939
        %v941 = vsel %vm931, %v885, 0.0
        %v942 = vadd.f32 %v940, %v941
        %vm943 = vcmask 259072
        %v944 = vsel %vm943, %v889, 0.0
        %v945 = vadd.f32 %v942, %v944
        %v946 = vrot.slane %v945, 4
        %v947 = vadd.f32 %v945, %v946
        %v948 = vrot.slane %v947, 2
        %v949 = vadd.f32 %v947, %v948
        %v950 = vrot.slane %v949, 1
        %v951 = vadd.f32 %v949, %v950
        %v956 = vcombine.low %v904, %v917
        %v957 = vcombine.low %v930, %v951
        %v959 = vunpack.c.l.s4 1966171168
        %v960 = vunpack.c.0.s8 %v959
        %v961 = vlaneseq
        %v962 = vshrl.u32 %v961, 7
        %v963 = vsub.s32 %v960, %v962
        %v964 = vrot.slane %v956, %v963
        %v966 = vunpack.c.l.s4 1966171168
        %v967 = vunpack.c.0.s8 %v966
        %v968 = vlaneseq
        %v969 = vshrl.u32 %v968, 7
        %v970 = vsub.s32 %v967, %v969
        %v971 = vrot.slane %v957, %v970
        %v972 = vcombine.low %v964, %v971
        %v974 = vunpack.c.l.s4 1966171168
        %v975 = vunpack.c.0.s8 %v974
        %v976 = vlaneseq
        %v977 = vshrl.u32 %v976, 7
        %v978 = vsub.s32 %v975, %v977
        %v979 = vrot.slane %v972, %v978
        %v981 = vadd.f32 %v890, %v979
        %v982 = vlaneseq
        %vm983 = vcmp.ge.s32.totalorder %v982, 0
        %vm984 = vcmp.lt.s32.totalorder %v982, 416
        %vm985 = vmand %vm983, %vm984
        %986 = vst.msk [vmem:[#allocation2] sm:$0xf] %vm985, %v981
        %v987 = vld [vmem:[#allocation3] sm:$0xf]
        %v988 = vmul.f32 %v862, %v698
        %v989 = vmul.f32 %v863, %v700
        %v990 = vmul.f32 %v864, %v769
        %v991 = vmul.f32 %v865, %v771
        %v992 = vmul.f32 %v866, %v702
        %v993 = vmul.f32 %v867, %v704
        %v994 = vmul.f32 %v868, %v773
        %v995 = vmul.f32 %v869, %v775
        %v996 = vmul.f32 %v870, %v708
        %v997 = vmul.f32 %v871, %v710
        %v998 = vmul.f32 %v872, %v779
        %v999 = vmul.f32 %v873, %v781
        %v1000 = vmul.f32 %v874, %v712
        %v1001 = vmul.f32 %v875, %v714
        %v1002 = vmul.f32 %v876, %v783
        %v1003 = vmul.f32 %v877, %v785
        %v1004 = vmul.f32 %v878, %v718
        %v1005 = vmul.f32 %v879, %v720
        %v1006 = vmul.f32 %v880, %v789
        %v1007 = vmul.f32 %v881, %v791
        %v1008 = vmul.f32 %v882, %v722
        %v1009 = vmul.f32 %v883, %v724
        %v1010 = vmul.f32 %v884, %v793
        %v1011 = vmul.f32 %v885, %v795
        %v1012 = vmul.f32 %v886, %v728
        %v1013 = vmul.f32 %v887, %v730
        %v1014 = vmul.f32 %v888, %v799
        %v1015 = vmul.f32 %v889, %v801
        %v1016 = vadd.f32 %v988, %v992
        %v1017 = vadd.f32 %v1016, %v996
        %v1018 = vadd.f32 %v1017, %v1000
        %v1019 = vadd.f32 %v1018, %v1004
        %v1020 = vadd.f32 %v1019, %v1008
        %v1021 = vsel %vm896, %v1012, 0.0
        %v1022 = vadd.f32 %v1020, %v1021
        %v1023 = vrot.slane %v1022, 4
        %v1024 = vadd.f32 %v1022, %v1023
        %v1025 = vrot.slane %v1024, 2
        %v1026 = vadd.f32 %v1024, %v1025
        %v1027 = vrot.slane %v1026, 1
        %v1028 = vadd.f32 %v1026, %v1027
        %v1029 = vadd.f32 %v989, %v993
        %v1030 = vadd.f32 %v1029, %v997
        %v1031 = vadd.f32 %v1030, %v1001
        %v1032 = vadd.f32 %v1031, %v1005
        %v1033 = vadd.f32 %v1032, %v1009
        %v1034 = vsel %vm896, %v1013, 0.0
        %v1035 = vadd.f32 %v1033, %v1034
        %v1036 = vrot.slane %v1035, 4
        %v1037 = vadd.f32 %v1035, %v1036
        %v1038 = vrot.slane %v1037, 2
        %v1039 = vadd.f32 %v1037, %v1038
        %v1040 = vrot.slane %v1039, 1
        %v1041 = vadd.f32 %v1039, %v1040
        %v1042 = vadd.f32 %v990, %v994
        %v1043 = vadd.f32 %v1042, %v998
        %v1044 = vadd.f32 %v1043, %v1002
        %v1045 = vadd.f32 %v1044, %v1006
        %v1046 = vadd.f32 %v1045, %v1010
        %v1047 = vsel %vm896, %v1014, 0.0
        %v1048 = vadd.f32 %v1046, %v1047
        %v1049 = vrot.slane %v1048, 4
        %v1050 = vadd.f32 %v1048, %v1049
        %v1051 = vrot.slane %v1050, 2
        %v1052 = vadd.f32 %v1050, %v1051
        %v1053 = vrot.slane %v1052, 1
        %v1054 = vadd.f32 %v1052, %v1053
        %v1055 = vsel %vm931, %v991, 0.0
        %v1056 = vsel %vm931, %v995, 0.0
        %v1057 = vadd.f32 %v1055, %v1056
        %v1058 = vsel %vm931, %v999, 0.0
        %v1059 = vadd.f32 %v1057, %v1058
        %v1060 = vsel %vm931, %v1003, 0.0
        %v1061 = vadd.f32 %v1059, %v1060
        %v1062 = vsel %vm931, %v1007, 0.0
        %v1063 = vadd.f32 %v1061, %v1062
        %v1064 = vsel %vm931, %v1011, 0.0
        %v1065 = vadd.f32 %v1063, %v1064
        %v1066 = vsel %vm943, %v1015, 0.0
        %v1067 = vadd.f32 %v1065, %v1066
        %v1068 = vrot.slane %v1067, 4
        %v1069 = vadd.f32 %v1067, %v1068
        %v1070 = vrot.slane %v1069, 2
        %v1071 = vadd.f32 %v1069, %v1070
        %v1072 = vrot.slane %v1071, 1
        %v1073 = vadd.f32 %v1071, %v1072
        %v1078 = vcombine.low %v1028, %v1041
        %v1079 = vcombine.low %v1054, %v1073
        %v1081 = vunpack.c.l.s4 1966171168
        %v1082 = vunpack.c.0.s8 %v1081
        %v1083 = vlaneseq
        %v1084 = vshrl.u32 %v1083, 7
        %v1085 = vsub.s32 %v1082, %v1084
        %v1086 = vrot.slane %v1078, %v1085
        %v1088 = vunpack.c.l.s4 1966171168
        %v1089 = vunpack.c.0.s8 %v1088
        %v1090 = vlaneseq
        %v1091 = vshrl.u32 %v1090, 7
        %v1092 = vsub.s32 %v1089, %v1091
        %v1093 = vrot.slane %v1079, %v1092
        %v1094 = vcombine.low %v1086, %v1093
        %v1096 = vunpack.c.l.s4 1966171168
        %v1097 = vunpack.c.0.s8 %v1096
        %v1098 = vlaneseq
        %v1099 = vshrl.u32 %v1098, 7
        %v1100 = vsub.s32 %v1097, %v1099
        %v1101 = vrot.slane %v1094, %v1100
        %v1103 = vadd.f32 %v987, %v1101
        %1104 = vst.msk [vmem:[#allocation3] sm:$0xf] %vm985, %v1103
      $region72: #{cnn_forward.3} parent=63 // pred_fallthru
        _
      %p1105 = scmp.eq.s32.totalorder %s26, 1
      %p1106 = pnand %p1105, %p806
      %p1107 = pneg %p1106
      // Predicated region
      $region73: #{cnn_forward.3} parent=63 // pred_check
        _
      $region74: #{cnn_forward.3} parent=63 // pred_check_branch
        %1109 = sbr.rel (%p1106) target = $region76
      $region75: #{cnn_forward.3} parent=63 // pred_region
        %v1110 = vld [vmem:[#allocation2] sm:$0xf]
        %v1111 = vld [vmem:[%s2] sm:$0xff]
        %v1112 = vld [vmem:[%s2 + $0x8] sm:$0xff]
        %v1113 = vld [vmem:[%s2 + $0x10] sm:$0xff]
        %v1114 = vld [vmem:[%s2 + $0x18] sm:$0xff]
        %v1115 = vld [vmem:[%s2 + $0x20] sm:$0xff]
        %v1116 = vld [vmem:[%s2 + $0x28] sm:$0xff]
        %v1117 = vld [vmem:[%s2 + $0x30] sm:$0xff]
        %v1118 = vld [vmem:[%s2 + $0x38] sm:$0xff]
        %v1119 = vld [vmem:[%s2 + $0x40] sm:$0xff]
        %v1120 = vld [vmem:[%s2 + $0x48] sm:$0xff]
        %v1121 = vld [vmem:[%s2 + $0x50] sm:$0xff]
        %v1122 = vld [vmem:[%s2 + $0x58] sm:$0xff]
        %v1123 = vld [vmem:[%s2 + $0x60] sm:$0xff]
        %v1124 = vld [vmem:[%s2 + $0x68] sm:$0xff]
        %v1125 = vld [vmem:[%s2 + $0x70] sm:$0xff]
        %v1126 = vld [vmem:[%s2 + $0x78] sm:$0xff]
        %v1127 = vld [vmem:[%s2 + $0x80] sm:$0xff]
        %v1128 = vld [vmem:[%s2 + $0x88] sm:$0xff]
        %v1129 = vld [vmem:[%s2 + $0x90] sm:$0xff]
        %v1130 = vld [vmem:[%s2 + $0x98] sm:$0xff]
        %v1131 = vld [vmem:[%s2 + $0xa0] sm:$0xff]
        %v1132 = vld [vmem:[%s2 + $0xa8] sm:$0xff]
        %v1133 = vld [vmem:[%s2 + $0xb0] sm:$0xff]
        %v1134 = vld [vmem:[%s2 + $0xb8] sm:$0xff]
        %v1135 = vld [vmem:[%s2 + $0xc0] sm:$0xff]
        %v1136 = vld [vmem:[%s2 + $0xc8] sm:$0xff]
        %v1137 = vld [vmem:[%s2 + $0xd0] sm:$0xff]
        %v1138 = vld [vmem:[%s2 + $0xd8] sm:$0xff]
        %v1139 = vld [vmem:[%s2 + $0xe0] sm:$0xff]
        %v1140 = vld [vmem:[%s2 + $0xe8] sm:$0xff]
        %v1141 = vld [vmem:[%s2 + $0xf0] sm:$0xff]
        %v1142 = vld [vmem:[%s2 + $0xf8] sm:$0xff]
        %v1143 = vld [vmem:[%s2 + $0x100] sm:$0xff]
        %v1144 = vld [vmem:[%s2 + $0x108] sm:$0xff]
        %v1145 = vld [vmem:[%s2 + $0x110] sm:$0xff]
        %v1146 = vld [vmem:[%s2 + $0x118] sm:$0xff]
        %v1147 = vld [vmem:[%s2 + $0x120] sm:$0xff]
        %v1148 = vld [vmem:[%s2 + $0x128] sm:$0xff]
        %v1149 = vld [vmem:[%s2 + $0x130] sm:$0xff]
        %v1150 = vld [vmem:[%s2 + $0x138] sm:$0xff]
        %v1151 = vld [vmem:[%s2 + $0x140] sm:$0xff]
        %v1152 = vld [vmem:[%s2 + $0x148] sm:$0xff]
        %v1153 = vld [vmem:[%s2 + $0x150] sm:$0xff]
        %v1154 = vld [vmem:[%s2 + $0x158] sm:$0xff]
        %v1155 = vld [vmem:[%s2 + $0x160] sm:$0xff]
        %v1156 = vld [vmem:[%s2 + $0x168] sm:$0xff]
        %v1157 = vld [vmem:[%s2 + $0x170] sm:$0xff]
        %v1158 = vld [vmem:[%s2 + $0x178] sm:$0xff]
        %v1159 = vld [vmem:[%s2 + $0x180] sm:$0xff]
        %v1160 = vld [vmem:[%s2 + $0x188] sm:$0xff]
        %v1161 = vld [vmem:[%s2 + $0x190] sm:$0xff]
        %v1162 = vld [vmem:[%s2 + $0x198] sm:$0xff]
        %v1164 = vlaneseq
        %v1165 = vshrl.u32 %v1164, 7
        %v1166 = vsub.s32 0, %v1165
        %v1167 = vrot.slane %v1110, %v1166
        %v1168 = vlaneseq
        %v1169 = vshrl.u32 %v1168, 7
        %v1170 = vsub.s32 1, %v1169
        %v1171 = vrot.slane %v1110, %v1170
        %v1172 = vlaneseq
        %v1173 = vshrl.u32 %v1172, 7
        %v1174 = vsub.s32 2, %v1173
        %v1175 = vrot.slane %v1110, %v1174
        %v1176 = vlaneseq
        %v1177 = vshrl.u32 %v1176, 7
        %v1178 = vsub.s32 3, %v1177
        %v1179 = vrot.slane %v1110, %v1178
        %vm1183 = vcmask 261120
        %v1184 = vsel %vm1183, %v1179, 0
        %1186 = vmatprep.subr.mxu0 0.0
        %1187 = vmatpush1.msra.mxu0 %v1111
        %1188 = vmatprep.subr.mxu0 0.0
        %1189 = vmatpush1.msra.mxu0 %v1112
        %1190 = vmatprep.subr.mxu0 0.0
        %1191 = vmatpush1.msra.mxu0 %v1113
        %1192 = vmatprep.subr.mxu0 0.0
        %1193 = vmatpush1.msra.mxu0 %v1114
        %1194 = vmatprep.subr.mxu0 0.0
        %1195 = vmatpush1.msra.mxu0 %v1115
        %1196 = vmatprep.subr.mxu0 0.0
        %1197 = vmatpush1.msra.mxu0 %v1116
        %1198 = vmatprep.subr.mxu0 0.0
        %1199 = vmatpush1.msra.mxu0 %v1117
        %1200 = vmatprep.subr.mxu0 0.0
        %1201 = vmatpush1.msra.mxu0 %v1118
        %1202 = vmatprep.subr.mxu0 0.0
        %1203 = vmatpush1.msra.mxu0 %v1119
        %1204 = vmatprep.subr.mxu0 0.0
        %1205 = vmatpush1.msra.mxu0 %v1120
        %1206 = vmatprep.subr.mxu0 0.0
        %1207 = vmatpush1.msra.mxu0 %v1121
        %1208 = vmatprep.subr.mxu0 0.0
        %1209 = vmatpush1.msra.mxu0 %v1122
        %1210 = vmatprep.subr.mxu0 0.0
        %1211 = vmatpush1.msra.mxu0 %v1123
        %1212 = vmatprep.subr.mxu0 0.0
        %1213 = vmatpush1.msra.mxu0 %v1124
        %1214 = vmatprep.subr.mxu0 0.0
        %1215 = vmatpush1.msra.mxu0 %v1125
        %1216 = vmatprep.subr.mxu0 0.0
        %1217 = vmatpush1.msra.mxu0 %v1126
        %1218 = vmatprep.subr.mxu0 0.0
        %1219 = vmatpush1.msra.mxu0 %v1127
        %1220 = vmatprep.subr.mxu0 0.0
        %1221 = vmatpush1.msra.mxu0 %v1128
        %1222 = vmatprep.subr.mxu0 0.0
        %1223 = vmatpush1.msra.mxu0 %v1129
        %1224 = vmatprep.subr.mxu0 0.0
        %1225 = vmatpush1.msra.mxu0 %v1130
        %1226 = vmatprep.subr.mxu0 0.0
        %1227 = vmatpush1.msra.mxu0 %v1131
        %1228 = vmatprep.subr.mxu0 0.0
        %1229 = vmatpush1.msra.mxu0 %v1132
        %1230 = vmatprep.subr.mxu0 0.0
        %1231 = vmatpush1.msra.mxu0 %v1133
        %1232 = vmatprep.subr.mxu0 0.0
        %1233 = vmatpush1.msra.mxu0 %v1134
        %1234 = vmatprep.subr.mxu0 0.0
        %1235 = vmatpush1.msra.mxu0 %v1135
        %1236 = vmatprep.subr.mxu0 0.0
        %1237 = vmatpush1.msra.mxu0 %v1136
        %1238 = vmatprep.subr.mxu0 0.0
        %1239 = vmatpush1.msra.mxu0 %v1137
        %1240 = vmatprep.subr.mxu0 0.0
        %1241 = vmatpush1.msra.mxu0 %v1138
        %1242 = vmatprep.subr.mxu0 0.0
        %1243 = vmatpush1.msra.mxu0 %v1139
        %1244 = vmatprep.subr.mxu0 0.0
        %1245 = vmatpush1.msra.mxu0 %v1140
        %1246 = vmatprep.subr.mxu0 0.0
        %1247 = vmatpush1.msra.mxu0 %v1141
        %1248 = vmatprep.subr.mxu0 0.0
        %1249 = vmatpush1.msra.mxu0 %v1142
        %1250 = vmatprep.mubr.f32.mxu0 %v1171
        %1251 = vmatmul.mubr.f32.gmra.mrb[0].mxu0 %v1167
        %v1252 = vpop.f32.mrb[0].mxu0
        %v1253 = vadd.f32 0.0, %v1252
        %v1254 = vpop.f32.mrb[0].mxu0
        %1255 = vdwg.mxu0
        %1256 = vmatprep.subr.mxu0 0.0
        %1257 = vmatpush1.msra.mxu0 %v1143
        %1258 = vmatprep.subr.mxu0 0.0
        %1259 = vmatpush1.msra.mxu0 %v1144
        %1260 = vmatprep.subr.mxu0 0.0
        %1261 = vmatpush1.msra.mxu0 %v1145
        %1262 = vmatprep.subr.mxu0 0.0
        %1263 = vmatpush1.msra.mxu0 %v1146
        %1264 = vmatprep.subr.mxu0 0.0
        %1265 = vmatpush1.msra.mxu0 %v1147
        %1266 = vmatprep.subr.mxu0 0.0
        %1267 = vmatpush1.msra.mxu0 %v1148
        %1268 = vmatprep.subr.mxu0 0.0
        %1269 = vmatpush1.msra.mxu0 %v1149
        %1270 = vmatprep.subr.mxu0 0.0
        %1271 = vmatpush1.msra.mxu0 %v1150
        %1272 = vmatprep.subr.mxu0 0.0
        %1273 = vmatpush1.msra.mxu0 %v1151
        %1274 = vmatprep.subr.mxu0 0.0
        %1275 = vmatpush1.msra.mxu0 %v1152
        %1276 = vmatprep.subr.mxu0 0.0
        %1277 = vmatpush1.msra.mxu0 %v1153
        %1278 = vmatprep.subr.mxu0 0.0
        %1279 = vmatpush1.msra.mxu0 %v1154
        %1280 = vmatprep.subr.mxu0 0.0
        %1281 = vmatpush1.msra.mxu0 %v1155
        %1282 = vmatprep.subr.mxu0 0.0
        %1283 = vmatpush1.msra.mxu0 %v1156
        %1284 = vmatprep.subr.mxu0 0.0
        %1285 = vmatpush1.msra.mxu0 %v1157
        %1286 = vmatprep.subr.mxu0 0.0
        %1287 = vmatpush1.msra.mxu0 %v1158
        %1288 = vmatprep.subr.mxu0 0.0
        %1289 = vmatpush1.msra.mxu0 %v1159
        %1290 = vmatprep.subr.mxu0 0.0
        %1291 = vmatpush1.msra.mxu0 %v1160
        %1292 = vmatprep.subr.mxu0 0.0
        %1293 = vmatpush1.msra.mxu0 %v1161
        %1294 = vmatprep.subr.mxu0 0.0
        %1295 = vmatpush1.msra.mxu0 %v1162
        %1296 = vmatprep.subr.mxu0 0.0
        %1297 = vmatpush1.msra.mxu0 0.0
        %1298 = vmatprep.subr.mxu0 0.0
        %1299 = vmatpush1.msra.mxu0 0.0
        %1300 = vmatprep.subr.mxu0 0.0
        %1301 = vmatpush1.msra.mxu0 0.0
        %1302 = vmatprep.subr.mxu0 0.0
        %1303 = vmatpush1.msra.mxu0 0.0
        %1304 = vmatprep.subr.mxu0 0.0
        %1305 = vmatpush1.msra.mxu0 0.0
        %1306 = vmatprep.subr.mxu0 0.0
        %1307 = vmatpush1.msra.mxu0 0.0
        %1308 = vmatprep.subr.mxu0 0.0
        %1309 = vmatpush1.msra.mxu0 0.0
        %1310 = vmatprep.subr.mxu0 0.0
        %1311 = vmatpush1.msra.mxu0 0.0
        %1312 = vmatprep.subr.mxu0 0.0
        %1313 = vmatpush1.msra.mxu0 0.0
        %1314 = vmatprep.subr.mxu0 0.0
        %1315 = vmatpush1.msra.mxu0 0.0
        %1316 = vmatprep.subr.mxu0 0.0
        %1317 = vmatpush1.msra.mxu0 0.0
        %1318 = vmatprep.subr.mxu0 0.0
        %1319 = vmatpush1.msra.mxu0 0.0
        %1320 = vmatprep.mubr.f32.mxu0 %v1184
        %1321 = vmatmul.mubr.f32.gmra.mrb[0].mxu0 %v1175
        %v1322 = vpop.f32.mrb[0].mxu0
        %v1323 = vadd.f32 %v1253, %v1322
        %v1324 = vpop.f32.mrb[0].mxu0
        %1325 = vdwg.mxu0
        %v1326 = vld [vmem:[#allocation3] sm:$0xf]
        %v1328 = vlaneseq
        %v1329 = vshrl.u32 %v1328, 7
        %v1330 = vsub.s32 0, %v1329
        %v1331 = vrot.slane %v1326, %v1330
        %v1332 = vlaneseq
        %v1333 = vshrl.u32 %v1332, 7
        %v1334 = vsub.s32 1, %v1333
        %v1335 = vrot.slane %v1326, %v1334
        %v1336 = vlaneseq
        %v1337 = vshrl.u32 %v1336, 7
        %v1338 = vsub.s32 2, %v1337
        %v1339 = vrot.slane %v1326, %v1338
        %v1340 = vlaneseq
        %v1341 = vshrl.u32 %v1340, 7
        %v1342 = vsub.s32 3, %v1341
        %v1343 = vrot.slane %v1326, %v1342
        %v1347 = vsel %vm1183, %v1343, 0
        %1349 = vmatprep.subr.mxu0 0.0
        %1350 = vmatpush1.msra.mxu0 %v1111
        %1351 = vmatprep.subr.mxu0 0.0
        %1352 = vmatpush1.msra.mxu0 %v1112
        %1353 = vmatprep.subr.mxu0 0.0
        %1354 = vmatpush1.msra.mxu0 %v1113
        %1355 = vmatprep.subr.mxu0 0.0
        %1356 = vmatpush1.msra.mxu0 %v1114
        %1357 = vmatprep.subr.mxu0 0.0
        %1358 = vmatpush1.msra.mxu0 %v1115
        %1359 = vmatprep.subr.mxu0 0.0
        %1360 = vmatpush1.msra.mxu0 %v1116
        %1361 = vmatprep.subr.mxu0 0.0
        %1362 = vmatpush1.msra.mxu0 %v1117
        %1363 = vmatprep.subr.mxu0 0.0
        %1364 = vmatpush1.msra.mxu0 %v1118
        %1365 = vmatprep.subr.mxu0 0.0
        %1366 = vmatpush1.msra.mxu0 %v1119
        %1367 = vmatprep.subr.mxu0 0.0
        %1368 = vmatpush1.msra.mxu0 %v1120
        %1369 = vmatprep.subr.mxu0 0.0
        %1370 = vmatpush1.msra.mxu0 %v1121
        %1371 = vmatprep.subr.mxu0 0.0
        %1372 = vmatpush1.msra.mxu0 %v1122
        %1373 = vmatprep.subr.mxu0 0.0
        %1374 = vmatpush1.msra.mxu0 %v1123
        %1375 = vmatprep.subr.mxu0 0.0
        %1376 = vmatpush1.msra.mxu0 %v1124
        %1377 = vmatprep.subr.mxu0 0.0
        %1378 = vmatpush1.msra.mxu0 %v1125
        %1379 = vmatprep.subr.mxu0 0.0
        %1380 = vmatpush1.msra.mxu0 %v1126
        %1381 = vmatprep.subr.mxu0 0.0
        %1382 = vmatpush1.msra.mxu0 %v1127
        %1383 = vmatprep.subr.mxu0 0.0
        %1384 = vmatpush1.msra.mxu0 %v1128
        %1385 = vmatprep.subr.mxu0 0.0
        %1386 = vmatpush1.msra.mxu0 %v1129
        %1387 = vmatprep.subr.mxu0 0.0
        %1388 = vmatpush1.msra.mxu0 %v1130
        %1389 = vmatprep.subr.mxu0 0.0
        %1390 = vmatpush1.msra.mxu0 %v1131
        %1391 = vmatprep.subr.mxu0 0.0
        %1392 = vmatpush1.msra.mxu0 %v1132
        %1393 = vmatprep.subr.mxu0 0.0
        %1394 = vmatpush1.msra.mxu0 %v1133
        %1395 = vmatprep.subr.mxu0 0.0
        %1396 = vmatpush1.msra.mxu0 %v1134
        %1397 = vmatprep.subr.mxu0 0.0
        %1398 = vmatpush1.msra.mxu0 %v1135
        %1399 = vmatprep.subr.mxu0 0.0
        %1400 = vmatpush1.msra.mxu0 %v1136
        %1401 = vmatprep.subr.mxu0 0.0
        %1402 = vmatpush1.msra.mxu0 %v1137
        %1403 = vmatprep.subr.mxu0 0.0
        %1404 = vmatpush1.msra.mxu0 %v1138
        %1405 = vmatprep.subr.mxu0 0.0
        %1406 = vmatpush1.msra.mxu0 %v1139
        %1407 = vmatprep.subr.mxu0 0.0
        %1408 = vmatpush1.msra.mxu0 %v1140
        %1409 = vmatprep.subr.mxu0 0.0
        %1410 = vmatpush1.msra.mxu0 %v1141
        %1411 = vmatprep.subr.mxu0 0.0
        %1412 = vmatpush1.msra.mxu0 %v1142
        %1413 = vmatprep.mubr.f32.mxu0 %v1335
        %1414 = vmatmul.mubr.f32.gmra.mrb[0].mxu0 %v1331
        %v1415 = vpop.f32.mrb[0].mxu0
        %v1416 = vadd.f32 0.0, %v1415
        %v1417 = vpop.f32.mrb[0].mxu0
        %1418 = vdwg.mxu0
        %1419 = vmatprep.subr.mxu0 0.0
        %1420 = vmatpush1.msra.mxu0 %v1143
        %1421 = vmatprep.subr.mxu0 0.0
        %1422 = vmatpush1.msra.mxu0 %v1144
        %1423 = vmatprep.subr.mxu0 0.0
        %1424 = vmatpush1.msra.mxu0 %v1145
        %1425 = vmatprep.subr.mxu0 0.0
        %1426 = vmatpush1.msra.mxu0 %v1146
        %1427 = vmatprep.subr.mxu0 0.0
        %1428 = vmatpush1.msra.mxu0 %v1147
        %1429 = vmatprep.subr.mxu0 0.0
        %1430 = vmatpush1.msra.mxu0 %v1148
        %1431 = vmatprep.subr.mxu0 0.0
        %1432 = vmatpush1.msra.mxu0 %v1149
        %1433 = vmatprep.subr.mxu0 0.0
        %1434 = vmatpush1.msra.mxu0 %v1150
        %1435 = vmatprep.subr.mxu0 0.0
        %1436 = vmatpush1.msra.mxu0 %v1151
        %1437 = vmatprep.subr.mxu0 0.0
        %1438 = vmatpush1.msra.mxu0 %v1152
        %1439 = vmatprep.subr.mxu0 0.0
        %1440 = vmatpush1.msra.mxu0 %v1153
        %1441 = vmatprep.subr.mxu0 0.0
        %1442 = vmatpush1.msra.mxu0 %v1154
        %1443 = vmatprep.subr.mxu0 0.0
        %1444 = vmatpush1.msra.mxu0 %v1155
        %1445 = vmatprep.subr.mxu0 0.0
        %1446 = vmatpush1.msra.mxu0 %v1156
        %1447 = vmatprep.subr.mxu0 0.0
        %1448 = vmatpush1.msra.mxu0 %v1157
        %1449 = vmatprep.subr.mxu0 0.0
        %1450 = vmatpush1.msra.mxu0 %v1158
        %1451 = vmatprep.subr.mxu0 0.0
        %1452 = vmatpush1.msra.mxu0 %v1159
        %1453 = vmatprep.subr.mxu0 0.0
        %1454 = vmatpush1.msra.mxu0 %v1160
        %1455 = vmatprep.subr.mxu0 0.0
        %1456 = vmatpush1.msra.mxu0 %v1161
        %1457 = vmatprep.subr.mxu0 0.0
        %1458 = vmatpush1.msra.mxu0 %v1162
        %1459 = vmatprep.subr.mxu0 0.0
        %1460 = vmatpush1.msra.mxu0 0.0
        %1461 = vmatprep.subr.mxu0 0.0
        %1462 = vmatpush1.msra.mxu0 0.0
        %1463 = vmatprep.subr.mxu0 0.0
        %1464 = vmatpush1.msra.mxu0 0.0
        %1465 = vmatprep.subr.mxu0 0.0
        %1466 = vmatpush1.msra.mxu0 0.0
        %1467 = vmatprep.subr.mxu0 0.0
        %1468 = vmatpush1.msra.mxu0 0.0
        %1469 = vmatprep.subr.mxu0 0.0
        %1470 = vmatpush1.msra.mxu0 0.0
        %1471 = vmatprep.subr.mxu0 0.0
        %1472 = vmatpush1.msra.mxu0 0.0
        %1473 = vmatprep.subr.mxu0 0.0
        %1474 = vmatpush1.msra.mxu0 0.0
        %1475 = vmatprep.subr.mxu0 0.0
        %1476 = vmatpush1.msra.mxu0 0.0
        %1477 = vmatprep.subr.mxu0 0.0
        %1478 = vmatpush1.msra.mxu0 0.0
        %1479 = vmatprep.subr.mxu0 0.0
        %1480 = vmatpush1.msra.mxu0 0.0
        %1481 = vmatprep.subr.mxu0 0.0
        %1482 = vmatpush1.msra.mxu0 0.0
        %1483 = vmatprep.mubr.f32.mxu0 %v1347
        %1484 = vmatmul.mubr.f32.gmra.mrb[0].mxu0 %v1339
        %v1485 = vpop.f32.mrb[0].mxu0
        %v1486 = vadd.f32 %v1416, %v1485
        %v1487 = vpop.f32.mrb[0].mxu0
        %1488 = vdwg.mxu0
        %v1489 = vmul.f32 %v1323, 0.000739645
        %v1490 = vmul.f32 %v1486, 0.000739645
        %v1491 = vmul.f32 %v1489, %v1489
        %v1492 = vsub.f32 %v1490, %v1491
        %v1493 = vld [vmem:[%s4] sm:$0x1]
        %v1494 = vadd.f32 %v1492, 1e-05
        %v1495 = vrsqrt.pop %v1494
        %v1496 = vmul.f32 %v1493, %v1495
        %v1497 = vld [vmem:[%s5] sm:$0x1]
        %v1498 = vmul.f32 %v1489, %v1496
        %v1499 = vsub.f32 %v1497, %v1498
        %v1500 = vld [vmem:[%s3] sm:$0xff]
        %v1501 = vld [vmem:[%s3 + $0x8] sm:$0xff]
        %v1502 = vld [vmem:[%s3 + $0x10] sm:$0xff]
        %v1503 = vld [vmem:[%s3 + $0x18] sm:$0xff]
        %v1504 = vld [vmem:[%s3 + $0x20] sm:$0xff]
        %v1505 = vld [vmem:[%s3 + $0x28] sm:$0xff]
        %v1506 = vld [vmem:[%s3 + $0x30] sm:$0xff]
        %v1507 = vld [vmem:[%s3 + $0x38] sm:$0xff]
        %vm1508 = vcmask 130048
        %v1510 = vsel %vm1508, %v1496, 0
        %1512 = vmatprep.subr.mxu0 %v1501
        %1513 = vmatpush1.msra.mxu0 %v1500
        %1514 = vmatprep.subr.mxu0 %v1505
        %1515 = vmatpush1.msra.mxu0 %v1504
        %1516 = vmatprep.subr.mxu0 0.0
        %1517 = vmatpush1.msra.mxu0 0.0
        %1518 = vmatprep.subr.mxu0 0.0
        %1519 = vmatpush1.msra.mxu0 0.0
        %1520 = vmatprep.subr.mxu0 0.0
        %1521 = vmatpush1.msra.mxu0 0.0
        %1522 = vmatprep.subr.mxu0 0.0
        %1523 = vmatpush1.msra.mxu0 0.0
        %1524 = vmatprep.subr.mxu0 0.0
        %1525 = vmatpush1.msra.mxu0 0.0
        %1526 = vmatprep.subr.mxu0 0.0
        %1527 = vmatpush1.msra.mxu0 0.0
        %1528 = vmatprep.subr.mxu0 0.0
        %1529 = vmatpush1.msra.mxu0 0.0
        %1530 = vmatprep.subr.mxu0 0.0
        %1531 = vmatpush1.msra.mxu0 0.0
        %1532 = vmatprep.subr.mxu0 0.0
        %1533 = vmatpush1.msra.mxu0 0.0
        %1534 = vmatprep.subr.mxu0 0.0
        %1535 = vmatpush1.msra.mxu0 0.0
        %1536 = vmatprep.subr.mxu0 0.0
        %1537 = vmatpush1.msra.mxu0 0.0
        %1538 = vmatprep.subr.mxu0 0.0
        %1539 = vmatpush1.msra.mxu0 0.0
        %1540 = vmatprep.subr.mxu0 0.0
        %1541 = vmatpush1.msra.mxu0 0.0
        %1542 = vmatprep.subr.mxu0 0.0
        %1543 = vmatpush1.msra.mxu0 0.0
        %1544 = vmatprep.subr.mxu0 0.0
        %1545 = vmatpush1.msra.mxu0 0.0
        %1546 = vmatprep.subr.mxu0 0.0
        %1547 = vmatpush1.msra.mxu0 0.0
        %1548 = vmatprep.subr.mxu0 0.0
        %1549 = vmatpush1.msra.mxu0 0.0
        %1550 = vmatprep.subr.mxu0 0.0
        %1551 = vmatpush1.msra.mxu0 0.0
        %1552 = vmatprep.subr.mxu0 0.0
        %1553 = vmatpush1.msra.mxu0 0.0
        %1554 = vmatprep.subr.mxu0 0.0
        %1555 = vmatpush1.msra.mxu0 0.0
        %1556 = vmatprep.subr.mxu0 0.0
        %1557 = vmatpush1.msra.mxu0 0.0
        %1558 = vmatprep.subr.mxu0 0.0
        %1559 = vmatpush1.msra.mxu0 0.0
        %1560 = vmatprep.subr.mxu0 0.0
        %1561 = vmatpush1.msra.mxu0 0.0
        %1562 = vmatprep.subr.mxu0 0.0
        %1563 = vmatpush1.msra.mxu0 0.0
        %1564 = vmatprep.subr.mxu0 0.0
        %1565 = vmatpush1.msra.mxu0 0.0
        %1566 = vmatprep.subr.mxu0 0.0
        %1567 = vmatpush1.msra.mxu0 0.0
        %1568 = vmatprep.subr.mxu0 0.0
        %1569 = vmatpush1.msra.mxu0 0.0
        %1570 = vmatprep.subr.mxu0 0.0
        %1571 = vmatpush1.msra.mxu0 0.0
        %1572 = vmatprep.subr.mxu0 0.0
        %1573 = vmatpush1.msra.mxu0 0.0
        %1574 = vmatprep.subr.mxu0 0.0
        %1575 = vmatpush1.msra.mxu0 0.0
        %1576 = vmatprep.mubr.f32.mxu0 0.0
        %1577 = vmatmul.mubr.f32.gmra.mrb[0].mxu0 %v1510
        %v1578 = vpop.f32.mrb[0].mxu0
        %v1579 = vadd.f32 0.0, %v1578
        %v1580 = vpop.f32.mrb[0].mxu0
        %v1581 = vadd.f32 0.0, %v1580
        %1582 = vdwg.mxu0
        %1583 = vmatprep.subr.mxu0 %v1503
        %1584 = vmatpush1.msra.mxu0 %v1502
        %1585 = vmatprep.subr.mxu0 %v1507
        %1586 = vmatpush1.msra.mxu0 %v1506
        %1587 = vmatprep.subr.mxu0 0.0
        %1588 = vmatpush1.msra.mxu0 0.0
        %1589 = vmatprep.subr.mxu0 0.0
        %1590 = vmatpush1.msra.mxu0 0.0
        %1591 = vmatprep.subr.mxu0 0.0
        %1592 = vmatpush1.msra.mxu0 0.0
        %1593 = vmatprep.subr.mxu0 0.0
        %1594 = vmatpush1.msra.mxu0 0.0
        %1595 = vmatprep.subr.mxu0 0.0
        %1596 = vmatpush1.msra.mxu0 0.0
        %1597 = vmatprep.subr.mxu0 0.0
        %1598 = vmatpush1.msra.mxu0 0.0
        %1599 = vmatprep.subr.mxu0 0.0
        %1600 = vmatpush1.msra.mxu0 0.0
        %1601 = vmatprep.subr.mxu0 0.0
        %1602 = vmatpush1.msra.mxu0 0.0
        %1603 = vmatprep.subr.mxu0 0.0
        %1604 = vmatpush1.msra.mxu0 0.0
        %1605 = vmatprep.subr.mxu0 0.0
        %1606 = vmatpush1.msra.mxu0 0.0
        %1607 = vmatprep.subr.mxu0 0.0
        %1608 = vmatpush1.msra.mxu0 0.0
        %1609 = vmatprep.subr.mxu0 0.0
        %1610 = vmatpush1.msra.mxu0 0.0
        %1611 = vmatprep.subr.mxu0 0.0
        %1612 = vmatpush1.msra.mxu0 0.0
        %1613 = vmatprep.subr.mxu0 0.0
        %1614 = vmatpush1.msra.mxu0 0.0
        %1615 = vmatprep.subr.mxu0 0.0
        %1616 = vmatpush1.msra.mxu0 0.0
        %1617 = vmatprep.subr.mxu0 0.0
        %1618 = vmatpush1.msra.mxu0 0.0
        %1619 = vmatprep.subr.mxu0 0.0
        %1620 = vmatpush1.msra.mxu0 0.0
        %1621 = vmatprep.subr.mxu0 0.0
        %1622 = vmatpush1.msra.mxu0 0.0
        %1623 = vmatprep.subr.mxu0 0.0
        %1624 = vmatpush1.msra.mxu0 0.0
        %1625 = vmatprep.subr.mxu0 0.0
        %1626 = vmatpush1.msra.mxu0 0.0
        %1627 = vmatprep.subr.mxu0 0.0
        %1628 = vmatpush1.msra.mxu0 0.0
        %1629 = vmatprep.subr.mxu0 0.0
        %1630 = vmatpush1.msra.mxu0 0.0
        %1631 = vmatprep.subr.mxu0 0.0
        %1632 = vmatpush1.msra.mxu0 0.0
        %1633 = vmatprep.subr.mxu0 0.0
        %1634 = vmatpush1.msra.mxu0 0.0
        %1635 = vmatprep.subr.mxu0 0.0
        %1636 = vmatpush1.msra.mxu0 0.0
        %1637 = vmatprep.subr.mxu0 0.0
        %1638 = vmatpush1.msra.mxu0 0.0
        %1639 = vmatprep.subr.mxu0 0.0
        %1640 = vmatpush1.msra.mxu0 0.0
        %1641 = vmatprep.subr.mxu0 0.0
        %1642 = vmatpush1.msra.mxu0 0.0
        %1643 = vmatprep.subr.mxu0 0.0
        %1644 = vmatpush1.msra.mxu0 0.0
        %1645 = vmatprep.subr.mxu0 0.0
        %1646 = vmatpush1.msra.mxu0 0.0
        %1647 = vmatprep.mubr.f32.mxu0 0.0
        %1648 = vmatmul.mubr.f32.gmra.mrb[0].mxu0 %v1510
        %v1649 = vpop.f32.mrb[0].mxu0
        %v1650 = vadd.f32 0.0, %v1649
        %v1651 = vpop.f32.mrb[0].mxu0
        %v1652 = vadd.f32 0.0, %v1651
        %1653 = vdwg.mxu0
        %v1658 = vcombine.low %v1579, %v1581
        %v1659 = vcombine.low %v1650, %v1652
        %v1661 = vunpack.c.l.s4 1966171168
        %v1662 = vunpack.c.0.s8 %v1661
        %v1663 = vlaneseq
        %v1664 = vshrl.u32 %v1663, 7
        %v1665 = vsub.s32 %v1662, %v1664
        %v1666 = vrot.slane %v1658, %v1665
        %v1668 = vunpack.c.l.s4 1966171168
        %v1669 = vunpack.c.0.s8 %v1668
        %v1670 = vlaneseq
        %v1671 = vshrl.u32 %v1670, 7
        %v1672 = vsub.s32 %v1669, %v1671
        %v1673 = vrot.slane %v1659, %v1672
        %v1674 = vcombine.low %v1666, %v1673
        %v1676 = vunpack.c.l.s4 1966171168
        %v1677 = vunpack.c.0.s8 %v1676
        %v1678 = vlaneseq
        %v1679 = vshrl.u32 %v1678, 7
        %v1680 = vsub.s32 %v1677, %v1679
        %v1681 = vrot.slane %v1674, %v1680
        %v1683 = vlaneseq
        %vm1684 = vcmp.ge.s32.totalorder %v1683, 0
        %vm1685 = vcmp.lt.s32.totalorder %v1683, 416
        %vm1686 = vmand %vm1684, %vm1685
        %1687 = vst.msk [vmem:[#allocation2] sm:$0xf] %vm1686, %v1681
        %v1688 = vld [vmem:[%s3] sm:$0xff]
        %v1689 = vld [vmem:[%s3 + $0x8] sm:$0xff]
        %v1690 = vld [vmem:[%s3 + $0x10] sm:$0xff]
        %v1691 = vld [vmem:[%s3 + $0x18] sm:$0xff]
        %v1692 = vld [vmem:[%s3 + $0x20] sm:$0xff]
        %v1693 = vld [vmem:[%s3 + $0x28] sm:$0xff]
        %v1694 = vld [vmem:[%s3 + $0x30] sm:$0xff]
        %v1695 = vld [vmem:[%s3 + $0x38] sm:$0xff]
        %v1697 = vsel %vm1508, %v1499, 0
        %1699 = vmatprep.subr.mxu0 %v1689
        %1700 = vmatpush1.msra.mxu0 %v1688
        %1701 = vmatprep.subr.mxu0 %v1693
        %1702 = vmatpush1.msra.mxu0 %v1692
        %1703 = vmatprep.subr.mxu0 0.0
        %1704 = vmatpush1.msra.mxu0 0.0
        %1705 = vmatprep.subr.mxu0 0.0
        %1706 = vmatpush1.msra.mxu0 0.0
        %1707 = vmatprep.subr.mxu0 0.0
        %1708 = vmatpush1.msra.mxu0 0.0
        %1709 = vmatprep.subr.mxu0 0.0
        %1710 = vmatpush1.msra.mxu0 0.0
        %1711 = vmatprep.subr.mxu0 0.0
        %1712 = vmatpush1.msra.mxu0 0.0
        %1713 = vmatprep.subr.mxu0 0.0
        %1714 = vmatpush1.msra.mxu0 0.0
        %1715 = vmatprep.subr.mxu0 0.0
        %1716 = vmatpush1.msra.mxu0 0.0
        %1717 = vmatprep.subr.mxu0 0.0
        %1718 = vmatpush1.msra.mxu0 0.0
        %1719 = vmatprep.subr.mxu0 0.0
        %1720 = vmatpush1.msra.mxu0 0.0
        %1721 = vmatprep.subr.mxu0 0.0
        %1722 = vmatpush1.msra.mxu0 0.0
        %1723 = vmatprep.subr.mxu0 0.0
        %1724 = vmatpush1.msra.mxu0 0.0
        %1725 = vmatprep.subr.mxu0 0.0
        %1726 = vmatpush1.msra.mxu0 0.0
        %1727 = vmatprep.subr.mxu0 0.0
        %1728 = vmatpush1.msra.mxu0 0.0
        %1729 = vmatprep.subr.mxu0 0.0
        %1730 = vmatpush1.msra.mxu0 0.0
        %1731 = vmatprep.subr.mxu0 0.0
        %1732 = vmatpush1.msra.mxu0 0.0
        %1733 = vmatprep.subr.mxu0 0.0
        %1734 = vmatpush1.msra.mxu0 0.0
        %1735 = vmatprep.subr.mxu0 0.0
        %1736 = vmatpush1.msra.mxu0 0.0
        %1737 = vmatprep.subr.mxu0 0.0
        %1738 = vmatpush1.msra.mxu0 0.0
        %1739 = vmatprep.subr.mxu0 0.0
        %1740 = vmatpush1.msra.mxu0 0.0
        %1741 = vmatprep.subr.mxu0 0.0
        %1742 = vmatpush1.msra.mxu0 0.0
        %1743 = vmatprep.subr.mxu0 0.0
        %1744 = vmatpush1.msra.mxu0 0.0
        %1745 = vmatprep.subr.mxu0 0.0
        %1746 = vmatpush1.msra.mxu0 0.0
        %1747 = vmatprep.subr.mxu0 0.0
        %1748 = vmatpush1.msra.mxu0 0.0
        %1749 = vmatprep.subr.mxu0 0.0
        %1750 = vmatpush1.msra.mxu0 0.0
        %1751 = vmatprep.subr.mxu0 0.0
        %1752 = vmatpush1.msra.mxu0 0.0
        %1753 = vmatprep.subr.mxu0 0.0
        %1754 = vmatpush1.msra.mxu0 0.0
        %1755 = vmatprep.subr.mxu0 0.0
        %1756 = vmatpush1.msra.mxu0 0.0
        %1757 = vmatprep.subr.mxu0 0.0
        %1758 = vmatpush1.msra.mxu0 0.0
        %1759 = vmatprep.subr.mxu0 0.0
        %1760 = vmatpush1.msra.mxu0 0.0
        %1761 = vmatprep.subr.mxu0 0.0
        %1762 = vmatpush1.msra.mxu0 0.0
        %1763 = vmatprep.mubr.f32.mxu0 0.0
        %1764 = vmatmul.mubr.f32.gmra.mrb[0].mxu0 %v1697
        %v1765 = vpop.f32.mrb[0].mxu0
        %v1766 = vadd.f32 0.0, %v1765
        %v1767 = vpop.f32.mrb[0].mxu0
        %v1768 = vadd.f32 0.0, %v1767
        %1769 = vdwg.mxu0
        %1770 = vmatprep.subr.mxu0 %v1691
        %1771 = vmatpush1.msra.mxu0 %v1690
        %1772 = vmatprep.subr.mxu0 %v1695
        %1773 = vmatpush1.msra.mxu0 %v1694
        %1774 = vmatprep.subr.mxu0 0.0
        %1775 = vmatpush1.msra.mxu0 0.0
        %1776 = vmatprep.subr.mxu0 0.0
        %1777 = vmatpush1.msra.mxu0 0.0
        %1778 = vmatprep.subr.mxu0 0.0
        %1779 = vmatpush1.msra.mxu0 0.0
        %1780 = vmatprep.subr.mxu0 0.0
        %1781 = vmatpush1.msra.mxu0 0.0
        %1782 = vmatprep.subr.mxu0 0.0
        %1783 = vmatpush1.msra.mxu0 0.0
        %1784 = vmatprep.subr.mxu0 0.0
        %1785 = vmatpush1.msra.mxu0 0.0
        %1786 = vmatprep.subr.mxu0 0.0
        %1787 = vmatpush1.msra.mxu0 0.0
        %1788 = vmatprep.subr.mxu0 0.0
        %1789 = vmatpush1.msra.mxu0 0.0
        %1790 = vmatprep.subr.mxu0 0.0
        %1791 = vmatpush1.msra.mxu0 0.0
        %1792 = vmatprep.subr.mxu0 0.0
        %1793 = vmatpush1.msra.mxu0 0.0
        %1794 = vmatprep.subr.mxu0 0.0
        %1795 = vmatpush1.msra.mxu0 0.0
        %1796 = vmatprep.subr.mxu0 0.0
        %1797 = vmatpush1.msra.mxu0 0.0
        %1798 = vmatprep.subr.mxu0 0.0
        %1799 = vmatpush1.msra.mxu0 0.0
        %1800 = vmatprep.subr.mxu0 0.0
        %1801 = vmatpush1.msra.mxu0 0.0
        %1802 = vmatprep.subr.mxu0 0.0
        %1803 = vmatpush1.msra.mxu0 0.0
        %1804 = vmatprep.subr.mxu0 0.0
        %1805 = vmatpush1.msra.mxu0 0.0
        %1806 = vmatprep.subr.mxu0 0.0
        %1807 = vmatpush1.msra.mxu0 0.0
        %1808 = vmatprep.subr.mxu0 0.0
        %1809 = vmatpush1.msra.mxu0 0.0
        %1810 = vmatprep.subr.mxu0 0.0
        %1811 = vmatpush1.msra.mxu0 0.0
        %1812 = vmatprep.subr.mxu0 0.0
        %1813 = vmatpush1.msra.mxu0 0.0
        %1814 = vmatprep.subr.mxu0 0.0
        %1815 = vmatpush1.msra.mxu0 0.0
        %1816 = vmatprep.subr.mxu0 0.0
        %1817 = vmatpush1.msra.mxu0 0.0
        %1818 = vmatprep.subr.mxu0 0.0
        %1819 = vmatpush1.msra.mxu0 0.0
        %1820 = vmatprep.subr.mxu0 0.0
        %1821 = vmatpush1.msra.mxu0 0.0
        %1822 = vmatprep.subr.mxu0 0.0
        %1823 = vmatpush1.msra.mxu0 0.0
        %1824 = vmatprep.subr.mxu0 0.0
        %1825 = vmatpush1.msra.mxu0 0.0
        %1826 = vmatprep.subr.mxu0 0.0
        %1827 = vmatpush1.msra.mxu0 0.0
        %1828 = vmatprep.subr.mxu0 0.0
        %1829 = vmatpush1.msra.mxu0 0.0
        %1830 = vmatprep.subr.mxu0 0.0
        %1831 = vmatpush1.msra.mxu0 0.0
        %1832 = vmatprep.subr.mxu0 0.0
        %1833 = vmatpush1.msra.mxu0 0.0
        %1834 = vmatprep.mubr.f32.mxu0 0.0
        %1835 = vmatmul.mubr.f32.gmra.mrb[0].mxu0 %v1697
        %v1836 = vpop.f32.mrb[0].mxu0
        %v1837 = vadd.f32 0.0, %v1836
        %v1838 = vpop.f32.mrb[0].mxu0
        %v1839 = vadd.f32 0.0, %v1838
        %1840 = vdwg.mxu0
        %v1845 = vcombine.low %v1766, %v1768
        %v1846 = vcombine.low %v1837, %v1839
        %v1848 = vunpack.c.l.s4 1966171168
        %v1849 = vunpack.c.0.s8 %v1848
        %v1850 = vlaneseq
        %v1851 = vshrl.u32 %v1850, 7
        %v1852 = vsub.s32 %v1849, %v1851
        %v1853 = vrot.slane %v1845, %v1852
        %v1855 = vunpack.c.l.s4 1966171168
        %v1856 = vunpack.c.0.s8 %v1855
        %v1857 = vlaneseq
        %v1858 = vshrl.u32 %v1857, 7
        %v1859 = vsub.s32 %v1856, %v1858
        %v1860 = vrot.slane %v1846, %v1859
        %v1861 = vcombine.low %v1853, %v1860
        %v1863 = vunpack.c.l.s4 1966171168
        %v1864 = vunpack.c.0.s8 %v1863
        %v1865 = vlaneseq
        %v1866 = vshrl.u32 %v1865, 7
        %v1867 = vsub.s32 %v1864, %v1866
        %v1868 = vrot.slane %v1861, %v1867
        %1870 = vst.msk [vmem:[#allocation3] sm:$0xf] %vm1686, %v1868
      $region76: #{cnn_forward.3} parent=63 // pred_fallthru
        _
      // Predicated region
      $region77: #{cnn_forward.3} parent=63 // pred_check
        %p1871 = pneg %p1105
      $region78: #{cnn_forward.3} parent=63 // pred_check_branch
        %1873 = sbr.rel (%p1871) target = $region80
      $region79: #{cnn_forward.3} parent=63 // pred_region
        %v1874 = vld [vmem:[#allocation2] sm:$0xf]
        %v1876 = vlaneseq
        %v1877 = vshrl.u32 %v1876, 7
        %v1878 = vsub.s32 0, %v1877
        %v1879 = vrot.slane %v1874, %v1878
        %v1880 = vlaneseq
        %v1881 = vshrl.u32 %v1880, 7
        %v1882 = vsub.s32 1, %v1881
        %v1883 = vrot.slane %v1874, %v1882
        %v1884 = vlaneseq
        %v1885 = vshrl.u32 %v1884, 7
        %v1886 = vsub.s32 2, %v1885
        %v1887 = vrot.slane %v1874, %v1886
        %v1888 = vlaneseq
        %v1889 = vshrl.u32 %v1888, 7
        %v1890 = vsub.s32 3, %v1889
        %v1891 = vrot.slane %v1874, %v1890
        %v1896 = vmul.f32 %v698, %v1879
        %v1897 = vmul.f32 %v700, %v1883
        %v1898 = vmul.f32 %v769, %v1887
        %v1899 = vmul.f32 %v771, %v1891
        %v1900 = vmul.f32 %v702, %v1879
        %v1901 = vmul.f32 %v704, %v1883
        %v1902 = vmul.f32 %v773, %v1887
        %v1903 = vmul.f32 %v775, %v1891
        %v1904 = vmul.f32 %v708, %v1879
        %v1905 = vmul.f32 %v710, %v1883
        %v1906 = vmul.f32 %v779, %v1887
        %v1907 = vmul.f32 %v781, %v1891
        %v1908 = vmul.f32 %v712, %v1879
        %v1909 = vmul.f32 %v714, %v1883
        %v1910 = vmul.f32 %v783, %v1887
        %v1911 = vmul.f32 %v785, %v1891
        %v1912 = vmul.f32 %v718, %v1879
        %v1913 = vmul.f32 %v720, %v1883
        %v1914 = vmul.f32 %v789, %v1887
        %v1915 = vmul.f32 %v791, %v1891
        %v1916 = vmul.f32 %v722, %v1879
        %v1917 = vmul.f32 %v724, %v1883
        %v1918 = vmul.f32 %v793, %v1887
        %v1919 = vmul.f32 %v795, %v1891
        %v1920 = vmul.f32 %v728, %v1879
        %v1921 = vmul.f32 %v730, %v1883
        %v1922 = vmul.f32 %v799, %v1887
        %v1923 = vmul.f32 %v801, %v1891
        %v1924 = vld [vmem:[#allocation3] sm:$0xf]
        %v1926 = vlaneseq
        %v1927 = vshrl.u32 %v1926, 7
        %v1928 = vsub.s32 0, %v1927
        %v1929 = vrot.slane %v1924, %v1928
        %v1930 = vlaneseq
        %v1931 = vshrl.u32 %v1930, 7
        %v1932 = vsub.s32 1, %v1931
        %v1933 = vrot.slane %v1924, %v1932
        %v1934 = vlaneseq
        %v1935 = vshrl.u32 %v1934, 7
        %v1936 = vsub.s32 2, %v1935
        %v1937 = vrot.slane %v1924, %v1936
        %v1938 = vlaneseq
        %v1939 = vshrl.u32 %v1938, 7
        %v1940 = vsub.s32 3, %v1939
        %v1941 = vrot.slane %v1924, %v1940
        %v1946 = vadd.f32 %v1896, %v1929
        %v1947 = vadd.f32 %v1897, %v1933
        %v1948 = vadd.f32 %v1898, %v1937
        %v1949 = vadd.f32 %v1899, %v1941
        %v1950 = vadd.f32 %v1900, %v1929
        %v1951 = vadd.f32 %v1901, %v1933
        %v1952 = vadd.f32 %v1902, %v1937
        %v1953 = vadd.f32 %v1903, %v1941
        %v1954 = vadd.f32 %v1904, %v1929
        %v1955 = vadd.f32 %v1905, %v1933
        %v1956 = vadd.f32 %v1906, %v1937
        %v1957 = vadd.f32 %v1907, %v1941
        %v1958 = vadd.f32 %v1908, %v1929
        %v1959 = vadd.f32 %v1909, %v1933
        %v1960 = vadd.f32 %v1910, %v1937
        %v1961 = vadd.f32 %v1911, %v1941
        %v1962 = vadd.f32 %v1912, %v1929
        %v1963 = vadd.f32 %v1913, %v1933
        %v1964 = vadd.f32 %v1914, %v1937
        %v1965 = vadd.f32 %v1915, %v1941
        %v1966 = vadd.f32 %v1916, %v1929
        %v1967 = vadd.f32 %v1917, %v1933
        %v1968 = vadd.f32 %v1918, %v1937
        %v1969 = vadd.f32 %v1919, %v1941
        %v1970 = vadd.f32 %v1920, %v1929
        %v1971 = vadd.f32 %v1921, %v1933
        %v1972 = vadd.f32 %v1922, %v1937
        %v1973 = vadd.f32 %v1923, %v1941
        %vm1974 = vcmp.gt.f32.partialorder %v1946, 0.0
        %vm1975 = vcmp.gt.f32.partialorder %v1947, 0.0
        %vm1976 = vcmp.gt.f32.partialorder %v1948, 0.0
        %vm1977 = vcmp.gt.f32.partialorder %v1949, 0.0
        %vm1978 = vcmp.gt.f32.partialorder %v1950, 0.0
        %vm1979 = vcmp.gt.f32.partialorder %v1951, 0.0
        %vm1980 = vcmp.gt.f32.partialorder %v1952, 0.0
        %vm1981 = vcmp.gt.f32.partialorder %v1953, 0.0
        %vm1982 = vcmp.gt.f32.partialorder %v1954, 0.0
        %vm1983 = vcmp.gt.f32.partialorder %v1955, 0.0
        %vm1984 = vcmp.gt.f32.partialorder %v1956, 0.0
        %vm1985 = vcmp.gt.f32.partialorder %v1957, 0.0
        %vm1986 = vcmp.gt.f32.partialorder %v1958, 0.0
        %vm1987 = vcmp.gt.f32.partialorder %v1959, 0.0
        %vm1988 = vcmp.gt.f32.partialorder %v1960, 0.0
        %vm1989 = vcmp.gt.f32.partialorder %v1961, 0.0
        %vm1990 = vcmp.gt.f32.partialorder %v1962, 0.0
        %vm1991 = vcmp.gt.f32.partialorder %v1963, 0.0
        %vm1992 = vcmp.gt.f32.partialorder %v1964, 0.0
        %vm1993 = vcmp.gt.f32.partialorder %v1965, 0.0
        %vm1994 = vcmp.gt.f32.partialorder %v1966, 0.0
        %vm1995 = vcmp.gt.f32.partialorder %v1967, 0.0
        %vm1996 = vcmp.gt.f32.partialorder %v1968, 0.0
        %vm1997 = vcmp.gt.f32.partialorder %v1969, 0.0
        %vm1998 = vcmp.gt.f32.partialorder %v1970, 0.0
        %vm1999 = vcmp.gt.f32.partialorder %v1971, 0.0
        %vm2000 = vcmp.gt.f32.partialorder %v1972, 0.0
        %vm2001 = vcmp.gt.f32.partialorder %v1973, 0.0
        %v2002 = vmul.f32 %v1946, 0.01
        %v2003 = vmul.f32 %v1947, 0.01
        %v2004 = vmul.f32 %v1948, 0.01
        %v2005 = vmul.f32 %v1949, 0.01
        %v2006 = vmul.f32 %v1950, 0.01
        %v2007 = vmul.f32 %v1951, 0.01
        %v2008 = vmul.f32 %v1952, 0.01
        %v2009 = vmul.f32 %v1953, 0.01
        %v2010 = vmul.f32 %v1954, 0.01
        %v2011 = vmul.f32 %v1955, 0.01
        %v2012 = vmul.f32 %v1956, 0.01
        %v2013 = vmul.f32 %v1957, 0.01
        %v2014 = vmul.f32 %v1958, 0.01
        %v2015 = vmul.f32 %v1959, 0.01
        %v2016 = vmul.f32 %v1960, 0.01
        %v2017 = vmul.f32 %v1961, 0.01
        %v2018 = vmul.f32 %v1962, 0.01
        %v2019 = vmul.f32 %v1963, 0.01
        %v2020 = vmul.f32 %v1964, 0.01
        %v2021 = vmul.f32 %v1965, 0.01
        %v2022 = vmul.f32 %v1966, 0.01
        %v2023 = vmul.f32 %v1967, 0.01
        %v2024 = vmul.f32 %v1968, 0.01
        %v2025 = vmul.f32 %v1969, 0.01
        %v2026 = vmul.f32 %v1970, 0.01
        %v2027 = vmul.f32 %v1971, 0.01
        %v2028 = vmul.f32 %v1972, 0.01
        %v2029 = vmul.f32 %v1973, 0.01
        %v2030 = vsel %vm1974, %v1946, %v2002
        %v2031 = vsel %vm1975, %v1947, %v2003
        %v2032 = vsel %vm1976, %v1948, %v2004
        %v2033 = vsel %vm1977, %v1949, %v2005
        %v2034 = vsel %vm1978, %v1950, %v2006
        %v2035 = vsel %vm1979, %v1951, %v2007
        %v2036 = vsel %vm1980, %v1952, %v2008
        %v2037 = vsel %vm1981, %v1953, %v2009
        %v2038 = vsel %vm1982, %v1954, %v2010
        %v2039 = vsel %vm1983, %v1955, %v2011
        %v2040 = vsel %vm1984, %v1956, %v2012
        %v2041 = vsel %vm1985, %v1957, %v2013
        %v2042 = vsel %vm1986, %v1958, %v2014
        %v2043 = vsel %vm1987, %v1959, %v2015
        %v2044 = vsel %vm1988, %v1960, %v2016
        %v2045 = vsel %vm1989, %v1961, %v2017
        %v2046 = vsel %vm1990, %v1962, %v2018
        %v2047 = vsel %vm1991, %v1963, %v2019
        %v2048 = vsel %vm1992, %v1964, %v2020
        %v2049 = vsel %vm1993, %v1965, %v2021
        %v2050 = vsel %vm1994, %v1966, %v2022
        %v2051 = vsel %vm1995, %v1967, %v2023
        %v2052 = vsel %vm1996, %v1968, %v2024
        %v2053 = vsel %vm1997, %v1969, %v2025
        %v2054 = vsel %vm1998, %v1970, %v2026
        %v2055 = vsel %vm1999, %v1971, %v2027
        %v2056 = vsel %vm2000, %v1972, %v2028
        %v2057 = vsel %vm2001, %v1973, %v2029
        %v2058 = vpack.c.bf16 %v2034, %v2030
        %v2059 = vpack.c.bf16 %v2035, %v2031
        %v2060 = vpack.c.bf16 %v2036, %v2032
        %v2061 = vpack.c.bf16 %v2037, %v2033
        %v2062 = vpack.c.bf16 %v2042, %v2038
        %v2063 = vpack.c.bf16 %v2043, %v2039
        %v2064 = vpack.c.bf16 %v2044, %v2040
        %v2065 = vpack.c.bf16 %v2045, %v2041
        %v2066 = vpack.c.bf16 %v2050, %v2046
        %v2067 = vpack.c.bf16 %v2051, %v2047
        %v2068 = vpack.c.bf16 %v2052, %v2048
        %v2069 = vpack.c.bf16 %v2053, %v2049
        %v2070 = vpack.c.bf16 %v2054, %v2054
        %v2071 = vpack.c.bf16 %v2055, %v2055
        %v2072 = vpack.c.bf16 %v2056, %v2056
        %v2073 = vpack.c.bf16 %v2057, %v2057
        %v2074 = vld [vmem:[%s7] sm:$0xf]
        %v2075 = vld [vmem:[%s7 + $0x4] sm:$0xf]
        %v2076 = vld [vmem:[%s7 + $0x8] sm:$0xf]
        %v2077 = vld [vmem:[%s7 + $0xc] sm:$0x1]
        %v2082 = vunpack.c.l.b16 %v2074
        %v2083 = vunpack.c.l.b16 %v2075
        %v2084 = vunpack.c.l.b16 %v2076
        %v2085 = vunpack.c.l.b16 %v2077
        %v2086 = vpack.c.b16 %v2083, %v2082
        %v2087 = vpack.c.b16 %v2085, %v2084
        %vm2088 = vcmask 441344
        %v2090 = vsel %vm2088, %v2086, 0
        %v2093 = vsel %vm2088, %v2087, 0
        %vm2095 = vcmask 1042432
        %v2097 = vsel %vm2095, %v2070, 0
        %v2100 = vsel %vm2095, %v2071, 0
        %v2103 = vsel %vm2095, %v2072, 0
        %v2106 = vsel %vm2095, %v2073, 0
        %2108 = vmatprep.subr.bf16.mxu0 %v2059
        %2109 = vmatpush1.bf16.msra.mxu0 %v2058
        %2110 = vmatprep.subr.bf16.mxu0 %v2063
        %2111 = vmatpush1.bf16.msra.mxu0 %v2062
        %2112 = vmatprep.subr.bf16.mxu0 %v2067
        %2113 = vmatpush1.bf16.msra.mxu0 %v2066
        %2114 = vmatprep.subr.bf16.mxu0 %v2100
        %2115 = vmatpush1.bf16.msra.mxu0 %v2097
        %2116 = vmatprep.subr.bf16.mxu0 0
        %2117 = vmatpush1.bf16.msra.mxu0 0
        %2118 = vmatprep.subr.bf16.mxu0 0
        %2119 = vmatpush1.bf16.msra.mxu0 0
        %2120 = vmatprep.subr.bf16.mxu0 0
        %2121 = vmatpush1.bf16.msra.mxu0 0
        %2122 = vmatprep.subr.bf16.mxu0 0
        %2123 = vmatpush1.bf16.msra.mxu0 0
        %2124 = vmatprep.subr.bf16.mxu0 0
        %2125 = vmatpush1.bf16.msra.mxu0 0
        %2126 = vmatprep.subr.bf16.mxu0 0
        %2127 = vmatpush1.bf16.msra.mxu0 0
        %2128 = vmatprep.subr.bf16.mxu0 0
        %2129 = vmatpush1.bf16.msra.mxu0 0
        %2130 = vmatprep.subr.bf16.mxu0 0
        %2131 = vmatpush1.bf16.msra.mxu0 0
        %2132 = vmatprep.subr.bf16.mxu0 0
        %2133 = vmatpush1.bf16.msra.mxu0 0
        %2134 = vmatprep.subr.bf16.mxu0 0
        %2135 = vmatpush1.bf16.msra.mxu0 0
        %2136 = vmatprep.subr.bf16.mxu0 0
        %2137 = vmatpush1.bf16.msra.mxu0 0
        %2138 = vmatprep.subr.bf16.mxu0 0
        %2139 = vmatpush1.bf16.msra.mxu0 0
        %2140 = vmatprep.mubr.bf16.mxu0 0
        %2141 = vmatmul.mubr.bf16.gmra.mrb[0].mxu0 %v2090
        %v2142 = vpop.f32.mrb[0].mxu0
        %v2143 = vadd.f32 0.0, %v2142
        %v2144 = vpop.f32.mrb[0].mxu0
        %v2145 = vadd.f32 0.0, %v2144
        %v2146 = vpop.f32.mrb[0].mxu0
        %v2147 = vadd.f32 0.0, %v2146
        %v2148 = vpop.f32.mrb[0].mxu0
        %v2149 = vadd.f32 0.0, %v2148
        %2150 = vmatprep.mubr.bf16.mxu0 0
        %2151 = vmatmul.mubr.bf16.gmra.mrb[0].mxu0 %v2093
        %v2152 = vpop.f32.mrb[0].mxu0
        %v2153 = vadd.f32 0.0, %v2152
        %v2154 = vpop.f32.mrb[0].mxu0
        %v2155 = vadd.f32 0.0, %v2154
        %v2156 = vpop.f32.mrb[0].mxu0
        %v2157 = vadd.f32 0.0, %v2156
        %v2158 = vpop.f32.mrb[0].mxu0
        %v2159 = vadd.f32 0.0, %v2158
        %2160 = vdwg.mxu0
        %2161 = vmatprep.subr.bf16.mxu0 %v2061
        %2162 = vmatpush1.bf16.msra.mxu0 %v2060
        %2163 = vmatprep.subr.bf16.mxu0 %v2065
        %2164 = vmatpush1.bf16.msra.mxu0 %v2064
        %2165 = vmatprep.subr.bf16.mxu0 %v2069
        %2166 = vmatpush1.bf16.msra.mxu0 %v2068
        %2167 = vmatprep.subr.bf16.mxu0 %v2106
        %2168 = vmatpush1.bf16.msra.mxu0 %v2103
        %2169 = vmatprep.subr.bf16.mxu0 0
        %2170 = vmatpush1.bf16.msra.mxu0 0
        %2171 = vmatprep.subr.bf16.mxu0 0
        %2172 = vmatpush1.bf16.msra.mxu0 0
        %2173 = vmatprep.subr.bf16.mxu0 0
        %2174 = vmatpush1.bf16.msra.mxu0 0
        %2175 = vmatprep.subr.bf16.mxu0 0
        %2176 = vmatpush1.bf16.msra.mxu0 0
        %2177 = vmatprep.subr.bf16.mxu0 0
        %2178 = vmatpush1.bf16.msra.mxu0 0
        %2179 = vmatprep.subr.bf16.mxu0 0
        %2180 = vmatpush1.bf16.msra.mxu0 0
        %2181 = vmatprep.subr.bf16.mxu0 0
        %2182 = vmatpush1.bf16.msra.mxu0 0
        %2183 = vmatprep.subr.bf16.mxu0 0
        %2184 = vmatpush1.bf16.msra.mxu0 0
        %2185 = vmatprep.subr.bf16.mxu0 0
        %2186 = vmatpush1.bf16.msra.mxu0 0
        %2187 = vmatprep.subr.bf16.mxu0 0
        %2188 = vmatpush1.bf16.msra.mxu0 0
        %2189 = vmatprep.subr.bf16.mxu0 0
        %2190 = vmatpush1.bf16.msra.mxu0 0
        %2191 = vmatprep.subr.bf16.mxu0 0
        %2192 = vmatpush1.bf16.msra.mxu0 0
        %2193 = vmatprep.mubr.bf16.mxu0 0
        %2194 = vmatmul.mubr.bf16.gmra.mrb[0].mxu0 %v2090
        %v2195 = vpop.f32.mrb[0].mxu0
        %v2196 = vadd.f32 0.0, %v2195
        %v2197 = vpop.f32.mrb[0].mxu0
        %v2198 = vadd.f32 0.0, %v2197
        %v2199 = vpop.f32.mrb[0].mxu0
        %v2200 = vadd.f32 0.0, %v2199
        %v2201 = vpop.f32.mrb[0].mxu0
        %v2202 = vadd.f32 0.0, %v2201
        %2203 = vmatprep.mubr.bf16.mxu0 0
        %2204 = vmatmul.mubr.bf16.gmra.mrb[0].mxu0 %v2093
        %v2205 = vpop.f32.mrb[0].mxu0
        %v2206 = vadd.f32 0.0, %v2205
        %v2207 = vpop.f32.mrb[0].mxu0
        %v2208 = vadd.f32 0.0, %v2207
        %v2209 = vpop.f32.mrb[0].mxu0
        %v2210 = vadd.f32 0.0, %v2209
        %v2211 = vpop.f32.mrb[0].mxu0
        %v2212 = vadd.f32 0.0, %v2211
        %2213 = vdwg.mxu0
        %v2214 = vld [vmem:[%s8] sm:$0xf]
        %v2215 = vld [vmem:[%s8 + $0x4] sm:$0xf]
        %v2216 = vld [vmem:[%s8 + $0x8] sm:$0xf]
        %v2217 = vld [vmem:[%s8 + $0xc] sm:$0x1]
        %v2222 = vunpack.c.l.b16 %v2214
        %v2223 = vunpack.c.l.b16 %v2215
        %v2224 = vunpack.c.l.b16 %v2216
        %v2225 = vunpack.c.l.b16 %v2217
        %v2226 = vpack.c.b16 %v2223, %v2222
        %v2227 = vpack.c.b16 %v2225, %v2224
        %v2229 = vsel %vm2088, %v2226, 0
        %v2232 = vsel %vm2088, %v2227, 0
        %2234 = vmatprep.subr.bf16.mxu0 %v2059
        %2235 = vmatpush1.bf16.msra.mxu0 %v2058
        %2236 = vmatprep.subr.bf16.mxu0 %v2063
        %2237 = vmatpush1.bf16.msra.mxu0 %v2062
        %2238 = vmatprep.subr.bf16.mxu0 %v2067
        %2239 = vmatpush1.bf16.msra.mxu0 %v2066
        %2240 = vmatprep.subr.bf16.mxu0 %v2100
        %2241 = vmatpush1.bf16.msra.mxu0 %v2097
        %2242 = vmatprep.subr.bf16.mxu0 0
        %2243 = vmatpush1.bf16.msra.mxu0 0
        %2244 = vmatprep.subr.bf16.mxu0 0
        %2245 = vmatpush1.bf16.msra.mxu0 0
        %2246 = vmatprep.subr.bf16.mxu0 0
        %2247 = vmatpush1.bf16.msra.mxu0 0
        %2248 = vmatprep.subr.bf16.mxu0 0
        %2249 = vmatpush1.bf16.msra.mxu0 0
        %2250 = vmatprep.subr.bf16.mxu0 0
        %2251 = vmatpush1.bf16.msra.mxu0 0
        %2252 = vmatprep.subr.bf16.mxu0 0
        %2253 = vmatpush1.bf16.msra.mxu0 0
        %2254 = vmatprep.subr.bf16.mxu0 0
        %2255 = vmatpush1.bf16.msra.mxu0 0
        %2256 = vmatprep.subr.bf16.mxu0 0
        %2257 = vmatpush1.bf16.msra.mxu0 0
        %2258 = vmatprep.subr.bf16.mxu0 0
        %2259 = vmatpush1.bf16.msra.mxu0 0
        %2260 = vmatprep.subr.bf16.mxu0 0
        %2261 = vmatpush1.bf16.msra.mxu0 0
        %2262 = vmatprep.subr.bf16.mxu0 0
        %2263 = vmatpush1.bf16.msra.mxu0 0
        %2264 = vmatprep.subr.bf16.mxu0 0
        %2265 = vmatpush1.bf16.msra.mxu0 0
        %2266 = vmatprep.mubr.bf16.mxu0 0
        %2267 = vmatmul.mubr.bf16.gmra.mrb[0].mxu0 %v2229
        %v2268 = vpop.f32.mrb[0].mxu0
        %v2269 = vadd.f32 0.0, %v2268
        %v2270 = vpop.f32.mrb[0].mxu0
        %v2271 = vadd.f32 0.0, %v2270
        %v2272 = vpop.f32.mrb[0].mxu0
        %v2273 = vadd.f32 0.0, %v2272
        %v2274 = vpop.f32.mrb[0].mxu0
        %v2275 = vadd.f32 0.0, %v2274
        %2276 = vmatprep.mubr.bf16.mxu0 0
        %2277 = vmatmul.mubr.bf16.gmra.mrb[0].mxu0 %v2232
        %v2278 = vpop.f32.mrb[0].mxu0
        %v2279 = vadd.f32 0.0, %v2278
        %v2280 = vpop.f32.mrb[0].mxu0
        %v2281 = vadd.f32 0.0, %v2280
        %v2282 = vpop.f32.mrb[0].mxu0
        %v2283 = vadd.f32 0.0, %v2282
        %v2284 = vpop.f32.mrb[0].mxu0
        %v2285 = vadd.f32 0.0, %v2284
        %2286 = vdwg.mxu0
        %2287 = vmatprep.subr.bf16.mxu0 %v2061
        %2288 = vmatpush1.bf16.msra.mxu0 %v2060
        %2289 = vmatprep.subr.bf16.mxu0 %v2065
        %2290 = vmatpush1.bf16.msra.mxu0 %v2064
        %2291 = vmatprep.subr.bf16.mxu0 %v2069
        %2292 = vmatpush1.bf16.msra.mxu0 %v2068
        %2293 = vmatprep.subr.bf16.mxu0 %v2106
        %2294 = vmatpush1.bf16.msra.mxu0 %v2103
        %2295 = vmatprep.subr.bf16.mxu0 0
        %2296 = vmatpush1.bf16.msra.mxu0 0
        %2297 = vmatprep.subr.bf16.mxu0 0
        %2298 = vmatpush1.bf16.msra.mxu0 0
        %2299 = vmatprep.subr.bf16.mxu0 0
        %2300 = vmatpush1.bf16.msra.mxu0 0
        %2301 = vmatprep.subr.bf16.mxu0 0
        %2302 = vmatpush1.bf16.msra.mxu0 0
        %2303 = vmatprep.subr.bf16.mxu0 0
        %2304 = vmatpush1.bf16.msra.mxu0 0
        %2305 = vmatprep.subr.bf16.mxu0 0
        %2306 = vmatpush1.bf16.msra.mxu0 0
        %2307 = vmatprep.subr.bf16.mxu0 0
        %2308 = vmatpush1.bf16.msra.mxu0 0
        %2309 = vmatprep.subr.bf16.mxu0 0
        %2310 = vmatpush1.bf16.msra.mxu0 0
        %2311 = vmatprep.subr.bf16.mxu0 0
        %2312 = vmatpush1.bf16.msra.mxu0 0
        %2313 = vmatprep.subr.bf16.mxu0 0
        %2314 = vmatpush1.bf16.msra.mxu0 0
        %2315 = vmatprep.subr.bf16.mxu0 0
        %2316 = vmatpush1.bf16.msra.mxu0 0
        %2317 = vmatprep.subr.bf16.mxu0 0
        %2318 = vmatpush1.bf16.msra.mxu0 0
        %2319 = vmatprep.mubr.bf16.mxu0 0
        %2320 = vmatmul.mubr.bf16.gmra.mrb[0].mxu0 %v2229
        %v2321 = vpop.f32.mrb[0].mxu0
        %v2322 = vadd.f32 0.0, %v2321
        %v2323 = vpop.f32.mrb[0].mxu0
        %v2324 = vadd.f32 0.0, %v2323
        %v2325 = vpop.f32.mrb[0].mxu0
        %v2326 = vadd.f32 0.0, %v2325
        %v2327 = vpop.f32.mrb[0].mxu0
        %v2328 = vadd.f32 0.0, %v2327
        %2329 = vmatprep.mubr.bf16.mxu0 0
        %2330 = vmatmul.mubr.bf16.gmra.mrb[0].mxu0 %v2232
        %v2331 = vpop.f32.mrb[0].mxu0
        %v2332 = vadd.f32 0.0, %v2331
        %v2333 = vpop.f32.mrb[0].mxu0
        %v2334 = vadd.f32 0.0, %v2333
        %v2335 = vpop.f32.mrb[0].mxu0
        %v2336 = vadd.f32 0.0, %v2335
        %v2337 = vpop.f32.mrb[0].mxu0
        %v2338 = vadd.f32 0.0, %v2337
        %2339 = vdwg.mxu0
        %v2340 = vmax.f32 %v2143, %v2269
        %v2341 = vmax.f32 %v2145, %v2271
        %v2342 = vmax.f32 %v2196, %v2322
        %v2343 = vmax.f32 %v2198, %v2324
        %v2344 = vmax.f32 %v2147, %v2273
        %v2345 = vmax.f32 %v2149, %v2275
        %v2346 = vmax.f32 %v2200, %v2326
        %v2347 = vmax.f32 %v2202, %v2328
        %v2348 = vmax.f32 %v2153, %v2279
        %v2349 = vmax.f32 %v2155, %v2281
        %v2350 = vmax.f32 %v2206, %v2332
        %v2351 = vmax.f32 %v2208, %v2334
        %v2352 = vmax.f32 %v2157, %v2283
        %v2353 = vmax.f32 %v2159, %v2285
        %v2354 = vmax.f32 %v2210, %v2336
        %v2355 = vmax.f32 %v2212, %v2338
        %v2356 = vpack.c.bf16 %v2344, %v2340
        %v2357 = vpack.c.bf16 %v2345, %v2341
        %v2358 = vpack.c.bf16 %v2346, %v2342
        %v2359 = vpack.c.bf16 %v2347, %v2343
        %v2360 = vpack.c.bf16 %v2352, %v2348
        %v2361 = vpack.c.bf16 %v2353, %v2349
        %v2362 = vpack.c.bf16 %v2354, %v2350
        %v2363 = vpack.c.bf16 %v2355, %v2351
        %v2364 = vld [vmem:[%s9] sm:$0xff]
        %v2365 = vld [vmem:[%s9 + $0x8] sm:$0xff]
        %v2366 = vld [vmem:[%s9 + $0x10] sm:$0xff]
        %v2367 = vld [vmem:[%s9 + $0x18] sm:$0xff]
        %v2368 = vld [vmem:[%s9 + $0x20] sm:$0xff]
        %v2369 = vld [vmem:[%s9 + $0x28] sm:$0xff]
        %v2370 = vld [vmem:[%s9 + $0x30] sm:$0xff]
        %v2371 = vld [vmem:[%s9 + $0x38] sm:$0xff]
        %v2372 = vld [vmem:[%s9 + $0x40] sm:$0xff]
        %v2373 = vld [vmem:[%s9 + $0x48] sm:$0xff]
        %v2374 = vld [vmem:[%s9 + $0x50] sm:$0xff]
        %v2375 = vld [vmem:[%s9 + $0x58] sm:$0xff]
        %v2376 = vld [vmem:[%s9 + $0x60] sm:$0xff]
        %v2377 = vld [vmem:[%s9 + $0x68] sm:$0xff]
        %v2378 = vld [vmem:[%s9 + $0x70] sm:$0xff]
        %v2379 = vld [vmem:[%s9 + $0x78] sm:$0xff]
        %v2380 = vld [vmem:[%s9 + $0x80] sm:$0xff]
        %v2381 = vld [vmem:[%s9 + $0x88] sm:$0xff]
        %v2382 = vld [vmem:[%s9 + $0x90] sm:$0xff]
        %v2383 = vld [vmem:[%s9 + $0x98] sm:$0xff]
        %v2384 = vld [vmem:[%s9 + $0xa0] sm:$0xff]
        %v2385 = vld [vmem:[%s9 + $0xa8] sm:$0xff]
        %v2386 = vld [vmem:[%s9 + $0xb0] sm:$0xff]
        %v2387 = vld [vmem:[%s9 + $0xb8] sm:$0xff]
        %v2388 = vld [vmem:[%s9 + $0xc0] sm:$0xff]
        %v2389 = vld [vmem:[%s9 + $0xc8] sm:$0xff]
        %v2390 = vld [vmem:[%s9 + $0xd0] sm:$0xff]
        %v2391 = vld [vmem:[%s9 + $0xd8] sm:$0xff]
        %v2392 = vld [vmem:[%s9 + $0xe0] sm:$0xff]
        %v2393 = vld [vmem:[%s9 + $0xe8] sm:$0xff]
        %v2394 = vld [vmem:[%s9 + $0xf0] sm:$0xff]
        %v2395 = vld [vmem:[%s9 + $0xf8] sm:$0xff]
        %v2396 = vld [vmem:[%s9 + $0x100] sm:$0xff]
        %v2397 = vld [vmem:[%s9 + $0x108] sm:$0xff]
        %v2398 = vld [vmem:[%s9 + $0x110] sm:$0xff]
        %v2399 = vld [vmem:[%s9 + $0x118] sm:$0xff]
        %v2400 = vld [vmem:[%s9 + $0x120] sm:$0xff]
        %v2401 = vld [vmem:[%s9 + $0x128] sm:$0xff]
        %v2402 = vld [vmem:[%s9 + $0x130] sm:$0xff]
        %v2403 = vld [vmem:[%s9 + $0x138] sm:$0xff]
        %v2404 = vld [vmem:[%s9 + $0x140] sm:$0xff]
        %v2405 = vld [vmem:[%s9 + $0x148] sm:$0xff]
        %v2406 = vld [vmem:[%s9 + $0x150] sm:$0xff]
        %v2407 = vld [vmem:[%s9 + $0x158] sm:$0xff]
        %v2408 = vld [vmem:[%s9 + $0x160] sm:$0xff]
        %v2409 = vld [vmem:[%s9 + $0x168] sm:$0xff]
        %v2410 = vld [vmem:[%s9 + $0x170] sm:$0xff]
        %v2411 = vld [vmem:[%s9 + $0x178] sm:$0xff]
        %v2412 = vld [vmem:[%s9 + $0x180] sm:$0xff]
        %v2413 = vld [vmem:[%s9 + $0x188] sm:$0xff]
        %v2414 = vld [vmem:[%s9 + $0x190] sm:$0xff]
        %v2415 = vld [vmem:[%s9 + $0x198] sm:$0xff]
        %v2468 = vunpack.c.l.b16 %v2364
        %v2469 = vunpack.c.h.b16 %v2364
        %v2470 = vunpack.c.l.b16 %v2365
        %v2471 = vunpack.c.h.b16 %v2365
        %v2472 = vunpack.c.l.b16 %v2366
        %v2473 = vunpack.c.h.b16 %v2366
        %v2474 = vunpack.c.l.b16 %v2367
        %v2475 = vunpack.c.h.b16 %v2367
        %v2476 = vunpack.c.l.b16 %v2368
        %v2477 = vunpack.c.h.b16 %v2368
        %v2478 = vunpack.c.l.b16 %v2369
        %v2479 = vunpack.c.h.b16 %v2369
        %v2480 = vunpack.c.l.b16 %v2370
        %v2481 = vunpack.c.h.b16 %v2370
        %v2482 = vunpack.c.l.b16 %v2371
        %v2483 = vunpack.c.h.b16 %v2371
        %v2484 = vunpack.c.l.b16 %v2372
        %v2485 = vunpack.c.h.b16 %v2372
        %v2486 = vunpack.c.l.b16 %v2373
        %v2487 = vunpack.c.h.b16 %v2373
        %v2488 = vunpack.c.l.b16 %v2374
        %v2489 = vunpack.c.h.b16 %v2374
        %v2490 = vunpack.c.l.b16 %v2375
        %v2491 = vunpack.c.h.b16 %v2375
        %v2492 = vunpack.c.l.b16 %v2376
        %v2493 = vunpack.c.h.b16 %v2376
        %v2494 = vunpack.c.l.b16 %v2377
        %v2495 = vunpack.c.h.b16 %v2377
        %v2496 = vunpack.c.l.b16 %v2378
        %v2497 = vunpack.c.h.b16 %v2378
        %v2498 = vunpack.c.l.b16 %v2379
        %v2499 = vunpack.c.h.b16 %v2379
        %v2500 = vunpack.c.l.b16 %v2380
        %v2501 = vunpack.c.h.b16 %v2380
        %v2502 = vunpack.c.l.b16 %v2381
        %v2503 = vunpack.c.h.b16 %v2381
        %v2504 = vunpack.c.l.b16 %v2382
        %v2505 = vunpack.c.h.b16 %v2382
        %v2506 = vunpack.c.l.b16 %v2383
        %v2507 = vunpack.c.h.b16 %v2383
        %v2508 = vunpack.c.l.b16 %v2384
        %v2509 = vunpack.c.h.b16 %v2384
        %v2510 = vunpack.c.l.b16 %v2385
        %v2511 = vunpack.c.h.b16 %v2385
        %v2512 = vunpack.c.l.b16 %v2386
        %v2513 = vunpack.c.h.b16 %v2386
        %v2514 = vunpack.c.l.b16 %v2387
        %v2515 = vunpack.c.h.b16 %v2387
        %v2516 = vunpack.c.l.b16 %v2388
        %v2517 = vunpack.c.h.b16 %v2388
        %v2518 = vunpack.c.l.b16 %v2389
        %v2519 = vunpack.c.h.b16 %v2389
        %v2520 = vunpack.c.l.b16 %v2390
        %v2521 = vunpack.c.h.b16 %v2390
        %v2522 = vunpack.c.l.b16 %v2391
        %v2523 = vunpack.c.h.b16 %v2391
        %v2524 = vunpack.c.l.b16 %v2392
        %v2525 = vunpack.c.h.b16 %v2392
        %v2526 = vunpack.c.l.b16 %v2393
        %v2527 = vunpack.c.h.b16 %v2393
        %v2528 = vunpack.c.l.b16 %v2394
        %v2529 = vunpack.c.h.b16 %v2394
        %v2530 = vunpack.c.l.b16 %v2395
        %v2531 = vunpack.c.h.b16 %v2395
        %v2532 = vunpack.c.l.b16 %v2396
        %v2533 = vunpack.c.h.b16 %v2396
        %v2534 = vunpack.c.l.b16 %v2397
        %v2535 = vunpack.c.h.b16 %v2397
        %v2536 = vunpack.c.l.b16 %v2398
        %v2537 = vunpack.c.h.b16 %v2398
        %v2538 = vunpack.c.l.b16 %v2399
        %v2539 = vunpack.c.h.b16 %v2399
        %v2540 = vunpack.c.l.b16 %v2400
        %v2541 = vunpack.c.h.b16 %v2400
        %v2542 = vunpack.c.l.b16 %v2401
        %v2543 = vunpack.c.h.b16 %v2401
        %v2544 = vunpack.c.l.b16 %v2402
        %v2545 = vunpack.c.h.b16 %v2402
        %v2546 = vunpack.c.l.b16 %v2403
        %v2547 = vunpack.c.h.b16 %v2403
        %v2548 = vunpack.c.l.b16 %v2404
        %v2549 = vunpack.c.h.b16 %v2404
        %v2550 = vunpack.c.l.b16 %v2405
        %v2551 = vunpack.c.h.b16 %v2405
        %v2552 = vunpack.c.l.b16 %v2406
        %v2553 = vunpack.c.h.b16 %v2406
        %v2554 = vunpack.c.l.b16 %v2407
        %v2555 = vunpack.c.h.b16 %v2407
        %v2556 = vunpack.c.l.b16 %v2408
        %v2557 = vunpack.c.h.b16 %v2408
        %v2558 = vunpack.c.l.b16 %v2409
        %v2559 = vunpack.c.h.b16 %v2409
        %v2560 = vunpack.c.l.b16 %v2410
        %v2561 = vunpack.c.h.b16 %v2410
        %v2562 = vunpack.c.l.b16 %v2411
        %v2563 = vunpack.c.h.b16 %v2411
        %v2564 = vunpack.c.l.b16 %v2412
        %v2565 = vunpack.c.h.b16 %v2412
        %v2566 = vunpack.c.l.b16 %v2413
        %v2567 = vunpack.c.h.b16 %v2413
        %v2568 = vunpack.c.l.b16 %v2414
        %v2569 = vunpack.c.h.b16 %v2414
        %v2570 = vunpack.c.l.b16 %v2415
        %v2571 = vunpack.c.h.b16 %v2415
        %v2572 = vpack.c.b16 %v2470, %v2468
        %v2573 = vpack.c.b16 %v2471, %v2469
        %v2574 = vpack.c.b16 %v2474, %v2472
        %v2575 = vpack.c.b16 %v2475, %v2473
        %v2576 = vpack.c.b16 %v2478, %v2476
        %v2577 = vpack.c.b16 %v2479, %v2477
        %v2578 = vpack.c.b16 %v2482, %v2480
        %v2579 = vpack.c.b16 %v2483, %v2481
        %v2580 = vpack.c.b16 %v2486, %v2484
        %v2581 = vpack.c.b16 %v2487, %v2485
        %v2582 = vpack.c.b16 %v2490, %v2488
        %v2583 = vpack.c.b16 %v2491, %v2489
        %v2584 = vpack.c.b16 %v2494, %v2492
        %v2585 = vpack.c.b16 %v2495, %v2493
        %v2586 = vpack.c.b16 %v2498, %v2496
        %v2587 = vpack.c.b16 %v2499, %v2497
        %v2588 = vpack.c.b16 %v2502, %v2500
        %v2589 = vpack.c.b16 %v2503, %v2501
        %v2590 = vpack.c.b16 %v2506, %v2504
        %v2591 = vpack.c.b16 %v2507, %v2505
        %v2592 = vpack.c.b16 %v2510, %v2508
        %v2593 = vpack.c.b16 %v2511, %v2509
        %v2594 = vpack.c.b16 %v2514, %v2512
        %v2595 = vpack.c.b16 %v2515, %v2513
        %v2596 = vpack.c.b16 %v2518, %v2516
        %v2597 = vpack.c.b16 %v2519, %v2517
        %v2598 = vpack.c.b16 %v2522, %v2520
        %v2599 = vpack.c.b16 %v2523, %v2521
        %v2600 = vpack.c.b16 %v2526, %v2524
        %v2601 = vpack.c.b16 %v2527, %v2525
        %v2602 = vpack.c.b16 %v2530, %v2528
        %v2603 = vpack.c.b16 %v2531, %v2529
        %v2604 = vpack.c.b16 %v2534, %v2532
        %v2605 = vpack.c.b16 %v2535, %v2533
        %v2606 = vpack.c.b16 %v2538, %v2536
        %v2607 = vpack.c.b16 %v2539, %v2537
        %v2608 = vpack.c.b16 %v2542, %v2540
        %v2609 = vpack.c.b16 %v2543, %v2541
        %v2610 = vpack.c.b16 %v2546, %v2544
        %v2611 = vpack.c.b16 %v2547, %v2545
        %v2612 = vpack.c.b16 %v2550, %v2548
        %v2613 = vpack.c.b16 %v2551, %v2549
        %v2614 = vpack.c.b16 %v2554, %v2552
        %v2615 = vpack.c.b16 %v2555, %v2553
        %v2616 = vpack.c.b16 %v2558, %v2556
        %v2617 = vpack.c.b16 %v2559, %v2557
        %v2618 = vpack.c.b16 %v2562, %v2560
        %v2619 = vpack.c.b16 %v2563, %v2561
        %v2620 = vpack.c.b16 %v2566, %v2564
        %v2621 = vpack.c.b16 %v2567, %v2565
        %v2622 = vpack.c.b16 %v2570, %v2568
        %v2623 = vpack.c.b16 %v2571, %v2569
        %vm2676 = vcmask 261120
        %v2678 = vsel %vm2676, %v2359, 0
        %v2681 = vsel %vm2676, %v2363, 0
        %2683 = vmatprep.subr.bf16.mxu0 %v2573
        %2684 = vmatpush1.bf16.msra.mxu0 %v2572
        %2685 = vmatprep.subr.bf16.mxu0 %v2575
        %2686 = vmatpush1.bf16.msra.mxu0 %v2574
        %2687 = vmatprep.subr.bf16.mxu0 %v2577
        %2688 = vmatpush1.bf16.msra.mxu0 %v2576
        %2689 = vmatprep.subr.bf16.mxu0 %v2579
        %2690 = vmatpush1.bf16.msra.mxu0 %v2578
        %2691 = vmatprep.subr.bf16.mxu0 %v2581
        %2692 = vmatpush1.bf16.msra.mxu0 %v2580
        %2693 = vmatprep.subr.bf16.mxu0 %v2583
        %2694 = vmatpush1.bf16.msra.mxu0 %v2582
        %2695 = vmatprep.subr.bf16.mxu0 %v2585
        %2696 = vmatpush1.bf16.msra.mxu0 %v2584
        %2697 = vmatprep.subr.bf16.mxu0 %v2587
        %2698 = vmatpush1.bf16.msra.mxu0 %v2586
        %2699 = vmatprep.subr.bf16.mxu0 %v2589
        %2700 = vmatpush1.bf16.msra.mxu0 %v2588
        %2701 = vmatprep.subr.bf16.mxu0 %v2591
        %2702 = vmatpush1.bf16.msra.mxu0 %v2590
        %2703 = vmatprep.subr.bf16.mxu0 %v2593
        %2704 = vmatpush1.bf16.msra.mxu0 %v2592
        %2705 = vmatprep.subr.bf16.mxu0 %v2595
        %2706 = vmatpush1.bf16.msra.mxu0 %v2594
        %2707 = vmatprep.subr.bf16.mxu0 %v2597
        %2708 = vmatpush1.bf16.msra.mxu0 %v2596
        %2709 = vmatprep.subr.bf16.mxu0 %v2599
        %2710 = vmatpush1.bf16.msra.mxu0 %v2598
        %2711 = vmatprep.subr.bf16.mxu0 %v2601
        %2712 = vmatpush1.bf16.msra.mxu0 %v2600
        %2713 = vmatprep.subr.bf16.mxu0 %v2603
        %2714 = vmatpush1.bf16.msra.mxu0 %v2602
        %2715 = vmatprep.mubr.bf16.mxu0 %v2357
        %2716 = vmatmul.mubr.bf16.gmra.mrb[0].mxu0 %v2356
        %v2717 = vpop.f32.mrb[0].mxu0
        %v2718 = vadd.f32 0.0, %v2717
        %v2719 = vpop.f32.mrb[0].mxu0
        %v2720 = vadd.f32 0.0, %v2719
        %v2721 = vpop.f32.mrb[0].mxu0
        %v2722 = vadd.f32 0.0, %v2721
        %v2723 = vpop.f32.mrb[0].mxu0
        %v2724 = vadd.f32 0.0, %v2723
        %2725 = vmatprep.mubr.bf16.mxu0 %v2361
        %2726 = vmatmul.mubr.bf16.gmra.mrb[0].mxu0 %v2360
        %v2727 = vpop.f32.mrb[0].mxu0
        %v2728 = vadd.f32 0.0, %v2727
        %v2729 = vpop.f32.mrb[0].mxu0
        %v2730 = vadd.f32 0.0, %v2729
        %v2731 = vpop.f32.mrb[0].mxu0
        %v2732 = vadd.f32 0.0, %v2731
        %v2733 = vpop.f32.mrb[0].mxu0
        %v2734 = vadd.f32 0.0, %v2733
        %2735 = vdwg.mxu0
        %2736 = vmatprep.subr.bf16.mxu0 %v2605
        %2737 = vmatpush1.bf16.msra.mxu0 %v2604
        %2738 = vmatprep.subr.bf16.mxu0 %v2607
        %2739 = vmatpush1.bf16.msra.mxu0 %v2606
        %2740 = vmatprep.subr.bf16.mxu0 %v2609
        %2741 = vmatpush1.bf16.msra.mxu0 %v2608
        %2742 = vmatprep.subr.bf16.mxu0 %v2611
        %2743 = vmatpush1.bf16.msra.mxu0 %v2610
        %2744 = vmatprep.subr.bf16.mxu0 %v2613
        %2745 = vmatpush1.bf16.msra.mxu0 %v2612
        %2746 = vmatprep.subr.bf16.mxu0 %v2615
        %2747 = vmatpush1.bf16.msra.mxu0 %v2614
        %2748 = vmatprep.subr.bf16.mxu0 %v2617
        %2749 = vmatpush1.bf16.msra.mxu0 %v2616
        %2750 = vmatprep.subr.bf16.mxu0 %v2619
        %2751 = vmatpush1.bf16.msra.mxu0 %v2618
        %2752 = vmatprep.subr.bf16.mxu0 %v2621
        %2753 = vmatpush1.bf16.msra.mxu0 %v2620
        %2754 = vmatprep.subr.bf16.mxu0 %v2623
        %2755 = vmatpush1.bf16.msra.mxu0 %v2622
        %2756 = vmatprep.subr.bf16.mxu0 0
        %2757 = vmatpush1.bf16.msra.mxu0 0
        %2758 = vmatprep.subr.bf16.mxu0 0
        %2759 = vmatpush1.bf16.msra.mxu0 0
        %2760 = vmatprep.subr.bf16.mxu0 0
        %2761 = vmatpush1.bf16.msra.mxu0 0
        %2762 = vmatprep.subr.bf16.mxu0 0
        %2763 = vmatpush1.bf16.msra.mxu0 0
        %2764 = vmatprep.subr.bf16.mxu0 0
        %2765 = vmatpush1.bf16.msra.mxu0 0
        %2766 = vmatprep.subr.bf16.mxu0 0
        %2767 = vmatpush1.bf16.msra.mxu0 0
        %2768 = vmatprep.mubr.bf16.mxu0 %v2678
        %2769 = vmatmul.mubr.bf16.gmra.mrb[0].mxu0 %v2358
        %v2770 = vpop.f32.mrb[0].mxu0
        %v2771 = vadd.f32 %v2718, %v2770
        %v2772 = vpop.f32.mrb[0].mxu0
        %v2773 = vadd.f32 %v2720, %v2772
        %v2774 = vpop.f32.mrb[0].mxu0
        %v2775 = vadd.f32 %v2722, %v2774
        %v2776 = vpop.f32.mrb[0].mxu0
        %v2777 = vadd.f32 %v2724, %v2776
        %2778 = vmatprep.mubr.bf16.mxu0 %v2681
        %2779 = vmatmul.mubr.bf16.gmra.mrb[0].mxu0 %v2362
        %v2780 = vpop.f32.mrb[0].mxu0
        %v2781 = vadd.f32 %v2728, %v2780
        %v2782 = vpop.f32.mrb[0].mxu0
        %v2783 = vadd.f32 %v2730, %v2782
        %v2784 = vpop.f32.mrb[0].mxu0
        %v2785 = vadd.f32 %v2732, %v2784
        %v2786 = vpop.f32.mrb[0].mxu0
        %v2787 = vadd.f32 %v2734, %v2786
        %2788 = vdwg.mxu0
        %v2789 = vld [vmem:[%s10] sm:$0xff]
        %v2790 = vld [vmem:[%s10 + $0x8] sm:$0xff]
        %v2791 = vld [vmem:[%s10 + $0x10] sm:$0xff]
        %v2792 = vld [vmem:[%s10 + $0x18] sm:$0xff]
        %v2793 = vld [vmem:[%s10 + $0x20] sm:$0xff]
        %v2794 = vld [vmem:[%s10 + $0x28] sm:$0xff]
        %v2795 = vld [vmem:[%s10 + $0x30] sm:$0xff]
        %v2796 = vld [vmem:[%s10 + $0x38] sm:$0xff]
        %v2797 = vld [vmem:[%s10 + $0x40] sm:$0xff]
        %v2798 = vld [vmem:[%s10 + $0x48] sm:$0xff]
        %v2799 = vld [vmem:[%s10 + $0x50] sm:$0xff]
        %v2800 = vld [vmem:[%s10 + $0x58] sm:$0xff]
        %v2801 = vld [vmem:[%s10 + $0x60] sm:$0xff]
        %v2802 = vld [vmem:[%s10 + $0x68] sm:$0xff]
        %v2803 = vld [vmem:[%s10 + $0x70] sm:$0xff]
        %v2804 = vld [vmem:[%s10 + $0x78] sm:$0xff]
        %v2805 = vld [vmem:[%s10 + $0x80] sm:$0xff]
        %v2806 = vld [vmem:[%s10 + $0x88] sm:$0xff]
        %v2807 = vld [vmem:[%s10 + $0x90] sm:$0xff]
        %v2808 = vld [vmem:[%s10 + $0x98] sm:$0xff]
        %v2809 = vld [vmem:[%s10 + $0xa0] sm:$0xff]
        %v2810 = vld [vmem:[%s10 + $0xa8] sm:$0xff]
        %v2811 = vld [vmem:[%s10 + $0xb0] sm:$0xff]
        %v2812 = vld [vmem:[%s10 + $0xb8] sm:$0xff]
        %v2813 = vld [vmem:[%s10 + $0xc0] sm:$0xff]
        %v2814 = vld [vmem:[%s10 + $0xc8] sm:$0xff]
        %v2815 = vld [vmem:[%s10 + $0xd0] sm:$0xff]
        %v2816 = vld [vmem:[%s10 + $0xd8] sm:$0xff]
        %v2817 = vld [vmem:[%s10 + $0xe0] sm:$0xff]
        %v2818 = vld [vmem:[%s10 + $0xe8] sm:$0xff]
        %v2819 = vld [vmem:[%s10 + $0xf0] sm:$0xff]
        %v2820 = vld [vmem:[%s10 + $0xf8] sm:$0xff]
        %v2821 = vld [vmem:[%s10 + $0x100] sm:$0xff]
        %v2822 = vld [vmem:[%s10 + $0x108] sm:$0xff]
        %v2823 = vld [vmem:[%s10 + $0x110] sm:$0xff]
        %v2824 = vld [vmem:[%s10 + $0x118] sm:$0xff]
        %v2825 = vld [vmem:[%s10 + $0x120] sm:$0xff]
        %v2826 = vld [vmem:[%s10 + $0x128] sm:$0xff]
        %v2827 = vld [vmem:[%s10 + $0x130] sm:$0xff]
        %v2828 = vld [vmem:[%s10 + $0x138] sm:$0xff]
        %v2829 = vld [vmem:[%s10 + $0x140] sm:$0xff]
        %v2830 = vld [vmem:[%s10 + $0x148] sm:$0xff]
        %v2831 = vld [vmem:[%s10 + $0x150] sm:$0xff]
        %v2832 = vld [vmem:[%s10 + $0x158] sm:$0xff]
        %v2833 = vld [vmem:[%s10 + $0x160] sm:$0xff]
        %v2834 = vld [vmem:[%s10 + $0x168] sm:$0xff]
        %v2835 = vld [vmem:[%s10 + $0x170] sm:$0xff]
        %v2836 = vld [vmem:[%s10 + $0x178] sm:$0xff]
        %v2837 = vld [vmem:[%s10 + $0x180] sm:$0xff]
        %v2838 = vld [vmem:[%s10 + $0x188] sm:$0xff]
        %v2839 = vld [vmem:[%s10 + $0x190] sm:$0xff]
        %v2840 = vld [vmem:[%s10 + $0x198] sm:$0xff]
        %v2893 = vunpack.c.l.b16 %v2789
        %v2894 = vunpack.c.h.b16 %v2789
        %v2895 = vunpack.c.l.b16 %v2790
        %v2896 = vunpack.c.h.b16 %v2790
        %v2897 = vunpack.c.l.b16 %v2791
        %v2898 = vunpack.c.h.b16 %v2791
        %v2899 = vunpack.c.l.b16 %v2792
        %v2900 = vunpack.c.h.b16 %v2792
        %v2901 = vunpack.c.l.b16 %v2793
        %v2902 = vunpack.c.h.b16 %v2793
        %v2903 = vunpack.c.l.b16 %v2794
        %v2904 = vunpack.c.h.b16 %v2794
        %v2905 = vunpack.c.l.b16 %v2795
        %v2906 = vunpack.c.h.b16 %v2795
        %v2907 = vunpack.c.l.b16 %v2796
        %v2908 = vunpack.c.h.b16 %v2796
        %v2909 = vunpack.c.l.b16 %v2797
        %v2910 = vunpack.c.h.b16 %v2797
        %v2911 = vunpack.c.l.b16 %v2798
        %v2912 = vunpack.c.h.b16 %v2798
        %v2913 = vunpack.c.l.b16 %v2799
        %v2914 = vunpack.c.h.b16 %v2799
        %v2915 = vunpack.c.l.b16 %v2800
        %v2916 = vunpack.c.h.b16 %v2800
        %v2917 = vunpack.c.l.b16 %v2801
        %v2918 = vunpack.c.h.b16 %v2801
        %v2919 = vunpack.c.l.b16 %v2802
        %v2920 = vunpack.c.h.b16 %v2802
        %v2921 = vunpack.c.l.b16 %v2803
        %v2922 = vunpack.c.h.b16 %v2803
        %v2923 = vunpack.c.l.b16 %v2804
        %v2924 = vunpack.c.h.b16 %v2804
        %v2925 = vunpack.c.l.b16 %v2805
        %v2926 = vunpack.c.h.b16 %v2805
        %v2927 = vunpack.c.l.b16 %v2806
        %v2928 = vunpack.c.h.b16 %v2806
        %v2929 = vunpack.c.l.b16 %v2807
        %v2930 = vunpack.c.h.b16 %v2807
        %v2931 = vunpack.c.l.b16 %v2808
        %v2932 = vunpack.c.h.b16 %v2808
        %v2933 = vunpack.c.l.b16 %v2809
        %v2934 = vunpack.c.h.b16 %v2809
        %v2935 = vunpack.c.l.b16 %v2810
        %v2936 = vunpack.c.h.b16 %v2810
        %v2937 = vunpack.c.l.b16 %v2811
        %v2938 = vunpack.c.h.b16 %v2811
        %v2939 = vunpack.c.l.b16 %v2812
        %v2940 = vunpack.c.h.b16 %v2812
        %v2941 = vunpack.c.l.b16 %v2813
        %v2942 = vunpack.c.h.b16 %v2813
        %v2943 = vunpack.c.l.b16 %v2814
        %v2944 = vunpack.c.h.b16 %v2814
        %v2945 = vunpack.c.l.b16 %v2815
        %v2946 = vunpack.c.h.b16 %v2815
        %v2947 = vunpack.c.l.b16 %v2816
        %v2948 = vunpack.c.h.b16 %v2816
        %v2949 = vunpack.c.l.b16 %v2817
        %v2950 = vunpack.c.h.b16 %v2817
        %v2951 = vunpack.c.l.b16 %v2818
        %v2952 = vunpack.c.h.b16 %v2818
        %v2953 = vunpack.c.l.b16 %v2819
        %v2954 = vunpack.c.h.b16 %v2819
        %v2955 = vunpack.c.l.b16 %v2820
        %v2956 = vunpack.c.h.b16 %v2820
        %v2957 = vunpack.c.l.b16 %v2821
        %v2958 = vunpack.c.h.b16 %v2821
        %v2959 = vunpack.c.l.b16 %v2822
        %v2960 = vunpack.c.h.b16 %v2822
        %v2961 = vunpack.c.l.b16 %v2823
        %v2962 = vunpack.c.h.b16 %v2823
        %v2963 = vunpack.c.l.b16 %v2824
        %v2964 = vunpack.c.h.b16 %v2824
        %v2965 = vunpack.c.l.b16 %v2825
        %v2966 = vunpack.c.h.b16 %v2825
        %v2967 = vunpack.c.l.b16 %v2826
        %v2968 = vunpack.c.h.b16 %v2826
        %v2969 = vunpack.c.l.b16 %v2827
        %v2970 = vunpack.c.h.b16 %v2827
        %v2971 = vunpack.c.l.b16 %v2828
        %v2972 = vunpack.c.h.b16 %v2828
        %v2973 = vunpack.c.l.b16 %v2829
        %v2974 = vunpack.c.h.b16 %v2829
        %v2975 = vunpack.c.l.b16 %v2830
        %v2976 = vunpack.c.h.b16 %v2830
        %v2977 = vunpack.c.l.b16 %v2831
        %v2978 = vunpack.c.h.b16 %v2831
        %v2979 = vunpack.c.l.b16 %v2832
        %v2980 = vunpack.c.h.b16 %v2832
        %v2981 = vunpack.c.l.b16 %v2833
        %v2982 = vunpack.c.h.b16 %v2833
        %v2983 = vunpack.c.l.b16 %v2834
        %v2984 = vunpack.c.h.b16 %v2834
        %v2985 = vunpack.c.l.b16 %v2835
        %v2986 = vunpack.c.h.b16 %v2835
        %v2987 = vunpack.c.l.b16 %v2836
        %v2988 = vunpack.c.h.b16 %v2836
        %v2989 = vunpack.c.l.b16 %v2837
        %v2990 = vunpack.c.h.b16 %v2837
        %v2991 = vunpack.c.l.b16 %v2838
        %v2992 = vunpack.c.h.b16 %v2838
        %v2993 = vunpack.c.l.b16 %v2839
        %v2994 = vunpack.c.h.b16 %v2839
        %v2995 = vunpack.c.l.b16 %v2840
        %v2996 = vunpack.c.h.b16 %v2840
        %v2997 = vpack.c.b16 %v2895, %v2893
        %v2998 = vpack.c.b16 %v2896, %v2894
        %v2999 = vpack.c.b16 %v2899, %v2897
        %v3000 = vpack.c.b16 %v2900, %v2898
        %v3001 = vpack.c.b16 %v2903, %v2901
        %v3002 = vpack.c.b16 %v2904, %v2902
        %v3003 = vpack.c.b16 %v2907, %v2905
        %v3004 = vpack.c.b16 %v2908, %v2906
        %v3005 = vpack.c.b16 %v2911, %v2909
        %v3006 = vpack.c.b16 %v2912, %v2910
        %v3007 = vpack.c.b16 %v2915, %v2913
        %v3008 = vpack.c.b16 %v2916, %v2914
        %v3009 = vpack.c.b16 %v2919, %v2917
        %v3010 = vpack.c.b16 %v2920, %v2918
        %v3011 = vpack.c.b16 %v2923, %v2921
        %v3012 = vpack.c.b16 %v2924, %v2922
        %v3013 = vpack.c.b16 %v2927, %v2925
        %v3014 = vpack.c.b16 %v2928, %v2926
        %v3015 = vpack.c.b16 %v2931, %v2929
        %v3016 = vpack.c.b16 %v2932, %v2930
        %v3017 = vpack.c.b16 %v2935, %v2933
        %v3018 = vpack.c.b16 %v2936, %v2934
        %v3019 = vpack.c.b16 %v2939, %v2937
        %v3020 = vpack.c.b16 %v2940, %v2938
        %v3021 = vpack.c.b16 %v2943, %v2941
        %v3022 = vpack.c.b16 %v2944, %v2942
        %v3023 = vpack.c.b16 %v2947, %v2945
        %v3024 = vpack.c.b16 %v2948, %v2946
        %v3025 = vpack.c.b16 %v2951, %v2949
        %v3026 = vpack.c.b16 %v2952, %v2950
        %v3027 = vpack.c.b16 %v2955, %v2953
        %v3028 = vpack.c.b16 %v2956, %v2954
        %v3029 = vpack.c.b16 %v2959, %v2957
        %v3030 = vpack.c.b16 %v2960, %v2958
        %v3031 = vpack.c.b16 %v2963, %v2961
        %v3032 = vpack.c.b16 %v2964, %v2962
        %v3033 = vpack.c.b16 %v2967, %v2965
        %v3034 = vpack.c.b16 %v2968, %v2966
        %v3035 = vpack.c.b16 %v2971, %v2969
        %v3036 = vpack.c.b16 %v2972, %v2970
        %v3037 = vpack.c.b16 %v2975, %v2973
        %v3038 = vpack.c.b16 %v2976, %v2974
        %v3039 = vpack.c.b16 %v2979, %v2977
        %v3040 = vpack.c.b16 %v2980, %v2978
        %v3041 = vpack.c.b16 %v2983, %v2981
        %v3042 = vpack.c.b16 %v2984, %v2982
        %v3043 = vpack.c.b16 %v2987, %v2985
        %v3044 = vpack.c.b16 %v2988, %v2986
        %v3045 = vpack.c.b16 %v2991, %v2989
        %v3046 = vpack.c.b16 %v2992, %v2990
        %v3047 = vpack.c.b16 %v2995, %v2993
        %v3048 = vpack.c.b16 %v2996, %v2994
        %3101 = vmatprep.subr.bf16.mxu0 %v2998
        %3102 = vmatpush1.bf16.msra.mxu0 %v2997
        %3103 = vmatprep.subr.bf16.mxu0 %v3000
        %3104 = vmatpush1.bf16.msra.mxu0 %v2999
        %3105 = vmatprep.subr.bf16.mxu0 %v3002
        %3106 = vmatpush1.bf16.msra.mxu0 %v3001
        %3107 = vmatprep.subr.bf16.mxu0 %v3004
        %3108 = vmatpush1.bf16.msra.mxu0 %v3003
        %3109 = vmatprep.subr.bf16.mxu0 %v3006
        %3110 = vmatpush1.bf16.msra.mxu0 %v3005
        %3111 = vmatprep.subr.bf16.mxu0 %v3008
        %3112 = vmatpush1.bf16.msra.mxu0 %v3007
        %3113 = vmatprep.subr.bf16.mxu0 %v3010
        %3114 = vmatpush1.bf16.msra.mxu0 %v3009
        %3115 = vmatprep.subr.bf16.mxu0 %v3012
        %3116 = vmatpush1.bf16.msra.mxu0 %v3011
        %3117 = vmatprep.subr.bf16.mxu0 %v3014
        %3118 = vmatpush1.bf16.msra.mxu0 %v3013
        %3119 = vmatprep.subr.bf16.mxu0 %v3016
        %3120 = vmatpush1.bf16.msra.mxu0 %v3015
        %3121 = vmatprep.subr.bf16.mxu0 %v3018
        %3122 = vmatpush1.bf16.msra.mxu0 %v3017
        %3123 = vmatprep.subr.bf16.mxu0 %v3020
        %3124 = vmatpush1.bf16.msra.mxu0 %v3019
        %3125 = vmatprep.subr.bf16.mxu0 %v3022
        %3126 = vmatpush1.bf16.msra.mxu0 %v3021
        %3127 = vmatprep.subr.bf16.mxu0 %v3024
        %3128 = vmatpush1.bf16.msra.mxu0 %v3023
        %3129 = vmatprep.subr.bf16.mxu0 %v3026
        %3130 = vmatpush1.bf16.msra.mxu0 %v3025
        %3131 = vmatprep.subr.bf16.mxu0 %v3028
        %3132 = vmatpush1.bf16.msra.mxu0 %v3027
        %3133 = vmatprep.mubr.bf16.mxu0 %v2357
        %3134 = vmatmul.mubr.bf16.gmra.mrb[0].mxu0 %v2356
        %v3135 = vpop.f32.mrb[0].mxu0
        %v3136 = vadd.f32 0.0, %v3135
        %v3137 = vpop.f32.mrb[0].mxu0
        %v3138 = vadd.f32 0.0, %v3137
        %v3139 = vpop.f32.mrb[0].mxu0
        %v3140 = vadd.f32 0.0, %v3139
        %v3141 = vpop.f32.mrb[0].mxu0
        %v3142 = vadd.f32 0.0, %v3141
        %3143 = vmatprep.mubr.bf16.mxu0 %v2361
        %3144 = vmatmul.mubr.bf16.gmra.mrb[0].mxu0 %v2360
        %v3145 = vpop.f32.mrb[0].mxu0
        %v3146 = vadd.f32 0.0, %v3145
        %v3147 = vpop.f32.mrb[0].mxu0
        %v3148 = vadd.f32 0.0, %v3147
        %v3149 = vpop.f32.mrb[0].mxu0
        %v3150 = vadd.f32 0.0, %v3149
        %v3151 = vpop.f32.mrb[0].mxu0
        %v3152 = vadd.f32 0.0, %v3151
        %3153 = vdwg.mxu0
        %3154 = vmatprep.subr.bf16.mxu0 %v3030
        %3155 = vmatpush1.bf16.msra.mxu0 %v3029
        %3156 = vmatprep.subr.bf16.mxu0 %v3032
        %3157 = vmatpush1.bf16.msra.mxu0 %v3031
        %3158 = vmatprep.subr.bf16.mxu0 %v3034
        %3159 = vmatpush1.bf16.msra.mxu0 %v3033
        %3160 = vmatprep.subr.bf16.mxu0 %v3036
        %3161 = vmatpush1.bf16.msra.mxu0 %v3035
        %3162 = vmatprep.subr.bf16.mxu0 %v3038
        %3163 = vmatpush1.bf16.msra.mxu0 %v3037
        %3164 = vmatprep.subr.bf16.mxu0 %v3040
        %3165 = vmatpush1.bf16.msra.mxu0 %v3039
        %3166 = vmatprep.subr.bf16.mxu0 %v3042
        %3167 = vmatpush1.bf16.msra.mxu0 %v3041
        %3168 = vmatprep.subr.bf16.mxu0 %v3044
        %3169 = vmatpush1.bf16.msra.mxu0 %v3043
        %3170 = vmatprep.subr.bf16.mxu0 %v3046
        %3171 = vmatpush1.bf16.msra.mxu0 %v3045
        %3172 = vmatprep.subr.bf16.mxu0 %v3048
        %3173 = vmatpush1.bf16.msra.mxu0 %v3047
        %3174 = vmatprep.subr.bf16.mxu0 0
        %3175 = vmatpush1.bf16.msra.mxu0 0
        %3176 = vmatprep.subr.bf16.mxu0 0
        %3177 = vmatpush1.bf16.msra.mxu0 0
        %3178 = vmatprep.subr.bf16.mxu0 0
        %3179 = vmatpush1.bf16.msra.mxu0 0
        %3180 = vmatprep.subr.bf16.mxu0 0
        %3181 = vmatpush1.bf16.msra.mxu0 0
        %3182 = vmatprep.subr.bf16.mxu0 0
        %3183 = vmatpush1.bf16.msra.mxu0 0
        %3184 = vmatprep.subr.bf16.mxu0 0
        %3185 = vmatpush1.bf16.msra.mxu0 0
        %3186 = vmatprep.mubr.bf16.mxu0 %v2678
        %3187 = vmatmul.mubr.bf16.gmra.mrb[0].mxu0 %v2358
        %v3188 = vpop.f32.mrb[0].mxu0
        %v3189 = vadd.f32 %v3136, %v3188
        %v3190 = vpop.f32.mrb[0].mxu0
        %v3191 = vadd.f32 %v3138, %v3190
        %v3192 = vpop.f32.mrb[0].mxu0
        %v3193 = vadd.f32 %v3140, %v3192
        %v3194 = vpop.f32.mrb[0].mxu0
        %v3195 = vadd.f32 %v3142, %v3194
        %3196 = vmatprep.mubr.bf16.mxu0 %v2681
        %3197 = vmatmul.mubr.bf16.gmra.mrb[0].mxu0 %v2362
        %v3198 = vpop.f32.mrb[0].mxu0
        %v3199 = vadd.f32 %v3146, %v3198
        %v3200 = vpop.f32.mrb[0].mxu0
        %v3201 = vadd.f32 %v3148, %v3200
        %v3202 = vpop.f32.mrb[0].mxu0
        %v3203 = vadd.f32 %v3150, %v3202
        %v3204 = vpop.f32.mrb[0].mxu0
        %v3205 = vadd.f32 %v3152, %v3204
        %3206 = vdwg.mxu0
        %v3207 = vmax.f32 %v2771, %v3189
        %v3208 = vmax.f32 %v2773, %v3191
        %v3209 = vmax.f32 %v2775, %v3193
        %v3210 = vmax.f32 %v2777, %v3195
        %v3211 = vmax.f32 %v2781, %v3199
        %v3212 = vmax.f32 %v2783, %v3201
        %v3213 = vmax.f32 %v2785, %v3203
        %v3214 = vmax.f32 %v2787, %v3205
        %v3215 = vpack.c.bf16 %v3209, %v3207
        %v3216 = vpack.c.bf16 %v3210, %v3208
        %v3217 = vpack.c.bf16 %v3213, %v3211
        %v3218 = vpack.c.bf16 %v3214, %v3212
        %v3223 = vunpack.c.l.b16 %v3215
        %v3224 = vunpack.c.l.b16 %v3216
        %v3225 = vunpack.c.h.b16 %v3215
        %v3226 = vunpack.c.h.b16 %v3216
        %v3227 = vunpack.c.l.b16 %v3217
        %v3228 = vunpack.c.l.b16 %v3218
        %v3229 = vunpack.c.h.b16 %v3217
        %v3230 = vunpack.c.h.b16 %v3218
        %v3231 = vpack.c.b16 %v3224, %v3223
        %v3232 = vpack.c.b16 %v3226, %v3225
        %v3233 = vpack.c.b16 %v3228, %v3227
        %v3234 = vpack.c.b16 %v3230, %v3229
        %vm3239 = vcmask 1043456
        %vm3240 = vcmask 654340
        %vm3241 = vmor %vm3240, %vm3239
        %3242 = vst.msk [vmem:[%s406] sm:$0xff] %vm3241, %v3231
        %3243 = vst.msk [vmem:[%s406 + $0x8] sm:$0xff] %vm3241, %v3232
        %3244 = vst.msk [vmem:[%s406 + $0x10] sm:$0xff] %vm3241, %v3233
        %vm3245 = vcmask 1040384
        %vm3246 = vcmask 651268
        %vm3247 = vmor %vm3246, %vm3245
        %3248 = vst.msk [vmem:[%s406 + $0x18] sm:$0x11] %vm3247, %v3234
      $region80: #{cnn_forward.3} parent=63 // pred_fallthru
        _
      %s3249 = smul.u32 %s26, %s27
      %s3250 = smul.u32 4, %s3249
      %p3251 = scmp.lt.s32.totalorder %s3250, 3
      %s3252 = scalar_select %p3251, %s3250, 3
      %s3253 = smul.addr %s3252, 2
      %s3254 = smul.addr %s3253, 4
      %s3255 = scalar_lea.vmem %s11, %s3254
      // Predicated region
      $region81: #{cnn_forward.3} parent=63 // pred_check
        %p3256 = pneg %p290
      $region82: #{cnn_forward.3} parent=63 // pred_check_branch
        %3258 = sbr.rel (%p3256) target = $region84
      $region83: #{cnn_forward.3} parent=63 // pred_region
        %s3259 = smul.u32 %s26, %s27
        %s3260 = smul.u32 4, %s3259
      $region84: #{cnn_forward.3} parent=63 // pred_fallthru
        _
    $region64: #{cnn_forward.3} parent=5 // pred_fallthru
      _
    %p3261 = scmp.le.s32.totalorder 2, %s17
    // Predicated region
    $region85: #{cnn_forward.3} parent=5 // pred_check
      %p3262 = pneg %p3261
    $region86: #{cnn_forward.3} parent=5 // pred_check_branch
      %3264 = sbr.rel (%p3262) target = $region88
    $region87: #{cnn_forward.3} parent=5 // pred_region
      %s3265 = ssub.s32 %s17, 2
      // Predicated region
      $region89: #{cnn_forward.3} parent=87 // pred_check
        %p3266 = pneg %p296
      $region90: #{cnn_forward.3} parent=87 // pred_check_branch
        %3268 = sbr.rel (%p3266) target = $region92
      $region91: #{cnn_forward.3} parent=87 // pred_region
        %s3269 = smul.u32 %s28, %s29
        %s3270 = smul.u32 4, %s3269
        %p3271 = scmp.lt.s32.totalorder %s3270, 3
        %s3272 = scalar_select %p3271, %s3270, 3
        %s3273 = smul.addr %s3272, 2
        %s3274 = smul.addr %s3273, 4
        %s3275 = scalar_lea.vmem %s11, %s3274
      $region92: #{cnn_forward.3} parent=87 // pred_fallthru
        _
    $region88: #{cnn_forward.3} parent=5 // pred_fallthru
      _
  $region6: #{cnn_forward.3} parent=0 // loop_footer
    %s21 = sadd.s32 1, %s17
  $region7: #{cnn_forward.3} parent=0 // loop_footer_branch
    %16 = sbr.rel target = $region3
  $region8: #{cnn_forward.3} parent=0 // loop_exit
    _

// kernel: cnn_forward.5
$region0: #{cnn_forward.5}
  #allocation0 [shape = 'u32[]', space=smem, size = 0x4, offset = 0x4, fixed_abs, tag = 'smem constant byte address 0x4 - core index']
  #allocation1 [shape = 'u32[144,128]{1,0:T(1,128)}', space=vmem, size = 0x12000, scoped, tag = 'internal scratch']
  %s0 = inlined_call_operand.vmem [shape: bf16[8,400], index: 0, kind: input, shape index: {}]
  %s1 = inlined_call_operand.vmem [shape: bf16[400,120], index: 1, kind: input, shape index: {}]
  %s2 = inlined_call_operand.vmem [shape: f32[1,120], index: 2, kind: input, shape index: {}]
  %s3 = inlined_call_operand.vmem [shape: bf16[120,10], index: 3, kind: input, shape index: {}]
  %s4 = inlined_call_operand.vmem [shape: f32[1,10], index: 4, kind: input, shape index: {}]
  %s5 = inlined_call_operand.vmem [shape: f32[8,10], index: 5, kind: output, shape index: {}]
  %s6 = sld [smem:[#allocation0]]
  $region30: #{cnn_forward.5} parent=0
    _
  %s8 = ssub.s32 1, %s6
  %s9 = scalar_select 0, %s8, %s6
  // Predicated region
  $region2: #{cnn_forward.5} parent=0 // pred_check
    _
  $region3: #{cnn_forward.5} parent=0 // pred_check_branch
    %11 = sbr.rel (0) target = $region5
  $region4: #{cnn_forward.5} parent=0 // pred_region
    _
  $region5: #{cnn_forward.5} parent=0 // pred_fallthru
    _
  // Predicated region
  $region6: #{cnn_forward.5} parent=0 // pred_check
    _
  $region7: #{cnn_forward.5} parent=0 // pred_check_branch
    %13 = sbr.rel (0) target = $region9
  $region8: #{cnn_forward.5} parent=0 // pred_region
    _
  $region9: #{cnn_forward.5} parent=0 // pred_fallthru
    _
  // Predicated region
  $region10: #{cnn_forward.5} parent=0 // pred_check
    _
  $region11: #{cnn_forward.5} parent=0 // pred_check_branch
    %15 = sbr.rel (0) target = $region13
  $region12: #{cnn_forward.5} parent=0 // pred_region
    _
  $region13: #{cnn_forward.5} parent=0 // pred_fallthru
    _
  // Predicated region
  $region14: #{cnn_forward.5} parent=0 // pred_check
    _
  $region15: #{cnn_forward.5} parent=0 // pred_check_branch
    %17 = sbr.rel (0) target = $region17
  $region16: #{cnn_forward.5} parent=0 // pred_region
    _
  $region17: #{cnn_forward.5} parent=0 // pred_fallthru
    _
  // Predicated region
  $region18: #{cnn_forward.5} parent=0 // pred_check
    _
  $region19: #{cnn_forward.5} parent=0 // pred_check_branch
    %19 = sbr.rel (0) target = $region21
  $region20: #{cnn_forward.5} parent=0 // pred_region
    _
  $region21: #{cnn_forward.5} parent=0 // pred_fallthru
    _
  %v21 = vld [vmem:[%s0] sm:$0xff]
  %v22 = vld [vmem:[%s0 + $0x8] sm:$0xff]
  %v23 = vld [vmem:[%s1] sm:$0xf]
  %v24 = vld [vmem:[%s1 + $0x4] sm:$0xf]
  %v25 = vld [vmem:[%s1 + $0x8] sm:$0xf]
  %v26 = vld [vmem:[%s1 + $0xc] sm:$0xf]
  %v27 = vld [vmem:[%s1 + $0x10] sm:$0xf]
  %v28 = vld [vmem:[%s1 + $0x14] sm:$0xf]
  %v29 = vld [vmem:[%s1 + $0x18] sm:$0xf]
  %v30 = vld [vmem:[%s1 + $0x1c] sm:$0xf]
  %v31 = vld [vmem:[%s1 + $0x20] sm:$0xf]
  %v32 = vld [vmem:[%s1 + $0x24] sm:$0xf]
  %v33 = vld [vmem:[%s1 + $0x28] sm:$0xf]
  %v34 = vld [vmem:[%s1 + $0x2c] sm:$0xf]
  %v35 = vld [vmem:[%s1 + $0x30] sm:$0xf]
  %v36 = vld [vmem:[%s1 + $0x34] sm:$0xf]
  %v37 = vld [vmem:[%s1 + $0x38] sm:$0xf]
  %v38 = vld [vmem:[%s1 + $0x3c] sm:$0xf]
  %v39 = vld [vmem:[%s1 + $0x40] sm:$0xf]
  %v40 = vld [vmem:[%s1 + $0x44] sm:$0xf]
  %v41 = vld [vmem:[%s1 + $0x48] sm:$0xf]
  %v42 = vld [vmem:[%s1 + $0x4c] sm:$0xf]
  %v43 = vld [vmem:[%s1 + $0x50] sm:$0xf]
  %v44 = vld [vmem:[%s1 + $0x54] sm:$0xf]
  %v45 = vld [vmem:[%s1 + $0x58] sm:$0xf]
  %v46 = vld [vmem:[%s1 + $0x5c] sm:$0xf]
  %v47 = vld [vmem:[%s1 + $0x60] sm:$0xf]
  %v48 = vld [vmem:[%s1 + $0x64] sm:$0xf]
  %v49 = vld [vmem:[%s1 + $0x68] sm:$0xf]
  %v50 = vld [vmem:[%s1 + $0x6c] sm:$0xf]
  %v51 = vld [vmem:[%s1 + $0x70] sm:$0xf]
  %v52 = vld [vmem:[%s1 + $0x74] sm:$0xf]
  %v53 = vld [vmem:[%s1 + $0x78] sm:$0xf]
  %v54 = vld [vmem:[%s1 + $0x7c] sm:$0xf]
  %v55 = vld [vmem:[%s1 + $0x80] sm:$0xf]
  %v56 = vld [vmem:[%s1 + $0x84] sm:$0xf]
  %v57 = vld [vmem:[%s1 + $0x88] sm:$0xf]
  %v58 = vld [vmem:[%s1 + $0x8c] sm:$0xf]
  %v59 = vld [vmem:[%s1 + $0x90] sm:$0xf]
  %v60 = vld [vmem:[%s1 + $0x94] sm:$0xf]
  %v61 = vld [vmem:[%s1 + $0x98] sm:$0xf]
  %v62 = vld [vmem:[%s1 + $0x9c] sm:$0xf]
  %v63 = vld [vmem:[%s1 + $0xa0] sm:$0xf]
  %v64 = vld [vmem:[%s1 + $0xa4] sm:$0xf]
  %v65 = vld [vmem:[%s1 + $0xa8] sm:$0xf]
  %v66 = vld [vmem:[%s1 + $0xac] sm:$0xf]
  %v67 = vld [vmem:[%s1 + $0xb0] sm:$0xf]
  %v68 = vld [vmem:[%s1 + $0xb4] sm:$0xf]
  %v69 = vld [vmem:[%s1 + $0xb8] sm:$0xf]
  %v70 = vld [vmem:[%s1 + $0xbc] sm:$0xf]
  %v71 = vld [vmem:[%s1 + $0xc0] sm:$0xf]
  %v72 = vld [vmem:[%s1 + $0xc4] sm:$0xf]
  %v73 = vld [vmem:[%s2] sm:$0x1]
  %v75 = vlaneseq
  %v76 = vshrl.u32 %v75, 7
  %v77 = vsub.s32 0, %v76
  %v78 = vrot.slane %v73, %v77
  %v82 = vunpack.c.l.b16 %v21
  %v83 = vunpack.c.h.b16 %v21
  %v84 = vunpack.c.l.b16 %v22
  %v85 = vunpack.c.h.b16 %v22
  %v86 = vpack.c.b16 %v82, %v82
  %v87 = vpack.c.b16 %v83, %v83
  %v88 = vpack.c.b16 %v84, %v84
  %v89 = vpack.c.b16 %v85, %v85
  %v143 = vunpack.c.l.b16 %v23
  %v144 = vunpack.c.l.b16 %v24
  %v145 = vunpack.c.l.b16 %v25
  %v146 = vunpack.c.l.b16 %v26
  %v147 = vunpack.c.l.b16 %v27
  %v148 = vunpack.c.l.b16 %v28
  %v149 = vunpack.c.l.b16 %v29
  %v150 = vunpack.c.l.b16 %v30
  %v151 = vunpack.c.l.b16 %v31
  %v152 = vunpack.c.l.b16 %v32
  %v153 = vunpack.c.l.b16 %v33
  %v154 = vunpack.c.l.b16 %v34
  %v155 = vunpack.c.l.b16 %v35
  %v156 = vunpack.c.l.b16 %v36
  %v157 = vunpack.c.l.b16 %v37
  %v158 = vunpack.c.l.b16 %v38
  %v159 = vunpack.c.l.b16 %v39
  %v160 = vunpack.c.l.b16 %v40
  %v161 = vunpack.c.l.b16 %v41
  %v162 = vunpack.c.l.b16 %v42
  %v163 = vunpack.c.l.b16 %v43
  %v164 = vunpack.c.l.b16 %v44
  %v165 = vunpack.c.l.b16 %v45
  %v166 = vunpack.c.l.b16 %v46
  %v167 = vunpack.c.l.b16 %v47
  %v168 = vunpack.c.l.b16 %v48
  %v169 = vunpack.c.l.b16 %v49
  %v170 = vunpack.c.l.b16 %v50
  %v171 = vunpack.c.l.b16 %v51
  %v172 = vunpack.c.l.b16 %v52
  %v173 = vunpack.c.l.b16 %v53
  %v174 = vunpack.c.l.b16 %v54
  %v175 = vunpack.c.l.b16 %v55
  %v176 = vunpack.c.l.b16 %v56
  %v177 = vunpack.c.l.b16 %v57
  %v178 = vunpack.c.l.b16 %v58
  %v179 = vunpack.c.l.b16 %v59
  %v180 = vunpack.c.l.b16 %v60
  %v181 = vunpack.c.l.b16 %v61
  %v182 = vunpack.c.l.b16 %v62
  %v183 = vunpack.c.l.b16 %v63
  %v184 = vunpack.c.l.b16 %v64
  %v185 = vunpack.c.l.b16 %v65
  %v186 = vunpack.c.l.b16 %v66
  %v187 = vunpack.c.l.b16 %v67
  %v188 = vunpack.c.l.b16 %v68
  %v189 = vunpack.c.l.b16 %v69
  %v190 = vunpack.c.l.b16 %v70
  %v191 = vunpack.c.l.b16 %v71
  %v192 = vunpack.c.l.b16 %v72
  %v193 = vpack.c.b16 %v144, %v143
  %v194 = vpack.c.b16 %v146, %v145
  %v195 = vpack.c.b16 %v148, %v147
  %v196 = vpack.c.b16 %v150, %v149
  %v197 = vpack.c.b16 %v152, %v151
  %v198 = vpack.c.b16 %v154, %v153
  %v199 = vpack.c.b16 %v156, %v155
  %v200 = vpack.c.b16 %v158, %v157
  %v201 = vpack.c.b16 %v160, %v159
  %v202 = vpack.c.b16 %v162, %v161
  %v203 = vpack.c.b16 %v164, %v163
  %v204 = vpack.c.b16 %v166, %v165
  %v205 = vpack.c.b16 %v168, %v167
  %v206 = vpack.c.b16 %v170, %v169
  %v207 = vpack.c.b16 %v172, %v171
  %v208 = vpack.c.b16 %v174, %v173
  %v209 = vpack.c.b16 %v176, %v175
  %v210 = vpack.c.b16 %v178, %v177
  %v211 = vpack.c.b16 %v180, %v179
  %v212 = vpack.c.b16 %v182, %v181
  %v213 = vpack.c.b16 %v184, %v183
  %v214 = vpack.c.b16 %v186, %v185
  %v215 = vpack.c.b16 %v188, %v187
  %v216 = vpack.c.b16 %v190, %v189
  %v217 = vpack.c.b16 %v192, %v191
  %vm243 = vcmask 130048
  %v245 = vsel %vm243, %v89, 0
  %247 = vmatprep.subr.bf16.mxu0 0
  %248 = vmatpush1.bf16.msra.mxu0 %v193
  %249 = vmatprep.subr.bf16.mxu0 0
  %250 = vmatpush1.bf16.msra.mxu0 %v194
  %251 = vmatprep.subr.bf16.mxu0 0
  %252 = vmatpush1.bf16.msra.mxu0 %v195
  %253 = vmatprep.subr.bf16.mxu0 0
  %254 = vmatpush1.bf16.msra.mxu0 %v196
  %255 = vmatprep.subr.bf16.mxu0 0
  %256 = vmatpush1.bf16.msra.mxu0 %v197
  %257 = vmatprep.subr.bf16.mxu0 0
  %258 = vmatpush1.bf16.msra.mxu0 %v198
  %259 = vmatprep.subr.bf16.mxu0 0
  %260 = vmatpush1.bf16.msra.mxu0 %v199
  %261 = vmatprep.subr.bf16.mxu0 0
  %262 = vmatpush1.bf16.msra.mxu0 %v200
  %263 = vmatprep.subr.bf16.mxu0 0
  %264 = vmatpush1.bf16.msra.mxu0 %v201
  %265 = vmatprep.subr.bf16.mxu0 0
  %266 = vmatpush1.bf16.msra.mxu0 %v202
  %267 = vmatprep.subr.bf16.mxu0 0
  %268 = vmatpush1.bf16.msra.mxu0 %v203
  %269 = vmatprep.subr.bf16.mxu0 0
  %270 = vmatpush1.bf16.msra.mxu0 %v204
  %271 = vmatprep.subr.bf16.mxu0 0
  %272 = vmatpush1.bf16.msra.mxu0 %v205
  %273 = vmatprep.subr.bf16.mxu0 0
  %274 = vmatpush1.bf16.msra.mxu0 %v206
  %275 = vmatprep.subr.bf16.mxu0 0
  %276 = vmatpush1.bf16.msra.mxu0 %v207
  %277 = vmatprep.subr.bf16.mxu0 0
  %278 = vmatpush1.bf16.msra.mxu0 %v208
  %279 = vmatprep.mubr.bf16.mxu0 %v87
  %280 = vmatmul.mubr.bf16.gmra.mrb[0].mxu0 %v86
  %v281 = vpop.f32.mrb[0].mxu0
  %v282 = vadd.f32 %v78, %v281
  %v283 = vpop.f32.mrb[0].mxu0
  %v284 = vpop.f32.mrb[0].mxu0
  %v285 = vpop.f32.mrb[0].mxu0
  %286 = vdwg.mxu0
  %287 = vmatprep.subr.bf16.mxu0 0
  %288 = vmatpush1.bf16.msra.mxu0 %v209
  %289 = vmatprep.subr.bf16.mxu0 0
  %290 = vmatpush1.bf16.msra.mxu0 %v210
  %291 = vmatprep.subr.bf16.mxu0 0
  %292 = vmatpush1.bf16.msra.mxu0 %v211
  %293 = vmatprep.subr.bf16.mxu0 0
  %294 = vmatpush1.bf16.msra.mxu0 %v212
  %295 = vmatprep.subr.bf16.mxu0 0
  %296 = vmatpush1.bf16.msra.mxu0 %v213
  %297 = vmatprep.subr.bf16.mxu0 0
  %298 = vmatpush1.bf16.msra.mxu0 %v214
  %299 = vmatprep.subr.bf16.mxu0 0
  %300 = vmatpush1.bf16.msra.mxu0 %v215
  %301 = vmatprep.subr.bf16.mxu0 0
  %302 = vmatpush1.bf16.msra.mxu0 %v216
  %303 = vmatprep.subr.bf16.mxu0 0
  %304 = vmatpush1.bf16.msra.mxu0 %v217
  %305 = vmatprep.subr.bf16.mxu0 0
  %306 = vmatpush1.bf16.msra.mxu0 0
  %307 = vmatprep.subr.bf16.mxu0 0
  %308 = vmatpush1.bf16.msra.mxu0 0
  %309 = vmatprep.subr.bf16.mxu0 0
  %310 = vmatpush1.bf16.msra.mxu0 0
  %311 = vmatprep.subr.bf16.mxu0 0
  %312 = vmatpush1.bf16.msra.mxu0 0
  %313 = vmatprep.subr.bf16.mxu0 0
  %314 = vmatpush1.bf16.msra.mxu0 0
  %315 = vmatprep.subr.bf16.mxu0 0
  %316 = vmatpush1.bf16.msra.mxu0 0
  %317 = vmatprep.subr.bf16.mxu0 0
  %318 = vmatpush1.bf16.msra.mxu0 0
  %319 = vmatprep.mubr.bf16.mxu0 %v245
  %320 = vmatmul.mubr.bf16.gmra.mrb[0].mxu0 %v88
  %v321 = vpop.f32.mrb[0].mxu0
  %v322 = vadd.f32 %v282, %v321
  %v323 = vpop.f32.mrb[0].mxu0
  %v324 = vpop.f32.mrb[0].mxu0
  %v325 = vpop.f32.mrb[0].mxu0
  %326 = vdwg.mxu0
  %vm327 = vcmp.gt.f32.partialorder %v322, 0.0
  %v328 = vmul.f32 %v322, 0.01
  %v329 = vsel %vm327, %v322, %v328
  %v330 = vpack.c.bf16 %v329, %v329
  %v331 = vld [vmem:[%s3] sm:$0xf]
  %v332 = vld [vmem:[%s3 + $0x4] sm:$0xf]
  %v333 = vld [vmem:[%s3 + $0x8] sm:$0xf]
  %v334 = vld [vmem:[%s3 + $0xc] sm:$0xf]
  %v335 = vld [vmem:[%s3 + $0x10] sm:$0xf]
  %v336 = vld [vmem:[%s3 + $0x14] sm:$0xf]
  %v337 = vld [vmem:[%s3 + $0x18] sm:$0xf]
  %v338 = vld [vmem:[%s3 + $0x1c] sm:$0xf]
  %v339 = vld [vmem:[%s3 + $0x20] sm:$0xf]
  %v340 = vld [vmem:[%s3 + $0x24] sm:$0xf]
  %v341 = vld [vmem:[%s3 + $0x28] sm:$0xf]
  %v342 = vld [vmem:[%s3 + $0x2c] sm:$0xf]
  %v343 = vld [vmem:[%s3 + $0x30] sm:$0xf]
  %v344 = vld [vmem:[%s3 + $0x34] sm:$0xf]
  %v345 = vld [vmem:[%s3 + $0x38] sm:$0xf]
  %v346 = vld [vmem:[%s4] sm:$0x1]
  %v348 = vlaneseq
  %v349 = vshrl.u32 %v348, 7
  %v350 = vsub.s32 0, %v349
  %v351 = vrot.slane %v346, %v350
  %v368 = vunpack.c.l.b16 %v331
  %v369 = vunpack.c.l.b16 %v332
  %v370 = vunpack.c.l.b16 %v333
  %v371 = vunpack.c.l.b16 %v334
  %v372 = vunpack.c.l.b16 %v335
  %v373 = vunpack.c.l.b16 %v336
  %v374 = vunpack.c.l.b16 %v337
  %v375 = vunpack.c.l.b16 %v338
  %v376 = vunpack.c.l.b16 %v339
  %v377 = vunpack.c.l.b16 %v340
  %v378 = vunpack.c.l.b16 %v341
  %v379 = vunpack.c.l.b16 %v342
  %v380 = vunpack.c.l.b16 %v343
  %v381 = vunpack.c.l.b16 %v344
  %v382 = vunpack.c.l.b16 %v345
  %v383 = vpack.c.b16 %v369, %v368
  %v384 = vpack.c.b16 %v371, %v370
  %v385 = vpack.c.b16 %v373, %v372
  %v386 = vpack.c.b16 %v375, %v374
  %v387 = vpack.c.b16 %v377, %v376
  %v388 = vpack.c.b16 %v379, %v378
  %v389 = vpack.c.b16 %v381, %v380
  %v390 = vpack.c.b16 %v382, %v382
  %vm398 = vcmask 982016
  %v400 = vsel %vm398, %v330, 0
  %vm402 = vcmask 1043456
  %v404 = vsel %vm402, %v390, 0
  %406 = vmatprep.subr.bf16.mxu0 0
  %407 = vmatpush1.bf16.msra.mxu0 %v383
  %408 = vmatprep.subr.bf16.mxu0 0
  %409 = vmatpush1.bf16.msra.mxu0 %v384
  %410 = vmatprep.subr.bf16.mxu0 0
  %411 = vmatpush1.bf16.msra.mxu0 %v385
  %412 = vmatprep.subr.bf16.mxu0 0
  %413 = vmatpush1.bf16.msra.mxu0 %v386
  %414 = vmatprep.subr.bf16.mxu0 0
  %415 = vmatpush1.bf16.msra.mxu0 %v387
  %416 = vmatprep.subr.bf16.mxu0 0
  %417 = vmatpush1.bf16.msra.mxu0 %v388
  %418 = vmatprep.subr.bf16.mxu0 0
  %419 = vmatpush1.bf16.msra.mxu0 %v389
  %420 = vmatprep.subr.bf16.mxu0 0
  %421 = vmatpush1.bf16.msra.mxu0 %v404
  %422 = vmatprep.subr.bf16.mxu0 0
  %423 = vmatpush1.bf16.msra.mxu0 0
  %424 = vmatprep.subr.bf16.mxu0 0
  %425 = vmatpush1.bf16.msra.mxu0 0
  %426 = vmatprep.subr.bf16.mxu0 0
  %427 = vmatpush1.bf16.msra.mxu0 0
  %428 = vmatprep.subr.bf16.mxu0 0
  %429 = vmatpush1.bf16.msra.mxu0 0
  %430 = vmatprep.subr.bf16.mxu0 0
  %431 = vmatpush1.bf16.msra.mxu0 0
  %432 = vmatprep.subr.bf16.mxu0 0
  %433 = vmatpush1.bf16.msra.mxu0 0
  %434 = vmatprep.subr.bf16.mxu0 0
  %435 = vmatpush1.bf16.msra.mxu0 0
  %436 = vmatprep.subr.bf16.mxu0 0
  %437 = vmatpush1.bf16.msra.mxu0 0
  %438 = vmatprep.mubr.bf16.mxu0 0
  %439 = vmatmul.mubr.bf16.gmra.mrb[0].mxu0 %v400
  %v440 = vpop.f32.mrb[0].mxu0
  %v441 = vadd.f32 %v351, %v440
  %v442 = vpop.f32.mrb[0].mxu0
  %v443 = vpop.f32.mrb[0].mxu0
  %v444 = vpop.f32.mrb[0].mxu0
  %445 = vdwg.mxu0
  %vm446 = vcmask 80896
  %447 = vst.msk [vmem:[%s5] sm:$0xff] %vm446, %v441
  // Predicated region
  $region22: #{cnn_forward.5} parent=0 // pred_check
    _
  $region23: #{cnn_forward.5} parent=0 // pred_check_branch
    %449 = sbr.rel (0) target = $region25
  $region24: #{cnn_forward.5} parent=0 // pred_region
    _
  $region25: #{cnn_forward.5} parent=0 // pred_fallthru
    _
  // Predicated region
  $region26: #{cnn_forward.5} parent=0 // pred_check
    _
  $region27: #{cnn_forward.5} parent=0 // pred_check_branch
    %451 = sbr.rel (0) target = $region29
  $region28: #{cnn_forward.5} parent=0 // pred_region
    _
  $region29: #{cnn_forward.5} parent=0 // pred_fallthru
    _

// kernel: cnn_forward.4
$region0: #{cnn_forward.4}
  #allocation0 [shape = 'u32[]', space=smem, size = 0x4, offset = 0x4, fixed_abs, tag = 'smem constant byte address 0x4 - core index']
  #allocation1 [shape = 'u32[144,128]{1,0:T(1,128)}', space=vmem, size = 0x12000, scoped, tag = 'internal scratch']
  #allocation2 [shape = 'f32[1,176]{1,0:T(1,128)}', space=vmem, size = 0x400, scoped, tag = 'scratch operand']
  #allocation3 [shape = 'f32[1,176]{1,0:T(1,128)}', space=vmem, size = 0x400, scoped, tag = 'scratch operand']
  %s0 = inlined_call_operand.vmem [shape: bf16[26,208], index: 0, kind: input, shape index: {}]
  %s1 = inlined_call_operand.vmem [shape: bf16[624,176], index: 1, kind: input, shape index: {}]
  %s2 = inlined_call_operand.vmem [shape: f32[176,16], index: 2, kind: input, shape index: {}]
  %s3 = inlined_call_operand.vmem [shape: f32[16,176], index: 3, kind: input, shape index: {}]
  %s4 = inlined_call_operand.vmem [shape: f32[1,16], index: 4, kind: input, shape index: {}]
  %s5 = inlined_call_operand.vmem [shape: f32[1,16], index: 5, kind: input, shape index: {}]
  %s6 = inlined_call_operand.vmem [shape: f32[24,1], index: 6, kind: input, shape index: {}]
  %s7 = inlined_call_operand.vmem [shape: bf16[10,24], index: 7, kind: input, shape index: {}]
  %s8 = inlined_call_operand.vmem [shape: bf16[10,24], index: 8, kind: input, shape index: {}]
  %s9 = inlined_call_operand.vmem [shape: bf16[176,80], index: 9, kind: input, shape index: {}]
  %s10 = inlined_call_operand.vmem [shape: bf16[176,80], index: 10, kind: input, shape index: {}]
  %s11 = inlined_call_operand.vmem [shape: bf16[10,80], index: 11, kind: output, shape index: {}]
  %s12 = sld [smem:[#allocation0]]
  $region93: #{cnn_forward.4} parent=0
    _
  %s14 = ssub.s32 1, %s12
  %s15 = scalar_select 0, %s14, %s12
  loop: start=0, step=1, limit=4
  $region2: #{cnn_forward.4} parent=0 // loop_pre_header
    _
  $region3: #{cnn_forward.4} parent=0 // loop_header
    %s17 = sphi 0, %s21
    %p18 = scmp.ge.s32.totalorder %s17, 4
    %s24 = sphi 0, %s36
    %s25 = sphi 0, %s32
    %s26 = sphi 0, %s24
    %s27 = sphi 0, %s25
    %s28 = sphi 0, %s26
    %s29 = sphi 0, %s27
    %s39 = sphi 0, %s41
    %s42 = sphi 0, %s39
    %s43 = sphi 0, %s42
    %s59 = sphi 0, %s43
    %s63 = sphi 0, %s63
    %s65 = sphi 0, %s63
    %s66 = sphi 0, %s65
    %s80 = sphi 0, %s66
    %s84 = sphi 0, %s84
    %s86 = sphi 0, %s84
    %s87 = sphi 0, %s86
    %s101 = sphi 0, %s87
    %s105 = sphi 0, %s105
    %s107 = sphi 0, %s105
    %s108 = sphi 0, %s107
    %s122 = sphi 0, %s108
    %s126 = sphi 0, %s126
    %s128 = sphi 0, %s126
    %s129 = sphi 0, %s128
    %s143 = sphi 0, %s129
    %s147 = sphi 0, %s147
    %s149 = sphi 0, %s147
    %s150 = sphi 0, %s149
    %s164 = sphi 0, %s150
    %s168 = sphi 0, %s168
    %s170 = sphi 0, %s168
    %s171 = sphi 0, %s170
    %s185 = sphi 0, %s171
    %s189 = sphi 0, %s189
    %s191 = sphi 0, %s189
    %s192 = sphi 0, %s191
    %s206 = sphi 0, %s192
    %s210 = sphi 0, %s210
    %s212 = sphi 0, %s210
    %s213 = sphi 0, %s212
    %s227 = sphi 0, %s213
    %s231 = sphi 0, %s231
    %s233 = sphi 0, %s231
    %s234 = sphi 0, %s233
    %s248 = sphi 0, %s234
    %s252 = sphi 0, %s252
    %s254 = sphi 0, %s252
    %s255 = sphi 0, %s254
    %s269 = sphi 0, %s255
    %s277 = sphi 0, %s279
    %s280 = sphi 0, %s277
    %s281 = sphi 0, %s280
    %s297 = sphi 0, %s281
  $region4: #{cnn_forward.4} parent=0 // loop_header_branch
    %20 = sbr.rel (%p18) target = $region8
  $region5: #{cnn_forward.4} parent=0 // loop_body
    %s22 = ssub.s32 %s17, 1
    %s23 = ssub.s32 %s17, 2
    %s30 = sadd.s32 1, %s25
    %p31 = scmp.ge.s32.totalorder %s30, 1
    %s32 = scalar_select %p31, 0, %s30
    %s33 = sadd.s32 1, %s24
    %s34 = scalar_select %p31, %s33, %s24
    %p35 = scmp.ge.s32.totalorder %s34, 2
    %s36 = scalar_select %p35, 0, %s34
    %s37 = ssub.s32 %s25, %s32
    %p38 = scmp.eq.s32.totalorder %s37, 0
    %s40 = sadd.s32 %s39, 1
    %s41 = scalar_select %p38, %s39, %s40
    %p44 = pneg %p38
    %p45 = scmp.eq.s32.totalorder %s17, 1
    %p46 = por %p44, %p45
    %p47 = scmp.ne.s32.totalorder %s39, %s42
    %p48 = scmp.eq.s32.totalorder %s17, 0
    %p49 = por %p47, %p48
    %p50 = scmp.ne.s32.totalorder %s39, %s42
    %p51 = scmp.eq.s32.totalorder %s22, 1
    %p52 = por %p50, %p51
    %p53 = scmp.ne.s32.totalorder %s42, %s43
    %p54 = scmp.eq.s32.totalorder %s22, 0
    %p55 = por %p53, %p54
    %p56 = scmp.ne.s32.totalorder %s42, %s43
    %p57 = scmp.eq.s32.totalorder %s23, 1
    %p58 = por %p56, %p57
    %p60 = scmp.ne.s32.totalorder %s43, %s59
    %p61 = scmp.eq.s32.totalorder %s23, 0
    %p62 = por %p60, %p61
    %s64 = sadd.s32 %s63, 1
    %p67 = scmp.eq.s32.totalorder %s17, 1
    %p68 = scmp.ne.s32.totalorder %s63, %s65
    %p69 = scmp.eq.s32.totalorder %s17, 0
    %p70 = por %p68, %p69
    %p71 = scmp.ne.s32.totalorder %s63, %s65
    %p72 = scmp.eq.s32.totalorder %s22, 1
    %p73 = por %p71, %p72
    %p74 = scmp.ne.s32.totalorder %s65, %s66
    %p75 = scmp.eq.s32.totalorder %s22, 0
    %p76 = por %p74, %p75
    %p77 = scmp.ne.s32.totalorder %s65, %s66
    %p78 = scmp.eq.s32.totalorder %s23, 1
    %p79 = por %p77, %p78
    %p81 = scmp.ne.s32.totalorder %s66, %s80
    %p82 = scmp.eq.s32.totalorder %s23, 0
    %p83 = por %p81, %p82
    %s85 = sadd.s32 %s84, 1
    %p88 = scmp.eq.s32.totalorder %s17, 1
    %p89 = scmp.ne.s32.totalorder %s84, %s86
    %p90 = scmp.eq.s32.totalorder %s17, 0
    %p91 = por %p89, %p90
    %p92 = scmp.ne.s32.totalorder %s84, %s86
    %p93 = scmp.eq.s32.totalorder %s22, 1
    %p94 = por %p92, %p93
    %p95 = scmp.ne.s32.totalorder %s86, %s87
    %p96 = scmp.eq.s32.totalorder %s22, 0
    %p97 = por %p95, %p96
    %p98 = scmp.ne.s32.totalorder %s86, %s87
    %p99 = scmp.eq.s32.totalorder %s23, 1
    %p100 = por %p98, %p99
    %p102 = scmp.ne.s32.totalorder %s87, %s101
    %p103 = scmp.eq.s32.totalorder %s23, 0
    %p104 = por %p102, %p103
    %s106 = sadd.s32 %s105, 1
    %p109 = scmp.eq.s32.totalorder %s17, 1
    %p110 = scmp.ne.s32.totalorder %s105, %s107
    %p111 = scmp.eq.s32.totalorder %s17, 0
    %p112 = por %p110, %p111
    %p113 = scmp.ne.s32.totalorder %s105, %s107
    %p114 = scmp.eq.s32.totalorder %s22, 1
    %p115 = por %p113, %p114
    %p116 = scmp.ne.s32.totalorder %s107, %s108
    %p117 = scmp.eq.s32.totalorder %s22, 0
    %p118 = por %p116, %p117
    %p119 = scmp.ne.s32.totalorder %s107, %s108
    %p120 = scmp.eq.s32.totalorder %s23, 1
    %p121 = por %p119, %p120
    %p123 = scmp.ne.s32.totalorder %s108, %s122
    %p124 = scmp.eq.s32.totalorder %s23, 0
    %p125 = por %p123, %p124
    %s127 = sadd.s32 %s126, 1
    %p130 = scmp.eq.s32.totalorder %s17, 1
    %p131 = scmp.ne.s32.totalorder %s126, %s128
    %p132 = scmp.eq.s32.totalorder %s17, 0
    %p133 = por %p131, %p132
    %p134 = scmp.ne.s32.totalorder %s126, %s128
    %p135 = scmp.eq.s32.totalorder %s22, 1
    %p136 = por %p134, %p135
    %p137 = scmp.ne.s32.totalorder %s128, %s129
    %p138 = scmp.eq.s32.totalorder %s22, 0
    %p139 = por %p137, %p138
    %p140 = scmp.ne.s32.totalorder %s128, %s129
    %p141 = scmp.eq.s32.totalorder %s23, 1
    %p142 = por %p140, %p141
    %p144 = scmp.ne.s32.totalorder %s129, %s143
    %p145 = scmp.eq.s32.totalorder %s23, 0
    %p146 = por %p144, %p145
    %s148 = sadd.s32 %s147, 1
    %p151 = scmp.eq.s32.totalorder %s17, 1
    %p152 = scmp.ne.s32.totalorder %s147, %s149
    %p153 = scmp.eq.s32.totalorder %s17, 0
    %p154 = por %p152, %p153
    %p155 = scmp.ne.s32.totalorder %s147, %s149
    %p156 = scmp.eq.s32.totalorder %s22, 1
    %p157 = por %p155, %p156
    %p158 = scmp.ne.s32.totalorder %s149, %s150
    %p159 = scmp.eq.s32.totalorder %s22, 0
    %p160 = por %p158, %p159
    %p161 = scmp.ne.s32.totalorder %s149, %s150
    %p162 = scmp.eq.s32.totalorder %s23, 1
    %p163 = por %p161, %p162
    %p165 = scmp.ne.s32.totalorder %s150, %s164
    %p166 = scmp.eq.s32.totalorder %s23, 0
    %p167 = por %p165, %p166
    %s169 = sadd.s32 %s168, 1
    %p172 = scmp.eq.s32.totalorder %s17, 1
    %p173 = scmp.ne.s32.totalorder %s168, %s170
    %p174 = scmp.eq.s32.totalorder %s17, 0
    %p175 = por %p173, %p174
    %p176 = scmp.ne.s32.totalorder %s168, %s170
    %p177 = scmp.eq.s32.totalorder %s22, 1
    %p178 = por %p176, %p177
    %p179 = scmp.ne.s32.totalorder %s170, %s171
    %p180 = scmp.eq.s32.totalorder %s22, 0
    %p181 = por %p179, %p180
    %p182 = scmp.ne.s32.totalorder %s170, %s171
    %p183 = scmp.eq.s32.totalorder %s23, 1
    %p184 = por %p182, %p183
    %p186 = scmp.ne.s32.totalorder %s171, %s185
    %p187 = scmp.eq.s32.totalorder %s23, 0
    %p188 = por %p186, %p187
    %s190 = sadd.s32 %s189, 1
    %p193 = scmp.eq.s32.totalorder %s17, 1
    %p194 = scmp.ne.s32.totalorder %s189, %s191
    %p195 = scmp.eq.s32.totalorder %s17, 0
    %p196 = por %p194, %p195
    %p197 = scmp.ne.s32.totalorder %s189, %s191
    %p198 = scmp.eq.s32.totalorder %s22, 1
    %p199 = por %p197, %p198
    %p200 = scmp.ne.s32.totalorder %s191, %s192
    %p201 = scmp.eq.s32.totalorder %s22, 0
    %p202 = por %p200, %p201
    %p203 = scmp.ne.s32.totalorder %s191, %s192
    %p204 = scmp.eq.s32.totalorder %s23, 1
    %p205 = por %p203, %p204
    %p207 = scmp.ne.s32.totalorder %s192, %s206
    %p208 = scmp.eq.s32.totalorder %s23, 0
    %p209 = por %p207, %p208
    %s211 = sadd.s32 %s210, 1
    %p214 = scmp.eq.s32.totalorder %s17, 1
    %p215 = scmp.ne.s32.totalorder %s210, %s212
    %p216 = scmp.eq.s32.totalorder %s17, 0
    %p217 = por %p215, %p216
    %p218 = scmp.ne.s32.totalorder %s210, %s212
    %p219 = scmp.eq.s32.totalorder %s22, 1
    %p220 = por %p218, %p219
    %p221 = scmp.ne.s32.totalorder %s212, %s213
    %p222 = scmp.eq.s32.totalorder %s22, 0
    %p223 = por %p221, %p222
    %p224 = scmp.ne.s32.totalorder %s212, %s213
    %p225 = scmp.eq.s32.totalorder %s23, 1
    %p226 = por %p224, %p225
    %p228 = scmp.ne.s32.totalorder %s213, %s227
    %p229 = scmp.eq.s32.totalorder %s23, 0
    %p230 = por %p228, %p229
    %s232 = sadd.s32 %s231, 1
    %p235 = scmp.eq.s32.totalorder %s17, 1
    %p236 = scmp.ne.s32.totalorder %s231, %s233
    %p237 = scmp.eq.s32.totalorder %s17, 0
    %p238 = por %p236, %p237
    %p239 = scmp.ne.s32.totalorder %s231, %s233
    %p240 = scmp.eq.s32.totalorder %s22, 1
    %p241 = por %p239, %p240
    %p242 = scmp.ne.s32.totalorder %s233, %s234
    %p243 = scmp.eq.s32.totalorder %s22, 0
    %p244 = por %p242, %p243
    %p245 = scmp.ne.s32.totalorder %s233, %s234
    %p246 = scmp.eq.s32.totalorder %s23, 1
    %p247 = por %p245, %p246
    %p249 = scmp.ne.s32.totalorder %s234, %s248
    %p250 = scmp.eq.s32.totalorder %s23, 0
    %p251 = por %p249, %p250
    %s253 = sadd.s32 %s252, 1
    %p256 = scmp.eq.s32.totalorder %s17, 1
    %p257 = scmp.ne.s32.totalorder %s252, %s254
    %p258 = scmp.eq.s32.totalorder %s17, 0
    %p259 = por %p257, %p258
    %p260 = scmp.ne.s32.totalorder %s252, %s254
    %p261 = scmp.eq.s32.totalorder %s22, 1
    %p262 = por %p260, %p261
    %p263 = scmp.ne.s32.totalorder %s254, %s255
    %p264 = scmp.eq.s32.totalorder %s22, 0
    %p265 = por %p263, %p264
    %p266 = scmp.ne.s32.totalorder %s254, %s255
    %p267 = scmp.eq.s32.totalorder %s23, 1
    %p268 = por %p266, %p267
    %p270 = scmp.ne.s32.totalorder %s255, %s269
    %p271 = scmp.eq.s32.totalorder %s23, 0
    %p272 = por %p270, %p271
    %s273 = smul.u32 %s24, %s25
    %s274 = smul.u32 %s36, %s32
    %s275 = ssub.s32 %s273, %s274
    %p276 = scmp.eq.s32.totalorder %s275, 0
    %s278 = sadd.s32 %s277, 1
    %s279 = scalar_select %p276, %s277, %s278
    %p282 = pneg %p276
    %p283 = scmp.eq.s32.totalorder %s17, 1
    %p284 = por %p282, %p283
    %p285 = scmp.ne.s32.totalorder %s277, %s280
    %p286 = scmp.eq.s32.totalorder %s17, 0
    %p287 = por %p285, %p286
    %p288 = scmp.ne.s32.totalorder %s277, %s280
    %p289 = scmp.eq.s32.totalorder %s22, 1
    %p290 = por %p288, %p289
    %p291 = scmp.ne.s32.totalorder %s280, %s281
    %p292 = scmp.eq.s32.totalorder %s22, 0
    %p293 = por %p291, %p292
    %p294 = scmp.ne.s32.totalorder %s280, %s281
    %p295 = scmp.eq.s32.totalorder %s23, 1
    %p296 = por %p294, %p295
    %p298 = scmp.ne.s32.totalorder %s281, %s297
    %p299 = scmp.eq.s32.totalorder %s23, 0
    %p300 = por %p298, %p299
    %p301 = scmp.le.s32.totalorder 1, %s17
    %p302 = scmp.lt.s32.totalorder %s17, 3
    %p303 = pnand %p301, %p302
    %p304 = pneg %p303
    // Predicated region
    $region9: #{cnn_forward.4} parent=5 // pred_check
      _
    $region10: #{cnn_forward.4} parent=5 // pred_check_branch
      %306 = sbr.rel (%p303) target = $region12
    $region11: #{cnn_forward.4} parent=5 // pred_region
      %s307 = ssub.s32 %s17, 1
      // Predicated region
      $region13: #{cnn_forward.4} parent=11 // pred_check
        %p308 = pneg %p55
      $region14: #{cnn_forward.4} parent=11 // pred_check_branch
        %310 = sbr.rel (%p308) target = $region16
      $region15: #{cnn_forward.4} parent=11 // pred_region
        %s311 = smul.u32 4, %s27
        %p312 = scmp.lt.s32.totalorder %s311, 3
        %s313 = scalar_select %p312, %s311, 3
        %s314 = smul.addr %s313, 2
        %s315 = smul.addr %s314, 4
        %s316 = scalar_lea.vmem %s0, %s315
        %s317 = smul.u32 4, %s27
      $region16: #{cnn_forward.4} parent=11 // pred_fallthru
        _
      // Predicated region
      $region17: #{cnn_forward.4} parent=11 // pred_check
        %p318 = pneg %p76
      $region18: #{cnn_forward.4} parent=11 // pred_check_branch
        %320 = sbr.rel (%p318) target = $region20
      $region19: #{cnn_forward.4} parent=11 // pred_region
        _
      $region20: #{cnn_forward.4} parent=11 // pred_fallthru
        _
      // Predicated region
      $region21: #{cnn_forward.4} parent=11 // pred_check
        %p321 = pneg %p97
      $region22: #{cnn_forward.4} parent=11 // pred_check_branch
        %323 = sbr.rel (%p321) target = $region24
      $region23: #{cnn_forward.4} parent=11 // pred_region
        _
      $region24: #{cnn_forward.4} parent=11 // pred_fallthru
        _
      // Predicated region
      $region25: #{cnn_forward.4} parent=11 // pred_check
        %p324 = pneg %p118
      $region26: #{cnn_forward.4} parent=11 // pred_check_branch
        %326 = sbr.rel (%p324) target = $region28
      $region27: #{cnn_forward.4} parent=11 // pred_region
        _
      $region28: #{cnn_forward.4} parent=11 // pred_fallthru
        _
      // Predicated region
      $region29: #{cnn_forward.4} parent=11 // pred_check
        %p327 = pneg %p139
      $region30: #{cnn_forward.4} parent=11 // pred_check_branch
        %329 = sbr.rel (%p327) target = $region32
      $region31: #{cnn_forward.4} parent=11 // pred_region
        _
      $region32: #{cnn_forward.4} parent=11 // pred_fallthru
        _
      // Predicated region
      $region33: #{cnn_forward.4} parent=11 // pred_check
        %p330 = pneg %p160
      $region34: #{cnn_forward.4} parent=11 // pred_check_branch
        %332 = sbr.rel (%p330) target = $region36
      $region35: #{cnn_forward.4} parent=11 // pred_region
        _
      $region36: #{cnn_forward.4} parent=11 // pred_fallthru
        _
      // Predicated region
      $region37: #{cnn_forward.4} parent=11 // pred_check
        %p333 = pneg %p181
      $region38: #{cnn_forward.4} parent=11 // pred_check_branch
        %335 = sbr.rel (%p333) target = $region40
      $region39: #{cnn_forward.4} parent=11 // pred_region
        _
      $region40: #{cnn_forward.4} parent=11 // pred_fallthru
        _
      // Predicated region
      $region41: #{cnn_forward.4} parent=11 // pred_check
        %p336 = pneg %p202
      $region42: #{cnn_forward.4} parent=11 // pred_check_branch
        %338 = sbr.rel (%p336) target = $region44
      $region43: #{cnn_forward.4} parent=11 // pred_region
        _
      $region44: #{cnn_forward.4} parent=11 // pred_fallthru
        _
      // Predicated region
      $region45: #{cnn_forward.4} parent=11 // pred_check
        %p339 = pneg %p223
      $region46: #{cnn_forward.4} parent=11 // pred_check_branch
        %341 = sbr.rel (%p339) target = $region48
      $region47: #{cnn_forward.4} parent=11 // pred_region
        _
      $region48: #{cnn_forward.4} parent=11 // pred_fallthru
        _
      // Predicated region
      $region49: #{cnn_forward.4} parent=11 // pred_check
        %p342 = pneg %p244
      $region50: #{cnn_forward.4} parent=11 // pred_check_branch
        %344 = sbr.rel (%p342) target = $region52
      $region51: #{cnn_forward.4} parent=11 // pred_region
        _
      $region52: #{cnn_forward.4} parent=11 // pred_fallthru
        _
      // Predicated region
      $region53: #{cnn_forward.4} parent=11 // pred_check
        %p345 = pneg %p265
      $region54: #{cnn_forward.4} parent=11 // pred_check_branch
        %347 = sbr.rel (%p345) target = $region56
      $region55: #{cnn_forward.4} parent=11 // pred_region
        _
      $region56: #{cnn_forward.4} parent=11 // pred_fallthru
        _
    $region12: #{cnn_forward.4} parent=5 // pred_fallthru
      _
    %p348 = scmp.lt.s32.totalorder %s17, 2
    // Predicated region
    $region57: #{cnn_forward.4} parent=5 // pred_check
      %p349 = pneg %p348
    $region58: #{cnn_forward.4} parent=5 // pred_check_branch
      %351 = sbr.rel (%p349) target = $region60
    $region59: #{cnn_forward.4} parent=5 // pred_region
      _
    $region60: #{cnn_forward.4} parent=5 // pred_fallthru
      _
    %p352 = scmp.le.s32.totalorder 1, %s17
    %p353 = scmp.lt.s32.totalorder %s17, 3
    %p354 = pnand %p352, %p353
    %p355 = pneg %p354
    // Predicated region
    $region61: #{cnn_forward.4} parent=5 // pred_check
      _
    $region62: #{cnn_forward.4} parent=5 // pred_check_branch
      %357 = sbr.rel (%p354) target = $region64
    $region63: #{cnn_forward.4} parent=5 // pred_region
      %s358 = ssub.s32 %s17, 1
      %s359 = smul.u32 4, %s27
      %p360 = scmp.lt.s32.totalorder %s359, 3
      %s361 = scalar_select %p360, %s359, 3
      %s362 = smul.addr %s361, 2
      %s363 = smul.addr %s362, 4
      %s364 = scalar_lea.vmem %s0, %s363
      %p365 = pneg %p55
      %p366 = pneg %p52
      %p367 = pneg %p76
      %p368 = pneg %p73
      %p369 = pneg %p97
      %p370 = pneg %p94
      %p371 = pneg %p118
      %p372 = pneg %p115
      %p373 = pneg %p139
      %p374 = pneg %p136
      %p375 = pneg %p160
      %p376 = pneg %p157
      %p377 = pneg %p181
      %p378 = pneg %p178
      %p379 = pneg %p202
      %p380 = pneg %p199
      %p381 = pneg %p223
      %p382 = pneg %p220
      %p383 = pneg %p244
      %p384 = pneg %p241
      %p385 = pneg %p265
      %p386 = pneg %p262
      %p387 = pneg %p293
      %p388 = pneg %p290
      %s389 = smul.u32 %s26, %s27
      %s390 = smul.u32 2, %s389
      %p391 = scmp.lt.s32.totalorder %s390, 1
      %s392 = scalar_select %p391, %s390, 1
      %s393 = smul.addr %s392, 4
      %s394 = scalar_lea.vmem %s11, %s393
      %s395 = smul.u32 4, %s27
      %p396 = scmp.lt.s32.totalorder %s395, 3
      %s397 = scalar_select %p396, %s395, 3
      %s398 = smul.addr %s397, 2
      %s399 = smul.addr %s398, 4
      %s400 = scalar_lea.vmem %s0, %s399
      %s401 = smul.u32 4, %s27
      %s402 = smul.u32 %s26, %s27
      %s403 = smul.u32 2, %s402
      %p404 = scmp.lt.s32.totalorder %s403, 1
      %s405 = scalar_select %p404, %s403, 1
      %s406 = smul.addr %s405, 4
      %s407 = scalar_lea.vmem %s11, %s406
      %s408 = smul.u32 %s26, %s27
      %s409 = smul.u32 2, %s408
      %v411 = vld [vmem:[%s400] sm:$0xff]
      %v412 = vld [vmem:[%s400 + $0x8] sm:$0xff]
      %v413 = vld [vmem:[%s400 + $0x10] sm:$0xff]
      %v414 = vld [vmem:[%s400 + $0x18] sm:$0x11]
      %v418 = vunpack.c.l.b16 %v411
      %v419 = vunpack.c.h.b16 %v411
      %v420 = vunpack.c.l.b16 %v412
      %v421 = vunpack.c.h.b16 %v412
      %v422 = vunpack.c.l.b16 %v413
      %v423 = vunpack.c.h.b16 %v413
      %v424 = vpack.c.b16 %v420, %v418
      %v425 = vpack.c.b16 %v421, %v419
      %v426 = vpack.c.b16 %v422, %v422
      %v427 = vpack.c.b16 %v423, %v423
      %v431 = vunpack.c.l.b16 %v414
      %v432 = vunpack.c.h.b16 %v414
      %v433 = vpack.c.b16 %v431, %v422
      %v434 = vpack.c.b16 %v432, %v423
      %vm435 = vsmask.f32 7424
      %v437 = vshrl.u32 %v424, 16
      %v439 = vshll.u32 %v424, 16
      %v441 = vrot.slane %v439, 1
      %v442 = vor.u32 %v437, %v441
      %v444 = vshll.u32 %v433, 16
      %v446 = vrot.slane %v444, 1
      %v447 = vsel %vm435, %v442, %v446
      %v449 = vshrl.u32 %v425, 16
      %v451 = vshll.u32 %v425, 16
      %v453 = vrot.slane %v451, 1
      %v454 = vor.u32 %v449, %v453
      %v456 = vshll.u32 %v434, 16
      %v458 = vrot.slane %v456, 1
      %v459 = vsel %vm435, %v454, %v458
      %v460 = vshrl.u32 %v433, 16
      %v462 = vor.u32 %v460, %v446
      %v463 = vshrl.u32 %v434, 16
      %v465 = vor.u32 %v463, %v458
      %466 = vrot.lane.b32.xlu0 %v447, 80
      %v467 = vpop.permute.xlu0 %466
      %468 = vrot.lane.b32.xlu0 %v459, 80
      %v469 = vpop.permute.xlu0 %468
      %470 = vrot.lane.b32.xlu0 %v462, 80
      %v471 = vpop.permute.xlu0 %470
      %472 = vrot.lane.b32.xlu0 %v465, 80
      %v473 = vpop.permute.xlu0 %472
      %vm474 = vcmask 654336
      %v475 = vsel %vm474, %v467, %v469
      %v476 = vsel %vm474, %v471, %v473
      %vm479 = vcmask 1046528
      %v480 = vrot.slane %v424, 1
      %v481 = vrot.slane %v433, 1
      %v482 = vsel %vm479, %v480, %v481
      %v483 = vrot.slane %v425, 1
      %v484 = vrot.slane %v434, 1
      %v485 = vsel %vm479, %v483, %v484
      %486 = vrot.lane.b32.xlu0 %v482, 32
      %v487 = vpop.permute.xlu0 %486
      %488 = vrot.lane.b32.xlu0 %v485, 32
      %v489 = vpop.permute.xlu0 %488
      %490 = vrot.lane.b32.xlu0 %v481, 32
      %v491 = vpop.permute.xlu0 %490
      %492 = vrot.lane.b32.xlu0 %v484, 32
      %v493 = vpop.permute.xlu0 %492
      %vm494 = vcmask 261120
      %v495 = vsel %vm494, %v487, %v489
      %v496 = vsel %vm494, %v491, %v493
      %vm497 = vcmask 654336
      %v499 = vsel %vm497, %v425, %v467
      %v503 = vsel %vm497, %v427, %v471
      %vm505 = vcmask 261120
      %v508 = vsel %vm505, %v469, %v487
      %v512 = vsel %vm505, %v473, %v491
      %v514 = vld [vmem:[%s1] sm:$0xff]
      %v515 = vld [vmem:[%s1 + $0x8] sm:$0xff]
      %v516 = vld [vmem:[%s1 + $0x10] sm:$0xff]
      %v517 = vld [vmem:[%s1 + $0x18] sm:$0xff]
      %v518 = vld [vmem:[%s1 + $0x20] sm:$0xff]
      %v519 = vld [vmem:[%s1 + $0x28] sm:$0xff]
      %v520 = vld [vmem:[%s1 + $0x30] sm:$0xff]
      %v521 = vld [vmem:[%s1 + $0x38] sm:$0xff]
      %v522 = vld [vmem:[%s1 + $0x40] sm:$0xff]
      %v523 = vld [vmem:[%s1 + $0x48] sm:$0xff]
      %v524 = vld [vmem:[%s1 + $0x50] sm:$0xff]
      %v525 = vld [vmem:[%s1 + $0x58] sm:$0xff]
      %v526 = vld [vmem:[%s1 + $0x60] sm:$0xff]
      %v527 = vld [vmem:[%s1 + $0x68] sm:$0xff]
      %v528 = vld [vmem:[%s1 + $0x70] sm:$0xff]
      %v529 = vld [vmem:[%s1 + $0x78] sm:$0xff]
      %v530 = vld [vmem:[%s1 + $0x80] sm:$0xff]
      %v531 = vld [vmem:[%s1 + $0x88] sm:$0xff]
      %v532 = vld [vmem:[%s1 + $0x90] sm:$0xff]
      %v533 = vld [vmem:[%s1 + $0x98] sm:$0xff]
      %v534 = vld [vmem:[%s1 + $0xa0] sm:$0xff]
      %v535 = vld [vmem:[%s1 + $0xa8] sm:$0xff]
      %v536 = vld [vmem:[%s1 + $0xb0] sm:$0xff]
      %v537 = vld [vmem:[%s1 + $0xb8] sm:$0xff]
      %v538 = vld [vmem:[%s1 + $0xc0] sm:$0xff]
      %v539 = vld [vmem:[%s1 + $0xc8] sm:$0xff]
      %v540 = vld [vmem:[%s1 + $0xd0] sm:$0xff]
      %v541 = vld [vmem:[%s1 + $0xd8] sm:$0xff]
      %v542 = vld [vmem:[%s1 + $0xe0] sm:$0xff]
      %v543 = vld [vmem:[%s1 + $0xe8] sm:$0xff]
      %v544 = vld [vmem:[%s1 + $0xf0] sm:$0xff]
      %v545 = vld [vmem:[%s1 + $0xf8] sm:$0xff]
      %v546 = vld [vmem:[%s1 + $0x100] sm:$0xff]
      %v547 = vld [vmem:[%s1 + $0x108] sm:$0xff]
      %v548 = vld [vmem:[%s1 + $0x110] sm:$0xff]
      %v549 = vld [vmem:[%s1 + $0x118] sm:$0xff]
      %v550 = vld [vmem:[%s1 + $0x120] sm:$0xff]
      %v551 = vld [vmem:[%s1 + $0x128] sm:$0xff]
      %v552 = vld [vmem:[%s1 + $0x130] sm:$0xff]
      %v553 = vld [vmem:[%s1 + $0x138] sm:$0xff]
      %v554 = vld [vmem:[%s1 + $0x140] sm:$0xff]
      %v555 = vld [vmem:[%s1 + $0x148] sm:$0xff]
      %v556 = vld [vmem:[%s1 + $0x150] sm:$0xff]
      %v557 = vld [vmem:[%s1 + $0x158] sm:$0xff]
      %v558 = vld [vmem:[%s1 + $0x160] sm:$0xff]
      %v559 = vld [vmem:[%s1 + $0x168] sm:$0xff]
      %v560 = vld [vmem:[%s1 + $0x170] sm:$0xff]
      %v561 = vld [vmem:[%s1 + $0x178] sm:$0xff]
      %v562 = vld [vmem:[%s1 + $0x180] sm:$0xff]
      %v563 = vld [vmem:[%s1 + $0x188] sm:$0xff]
      %v564 = vld [vmem:[%s1 + $0x190] sm:$0xff]
      %v565 = vld [vmem:[%s1 + $0x198] sm:$0xff]
      %v566 = vld [vmem:[%s1 + $0x1a0] sm:$0xff]
      %v567 = vld [vmem:[%s1 + $0x1a8] sm:$0xff]
      %v568 = vld [vmem:[%s1 + $0x1b0] sm:$0xff]
      %v569 = vld [vmem:[%s1 + $0x1b8] sm:$0xff]
      %v570 = vld [vmem:[%s1 + $0x1c0] sm:$0xff]
      %v571 = vld [vmem:[%s1 + $0x1c8] sm:$0xff]
      %v572 = vld [vmem:[%s1 + $0x1d0] sm:$0xff]
      %v573 = vld [vmem:[%s1 + $0x1d8] sm:$0xff]
      %v574 = vld [vmem:[%s1 + $0x1e0] sm:$0xff]
      %v575 = vld [vmem:[%s1 + $0x1e8] sm:$0xff]
      %v576 = vld [vmem:[%s1 + $0x1f0] sm:$0xff]
      %v577 = vld [vmem:[%s1 + $0x1f8] sm:$0xff]
      %v578 = vld [vmem:[%s1 + $0x200] sm:$0xff]
      %v579 = vld [vmem:[%s1 + $0x208] sm:$0xff]
      %v580 = vld [vmem:[%s1 + $0x210] sm:$0xff]
      %v581 = vld [vmem:[%s1 + $0x218] sm:$0xff]
      %v582 = vld [vmem:[%s1 + $0x220] sm:$0xff]
      %v583 = vld [vmem:[%s1 + $0x228] sm:$0xff]
      %v584 = vld [vmem:[%s1 + $0x230] sm:$0xff]
      %v585 = vld [vmem:[%s1 + $0x238] sm:$0xff]
      %v586 = vld [vmem:[%s1 + $0x240] sm:$0xff]
      %v587 = vld [vmem:[%s1 + $0x248] sm:$0xff]
      %v588 = vld [vmem:[%s1 + $0x250] sm:$0xff]
      %v589 = vld [vmem:[%s1 + $0x258] sm:$0xff]
      %v590 = vld [vmem:[%s1 + $0x260] sm:$0xff]
      %v591 = vld [vmem:[%s1 + $0x268] sm:$0xff]
      %v670 = vunpack.c.l.b16 %v514
      %v671 = vunpack.c.h.b16 %v514
      %v672 = vunpack.c.l.b16 %v515
      %v673 = vunpack.c.h.b16 %v515
      %v674 = vunpack.c.l.b16 %v516
      %v675 = vunpack.c.h.b16 %v516
      %v676 = vunpack.c.l.b16 %v517
      %v677 = vunpack.c.h.b16 %v517
      %v678 = vunpack.c.l.b16 %v518
      %v679 = vunpack.c.h.b16 %v518
      %v680 = vunpack.c.l.b16 %v519
      %v681 = vunpack.c.h.b16 %v519
      %v682 = vunpack.c.l.b16 %v520
      %v683 = vunpack.c.h.b16 %v520
      %v684 = vunpack.c.l.b16 %v521
      %v685 = vunpack.c.h.b16 %v521
      %v686 = vunpack.c.l.b16 %v522
      %v687 = vunpack.c.h.b16 %v522
      %v688 = vunpack.c.l.b16 %v523
      %v689 = vunpack.c.h.b16 %v523
      %v690 = vunpack.c.l.b16 %v524
      %v691 = vunpack.c.h.b16 %v524
      %v692 = vunpack.c.l.b16 %v525
      %v693 = vunpack.c.h.b16 %v525
      %v694 = vunpack.c.l.b16 %v526
      %v695 = vunpack.c.h.b16 %v526
      %v696 = vunpack.c.l.b16 %v527
      %v697 = vunpack.c.h.b16 %v527
      %v698 = vunpack.c.l.b16 %v528
      %v699 = vunpack.c.h.b16 %v528
      %v700 = vunpack.c.l.b16 %v529
      %v701 = vunpack.c.h.b16 %v529
      %v702 = vunpack.c.l.b16 %v530
      %v703 = vunpack.c.h.b16 %v530
      %v704 = vunpack.c.l.b16 %v531
      %v705 = vunpack.c.h.b16 %v531
      %v706 = vunpack.c.l.b16 %v532
      %v707 = vunpack.c.h.b16 %v532
      %v708 = vunpack.c.l.b16 %v533
      %v709 = vunpack.c.h.b16 %v533
      %v710 = vunpack.c.l.b16 %v534
      %v711 = vunpack.c.h.b16 %v534
      %v712 = vunpack.c.l.b16 %v535
      %v713 = vunpack.c.h.b16 %v535
      %v714 = vunpack.c.l.b16 %v536
      %v715 = vunpack.c.h.b16 %v536
      %v716 = vunpack.c.l.b16 %v537
      %v717 = vunpack.c.h.b16 %v537
      %v718 = vunpack.c.l.b16 %v538
      %v719 = vunpack.c.h.b16 %v538
      %v720 = vunpack.c.l.b16 %v539
      %v721 = vunpack.c.h.b16 %v539
      %v722 = vunpack.c.l.b16 %v540
      %v723 = vunpack.c.h.b16 %v540
      %v724 = vunpack.c.l.b16 %v541
      %v725 = vunpack.c.h.b16 %v541
      %v726 = vunpack.c.l.b16 %v542
      %v727 = vunpack.c.h.b16 %v542
      %v728 = vunpack.c.l.b16 %v543
      %v729 = vunpack.c.h.b16 %v543
      %v730 = vunpack.c.l.b16 %v544
      %v731 = vunpack.c.h.b16 %v544
      %v732 = vunpack.c.l.b16 %v545
      %v733 = vunpack.c.h.b16 %v545
      %v734 = vunpack.c.l.b16 %v546
      %v735 = vunpack.c.h.b16 %v546
      %v736 = vunpack.c.l.b16 %v547
      %v737 = vunpack.c.h.b16 %v547
      %v738 = vunpack.c.l.b16 %v548
      %v739 = vunpack.c.h.b16 %v548
      %v740 = vunpack.c.l.b16 %v549
      %v741 = vunpack.c.h.b16 %v549
      %v742 = vunpack.c.l.b16 %v550
      %v743 = vunpack.c.h.b16 %v550
      %v744 = vunpack.c.l.b16 %v551
      %v745 = vunpack.c.h.b16 %v551
      %v746 = vunpack.c.l.b16 %v552
      %v747 = vunpack.c.h.b16 %v552
      %v748 = vunpack.c.l.b16 %v553
      %v749 = vunpack.c.h.b16 %v553
      %v750 = vunpack.c.l.b16 %v554
      %v751 = vunpack.c.h.b16 %v554
      %v752 = vunpack.c.l.b16 %v555
      %v753 = vunpack.c.h.b16 %v555
      %v754 = vunpack.c.l.b16 %v556
      %v755 = vunpack.c.h.b16 %v556
      %v756 = vunpack.c.l.b16 %v557
      %v757 = vunpack.c.h.b16 %v557
      %v758 = vunpack.c.l.b16 %v558
      %v759 = vunpack.c.h.b16 %v558
      %v760 = vunpack.c.l.b16 %v559
      %v761 = vunpack.c.h.b16 %v559
      %v762 = vunpack.c.l.b16 %v560
      %v763 = vunpack.c.h.b16 %v560
      %v764 = vunpack.c.l.b16 %v561
      %v765 = vunpack.c.h.b16 %v561
      %v766 = vunpack.c.l.b16 %v562
      %v767 = vunpack.c.h.b16 %v562
      %v768 = vunpack.c.l.b16 %v563
      %v769 = vunpack.c.h.b16 %v563
      %v770 = vunpack.c.l.b16 %v564
      %v771 = vunpack.c.h.b16 %v564
      %v772 = vunpack.c.l.b16 %v565
      %v773 = vunpack.c.h.b16 %v565
      %v774 = vunpack.c.l.b16 %v566
      %v775 = vunpack.c.h.b16 %v566
      %v776 = vunpack.c.l.b16 %v567
      %v777 = vunpack.c.h.b16 %v567
      %v778 = vunpack.c.l.b16 %v568
      %v779 = vunpack.c.h.b16 %v568
      %v780 = vunpack.c.l.b16 %v569
      %v781 = vunpack.c.h.b16 %v569
      %v782 = vunpack.c.l.b16 %v570
      %v783 = vunpack.c.h.b16 %v570
      %v784 = vunpack.c.l.b16 %v571
      %v785 = vunpack.c.h.b16 %v571
      %v786 = vunpack.c.l.b16 %v572
      %v787 = vunpack.c.h.b16 %v572
      %v788 = vunpack.c.l.b16 %v573
      %v789 = vunpack.c.h.b16 %v573
      %v790 = vunpack.c.l.b16 %v574
      %v791 = vunpack.c.h.b16 %v574
      %v792 = vunpack.c.l.b16 %v575
      %v793 = vunpack.c.h.b16 %v575
      %v794 = vunpack.c.l.b16 %v576
      %v795 = vunpack.c.h.b16 %v576
      %v796 = vunpack.c.l.b16 %v577
      %v797 = vunpack.c.h.b16 %v577
      %v798 = vunpack.c.l.b16 %v578
      %v799 = vunpack.c.h.b16 %v578
      %v800 = vunpack.c.l.b16 %v579
      %v801 = vunpack.c.h.b16 %v579
      %v802 = vunpack.c.l.b16 %v580
      %v803 = vunpack.c.h.b16 %v580
      %v804 = vunpack.c.l.b16 %v581
      %v805 = vunpack.c.h.b16 %v581
      %v806 = vunpack.c.l.b16 %v582
      %v807 = vunpack.c.h.b16 %v582
      %v808 = vunpack.c.l.b16 %v583
      %v809 = vunpack.c.h.b16 %v583
      %v810 = vunpack.c.l.b16 %v584
      %v811 = vunpack.c.h.b16 %v584
      %v812 = vunpack.c.l.b16 %v585
      %v813 = vunpack.c.h.b16 %v585
      %v814 = vunpack.c.l.b16 %v586
      %v815 = vunpack.c.h.b16 %v586
      %v816 = vunpack.c.l.b16 %v587
      %v817 = vunpack.c.h.b16 %v587
      %v818 = vunpack.c.l.b16 %v588
      %v819 = vunpack.c.h.b16 %v588
      %v820 = vunpack.c.l.b16 %v589
      %v821 = vunpack.c.h.b16 %v589
      %v822 = vunpack.c.l.b16 %v590
      %v823 = vunpack.c.h.b16 %v590
      %v824 = vunpack.c.l.b16 %v591
      %v825 = vunpack.c.h.b16 %v591
      %v826 = vpack.c.b16 %v672, %v670
      %v827 = vpack.c.b16 %v673, %v671
      %v828 = vpack.c.b16 %v676, %v674
      %v829 = vpack.c.b16 %v677, %v675
      %v830 = vpack.c.b16 %v680, %v678
      %v831 = vpack.c.b16 %v681, %v679
      %v832 = vpack.c.b16 %v684, %v682
      %v833 = vpack.c.b16 %v685, %v683
      %v834 = vpack.c.b16 %v688, %v686
      %v835 = vpack.c.b16 %v689, %v687
      %v836 = vpack.c.b16 %v692, %v690
      %v837 = vpack.c.b16 %v693, %v691
      %v838 = vpack.c.b16 %v696, %v694
      %v839 = vpack.c.b16 %v697, %v695
      %v840 = vpack.c.b16 %v700, %v698
      %v841 = vpack.c.b16 %v701, %v699
      %v842 = vpack.c.b16 %v704, %v702
      %v843 = vpack.c.b16 %v705, %v703
      %v844 = vpack.c.b16 %v708, %v706
      %v845 = vpack.c.b16 %v709, %v707
      %v846 = vpack.c.b16 %v712, %v710
      %v847 = vpack.c.b16 %v713, %v711
      %v848 = vpack.c.b16 %v716, %v714
      %v849 = vpack.c.b16 %v717, %v715
      %v850 = vpack.c.b16 %v720, %v718
      %v851 = vpack.c.b16 %v721, %v719
      %v852 = vpack.c.b16 %v724, %v722
      %v853 = vpack.c.b16 %v725, %v723
      %v854 = vpack.c.b16 %v728, %v726
      %v855 = vpack.c.b16 %v729, %v727
      %v856 = vpack.c.b16 %v732, %v730
      %v857 = vpack.c.b16 %v733, %v731
      %v858 = vpack.c.b16 %v736, %v734
      %v859 = vpack.c.b16 %v737, %v735
      %v860 = vpack.c.b16 %v740, %v738
      %v861 = vpack.c.b16 %v741, %v739
      %v862 = vpack.c.b16 %v744, %v742
      %v863 = vpack.c.b16 %v745, %v743
      %v864 = vpack.c.b16 %v748, %v746
      %v865 = vpack.c.b16 %v749, %v747
      %v866 = vpack.c.b16 %v752, %v750
      %v867 = vpack.c.b16 %v753, %v751
      %v868 = vpack.c.b16 %v756, %v754
      %v869 = vpack.c.b16 %v757, %v755
      %v870 = vpack.c.b16 %v760, %v758
      %v871 = vpack.c.b16 %v761, %v759
      %v872 = vpack.c.b16 %v764, %v762
      %v873 = vpack.c.b16 %v765, %v763
      %v874 = vpack.c.b16 %v768, %v766
      %v875 = vpack.c.b16 %v769, %v767
      %v876 = vpack.c.b16 %v772, %v770
      %v877 = vpack.c.b16 %v773, %v771
      %v878 = vpack.c.b16 %v776, %v774
      %v879 = vpack.c.b16 %v777, %v775
      %v880 = vpack.c.b16 %v780, %v778
      %v881 = vpack.c.b16 %v781, %v779
      %v882 = vpack.c.b16 %v784, %v782
      %v883 = vpack.c.b16 %v785, %v783
      %v884 = vpack.c.b16 %v788, %v786
      %v885 = vpack.c.b16 %v789, %v787
      %v886 = vpack.c.b16 %v792, %v790
      %v887 = vpack.c.b16 %v793, %v791
      %v888 = vpack.c.b16 %v796, %v794
      %v889 = vpack.c.b16 %v797, %v795
      %v890 = vpack.c.b16 %v800, %v798
      %v891 = vpack.c.b16 %v801, %v799
      %v892 = vpack.c.b16 %v804, %v802
      %v893 = vpack.c.b16 %v805, %v803
      %v894 = vpack.c.b16 %v808, %v806
      %v895 = vpack.c.b16 %v809, %v807
      %v896 = vpack.c.b16 %v812, %v810
      %v897 = vpack.c.b16 %v813, %v811
      %v898 = vpack.c.b16 %v816, %v814
      %v899 = vpack.c.b16 %v817, %v815
      %v900 = vpack.c.b16 %v820, %v818
      %v901 = vpack.c.b16 %v821, %v819
      %v902 = vpack.c.b16 %v824, %v822
      %v903 = vpack.c.b16 %v825, %v823
      %vm982 = vcmask 916480
      %v984 = vsel %vm982, %v495, 0
      %v987 = vsel %vm982, %v496, 0
      %989 = vmatprep.subr.bf16.mxu0 %v827
      %990 = vmatpush1.bf16.msra.mxu0 %v826
      %991 = vmatprep.subr.bf16.mxu0 %v829
      %992 = vmatpush1.bf16.msra.mxu0 %v828
      %993 = vmatprep.subr.bf16.mxu0 %v831
      %994 = vmatpush1.bf16.msra.mxu0 %v830
      %995 = vmatprep.subr.bf16.mxu0 %v833
      %996 = vmatpush1.bf16.msra.mxu0 %v832
      %997 = vmatprep.subr.bf16.mxu0 %v835
      %998 = vmatpush1.bf16.msra.mxu0 %v834
      %999 = vmatprep.subr.bf16.mxu0 %v837
      %1000 = vmatpush1.bf16.msra.mxu0 %v836
      %1001 = vmatprep.subr.bf16.mxu0 %v839
      %1002 = vmatpush1.bf16.msra.mxu0 %v838
      %1003 = vmatprep.subr.bf16.mxu0 %v841
      %1004 = vmatpush1.bf16.msra.mxu0 %v840
      %1005 = vmatprep.subr.bf16.mxu0 %v843
      %1006 = vmatpush1.bf16.msra.mxu0 %v842
      %1007 = vmatprep.subr.bf16.mxu0 %v845
      %1008 = vmatpush1.bf16.msra.mxu0 %v844
      %1009 = vmatprep.subr.bf16.mxu0 %v847
      %1010 = vmatpush1.bf16.msra.mxu0 %v846
      %1011 = vmatprep.subr.bf16.mxu0 %v849
      %1012 = vmatpush1.bf16.msra.mxu0 %v848
      %1013 = vmatprep.subr.bf16.mxu0 %v851
      %1014 = vmatpush1.bf16.msra.mxu0 %v850
      %1015 = vmatprep.subr.bf16.mxu0 %v853
      %1016 = vmatpush1.bf16.msra.mxu0 %v852
      %1017 = vmatprep.subr.bf16.mxu0 %v855
      %1018 = vmatpush1.bf16.msra.mxu0 %v854
      %1019 = vmatprep.subr.bf16.mxu0 %v857
      %1020 = vmatpush1.bf16.msra.mxu0 %v856
      %1021 = vmatprep.mubr.bf16.mxu0 %v499
      %1022 = vmatmul.mubr.bf16.gmra.mrb[0].mxu0 %v424
      %v1023 = vpop.f32.mrb[0].mxu0
      %v1024 = vadd.f32 0.0, %v1023
      %v1025 = vpop.f32.mrb[0].mxu0
      %v1026 = vadd.f32 0.0, %v1025
      %v1027 = vpop.f32.mrb[0].mxu0
      %v1028 = vadd.f32 0.0, %v1027
      %v1029 = vpop.f32.mrb[0].mxu0
      %v1030 = vadd.f32 0.0, %v1029
      %1031 = vmatprep.mubr.bf16.mxu0 %v503
      %1032 = vmatmul.mubr.bf16.gmra.mrb[0].mxu0 %v426
      %v1033 = vpop.f32.mrb[0].mxu0
      %v1034 = vadd.f32 0.0, %v1033
      %v1035 = vpop.f32.mrb[0].mxu0
      %v1036 = vadd.f32 0.0, %v1035
      %v1037 = vpop.f32.mrb[0].mxu0
      %v1038 = vpop.f32.mrb[0].mxu0
      %1039 = vdwg.mxu0
      %1040 = vmatprep.subr.bf16.mxu0 %v859
      %1041 = vmatpush1.bf16.msra.mxu0 %v858
      %1042 = vmatprep.subr.bf16.mxu0 %v861
      %1043 = vmatpush1.bf16.msra.mxu0 %v860
      %1044 = vmatprep.subr.bf16.mxu0 %v863
      %1045 = vmatpush1.bf16.msra.mxu0 %v862
      %1046 = vmatprep.subr.bf16.mxu0 %v865
      %1047 = vmatpush1.bf16.msra.mxu0 %v864
      %1048 = vmatprep.subr.bf16.mxu0 %v867
      %1049 = vmatpush1.bf16.msra.mxu0 %v866
      %1050 = vmatprep.subr.bf16.mxu0 %v869
      %1051 = vmatpush1.bf16.msra.mxu0 %v868
      %1052 = vmatprep.subr.bf16.mxu0 %v871
      %1053 = vmatpush1.bf16.msra.mxu0 %v870
      %1054 = vmatprep.subr.bf16.mxu0 %v873
      %1055 = vmatpush1.bf16.msra.mxu0 %v872
      %1056 = vmatprep.subr.bf16.mxu0 %v875
      %1057 = vmatpush1.bf16.msra.mxu0 %v874
      %1058 = vmatprep.subr.bf16.mxu0 %v877
      %1059 = vmatpush1.bf16.msra.mxu0 %v876
      %1060 = vmatprep.subr.bf16.mxu0 %v879
      %1061 = vmatpush1.bf16.msra.mxu0 %v878
      %1062 = vmatprep.subr.bf16.mxu0 %v881
      %1063 = vmatpush1.bf16.msra.mxu0 %v880
      %1064 = vmatprep.subr.bf16.mxu0 %v883
      %1065 = vmatpush1.bf16.msra.mxu0 %v882
      %1066 = vmatprep.subr.bf16.mxu0 %v885
      %1067 = vmatpush1.bf16.msra.mxu0 %v884
      %1068 = vmatprep.subr.bf16.mxu0 %v887
      %1069 = vmatpush1.bf16.msra.mxu0 %v886
      %1070 = vmatprep.subr.bf16.mxu0 %v889
      %1071 = vmatpush1.bf16.msra.mxu0 %v888
      %1072 = vmatprep.mubr.bf16.mxu0 %v508
      %1073 = vmatmul.mubr.bf16.gmra.mrb[0].mxu0 %v475
      %v1074 = vpop.f32.mrb[0].mxu0
      %v1075 = vadd.f32 %v1024, %v1074
      %v1076 = vpop.f32.mrb[0].mxu0
      %v1077 = vadd.f32 %v1026, %v1076
      %v1078 = vpop.f32.mrb[0].mxu0
      %v1079 = vadd.f32 %v1028, %v1078
      %v1080 = vpop.f32.mrb[0].mxu0
      %v1081 = vadd.f32 %v1030, %v1080
      %1082 = vmatprep.mubr.bf16.mxu0 %v512
      %1083 = vmatmul.mubr.bf16.gmra.mrb[0].mxu0 %v476
      %v1084 = vpop.f32.mrb[0].mxu0
      %v1085 = vadd.f32 %v1034, %v1084
      %v1086 = vpop.f32.mrb[0].mxu0
      %v1087 = vadd.f32 %v1036, %v1086
      %v1088 = vpop.f32.mrb[0].mxu0
      %v1089 = vpop.f32.mrb[0].mxu0
      %1090 = vdwg.mxu0
      %1091 = vmatprep.subr.bf16.mxu0 %v891
      %1092 = vmatpush1.bf16.msra.mxu0 %v890
      %1093 = vmatprep.subr.bf16.mxu0 %v893
      %1094 = vmatpush1.bf16.msra.mxu0 %v892
      %1095 = vmatprep.subr.bf16.mxu0 %v895
      %1096 = vmatpush1.bf16.msra.mxu0 %v894
      %1097 = vmatprep.subr.bf16.mxu0 %v897
      %1098 = vmatpush1.bf16.msra.mxu0 %v896
      %1099 = vmatprep.subr.bf16.mxu0 %v899
      %1100 = vmatpush1.bf16.msra.mxu0 %v898
      %1101 = vmatprep.subr.bf16.mxu0 %v901
      %1102 = vmatpush1.bf16.msra.mxu0 %v900
      %1103 = vmatprep.subr.bf16.mxu0 %v903
      %1104 = vmatpush1.bf16.msra.mxu0 %v902
      %1105 = vmatprep.subr.bf16.mxu0 0
      %1106 = vmatpush1.bf16.msra.mxu0 0
      %1107 = vmatprep.subr.bf16.mxu0 0
      %1108 = vmatpush1.bf16.msra.mxu0 0
      %1109 = vmatprep.subr.bf16.mxu0 0
      %1110 = vmatpush1.bf16.msra.mxu0 0
      %1111 = vmatprep.subr.bf16.mxu0 0
      %1112 = vmatpush1.bf16.msra.mxu0 0
      %1113 = vmatprep.subr.bf16.mxu0 0
      %1114 = vmatpush1.bf16.msra.mxu0 0
      %1115 = vmatprep.subr.bf16.mxu0 0
      %1116 = vmatpush1.bf16.msra.mxu0 0
      %1117 = vmatprep.subr.bf16.mxu0 0
      %1118 = vmatpush1.bf16.msra.mxu0 0
      %1119 = vmatprep.subr.bf16.mxu0 0
      %1120 = vmatpush1.bf16.msra.mxu0 0
      %1121 = vmatprep.subr.bf16.mxu0 0
      %1122 = vmatpush1.bf16.msra.mxu0 0
      %1123 = vmatprep.mubr.bf16.mxu0 0
      %1124 = vmatmul.mubr.bf16.gmra.mrb[0].mxu0 %v984
      %v1125 = vpop.f32.mrb[0].mxu0
      %v1126 = vadd.f32 %v1075, %v1125
      %v1127 = vpop.f32.mrb[0].mxu0
      %v1128 = vadd.f32 %v1077, %v1127
      %v1129 = vpop.f32.mrb[0].mxu0
      %v1130 = vadd.f32 %v1079, %v1129
      %v1131 = vpop.f32.mrb[0].mxu0
      %v1132 = vadd.f32 %v1081, %v1131
      %1133 = vmatprep.mubr.bf16.mxu0 0
      %1134 = vmatmul.mubr.bf16.gmra.mrb[0].mxu0 %v987
      %v1135 = vpop.f32.mrb[0].mxu0
      %v1136 = vadd.f32 %v1085, %v1135
      %v1137 = vpop.f32.mrb[0].mxu0
      %v1138 = vadd.f32 %v1087, %v1137
      %v1139 = vpop.f32.mrb[0].mxu0
      %v1140 = vpop.f32.mrb[0].mxu0
      %1141 = vdwg.mxu0
      %p1142 = scmp.eq.s32.totalorder %s26, 0
      %p1143 = scmp.eq.s32.totalorder %s27, 0
      %p1144 = pnand %p1142, %p1143
      %p1145 = pneg %p1144
      // Predicated region
      $region65: #{cnn_forward.4} parent=63 // pred_check
        _
      $region66: #{cnn_forward.4} parent=63 // pred_check_branch
        %1147 = sbr.rel (%p1144) target = $region68
      $region67: #{cnn_forward.4} parent=63 // pred_region
        %v1148 = vlaneseq
        %vm1149 = vcmp.ge.s32.totalorder %v1148, 0
        %vm1150 = vcmp.lt.s32.totalorder %v1148, 176
        %vm1151 = vmand %vm1149, %vm1150
        %1152 = vst.msk [vmem:[#allocation2] sm:$0x3] %vm1151, 0.0
        %1153 = vst.msk [vmem:[#allocation3] sm:$0x3] %vm1151, 0.0
      $region68: #{cnn_forward.4} parent=63 // pred_fallthru
        _
      // Predicated region
      $region69: #{cnn_forward.4} parent=63 // pred_check
        %p1154 = pneg %p1142
      $region70: #{cnn_forward.4} parent=63 // pred_check_branch
        %1156 = sbr.rel (%p1154) target = $region72
      $region71: #{cnn_forward.4} parent=63 // pred_region
        %v1157 = vld [vmem:[%s6] sm:$0xff]
        %v1158 = vld [vmem:[%s6 + $0x8] sm:$0xff]
        %v1159 = vld [vmem:[%s6 + $0x10] sm:$0xff]
        %1161 = vset.pattern.permute.xlu0 0
        %1162 = vperm.xlu0 %1161, %v1157
        %v1163 = vpop.permute.xlu0 %1162
        %1166 = vset.pattern.permute.xlu0 0
        %1167 = vperm.xlu0 %1166, %v1158
        %v1168 = vpop.permute.xlu0 %1167
        %1171 = vset.pattern.permute.xlu0 0
        %1172 = vperm.xlu0 %1171, %v1159
        %v1173 = vpop.permute.xlu0 %1172
        %v1175 = vmul.f32 %v1126, %v1163
        %v1176 = vmul.f32 %v1128, %v1163
        %v1177 = vmul.f32 %v1130, %v1168
        %v1178 = vmul.f32 %v1132, %v1168
        %v1179 = vmul.f32 %v1136, %v1173
        %v1180 = vmul.f32 %v1138, %v1173
        %v1181 = vld [vmem:[#allocation2] sm:$0x3]
        %v1182 = vadd.f32 %v1175, %v1177
        %v1183 = vadd.f32 %v1182, %v1179
        %v1184 = vrot.slane %v1183, 4
        %v1185 = vadd.f32 %v1183, %v1184
        %v1186 = vrot.slane %v1185, 2
        %v1187 = vadd.f32 %v1185, %v1186
        %v1188 = vrot.slane %v1187, 1
        %v1189 = vadd.f32 %v1187, %v1188
        %vm1190 = vcmask 392192
        %v1191 = vsel %vm1190, %v1176, 0.0
        %v1192 = vsel %vm1190, %v1178, 0.0
        %v1193 = vadd.f32 %v1191, %v1192
        %v1194 = vsel %vm1190, %v1180, 0.0
        %v1195 = vadd.f32 %v1193, %v1194
        %v1196 = vrot.slane %v1195, 4
        %v1197 = vadd.f32 %v1195, %v1196
        %v1198 = vrot.slane %v1197, 2
        %v1199 = vadd.f32 %v1197, %v1198
        %v1200 = vrot.slane %v1199, 1
        %v1201 = vadd.f32 %v1199, %v1200
        %v1204 = vcombine.low %v1189, %v1201
        %v1206 = vunpack.c.l.s4 1966171168
        %v1207 = vunpack.c.0.s8 %v1206
        %v1208 = vlaneseq
        %v1209 = vshrl.u32 %v1208, 7
        %v1210 = vsub.s32 %v1207, %v1209
        %v1211 = vrot.slane %v1204, %v1210
        %v1213 = vunpack.c.l.s4 1966171168
        %v1214 = vunpack.c.0.s8 %v1213
        %v1215 = vlaneseq
        %v1216 = vshrl.u32 %v1215, 7
        %v1217 = vsub.s32 %v1214, %v1216
        %v1218 = vrot.slane %v1211, %v1217
        %v1220 = vadd.f32 %v1181, %v1218
        %v1221 = vlaneseq
        %vm1222 = vcmp.ge.s32.totalorder %v1221, 0
        %vm1223 = vcmp.lt.s32.totalorder %v1221, 176
        %vm1224 = vmand %vm1222, %vm1223
        %1225 = vst.msk [vmem:[#allocation2] sm:$0x3] %vm1224, %v1220
        %v1226 = vld [vmem:[#allocation3] sm:$0x3]
        %v1227 = vmul.f32 %v1175, %v1126
        %v1228 = vmul.f32 %v1176, %v1128
        %v1229 = vmul.f32 %v1177, %v1130
        %v1230 = vmul.f32 %v1178, %v1132
        %v1231 = vmul.f32 %v1179, %v1136
        %v1232 = vmul.f32 %v1180, %v1138
        %v1233 = vadd.f32 %v1227, %v1229
        %v1234 = vadd.f32 %v1233, %v1231
        %v1235 = vrot.slane %v1234, 4
        %v1236 = vadd.f32 %v1234, %v1235
        %v1237 = vrot.slane %v1236, 2
        %v1238 = vadd.f32 %v1236, %v1237
        %v1239 = vrot.slane %v1238, 1
        %v1240 = vadd.f32 %v1238, %v1239
        %v1241 = vsel %vm1190, %v1228, 0.0
        %v1242 = vsel %vm1190, %v1230, 0.0
        %v1243 = vadd.f32 %v1241, %v1242
        %v1244 = vsel %vm1190, %v1232, 0.0
        %v1245 = vadd.f32 %v1243, %v1244
        %v1246 = vrot.slane %v1245, 4
        %v1247 = vadd.f32 %v1245, %v1246
        %v1248 = vrot.slane %v1247, 2
        %v1249 = vadd.f32 %v1247, %v1248
        %v1250 = vrot.slane %v1249, 1
        %v1251 = vadd.f32 %v1249, %v1250
        %v1254 = vcombine.low %v1240, %v1251
        %v1256 = vunpack.c.l.s4 1966171168
        %v1257 = vunpack.c.0.s8 %v1256
        %v1258 = vlaneseq
        %v1259 = vshrl.u32 %v1258, 7
        %v1260 = vsub.s32 %v1257, %v1259
        %v1261 = vrot.slane %v1254, %v1260
        %v1263 = vunpack.c.l.s4 1966171168
        %v1264 = vunpack.c.0.s8 %v1263
        %v1265 = vlaneseq
        %v1266 = vshrl.u32 %v1265, 7
        %v1267 = vsub.s32 %v1264, %v1266
        %v1268 = vrot.slane %v1261, %v1267
        %v1270 = vadd.f32 %v1226, %v1268
        %1271 = vst.msk [vmem:[#allocation3] sm:$0x3] %vm1224, %v1270
      $region72: #{cnn_forward.4} parent=63 // pred_fallthru
        _
      %p1272 = scmp.eq.s32.totalorder %s26, 1
      %p1273 = pnand %p1272, %p1143
      %p1274 = pneg %p1273
      // Predicated region
      $region73: #{cnn_forward.4} parent=63 // pred_check
        _
      $region74: #{cnn_forward.4} parent=63 // pred_check_branch
        %1276 = sbr.rel (%p1273) target = $region76
      $region75: #{cnn_forward.4} parent=63 // pred_region
        %v1277 = vld [vmem:[#allocation2] sm:$0x3]
        %v1278 = vld [vmem:[%s2] sm:$0xff]
        %v1279 = vld [vmem:[%s2 + $0x8] sm:$0xff]
        %v1280 = vld [vmem:[%s2 + $0x10] sm:$0xff]
        %v1281 = vld [vmem:[%s2 + $0x18] sm:$0xff]
        %v1282 = vld [vmem:[%s2 + $0x20] sm:$0xff]
        %v1283 = vld [vmem:[%s2 + $0x28] sm:$0xff]
        %v1284 = vld [vmem:[%s2 + $0x30] sm:$0xff]
        %v1285 = vld [vmem:[%s2 + $0x38] sm:$0xff]
        %v1286 = vld [vmem:[%s2 + $0x40] sm:$0xff]
        %v1287 = vld [vmem:[%s2 + $0x48] sm:$0xff]
        %v1288 = vld [vmem:[%s2 + $0x50] sm:$0xff]
        %v1289 = vld [vmem:[%s2 + $0x58] sm:$0xff]
        %v1290 = vld [vmem:[%s2 + $0x60] sm:$0xff]
        %v1291 = vld [vmem:[%s2 + $0x68] sm:$0xff]
        %v1292 = vld [vmem:[%s2 + $0x70] sm:$0xff]
        %v1293 = vld [vmem:[%s2 + $0x78] sm:$0xff]
        %v1294 = vld [vmem:[%s2 + $0x80] sm:$0xff]
        %v1295 = vld [vmem:[%s2 + $0x88] sm:$0xff]
        %v1296 = vld [vmem:[%s2 + $0x90] sm:$0xff]
        %v1297 = vld [vmem:[%s2 + $0x98] sm:$0xff]
        %v1298 = vld [vmem:[%s2 + $0xa0] sm:$0xff]
        %v1299 = vld [vmem:[%s2 + $0xa8] sm:$0xff]
        %v1301 = vlaneseq
        %v1302 = vshrl.u32 %v1301, 7
        %v1303 = vsub.s32 0, %v1302
        %v1304 = vrot.slane %v1277, %v1303
        %v1305 = vlaneseq
        %v1306 = vshrl.u32 %v1305, 7
        %v1307 = vsub.s32 1, %v1306
        %v1308 = vrot.slane %v1277, %v1307
        %vm1310 = vcmask 392192
        %v1311 = vsel %vm1310, %v1308, 0
        %1313 = vmatprep.subr.mxu0 0.0
        %1314 = vmatpush1.msra.mxu0 %v1278
        %1315 = vmatprep.subr.mxu0 0.0
        %1316 = vmatpush1.msra.mxu0 %v1279
        %1317 = vmatprep.subr.mxu0 0.0
        %1318 = vmatpush1.msra.mxu0 %v1280
        %1319 = vmatprep.subr.mxu0 0.0
        %1320 = vmatpush1.msra.mxu0 %v1281
        %1321 = vmatprep.subr.mxu0 0.0
        %1322 = vmatpush1.msra.mxu0 %v1282
        %1323 = vmatprep.subr.mxu0 0.0
        %1324 = vmatpush1.msra.mxu0 %v1283
        %1325 = vmatprep.subr.mxu0 0.0
        %1326 = vmatpush1.msra.mxu0 %v1284
        %1327 = vmatprep.subr.mxu0 0.0
        %1328 = vmatpush1.msra.mxu0 %v1285
        %1329 = vmatprep.subr.mxu0 0.0
        %1330 = vmatpush1.msra.mxu0 %v1286
        %1331 = vmatprep.subr.mxu0 0.0
        %1332 = vmatpush1.msra.mxu0 %v1287
        %1333 = vmatprep.subr.mxu0 0.0
        %1334 = vmatpush1.msra.mxu0 %v1288
        %1335 = vmatprep.subr.mxu0 0.0
        %1336 = vmatpush1.msra.mxu0 %v1289
        %1337 = vmatprep.subr.mxu0 0.0
        %1338 = vmatpush1.msra.mxu0 %v1290
        %1339 = vmatprep.subr.mxu0 0.0
        %1340 = vmatpush1.msra.mxu0 %v1291
        %1341 = vmatprep.subr.mxu0 0.0
        %1342 = vmatpush1.msra.mxu0 %v1292
        %1343 = vmatprep.subr.mxu0 0.0
        %1344 = vmatpush1.msra.mxu0 %v1293
        %1345 = vmatprep.subr.mxu0 0.0
        %1346 = vmatpush1.msra.mxu0 %v1294
        %1347 = vmatprep.subr.mxu0 0.0
        %1348 = vmatpush1.msra.mxu0 %v1295
        %1349 = vmatprep.subr.mxu0 0.0
        %1350 = vmatpush1.msra.mxu0 %v1296
        %1351 = vmatprep.subr.mxu0 0.0
        %1352 = vmatpush1.msra.mxu0 %v1297
        %1353 = vmatprep.subr.mxu0 0.0
        %1354 = vmatpush1.msra.mxu0 %v1298
        %1355 = vmatprep.subr.mxu0 0.0
        %1356 = vmatpush1.msra.mxu0 %v1299
        %1357 = vmatprep.subr.mxu0 0.0
        %1358 = vmatpush1.msra.mxu0 0.0
        %1359 = vmatprep.subr.mxu0 0.0
        %1360 = vmatpush1.msra.mxu0 0.0
        %1361 = vmatprep.subr.mxu0 0.0
        %1362 = vmatpush1.msra.mxu0 0.0
        %1363 = vmatprep.subr.mxu0 0.0
        %1364 = vmatpush1.msra.mxu0 0.0
        %1365 = vmatprep.subr.mxu0 0.0
        %1366 = vmatpush1.msra.mxu0 0.0
        %1367 = vmatprep.subr.mxu0 0.0
        %1368 = vmatpush1.msra.mxu0 0.0
        %1369 = vmatprep.subr.mxu0 0.0
        %1370 = vmatpush1.msra.mxu0 0.0
        %1371 = vmatprep.subr.mxu0 0.0
        %1372 = vmatpush1.msra.mxu0 0.0
        %1373 = vmatprep.subr.mxu0 0.0
        %1374 = vmatpush1.msra.mxu0 0.0
        %1375 = vmatprep.subr.mxu0 0.0
        %1376 = vmatpush1.msra.mxu0 0.0
        %1377 = vmatprep.mubr.f32.mxu0 %v1311
        %1378 = vmatmul.mubr.f32.gmra.mrb[0].mxu0 %v1304
        %v1379 = vpop.f32.mrb[0].mxu0
        %v1380 = vadd.f32 0.0, %v1379
        %v1381 = vpop.f32.mrb[0].mxu0
        %1382 = vdwg.mxu0
        %v1383 = vld [vmem:[#allocation3] sm:$0x3]
        %v1385 = vlaneseq
        %v1386 = vshrl.u32 %v1385, 7
        %v1387 = vsub.s32 0, %v1386
        %v1388 = vrot.slane %v1383, %v1387
        %v1389 = vlaneseq
        %v1390 = vshrl.u32 %v1389, 7
        %v1391 = vsub.s32 1, %v1390
        %v1392 = vrot.slane %v1383, %v1391
        %v1394 = vsel %vm1310, %v1392, 0
        %1396 = vmatprep.subr.mxu0 0.0
        %1397 = vmatpush1.msra.mxu0 %v1278
        %1398 = vmatprep.subr.mxu0 0.0
        %1399 = vmatpush1.msra.mxu0 %v1279
        %1400 = vmatprep.subr.mxu0 0.0
        %1401 = vmatpush1.msra.mxu0 %v1280
        %1402 = vmatprep.subr.mxu0 0.0
        %1403 = vmatpush1.msra.mxu0 %v1281
        %1404 = vmatprep.subr.mxu0 0.0
        %1405 = vmatpush1.msra.mxu0 %v1282
        %1406 = vmatprep.subr.mxu0 0.0
        %1407 = vmatpush1.msra.mxu0 %v1283
        %1408 = vmatprep.subr.mxu0 0.0
        %1409 = vmatpush1.msra.mxu0 %v1284
        %1410 = vmatprep.subr.mxu0 0.0
        %1411 = vmatpush1.msra.mxu0 %v1285
        %1412 = vmatprep.subr.mxu0 0.0
        %1413 = vmatpush1.msra.mxu0 %v1286
        %1414 = vmatprep.subr.mxu0 0.0
        %1415 = vmatpush1.msra.mxu0 %v1287
        %1416 = vmatprep.subr.mxu0 0.0
        %1417 = vmatpush1.msra.mxu0 %v1288
        %1418 = vmatprep.subr.mxu0 0.0
        %1419 = vmatpush1.msra.mxu0 %v1289
        %1420 = vmatprep.subr.mxu0 0.0
        %1421 = vmatpush1.msra.mxu0 %v1290
        %1422 = vmatprep.subr.mxu0 0.0
        %1423 = vmatpush1.msra.mxu0 %v1291
        %1424 = vmatprep.subr.mxu0 0.0
        %1425 = vmatpush1.msra.mxu0 %v1292
        %1426 = vmatprep.subr.mxu0 0.0
        %1427 = vmatpush1.msra.mxu0 %v1293
        %1428 = vmatprep.subr.mxu0 0.0
        %1429 = vmatpush1.msra.mxu0 %v1294
        %1430 = vmatprep.subr.mxu0 0.0
        %1431 = vmatpush1.msra.mxu0 %v1295
        %1432 = vmatprep.subr.mxu0 0.0
        %1433 = vmatpush1.msra.mxu0 %v1296
        %1434 = vmatprep.subr.mxu0 0.0
        %1435 = vmatpush1.msra.mxu0 %v1297
        %1436 = vmatprep.subr.mxu0 0.0
        %1437 = vmatpush1.msra.mxu0 %v1298
        %1438 = vmatprep.subr.mxu0 0.0
        %1439 = vmatpush1.msra.mxu0 %v1299
        %1440 = vmatprep.subr.mxu0 0.0
        %1441 = vmatpush1.msra.mxu0 0.0
        %1442 = vmatprep.subr.mxu0 0.0
        %1443 = vmatpush1.msra.mxu0 0.0
        %1444 = vmatprep.subr.mxu0 0.0
        %1445 = vmatpush1.msra.mxu0 0.0
        %1446 = vmatprep.subr.mxu0 0.0
        %1447 = vmatpush1.msra.mxu0 0.0
        %1448 = vmatprep.subr.mxu0 0.0
        %1449 = vmatpush1.msra.mxu0 0.0
        %1450 = vmatprep.subr.mxu0 0.0
        %1451 = vmatpush1.msra.mxu0 0.0
        %1452 = vmatprep.subr.mxu0 0.0
        %1453 = vmatpush1.msra.mxu0 0.0
        %1454 = vmatprep.subr.mxu0 0.0
        %1455 = vmatpush1.msra.mxu0 0.0
        %1456 = vmatprep.subr.mxu0 0.0
        %1457 = vmatpush1.msra.mxu0 0.0
        %1458 = vmatprep.subr.mxu0 0.0
        %1459 = vmatpush1.msra.mxu0 0.0
        %1460 = vmatprep.mubr.f32.mxu0 %v1394
        %1461 = vmatmul.mubr.f32.gmra.mrb[0].mxu0 %v1388
        %v1462 = vpop.f32.mrb[0].mxu0
        %v1463 = vadd.f32 0.0, %v1462
        %v1464 = vpop.f32.mrb[0].mxu0
        %1465 = vdwg.mxu0
        %v1466 = vmul.f32 %v1380, 0.004132231
        %v1467 = vmul.f32 %v1463, 0.004132231
        %v1468 = vmul.f32 %v1466, %v1466
        %v1469 = vsub.f32 %v1467, %v1468
        %v1470 = vld [vmem:[%s4] sm:$0x1]
        %v1471 = vadd.f32 %v1469, 1e-05
        %v1472 = vrsqrt.pop %v1471
        %v1473 = vmul.f32 %v1470, %v1472
        %v1474 = vld [vmem:[%s5] sm:$0x1]
        %v1475 = vmul.f32 %v1466, %v1473
        %v1476 = vsub.f32 %v1474, %v1475
        %v1477 = vld [vmem:[%s3] sm:$0xff]
        %v1478 = vld [vmem:[%s3 + $0x8] sm:$0xff]
        %v1479 = vld [vmem:[%s3 + $0x10] sm:$0xff]
        %v1480 = vld [vmem:[%s3 + $0x18] sm:$0xff]
        %vm1481 = vcmask 130048
        %v1483 = vsel %vm1481, %v1473, 0
        %1485 = vmatprep.subr.mxu0 %v1478
        %1486 = vmatpush1.msra.mxu0 %v1477
        %1487 = vmatprep.subr.mxu0 %v1480
        %1488 = vmatpush1.msra.mxu0 %v1479
        %1489 = vmatprep.subr.mxu0 0.0
        %1490 = vmatpush1.msra.mxu0 0.0
        %1491 = vmatprep.subr.mxu0 0.0
        %1492 = vmatpush1.msra.mxu0 0.0
        %1493 = vmatprep.subr.mxu0 0.0
        %1494 = vmatpush1.msra.mxu0 0.0
        %1495 = vmatprep.subr.mxu0 0.0
        %1496 = vmatpush1.msra.mxu0 0.0
        %1497 = vmatprep.subr.mxu0 0.0
        %1498 = vmatpush1.msra.mxu0 0.0
        %1499 = vmatprep.subr.mxu0 0.0
        %1500 = vmatpush1.msra.mxu0 0.0
        %1501 = vmatprep.subr.mxu0 0.0
        %1502 = vmatpush1.msra.mxu0 0.0
        %1503 = vmatprep.subr.mxu0 0.0
        %1504 = vmatpush1.msra.mxu0 0.0
        %1505 = vmatprep.subr.mxu0 0.0
        %1506 = vmatpush1.msra.mxu0 0.0
        %1507 = vmatprep.subr.mxu0 0.0
        %1508 = vmatpush1.msra.mxu0 0.0
        %1509 = vmatprep.subr.mxu0 0.0
        %1510 = vmatpush1.msra.mxu0 0.0
        %1511 = vmatprep.subr.mxu0 0.0
        %1512 = vmatpush1.msra.mxu0 0.0
        %1513 = vmatprep.subr.mxu0 0.0
        %1514 = vmatpush1.msra.mxu0 0.0
        %1515 = vmatprep.subr.mxu0 0.0
        %1516 = vmatpush1.msra.mxu0 0.0
        %1517 = vmatprep.subr.mxu0 0.0
        %1518 = vmatpush1.msra.mxu0 0.0
        %1519 = vmatprep.subr.mxu0 0.0
        %1520 = vmatpush1.msra.mxu0 0.0
        %1521 = vmatprep.subr.mxu0 0.0
        %1522 = vmatpush1.msra.mxu0 0.0
        %1523 = vmatprep.subr.mxu0 0.0
        %1524 = vmatpush1.msra.mxu0 0.0
        %1525 = vmatprep.subr.mxu0 0.0
        %1526 = vmatpush1.msra.mxu0 0.0
        %1527 = vmatprep.subr.mxu0 0.0
        %1528 = vmatpush1.msra.mxu0 0.0
        %1529 = vmatprep.subr.mxu0 0.0
        %1530 = vmatpush1.msra.mxu0 0.0
        %1531 = vmatprep.subr.mxu0 0.0
        %1532 = vmatpush1.msra.mxu0 0.0
        %1533 = vmatprep.subr.mxu0 0.0
        %1534 = vmatpush1.msra.mxu0 0.0
        %1535 = vmatprep.subr.mxu0 0.0
        %1536 = vmatpush1.msra.mxu0 0.0
        %1537 = vmatprep.subr.mxu0 0.0
        %1538 = vmatpush1.msra.mxu0 0.0
        %1539 = vmatprep.subr.mxu0 0.0
        %1540 = vmatpush1.msra.mxu0 0.0
        %1541 = vmatprep.subr.mxu0 0.0
        %1542 = vmatpush1.msra.mxu0 0.0
        %1543 = vmatprep.subr.mxu0 0.0
        %1544 = vmatpush1.msra.mxu0 0.0
        %1545 = vmatprep.subr.mxu0 0.0
        %1546 = vmatpush1.msra.mxu0 0.0
        %1547 = vmatprep.subr.mxu0 0.0
        %1548 = vmatpush1.msra.mxu0 0.0
        %1549 = vmatprep.mubr.f32.mxu0 0.0
        %1550 = vmatmul.mubr.f32.gmra.mrb[0].mxu0 %v1483
        %v1551 = vpop.f32.mrb[0].mxu0
        %v1552 = vadd.f32 0.0, %v1551
        %v1553 = vpop.f32.mrb[0].mxu0
        %v1554 = vadd.f32 0.0, %v1553
        %1555 = vdwg.mxu0
        %v1558 = vcombine.low %v1552, %v1554
        %v1560 = vunpack.c.l.s4 1966171168
        %v1561 = vunpack.c.0.s8 %v1560
        %v1562 = vlaneseq
        %v1563 = vshrl.u32 %v1562, 7
        %v1564 = vsub.s32 %v1561, %v1563
        %v1565 = vrot.slane %v1558, %v1564
        %v1567 = vunpack.c.l.s4 1966171168
        %v1568 = vunpack.c.0.s8 %v1567
        %v1569 = vlaneseq
        %v1570 = vshrl.u32 %v1569, 7
        %v1571 = vsub.s32 %v1568, %v1570
        %v1572 = vrot.slane %v1565, %v1571
        %v1574 = vlaneseq
        %vm1575 = vcmp.ge.s32.totalorder %v1574, 0
        %vm1576 = vcmp.lt.s32.totalorder %v1574, 176
        %vm1577 = vmand %vm1575, %vm1576
        %1578 = vst.msk [vmem:[#allocation2] sm:$0x3] %vm1577, %v1572
        %v1579 = vld [vmem:[%s3] sm:$0xff]
        %v1580 = vld [vmem:[%s3 + $0x8] sm:$0xff]
        %v1581 = vld [vmem:[%s3 + $0x10] sm:$0xff]
        %v1582 = vld [vmem:[%s3 + $0x18] sm:$0xff]
        %v1584 = vsel %vm1481, %v1476, 0
        %1586 = vmatprep.subr.mxu0 %v1580
        %1587 = vmatpush1.msra.mxu0 %v1579
        %1588 = vmatprep.subr.mxu0 %v1582
        %1589 = vmatpush1.msra.mxu0 %v1581
        %1590 = vmatprep.subr.mxu0 0.0
        %1591 = vmatpush1.msra.mxu0 0.0
        %1592 = vmatprep.subr.mxu0 0.0
        %1593 = vmatpush1.msra.mxu0 0.0
        %1594 = vmatprep.subr.mxu0 0.0
        %1595 = vmatpush1.msra.mxu0 0.0
        %1596 = vmatprep.subr.mxu0 0.0
        %1597 = vmatpush1.msra.mxu0 0.0
        %1598 = vmatprep.subr.mxu0 0.0
        %1599 = vmatpush1.msra.mxu0 0.0
        %1600 = vmatprep.subr.mxu0 0.0
        %1601 = vmatpush1.msra.mxu0 0.0
        %1602 = vmatprep.subr.mxu0 0.0
        %1603 = vmatpush1.msra.mxu0 0.0
        %1604 = vmatprep.subr.mxu0 0.0
        %1605 = vmatpush1.msra.mxu0 0.0
        %1606 = vmatprep.subr.mxu0 0.0
        %1607 = vmatpush1.msra.mxu0 0.0
        %1608 = vmatprep.subr.mxu0 0.0
        %1609 = vmatpush1.msra.mxu0 0.0
        %1610 = vmatprep.subr.mxu0 0.0
        %1611 = vmatpush1.msra.mxu0 0.0
        %1612 = vmatprep.subr.mxu0 0.0
        %1613 = vmatpush1.msra.mxu0 0.0
        %1614 = vmatprep.subr.mxu0 0.0
        %1615 = vmatpush1.msra.mxu0 0.0
        %1616 = vmatprep.subr.mxu0 0.0
        %1617 = vmatpush1.msra.mxu0 0.0
        %1618 = vmatprep.subr.mxu0 0.0
        %1619 = vmatpush1.msra.mxu0 0.0
        %1620 = vmatprep.subr.mxu0 0.0
        %1621 = vmatpush1.msra.mxu0 0.0
        %1622 = vmatprep.subr.mxu0 0.0
        %1623 = vmatpush1.msra.mxu0 0.0
        %1624 = vmatprep.subr.mxu0 0.0
        %1625 = vmatpush1.msra.mxu0 0.0
        %1626 = vmatprep.subr.mxu0 0.0
        %1627 = vmatpush1.msra.mxu0 0.0
        %1628 = vmatprep.subr.mxu0 0.0
        %1629 = vmatpush1.msra.mxu0 0.0
        %1630 = vmatprep.subr.mxu0 0.0
        %1631 = vmatpush1.msra.mxu0 0.0
        %1632 = vmatprep.subr.mxu0 0.0
        %1633 = vmatpush1.msra.mxu0 0.0
        %1634 = vmatprep.subr.mxu0 0.0
        %1635 = vmatpush1.msra.mxu0 0.0
        %1636 = vmatprep.subr.mxu0 0.0
        %1637 = vmatpush1.msra.mxu0 0.0
        %1638 = vmatprep.subr.mxu0 0.0
        %1639 = vmatpush1.msra.mxu0 0.0
        %1640 = vmatprep.subr.mxu0 0.0
        %1641 = vmatpush1.msra.mxu0 0.0
        %1642 = vmatprep.subr.mxu0 0.0
        %1643 = vmatpush1.msra.mxu0 0.0
        %1644 = vmatprep.subr.mxu0 0.0
        %1645 = vmatpush1.msra.mxu0 0.0
        %1646 = vmatprep.subr.mxu0 0.0
        %1647 = vmatpush1.msra.mxu0 0.0
        %1648 = vmatprep.subr.mxu0 0.0
        %1649 = vmatpush1.msra.mxu0 0.0
        %1650 = vmatprep.mubr.f32.mxu0 0.0
        %1651 = vmatmul.mubr.f32.gmra.mrb[0].mxu0 %v1584
        %v1652 = vpop.f32.mrb[0].mxu0
        %v1653 = vadd.f32 0.0, %v1652
        %v1654 = vpop.f32.mrb[0].mxu0
        %v1655 = vadd.f32 0.0, %v1654
        %1656 = vdwg.mxu0
        %v1659 = vcombine.low %v1653, %v1655
        %v1661 = vunpack.c.l.s4 1966171168
        %v1662 = vunpack.c.0.s8 %v1661
        %v1663 = vlaneseq
        %v1664 = vshrl.u32 %v1663, 7
        %v1665 = vsub.s32 %v1662, %v1664
        %v1666 = vrot.slane %v1659, %v1665
        %v1668 = vunpack.c.l.s4 1966171168
        %v1669 = vunpack.c.0.s8 %v1668
        %v1670 = vlaneseq
        %v1671 = vshrl.u32 %v1670, 7
        %v1672 = vsub.s32 %v1669, %v1671
        %v1673 = vrot.slane %v1666, %v1672
        %1675 = vst.msk [vmem:[#allocation3] sm:$0x3] %vm1577, %v1673
      $region76: #{cnn_forward.4} parent=63 // pred_fallthru
        _
      // Predicated region
      $region77: #{cnn_forward.4} parent=63 // pred_check
        %p1676 = pneg %p1272
      $region78: #{cnn_forward.4} parent=63 // pred_check_branch
        %1678 = sbr.rel (%p1676) target = $region80
      $region79: #{cnn_forward.4} parent=63 // pred_region
        %v1679 = vld [vmem:[#allocation2] sm:$0x3]
        %v1681 = vlaneseq
        %v1682 = vshrl.u32 %v1681, 7
        %v1683 = vsub.s32 0, %v1682
        %v1684 = vrot.slane %v1679, %v1683
        %v1685 = vlaneseq
        %v1686 = vshrl.u32 %v1685, 7
        %v1687 = vsub.s32 1, %v1686
        %v1688 = vrot.slane %v1679, %v1687
        %v1691 = vmul.f32 %v1126, %v1684
        %v1692 = vmul.f32 %v1128, %v1688
        %v1693 = vmul.f32 %v1130, %v1684
        %v1694 = vmul.f32 %v1132, %v1688
        %v1695 = vmul.f32 %v1136, %v1684
        %v1696 = vmul.f32 %v1138, %v1688
        %v1697 = vld [vmem:[#allocation3] sm:$0x3]
        %v1699 = vlaneseq
        %v1700 = vshrl.u32 %v1699, 7
        %v1701 = vsub.s32 0, %v1700
        %v1702 = vrot.slane %v1697, %v1701
        %v1703 = vlaneseq
        %v1704 = vshrl.u32 %v1703, 7
        %v1705 = vsub.s32 1, %v1704
        %v1706 = vrot.slane %v1697, %v1705
        %v1709 = vadd.f32 %v1691, %v1702
        %v1710 = vadd.f32 %v1692, %v1706
        %v1711 = vadd.f32 %v1693, %v1702
        %v1712 = vadd.f32 %v1694, %v1706
        %v1713 = vadd.f32 %v1695, %v1702
        %v1714 = vadd.f32 %v1696, %v1706
        %vm1715 = vcmp.gt.f32.partialorder %v1709, 0.0
        %vm1716 = vcmp.gt.f32.partialorder %v1710, 0.0
        %vm1717 = vcmp.gt.f32.partialorder %v1711, 0.0
        %vm1718 = vcmp.gt.f32.partialorder %v1712, 0.0
        %vm1719 = vcmp.gt.f32.partialorder %v1713, 0.0
        %vm1720 = vcmp.gt.f32.partialorder %v1714, 0.0
        %v1721 = vmul.f32 %v1709, 0.01
        %v1722 = vmul.f32 %v1710, 0.01
        %v1723 = vmul.f32 %v1711, 0.01
        %v1724 = vmul.f32 %v1712, 0.01
        %v1725 = vmul.f32 %v1713, 0.01
        %v1726 = vmul.f32 %v1714, 0.01
        %v1727 = vsel %vm1715, %v1709, %v1721
        %v1728 = vsel %vm1716, %v1710, %v1722
        %v1729 = vsel %vm1717, %v1711, %v1723
        %v1730 = vsel %vm1718, %v1712, %v1724
        %v1731 = vsel %vm1719, %v1713, %v1725
        %v1732 = vsel %vm1720, %v1714, %v1726
        %v1733 = vpack.c.bf16 %v1729, %v1727
        %v1734 = vpack.c.bf16 %v1730, %v1728
        %v1735 = vpack.c.bf16 %v1731, %v1731
        %v1736 = vpack.c.bf16 %v1732, %v1732
        %v1737 = vld [vmem:[%s7] sm:$0xf]
        %v1738 = vld [vmem:[%s7 + $0x4] sm:$0x1]
        %v1741 = vunpack.c.l.b16 %v1737
        %v1742 = vunpack.c.l.b16 %v1738
        %v1743 = vpack.c.b16 %v1742, %v1741
        %vm1744 = vcmask 195584
        %v1746 = vsel %vm1744, %v1743, 0
        %vm1748 = vcmask 1043456
        %v1750 = vsel %vm1748, %v1735, 0
        %v1753 = vsel %vm1748, %v1736, 0
        %1755 = vmatprep.subr.bf16.mxu0 %v1734
        %1756 = vmatpush1.bf16.msra.mxu0 %v1733
        %1757 = vmatprep.subr.bf16.mxu0 %v1753
        %1758 = vmatpush1.bf16.msra.mxu0 %v1750
        %1759 = vmatprep.subr.bf16.mxu0 0
        %1760 = vmatpush1.bf16.msra.mxu0 0
        %1761 = vmatprep.subr.bf16.mxu0 0
        %1762 = vmatpush1.bf16.msra.mxu0 0
        %1763 = vmatprep.subr.bf16.mxu0 0
        %1764 = vmatpush1.bf16.msra.mxu0 0
        %1765 = vmatprep.subr.bf16.mxu0 0
        %1766 = vmatpush1.bf16.msra.mxu0 0
        %1767 = vmatprep.subr.bf16.mxu0 0
        %1768 = vmatpush1.bf16.msra.mxu0 0
        %1769 = vmatprep.subr.bf16.mxu0 0
        %1770 = vmatpush1.bf16.msra.mxu0 0
        %1771 = vmatprep.subr.bf16.mxu0 0
        %1772 = vmatpush1.bf16.msra.mxu0 0
        %1773 = vmatprep.subr.bf16.mxu0 0
        %1774 = vmatpush1.bf16.msra.mxu0 0
        %1775 = vmatprep.subr.bf16.mxu0 0
        %1776 = vmatpush1.bf16.msra.mxu0 0
        %1777 = vmatprep.subr.bf16.mxu0 0
        %1778 = vmatpush1.bf16.msra.mxu0 0
        %1779 = vmatprep.subr.bf16.mxu0 0
        %1780 = vmatpush1.bf16.msra.mxu0 0
        %1781 = vmatprep.subr.bf16.mxu0 0
        %1782 = vmatpush1.bf16.msra.mxu0 0
        %1783 = vmatprep.subr.bf16.mxu0 0
        %1784 = vmatpush1.bf16.msra.mxu0 0
        %1785 = vmatprep.subr.bf16.mxu0 0
        %1786 = vmatpush1.bf16.msra.mxu0 0
        %1787 = vmatprep.mubr.bf16.mxu0 0
        %1788 = vmatmul.mubr.bf16.gmra.mrb[0].mxu0 %v1746
        %v1789 = vpop.f32.mrb[0].mxu0
        %v1790 = vadd.f32 0.0, %v1789
        %v1791 = vpop.f32.mrb[0].mxu0
        %v1792 = vadd.f32 0.0, %v1791
        %v1793 = vpop.f32.mrb[0].mxu0
        %v1794 = vadd.f32 0.0, %v1793
        %v1795 = vpop.f32.mrb[0].mxu0
        %v1796 = vadd.f32 0.0, %v1795
        %1797 = vdwg.mxu0
        %v1798 = vld [vmem:[%s8] sm:$0xf]
        %v1799 = vld [vmem:[%s8 + $0x4] sm:$0x1]
        %v1802 = vunpack.c.l.b16 %v1798
        %v1803 = vunpack.c.l.b16 %v1799
        %v1804 = vpack.c.b16 %v1803, %v1802
        %v1806 = vsel %vm1744, %v1804, 0
        %1808 = vmatprep.subr.bf16.mxu0 %v1734
        %1809 = vmatpush1.bf16.msra.mxu0 %v1733
        %1810 = vmatprep.subr.bf16.mxu0 %v1753
        %1811 = vmatpush1.bf16.msra.mxu0 %v1750
        %1812 = vmatprep.subr.bf16.mxu0 0
        %1813 = vmatpush1.bf16.msra.mxu0 0
        %1814 = vmatprep.subr.bf16.mxu0 0
        %1815 = vmatpush1.bf16.msra.mxu0 0
        %1816 = vmatprep.subr.bf16.mxu0 0
        %1817 = vmatpush1.bf16.msra.mxu0 0
        %1818 = vmatprep.subr.bf16.mxu0 0
        %1819 = vmatpush1.bf16.msra.mxu0 0
        %1820 = vmatprep.subr.bf16.mxu0 0
        %1821 = vmatpush1.bf16.msra.mxu0 0
        %1822 = vmatprep.subr.bf16.mxu0 0
        %1823 = vmatpush1.bf16.msra.mxu0 0
        %1824 = vmatprep.subr.bf16.mxu0 0
        %1825 = vmatpush1.bf16.msra.mxu0 0
        %1826 = vmatprep.subr.bf16.mxu0 0
        %1827 = vmatpush1.bf16.msra.mxu0 0
        %1828 = vmatprep.subr.bf16.mxu0 0
        %1829 = vmatpush1.bf16.msra.mxu0 0
        %1830 = vmatprep.subr.bf16.mxu0 0
        %1831 = vmatpush1.bf16.msra.mxu0 0
        %1832 = vmatprep.subr.bf16.mxu0 0
        %1833 = vmatpush1.bf16.msra.mxu0 0
        %1834 = vmatprep.subr.bf16.mxu0 0
        %1835 = vmatpush1.bf16.msra.mxu0 0
        %1836 = vmatprep.subr.bf16.mxu0 0
        %1837 = vmatpush1.bf16.msra.mxu0 0
        %1838 = vmatprep.subr.bf16.mxu0 0
        %1839 = vmatpush1.bf16.msra.mxu0 0
        %1840 = vmatprep.mubr.bf16.mxu0 0
        %1841 = vmatmul.mubr.bf16.gmra.mrb[0].mxu0 %v1806
        %v1842 = vpop.f32.mrb[0].mxu0
        %v1843 = vadd.f32 0.0, %v1842
        %v1844 = vpop.f32.mrb[0].mxu0
        %v1845 = vadd.f32 0.0, %v1844
        %v1846 = vpop.f32.mrb[0].mxu0
        %v1847 = vadd.f32 0.0, %v1846
        %v1848 = vpop.f32.mrb[0].mxu0
        %v1849 = vadd.f32 0.0, %v1848
        %1850 = vdwg.mxu0
        %v1851 = vmax.f32 %v1790, %v1843
        %v1852 = vmax.f32 %v1792, %v1845
        %v1853 = vmax.f32 %v1794, %v1847
        %v1854 = vmax.f32 %v1796, %v1849
        %v1855 = vpack.c.bf16 %v1853, %v1851
        %v1856 = vpack.c.bf16 %v1854, %v1852
        %v1857 = vld [vmem:[%s9] sm:$0xf]
        %v1858 = vld [vmem:[%s9 + $0x4] sm:$0xf]
        %v1859 = vld [vmem:[%s9 + $0x8] sm:$0xf]
        %v1860 = vld [vmem:[%s9 + $0xc] sm:$0xf]
        %v1861 = vld [vmem:[%s9 + $0x10] sm:$0xf]
        %v1862 = vld [vmem:[%s9 + $0x14] sm:$0xf]
        %v1863 = vld [vmem:[%s9 + $0x18] sm:$0xf]
        %v1864 = vld [vmem:[%s9 + $0x1c] sm:$0xf]
        %v1865 = vld [vmem:[%s9 + $0x20] sm:$0xf]
        %v1866 = vld [vmem:[%s9 + $0x24] sm:$0xf]
        %v1867 = vld [vmem:[%s9 + $0x28] sm:$0xf]
        %v1868 = vld [vmem:[%s9 + $0x2c] sm:$0xf]
        %v1869 = vld [vmem:[%s9 + $0x30] sm:$0xf]
        %v1870 = vld [vmem:[%s9 + $0x34] sm:$0xf]
        %v1871 = vld [vmem:[%s9 + $0x38] sm:$0xf]
        %v1872 = vld [vmem:[%s9 + $0x3c] sm:$0xf]
        %v1873 = vld [vmem:[%s9 + $0x40] sm:$0xf]
        %v1874 = vld [vmem:[%s9 + $0x44] sm:$0xf]
        %v1875 = vld [vmem:[%s9 + $0x48] sm:$0xf]
        %v1876 = vld [vmem:[%s9 + $0x4c] sm:$0xf]
        %v1877 = vld [vmem:[%s9 + $0x50] sm:$0xf]
        %v1878 = vld [vmem:[%s9 + $0x54] sm:$0xf]
        %v1901 = vunpack.c.l.b16 %v1857
        %v1902 = vunpack.c.l.b16 %v1858
        %v1903 = vunpack.c.l.b16 %v1859
        %v1904 = vunpack.c.l.b16 %v1860
        %v1905 = vunpack.c.l.b16 %v1861
        %v1906 = vunpack.c.l.b16 %v1862
        %v1907 = vunpack.c.l.b16 %v1863
        %v1908 = vunpack.c.l.b16 %v1864
        %v1909 = vunpack.c.l.b16 %v1865
        %v1910 = vunpack.c.l.b16 %v1866
        %v1911 = vunpack.c.l.b16 %v1867
        %v1912 = vunpack.c.l.b16 %v1868
        %v1913 = vunpack.c.l.b16 %v1869
        %v1914 = vunpack.c.l.b16 %v1870
        %v1915 = vunpack.c.l.b16 %v1871
        %v1916 = vunpack.c.l.b16 %v1872
        %v1917 = vunpack.c.l.b16 %v1873
        %v1918 = vunpack.c.l.b16 %v1874
        %v1919 = vunpack.c.l.b16 %v1875
        %v1920 = vunpack.c.l.b16 %v1876
        %v1921 = vunpack.c.l.b16 %v1877
        %v1922 = vunpack.c.l.b16 %v1878
        %v1923 = vpack.c.b16 %v1902, %v1901
        %v1924 = vpack.c.b16 %v1904, %v1903
        %v1925 = vpack.c.b16 %v1906, %v1905
        %v1926 = vpack.c.b16 %v1908, %v1907
        %v1927 = vpack.c.b16 %v1910, %v1909
        %v1928 = vpack.c.b16 %v1912, %v1911
        %v1929 = vpack.c.b16 %v1914, %v1913
        %v1930 = vpack.c.b16 %v1916, %v1915
        %v1931 = vpack.c.b16 %v1918, %v1917
        %v1932 = vpack.c.b16 %v1920, %v1919
        %v1933 = vpack.c.b16 %v1922, %v1921
        %vm1945 = vcmask 392192
        %v1947 = vsel %vm1945, %v1856, 0
        %1949 = vmatprep.subr.bf16.mxu0 0
        %1950 = vmatpush1.bf16.msra.mxu0 %v1923
        %1951 = vmatprep.subr.bf16.mxu0 0
        %1952 = vmatpush1.bf16.msra.mxu0 %v1924
        %1953 = vmatprep.subr.bf16.mxu0 0
        %1954 = vmatpush1.bf16.msra.mxu0 %v1925
        %1955 = vmatprep.subr.bf16.mxu0 0
        %1956 = vmatpush1.bf16.msra.mxu0 %v1926
        %1957 = vmatprep.subr.bf16.mxu0 0
        %1958 = vmatpush1.bf16.msra.mxu0 %v1927
        %1959 = vmatprep.subr.bf16.mxu0 0
        %1960 = vmatpush1.bf16.msra.mxu0 %v1928
        %1961 = vmatprep.subr.bf16.mxu0 0
        %1962 = vmatpush1.bf16.msra.mxu0 %v1929
        %1963 = vmatprep.subr.bf16.mxu0 0
        %1964 = vmatpush1.bf16.msra.mxu0 %v1930
        %1965 = vmatprep.subr.bf16.mxu0 0
        %1966 = vmatpush1.bf16.msra.mxu0 %v1931
        %1967 = vmatprep.subr.bf16.mxu0 0
        %1968 = vmatpush1.bf16.msra.mxu0 %v1932
        %1969 = vmatprep.subr.bf16.mxu0 0
        %1970 = vmatpush1.bf16.msra.mxu0 %v1933
        %1971 = vmatprep.subr.bf16.mxu0 0
        %1972 = vmatpush1.bf16.msra.mxu0 0
        %1973 = vmatprep.subr.bf16.mxu0 0
        %1974 = vmatpush1.bf16.msra.mxu0 0
        %1975 = vmatprep.subr.bf16.mxu0 0
        %1976 = vmatpush1.bf16.msra.mxu0 0
        %1977 = vmatprep.subr.bf16.mxu0 0
        %1978 = vmatpush1.bf16.msra.mxu0 0
        %1979 = vmatprep.subr.bf16.mxu0 0
        %1980 = vmatpush1.bf16.msra.mxu0 0
        %1981 = vmatprep.mubr.bf16.mxu0 %v1947
        %1982 = vmatmul.mubr.bf16.gmra.mrb[0].mxu0 %v1855
        %v1983 = vpop.f32.mrb[0].mxu0
        %v1984 = vadd.f32 0.0, %v1983
        %v1985 = vpop.f32.mrb[0].mxu0
        %v1986 = vpop.f32.mrb[0].mxu0
        %v1987 = vadd.f32 0.0, %v1986
        %v1988 = vpop.f32.mrb[0].mxu0
        %1989 = vdwg.mxu0
        %v1990 = vld [vmem:[%s10] sm:$0xf]
        %v1991 = vld [vmem:[%s10 + $0x4] sm:$0xf]
        %v1992 = vld [vmem:[%s10 + $0x8] sm:$0xf]
        %v1993 = vld [vmem:[%s10 + $0xc] sm:$0xf]
        %v1994 = vld [vmem:[%s10 + $0x10] sm:$0xf]
        %v1995 = vld [vmem:[%s10 + $0x14] sm:$0xf]
        %v1996 = vld [vmem:[%s10 + $0x18] sm:$0xf]
        %v1997 = vld [vmem:[%s10 + $0x1c] sm:$0xf]
        %v1998 = vld [vmem:[%s10 + $0x20] sm:$0xf]
        %v1999 = vld [vmem:[%s10 + $0x24] sm:$0xf]
        %v2000 = vld [vmem:[%s10 + $0x28] sm:$0xf]
        %v2001 = vld [vmem:[%s10 + $0x2c] sm:$0xf]
        %v2002 = vld [vmem:[%s10 + $0x30] sm:$0xf]
        %v2003 = vld [vmem:[%s10 + $0x34] sm:$0xf]
        %v2004 = vld [vmem:[%s10 + $0x38] sm:$0xf]
        %v2005 = vld [vmem:[%s10 + $0x3c] sm:$0xf]
        %v2006 = vld [vmem:[%s10 + $0x40] sm:$0xf]
        %v2007 = vld [vmem:[%s10 + $0x44] sm:$0xf]
        %v2008 = vld [vmem:[%s10 + $0x48] sm:$0xf]
        %v2009 = vld [vmem:[%s10 + $0x4c] sm:$0xf]
        %v2010 = vld [vmem:[%s10 + $0x50] sm:$0xf]
        %v2011 = vld [vmem:[%s10 + $0x54] sm:$0xf]
        %v2034 = vunpack.c.l.b16 %v1990
        %v2035 = vunpack.c.l.b16 %v1991
        %v2036 = vunpack.c.l.b16 %v1992
        %v2037 = vunpack.c.l.b16 %v1993
        %v2038 = vunpack.c.l.b16 %v1994
        %v2039 = vunpack.c.l.b16 %v1995
        %v2040 = vunpack.c.l.b16 %v1996
        %v2041 = vunpack.c.l.b16 %v1997
        %v2042 = vunpack.c.l.b16 %v1998
        %v2043 = vunpack.c.l.b16 %v1999
        %v2044 = vunpack.c.l.b16 %v2000
        %v2045 = vunpack.c.l.b16 %v2001
        %v2046 = vunpack.c.l.b16 %v2002
        %v2047 = vunpack.c.l.b16 %v2003
        %v2048 = vunpack.c.l.b16 %v2004
        %v2049 = vunpack.c.l.b16 %v2005
        %v2050 = vunpack.c.l.b16 %v2006
        %v2051 = vunpack.c.l.b16 %v2007
        %v2052 = vunpack.c.l.b16 %v2008
        %v2053 = vunpack.c.l.b16 %v2009
        %v2054 = vunpack.c.l.b16 %v2010
        %v2055 = vunpack.c.l.b16 %v2011
        %v2056 = vpack.c.b16 %v2035, %v2034
        %v2057 = vpack.c.b16 %v2037, %v2036
        %v2058 = vpack.c.b16 %v2039, %v2038
        %v2059 = vpack.c.b16 %v2041, %v2040
        %v2060 = vpack.c.b16 %v2043, %v2042
        %v2061 = vpack.c.b16 %v2045, %v2044
        %v2062 = vpack.c.b16 %v2047, %v2046
        %v2063 = vpack.c.b16 %v2049, %v2048
        %v2064 = vpack.c.b16 %v2051, %v2050
        %v2065 = vpack.c.b16 %v2053, %v2052
        %v2066 = vpack.c.b16 %v2055, %v2054
        %2078 = vmatprep.subr.bf16.mxu0 0
        %2079 = vmatpush1.bf16.msra.mxu0 %v2056
        %2080 = vmatprep.subr.bf16.mxu0 0
        %2081 = vmatpush1.bf16.msra.mxu0 %v2057
        %2082 = vmatprep.subr.bf16.mxu0 0
        %2083 = vmatpush1.bf16.msra.mxu0 %v2058
        %2084 = vmatprep.subr.bf16.mxu0 0
        %2085 = vmatpush1.bf16.msra.mxu0 %v2059
        %2086 = vmatprep.subr.bf16.mxu0 0
        %2087 = vmatpush1.bf16.msra.mxu0 %v2060
        %2088 = vmatprep.subr.bf16.mxu0 0
        %2089 = vmatpush1.bf16.msra.mxu0 %v2061
        %2090 = vmatprep.subr.bf16.mxu0 0
        %2091 = vmatpush1.bf16.msra.mxu0 %v2062
        %2092 = vmatprep.subr.bf16.mxu0 0
        %2093 = vmatpush1.bf16.msra.mxu0 %v2063
        %2094 = vmatprep.subr.bf16.mxu0 0
        %2095 = vmatpush1.bf16.msra.mxu0 %v2064
        %2096 = vmatprep.subr.bf16.mxu0 0
        %2097 = vmatpush1.bf16.msra.mxu0 %v2065
        %2098 = vmatprep.subr.bf16.mxu0 0
        %2099 = vmatpush1.bf16.msra.mxu0 %v2066
        %2100 = vmatprep.subr.bf16.mxu0 0
        %2101 = vmatpush1.bf16.msra.mxu0 0
        %2102 = vmatprep.subr.bf16.mxu0 0
        %2103 = vmatpush1.bf16.msra.mxu0 0
        %2104 = vmatprep.subr.bf16.mxu0 0
        %2105 = vmatpush1.bf16.msra.mxu0 0
        %2106 = vmatprep.subr.bf16.mxu0 0
        %2107 = vmatpush1.bf16.msra.mxu0 0
        %2108 = vmatprep.subr.bf16.mxu0 0
        %2109 = vmatpush1.bf16.msra.mxu0 0
        %2110 = vmatprep.mubr.bf16.mxu0 %v1947
        %2111 = vmatmul.mubr.bf16.gmra.mrb[0].mxu0 %v1855
        %v2112 = vpop.f32.mrb[0].mxu0
        %v2113 = vadd.f32 0.0, %v2112
        %v2114 = vpop.f32.mrb[0].mxu0
        %v2115 = vpop.f32.mrb[0].mxu0
        %v2116 = vadd.f32 0.0, %v2115
        %v2117 = vpop.f32.mrb[0].mxu0
        %2118 = vdwg.mxu0
        %v2119 = vmax.f32 %v1984, %v2113
        %v2120 = vmax.f32 %v1987, %v2116
        %v2121 = vpack.c.bf16 %v2120, %v2119
        %v2123 = vunpack.c.l.b16 %v2121
        %v2124 = vunpack.c.h.b16 %v2121
        %v2125 = vpack.c.b16 %v2123, %v2123
        %v2126 = vpack.c.b16 %v2124, %v2124
        %vm2129 = vcmask 650240
        %2130 = vst.msk [vmem:[%s407] sm:$0xf] %vm2129, %v2125
        %vm2131 = vcmask 647168
        %2132 = vst.msk [vmem:[%s407 + $0x4] sm:$0x1] %vm2131, %v2126
      $region80: #{cnn_forward.4} parent=63 // pred_fallthru
        _
      %s2133 = smul.u32 %s26, %s27
      %s2134 = smul.u32 2, %s2133
      %p2135 = scmp.lt.s32.totalorder %s2134, 1
      %s2136 = scalar_select %p2135, %s2134, 1
      %s2137 = smul.addr %s2136, 4
      %s2138 = scalar_lea.vmem %s11, %s2137
      // Predicated region
      $region81: #{cnn_forward.4} parent=63 // pred_check
        %p2139 = pneg %p290
      $region82: #{cnn_forward.4} parent=63 // pred_check_branch
        %2141 = sbr.rel (%p2139) target = $region84
      $region83: #{cnn_forward.4} parent=63 // pred_region
        %s2142 = smul.u32 %s26, %s27
        %s2143 = smul.u32 2, %s2142
      $region84: #{cnn_forward.4} parent=63 // pred_fallthru
        _
    $region64: #{cnn_forward.4} parent=5 // pred_fallthru
      _
    %p2144 = scmp.le.s32.totalorder 2, %s17
    // Predicated region
    $region85: #{cnn_forward.4} parent=5 // pred_check
      %p2145 = pneg %p2144
    $region86: #{cnn_forward.4} parent=5 // pred_check_branch
      %2147 = sbr.rel (%p2145) target = $region88
    $region87: #{cnn_forward.4} parent=5 // pred_region
      %s2148 = ssub.s32 %s17, 2
      // Predicated region
      $region89: #{cnn_forward.4} parent=87 // pred_check
        %p2149 = pneg %p296
      $region90: #{cnn_forward.4} parent=87 // pred_check_branch
        %2151 = sbr.rel (%p2149) target = $region92
      $region91: #{cnn_forward.4} parent=87 // pred_region
        %s2152 = smul.u32 %s28, %s29
        %s2153 = smul.u32 2, %s2152
        %p2154 = scmp.lt.s32.totalorder %s2153, 1
        %s2155 = scalar_select %p2154, %s2153, 1
        %s2156 = smul.addr %s2155, 4
        %s2157 = scalar_lea.vmem %s11, %s2156
      $region92: #{cnn_forward.4} parent=87 // pred_fallthru
        _
    $region88: #{cnn_forward.4} parent=5 // pred_fallthru
      _
  $region6: #{cnn_forward.4} parent=0 // loop_footer
    %s21 = sadd.s32 1, %s17
  $region7: #{cnn_forward.4} parent=0 // loop_footer_branch
    %16 = sbr.rel target = $region3
  $region8: #{cnn_forward.4} parent=0 // loop_exit
    _

</llo_original>
